<compile_context>
chip_gen: v5e
topology: v5e:2x2
jax: 0.10.0
libtpu: 0.0.40
codegen_flags: <defaults>
</compile_context>

<pallas_src>
import functools

import jax
import jax.numpy as jnp
from jax.experimental import pallas as pl
from jax.experimental.pallas import tpu as pltpu

# ---------------- static config (cfg stand-ins, small shapes) ----------------
BS = 2
N_SLICE_PER_C = 1
SEQ = N_SLICE_PER_C * 7           # cfg.n_slice_per_c * 7
IN_CHANS = 4                      # cfg.in_chans
IMG = 16                          # cfg.image_size
HDIM = 128                        # encoder feature dim (stand-in for conv_head.out_channels)
HLSTM = 256                       # LSTM hidden (fixed in module)
OUT_DIM = 4                       # cfg.out_dim
NSTACK = 2                        # two independent LSTM stacks: self.lstm, self.lstm2
BN_EPS = 1e-5
LEAKY = 0.1
DTYPE = jnp.float32
CDT = jnp.bfloat16                # matmul operand dtype (f32 accumulate)


def _sigmoid(x):
    # sigmoid(x) = 0.5*(tanh(x/2)+1): exact, uses EUP tanh, no VPU divide.
    return 0.5 * jnp.tanh(0.5 * x) + 0.5


# ---------------------------- Pallas kernels ---------------------------------
def _linear_kernel(x_ref, w_ref, b_ref, o_ref, *, activation):
    """y = act(x @ w + b); whole GEMM in one grid step (no K tiling needed)."""
    y = jnp.dot(x_ref[...].astype(CDT), w_ref[...].astype(CDT),
                preferred_element_type=jnp.float32) + b_ref[...]
    if activation == "relu":
        y = jnp.maximum(y, 0.0)
    o_ref[...] = y.astype(o_ref.dtype)


def linear_pallas(x, w, b, activation=None):
    M = x.shape[0]
    N = w.shape[-1]
    kernel = functools.partial(_linear_kernel, activation=activation)
    return pl.pallas_call(
        kernel,
        out_shape=jax.ShapeDtypeStruct((M, N), jnp.float32),
    )(x, w, b)


def _batched_linear_kernel(x_ref, w_ref, b_ref, o_ref):
    o_ref[...] = (jnp.dot(x_ref[...].astype(CDT), w_ref[...].astype(CDT),
                          preferred_element_type=jnp.float32)
                  + b_ref[...]).astype(o_ref.dtype)


def batched_linear_pallas(x, w, b):
    """Batched y[s] = x[s] @ w[s] + b[s], grid over the leading (stack) axis."""
    S_, M, K = x.shape
    N = w.shape[-1]
    return pl.pallas_call(
        _batched_linear_kernel,
        out_shape=jax.ShapeDtypeStruct((S_, M, N), jnp.float32),
        grid_spec=pltpu.PrefetchScalarGridSpec(
            num_scalar_prefetch=0,
            grid=(S_,),
            in_specs=[
                pl.BlockSpec((None, M, K), lambda s: (s, 0, 0)),
                pl.BlockSpec((None, K, N), lambda s: (s, 0, 0)),
                pl.BlockSpec((None, 1, N), lambda s: (s, 0, 0)),
            ],
            out_specs=pl.BlockSpec((None, M, N), lambda s: (s, 0, 0)),
        ),
        compiler_params=pltpu.CompilerParams(
            dimension_semantics=("parallel",)),
    )(x, w, b)


def _head_kernel(x_ref, w1_ref, b1_ref, w2_ref, b2_ref, o_ref):
    """Fused head: Linear -> (folded eval BatchNorm) -> LeakyReLU(0.1) -> Linear."""
    h = jnp.dot(x_ref[...].astype(CDT), w1_ref[...],
                preferred_element_type=jnp.float32) + b1_ref[...]
    h = jnp.where(h >= 0, h, LEAKY * h)
    y = jnp.dot(h.astype(CDT), w2_ref[...],
                preferred_element_type=jnp.float32) + b2_ref[...]
    o_ref[...] = y.astype(o_ref.dtype)


def head_pallas(x, p):
    M = x.shape[0]
    N = p["w2"].shape[-1]
    return pl.pallas_call(
        _head_kernel,
        out_shape=jax.ShapeDtypeStruct((M, N), jnp.float32),
    )(x, p["w1"], p["b1"], p["w2"], p["b2"])


def _lstm_rec_kernel(xpf_ref, xpb_ref, whf_ref, whb_ref,
                     hf_out_ref, hb_out_ref,
                     hf_sc, cf_sc, hb_sc, cb_sc):
    """One fused bidirectional LSTM layer.

    Grid = (stack, time).  Per step: forward direction consumes precomputed
    input-gates at time t, backward at time T-1-t (handled by the BlockSpec
    index maps).  h/c live in VMEM scratch; whh stays resident per stack.
    PyTorch gate order (i, f, g, o); gate math in f32.
    """
    H = hf_sc.shape[-1]

    @pl.when(pl.program_id(1) == 0)
    def _():
        hf_sc[...] = jnp.zeros_like(hf_sc)
        cf_sc[...] = jnp.zeros_like(cf_sc)
        hb_sc[...] = jnp.zeros_like(hb_sc)
        cb_sc[...] = jnp.zeros_like(cb_sc)

    def step(xp, wh, h_sc, c_sc, out_ref):
        gates = xp + jnp.dot(h_sc[...].astype(CDT), wh,
                             preferred_element_type=jnp.float32)
        i = _sigmoid(gates[:, 0 * H:1 * H])
        f = _sigmoid(gates[:, 1 * H:2 * H])
        g = jnp.tanh(gates[:, 2 * H:3 * H])
        o = _sigmoid(gates[:, 3 * H:4 * H])
        c = f * c_sc[...] + i * g
        h = o * jnp.tanh(c)
        c_sc[...] = c
        h_sc[...] = h
        out_ref[...] = h.astype(out_ref.dtype)

    step(xpf_ref[...], whf_ref[...], hf_sc, cf_sc, hf_out_ref)
    step(xpb_ref[...], whb_ref[...], hb_sc, cb_sc, hb_out_ref)


def lstm_layer_pallas(xp_f, xp_b, whh_f, whh_b):
    """xp_*: (T, S, B, 4H) f32 precomputed x@Wih + b; whh_*: (S, H, 4H) bf16."""
    T_, S_, B_, G4 = xp_f.shape
    H = G4 // 4
    return pl.pallas_call(
        _lstm_rec_kernel,
        out_shape=(jax.ShapeDtypeStruct((T_, S_, B_, H), jnp.float32),
                   jax.ShapeDtypeStruct((T_, S_, B_, H), jnp.float32)),
        grid_spec=pltpu.PrefetchScalarGridSpec(
            num_scalar_prefetch=0,
            grid=(S_, T_),
            in_specs=[
                pl.BlockSpec((None, None, B_, G4), lambda s, t: (t, s, 0, 0)),
                pl.BlockSpec((None, None, B_, G4),
                             lambda s, t: (T_ - 1 - t, s, 0, 0)),
                pl.BlockSpec((None, H, G4), lambda s, t: (s, 0, 0)),
                pl.BlockSpec((None, H, G4), lambda s, t: (s, 0, 0)),
            ],
            out_specs=[
                pl.BlockSpec((None, None, B_, H), lambda s, t: (t, s, 0, 0)),
                pl.BlockSpec((None, None, B_, H),
                             lambda s, t: (T_ - 1 - t, s, 0, 0)),
            ],
            scratch_shapes=[pltpu.VMEM((B_, H), jnp.float32)] * 4,
        ),
        compiler_params=pltpu.CompilerParams(
            dimension_semantics=("parallel", "arbitrary")),
    )(xp_f, xp_b, whh_f, whh_b)


# --------------------------- parameter init ----------------------------------
def _uniform(key, shape, fan_in):
    k = 1.0 / float(fan_in) ** 0.5
    return jax.random.uniform(key, shape, DTYPE, -k, k)


def _init_lstm_dir(key, d_in, h):
    ks = jax.random.split(key, 4)
    wih = _uniform(ks[0], (d_in, 4 * h), h)     # PyTorch weight_ih^T
    whh = _uniform(ks[1], (h, 4 * h), h)        # PyTorch weight_hh^T
    b = _uniform(ks[2], (4 * h,), h) + _uniform(ks[3], (4 * h,), h)  # b_ih + b_hh
    return wih, whh, b


def _init_head(key, d_in, d_mid, d_out):
    ks = jax.random.split(key, 6)
    w1 = _uniform(ks[0], (d_in, d_mid), d_in)
    b1 = _uniform(ks[1], (d_mid,), d_in)
    gamma = jax.random.uniform(ks[2], (d_mid,), DTYPE, 0.5, 1.5)
    beta = jax.random.uniform(ks[3], (d_mid,), DTYPE, -0.1, 0.1)
    mean = jnp.zeros((d_mid,), DTYPE)           # BN running_mean init
    var = jnp.ones((d_mid,), DTYPE)             # BN running_var init
    w2 = _uniform(ks[4], (d_mid, d_out), d_mid)
    b2 = _uniform(ks[5], (d_out,), d_mid)
    # fold eval-mode BatchNorm1d into the first linear
    scale = gamma * jax.lax.rsqrt(var + BN_EPS)
    return {
        "w1": (w1 * scale[None, :]).astype(CDT),
        "b1": ((b1 - mean) * scale + beta)[None, :],
        "w2": w2.astype(CDT),
        "b2": b2[None, :],
    }


def init_params(key):
    ks = jax.random.split(key, 16)
    d_flat = IN_CHANS * IMG * IMG

    # TODO(synk): the timm EfficientNet/ConvNeXt backbone has no clean Pallas
    # equivalent here; it is replaced by a synthetic flatten + linear + ReLU
    # feature extractor producing (N, HDIM), matching the module's interface.
    enc_w = _uniform(ks[0], (d_flat, HDIM), d_flat).astype(CDT)
    enc_b = _uniform(ks[1], (1, HDIM), d_flat)

    # LSTM weights: l0[dir][stack], l1[dir][stack]; dir 0 = fwd, 1 = bwd.
    idx = 2
    l0 = [[None] * NSTACK for _ in range(2)]
    l1 = [[None] * NSTACK for _ in range(2)]
    for d in range(2):
        for s in range(NSTACK):
            l0[d][s] = _init_lstm_dir(ks[idx], HDIM, HLSTM); idx += 1
    for d in range(2):
        for s in range(NSTACK):
            l1[d][s] = _init_lstm_dir(ks[idx], 2 * HLSTM, HLSTM); idx += 1

    # layer 0 input-projection weights concatenated over (dir, stack)
    l0_wih = jnp.concatenate(
        [l0[d][s][0] for d in range(2) for s in range(NSTACK)], axis=1).astype(CDT)
    l0_b = jnp.concatenate(
        [l0[d][s][2] for d in range(2) for s in range(NSTACK)], axis=0)[None, :]
    l0_whh_f = jnp.stack([l0[0][s][1] for s in range(NSTACK)], 0).astype(CDT)
    l0_whh_b = jnp.stack([l0[1][s][1] for s in range(NSTACK)], 0).astype(CDT)

    # layer 1 input-projection weights: per stack, columns = [fwd 4H | bwd 4H]
    l1_wih = jnp.stack(
        [jnp.concatenate([l1[0][s][0], l1[1][s][0]], axis=1) for s in range(NSTACK)],
        0).astype(CDT)
    l1_b = jnp.stack(
        [jnp.concatenate([l1[0][s][2], l1[1][s][2]], axis=0)[None, :]
         for s in range(NSTACK)], 0)
    l1_whh_f = jnp.stack([l1[0][s][1] for s in range(NSTACK)], 0).astype(CDT)
    l1_whh_b = jnp.stack([l1[1][s][1] for s in range(NSTACK)], 0).astype(CDT)

    return {
        "enc_w": enc_w, "enc_b": enc_b,
        "l0_wih": l0_wih, "l0_b": l0_b,
        "l0_whh_f": l0_whh_f, "l0_whh_b": l0_whh_b,
        "l1_wih": l1_wih, "l1_b": l1_b,
        "l1_whh_f": l1_whh_f, "l1_whh_b": l1_whh_b,
        "head1": _init_head(ks[14], 2 * HLSTM, 256, OUT_DIM),
        "head2": _init_head(ks[15], 2 * HLSTM, 256, 1),
    }


# ------------------------------- forward -------------------------------------
@jax.jit
def forward(params, x):
    bs = x.shape[0]
    # x.view(bs * n_slice_per_c * 7, in_chans, image_size, image_size), flattened
    xi = x.reshape(bs * SEQ, IN_CHANS * IMG * IMG)
    # synthetic encoder (single Pallas GEMM, no K tiling): flatten -> proj -> ReLU
    feat = linear_pallas(xi, params["enc_w"], params["enc_b"],
                         activation="relu")                        # (bs*SEQ, HDIM)

    # ---- LSTM layer 0: one GEMM for all (dir, stack) input projections ----
    xp0 = linear_pallas(feat, params["l0_wih"], params["l0_b"])    # (bs*SEQ, 2*S*4H)
    xp0 = xp0.reshape(bs, SEQ, 2, NSTACK, 4 * HLSTM)
    xp0 = xp0.transpose(2, 1, 3, 0, 4)                             # (dir, T, S, B, 4H)
    h0f, h0b = lstm_layer_pallas(xp0[0], xp0[1],
                                 params["l0_whh_f"], params["l0_whh_b"])

    # layer-0 bidirectional output per stack -> layer-1 input
    y0 = jnp.concatenate([h0f, h0b], axis=-1)                      # (T, S, B, 2H)
    y0 = y0.transpose(1, 2, 0, 3).reshape(NSTACK, bs * SEQ, 2 * HLSTM)

    # ---- LSTM layer 1: batched (per-stack) input projection + fused recurrence
    xp1 = batched_linear_pallas(y0, params["l1_wih"], params["l1_b"])  # (S, bs*SEQ, 2*4H)
    xp1 = xp1.reshape(NSTACK, bs, SEQ, 2, 4 * HLSTM).transpose(3, 2, 0, 1, 4)
    h1f, h1b = lstm_layer_pallas(xp1[0], xp1[1],
                                 params["l1_whh_f"], params["l1_whh_b"])

    y1 = jnp.concatenate([h1f, h1b], axis=-1)                      # (T, S, B, 2H)
    feat1 = y1[:, 0].transpose(1, 0, 2).reshape(bs * SEQ, 2 * HLSTM)  # lstm  -> head
    feat2_t0 = y1[0, 1]                                            # lstm2[:, 0] -> head2

    out1 = head_pallas(feat1, params["head1"])                     # (bs*SEQ, OUT_DIM)
    out2 = head_pallas(feat2_t0, params["head2"])                  # (bs, 1)
    return out1, out2


# --------------------------------- main ---------------------------------------
if __name__ == "__main__":
    key = jax.random.PRNGKey(0)
    kx, kp = jax.random.split(key)
    # input consistent with forward's view: (bs, seq, in_chans, H, W)
    x = jax.random.normal(kx, (BS, SEQ, IN_CHANS, IMG, IMG), DTYPE)
    params = init_params(kp)

    out1, out2 = forward(params, x)
    jax.block_until_ready((out1, out2))

    assert out1.shape == (BS * SEQ, OUT_DIM) and out2.shape == (BS, 1)
    assert jnp.all(jnp.isfinite(out1)) and jnp.all(jnp.isfinite(out2))
    print("KERNEL_OK")
</pallas_src>

<mosaic_0001>
module attributes {stable_mosaic.version = 11 : i64} {
  func.func @_linear_kernel(%arg0: memref<14x1024xf32, #tpu.memory_space<vmem>>, %arg1: memref<1024x128xbf16, #tpu.memory_space<vmem>>, %arg2: memref<1x128xf32, #tpu.memory_space<vmem>>, %arg3: memref<14x128xf32, #tpu.memory_space<vmem>>) attributes {dimension_semantics = [], scalar_prefetch = 0 : i64, scratch_operands = 0 : i64, tpu.core_type = #tpu.core_type<tc>} {
    %c0 = arith.constant 0 : index
    %c0_0 = arith.constant 0 : index
    %0 = vector.load %arg0[%c0, %c0_0] : memref<14x1024xf32, #tpu.memory_space<vmem>>, vector<14x1024xf32>
    %1 = arith.truncf %0 : vector<14x1024xf32> to vector<14x1024xbf16>
    %c0_1 = arith.constant 0 : index
    %c0_2 = arith.constant 0 : index
    %2 = vector.load %arg1[%c0_1, %c0_2] : memref<1024x128xbf16, #tpu.memory_space<vmem>>, vector<1024x128xbf16>
    %cst = arith.constant dense<0.000000e+00> : vector<14x128xf32>
    %3 = tpu.matmul %1, %2, %cst {dimension_numbers = #tpu.dot_dimension_numbers<[1], [0], [0], [1], [0, 0, 1, 1], [], []>} : vector<14x1024xbf16>, vector<1024x128xbf16>, vector<14x128xf32> -> vector<14x128xf32>
    %c0_3 = arith.constant 0 : index
    %c0_4 = arith.constant 0 : index
    %4 = vector.load %arg2[%c0_3, %c0_4] : memref<1x128xf32, #tpu.memory_space<vmem>>, vector<1x128xf32>
    %5 = vector.broadcast %4 : vector<1x128xf32> to vector<14x128xf32>
    %6 = arith.addf %3, %5 : vector<14x128xf32>
    %cst_5 = arith.constant 0.000000e+00 : f32
    %7 = vector.broadcast %cst_5 : f32 to vector<14x128xf32>
    %8 = arith.maximumf %6, %7 : vector<14x128xf32>
    %c0_6 = arith.constant 0 : index
    %c0_7 = arith.constant 0 : index
    %9 = vector.load %arg3[%c0_6, %c0_7] : memref<14x128xf32, #tpu.memory_space<vmem>>, vector<14x128xf32>
    tpu.vector_store %arg3[%c0_6, %c0_7], %8 {strides = array<i32>} : memref<14x128xf32, #tpu.memory_space<vmem>>, vector<14x128xf32>,
    return
  }
}

module attributes {stable_mosaic.version = 11 : i64} {
  func.func @_linear_kernel(%arg0: memref<14x128xf32, #tpu.memory_space<vmem>>, %arg1: memref<128x4096xbf16, #tpu.memory_space<vmem>>, %arg2: memref<1x4096xf32, #tpu.memory_space<vmem>>, %arg3: memref<14x4096xf32, #tpu.memory_space<vmem>>) attributes {dimension_semantics = [], scalar_prefetch = 0 : i64, scratch_operands = 0 : i64, tpu.core_type = #tpu.core_type<tc>} {
    %c0 = arith.constant 0 : index
    %c0_0 = arith.constant 0 : index
    %0 = vector.load %arg0[%c0, %c0_0] : memref<14x128xf32, #tpu.memory_space<vmem>>, vector<14x128xf32>
    %1 = arith.truncf %0 : vector<14x128xf32> to vector<14x128xbf16>
    %c0_1 = arith.constant 0 : index
    %c0_2 = arith.constant 0 : index
    %2 = vector.load %arg1[%c0_1, %c0_2] : memref<128x4096xbf16, #tpu.memory_space<vmem>>, vector<128x4096xbf16>
    %cst = arith.constant dense<0.000000e+00> : vector<14x4096xf32>
    %3 = tpu.matmul %1, %2, %cst {dimension_numbers = #tpu.dot_dimension_numbers<[1], [0], [0], [1], [0, 0, 1, 1], [], []>} : vector<14x128xbf16>, vector<128x4096xbf16>, vector<14x4096xf32> -> vector<14x4096xf32>
    %c0_3 = arith.constant 0 : index
    %c0_4 = arith.constant 0 : index
    %4 = vector.load %arg2[%c0_3, %c0_4] : memref<1x4096xf32, #tpu.memory_space<vmem>>, vector<1x4096xf32>
    %5 = vector.broadcast %4 : vector<1x4096xf32> to vector<14x4096xf32>
    %6 = arith.addf %3, %5 : vector<14x4096xf32>
    %c0_5 = arith.constant 0 : index
    %c0_6 = arith.constant 0 : index
    %7 = vector.load %arg3[%c0_5, %c0_6] : memref<14x4096xf32, #tpu.memory_space<vmem>>, vector<14x4096xf32>
    tpu.vector_store %arg3[%c0_5, %c0_6], %6 {strides = array<i32>} : memref<14x4096xf32, #tpu.memory_space<vmem>>, vector<14x4096xf32>,
    return
  }
}

module attributes {stable_mosaic.version = 11 : i64} {
  func.func @_lstm_rec_kernel(%arg0: i32, %arg1: i32, %arg2: memref<1x1x2x1024xf32, #tpu.memory_space<vmem>>, %arg3: memref<1x1x2x1024xf32, #tpu.memory_space<vmem>>, %arg4: memref<1x256x1024xbf16, #tpu.memory_space<vmem>>, %arg5: memref<1x256x1024xbf16, #tpu.memory_space<vmem>>, %arg6: memref<1x1x2x256xf32, #tpu.memory_space<vmem>>, %arg7: memref<1x1x2x256xf32, #tpu.memory_space<vmem>>, %arg8: memref<2x256xf32, #tpu.memory_space<vmem>>, %arg9: memref<2x256xf32, #tpu.memory_space<vmem>>, %arg10: memref<2x256xf32, #tpu.memory_space<vmem>>, %arg11: memref<2x256xf32, #tpu.memory_space<vmem>>) attributes {dimension_semantics = [#tpu.dimension_semantics<parallel>, #tpu.dimension_semantics<arbitrary>], iteration_bounds = array<i64: 2, 7>, scalar_prefetch = 0 : i64, scratch_operands = 4 : i64, tpu.core_type = #tpu.core_type<tc>, window_params = [{transform_indices = @transform_0, window_bounds = array<i64: 1, 1, 2, 1024>}, {transform_indices = @transform_1, window_bounds = array<i64: 1, 1, 2, 1024>}, {transform_indices = @transform_2, window_bounds = array<i64: 1, 256, 1024>}, {transform_indices = @transform_3, window_bounds = array<i64: 1, 256, 1024>}, {transform_indices = @transform_4, window_bounds = array<i64: 1, 1, 2, 256>}, {transform_indices = @transform_5, window_bounds = array<i64: 1, 1, 2, 256>}]} {
    %c0_i32 = arith.constant 0 : i32
    %0 = arith.cmpi eq, %arg1, %c0_i32 : i32
    %1 = arith.extui %0 : i1 to i32
    %c0_i32_0 = arith.constant 0 : i32
    %2 = arith.cmpi ne, %1, %c0_i32_0 : i32
    scf.if %2 {
      %cst_57 = arith.constant 0.000000e+00 : f32
      %93 = vector.broadcast %cst_57 : f32 to vector<2x256xf32>
      %c0_58 = arith.constant 0 : index
      %c0_59 = arith.constant 0 : index
      %94 = vector.load %arg8[%c0_58, %c0_59] : memref<2x256xf32, #tpu.memory_space<vmem>>, vector<2x256xf32>
      tpu.vector_store %arg8[%c0_58, %c0_59], %93 {strides = array<i32>} : memref<2x256xf32, #tpu.memory_space<vmem>>, vector<2x256xf32>,
      %cst_60 = arith.constant 0.000000e+00 : f32
      %95 = vector.broadcast %cst_60 : f32 to vector<2x256xf32>
      %c0_61 = arith.constant 0 : index
      %c0_62 = arith.constant 0 : index
      %96 = vector.load %arg9[%c0_61, %c0_62] : memref<2x256xf32, #tpu.memory_space<vmem>>, vector<2x256xf32>
      tpu.vector_store %arg9[%c0_61, %c0_62], %95 {strides = array<i32>} : memref<2x256xf32, #tpu.memory_space<vmem>>, vector<2x256xf32>,
      %cst_63 = arith.constant 0.000000e+00 : f32
      %97 = vector.broadcast %cst_63 : f32 to vector<2x256xf32>
      %c0_64 = arith.constant 0 : index
      %c0_65 = arith.constant 0 : index
      %98 = vector.load %arg10[%c0_64, %c0_65] : memref<2x256xf32, #tpu.memory_space<vmem>>, vector<2x256xf32>
      tpu.vector_store %arg10[%c0_64, %c0_65], %97 {strides = array<i32>} : memref<2x256xf32, #tpu.memory_space<vmem>>, vector<2x256xf32>,
      %cst_66 = arith.constant 0.000000e+00 : f32
      %99 = vector.broadcast %cst_66 : f32 to vector<2x256xf32>
      %c0_67 = arith.constant 0 : index
      %c0_68 = arith.constant 0 : index
      %100 = vector.load %arg11[%c0_67, %c0_68] : memref<2x256xf32, #tpu.memory_space<vmem>>, vector<2x256xf32>
      tpu.vector_store %arg11[%c0_67, %c0_68], %99 {strides = array<i32>} : memref<2x256xf32, #tpu.memory_space<vmem>>, vector<2x256xf32>,
    } else {
    }
    %c0 = arith.constant 0 : index
    %c0_1 = arith.constant 0 : index
    %c0_2 = arith.constant 0 : index
    %c0_3 = arith.constant 0 : index
    %3 = vector.load %arg2[%c0, %c0_1, %c0_2, %c0_3] : memref<1x1x2x1024xf32, #tpu.memory_space<vmem>>, vector<1x1x2x1024xf32>
    %4 = vector.shape_cast %3 : vector<1x1x2x1024xf32> to vector<2x1024xf32>
    %c0_4 = arith.constant 0 : index
    %c0_5 = arith.constant 0 : index
    %c0_6 = arith.constant 0 : index
    %5 = vector.load %arg4[%c0_4, %c0_5, %c0_6] : memref<1x256x1024xbf16, #tpu.memory_space<vmem>>, vector<1x256x1024xbf16>
    %6 = vector.shape_cast %5 : vector<1x256x1024xbf16> to vector<256x1024xbf16>
    %c0_7 = arith.constant 0 : index
    %c0_8 = arith.constant 0 : index
    %7 = vector.load %arg8[%c0_7, %c0_8] : memref<2x256xf32, #tpu.memory_space<vmem>>, vector<2x256xf32>
    %8 = arith.truncf %7 : vector<2x256xf32> to vector<2x256xbf16>
    %cst = arith.constant dense<0.000000e+00> : vector<2x1024xf32>
    %9 = tpu.matmul %8, %6, %cst {dimension_numbers = #tpu.dot_dimension_numbers<[1], [0], [0], [1], [0, 0, 1, 1], [], []>} : vector<2x256xbf16>, vector<256x1024xbf16>, vector<2x1024xf32> -> vector<2x1024xf32>
    %10 = arith.addf %4, %9 : vector<2x1024xf32>
    %11 = vector.extract_strided_slice %10 {offsets = [0, 0], sizes = [2, 256], strides = [1, 1]} : vector<2x1024xf32> to vector<2x256xf32>
    %cst_9 = arith.constant 5.000000e-01 : f32
    %12 = vector.broadcast %cst_9 : f32 to vector<2x256xf32>
    %13 = arith.mulf %12, %11 : vector<2x256xf32>
    %14 = math.tanh %13 : vector<2x256xf32>
    %cst_10 = arith.constant 5.000000e-01 : f32
    %15 = vector.broadcast %cst_10 : f32 to vector<2x256xf32>
    %16 = arith.mulf %15, %14 : vector<2x256xf32>
    %cst_11 = arith.constant 5.000000e-01 : f32
    %17 = vector.broadcast %cst_11 : f32 to vector<2x256xf32>
    %18 = arith.addf %16, %17 : vector<2x256xf32>
    %19 = vector.extract_strided_slice %10 {offsets = [0, 256], sizes = [2, 256], strides = [1, 1]} : vector<2x1024xf32> to vector<2x256xf32>
    %cst_12 = arith.constant 5.000000e-01 : f32
    %20 = vector.broadcast %cst_12 : f32 to vector<2x256xf32>
    %21 = arith.mulf %20, %19 : vector<2x256xf32>
    %22 = math.tanh %21 : vector<2x256xf32>
    %cst_13 = arith.constant 5.000000e-01 : f32
    %23 = vector.broadcast %cst_13 : f32 to vector<2x256xf32>
    %24 = arith.mulf %23, %22 : vector<2x256xf32>
    %cst_14 = arith.constant 5.000000e-01 : f32
    %25 = vector.broadcast %cst_14 : f32 to vector<2x256xf32>
    %26 = arith.addf %24, %25 : vector<2x256xf32>
    %27 = vector.extract_strided_slice %10 {offsets = [0, 512], sizes = [2, 256], strides = [1, 1]} : vector<2x1024xf32> to vector<2x256xf32>
    %28 = math.tanh %27 : vector<2x256xf32>
    %29 = vector.extract_strided_slice %10 {offsets = [0, 768], sizes = [2, 256], strides = [1, 1]} : vector<2x1024xf32> to vector<2x256xf32>
    %cst_15 = arith.constant 5.000000e-01 : f32
    %30 = vector.broadcast %cst_15 : f32 to vector<2x256xf32>
    %31 = arith.mulf %30, %29 : vector<2x256xf32>
    %32 = math.tanh %31 : vector<2x256xf32>
    %cst_16 = arith.constant 5.000000e-01 : f32
    %33 = vector.broadcast %cst_16 : f32 to vector<2x256xf32>
    %34 = arith.mulf %33, %32 : vector<2x256xf32>
    %cst_17 = arith.constant 5.000000e-01 : f32
    %35 = vector.broadcast %cst_17 : f32 to vector<2x256xf32>
    %36 = arith.addf %34, %35 : vector<2x256xf32>
    %c0_18 = arith.constant 0 : index
    %c0_19 = arith.constant 0 : index
    %37 = vector.load %arg9[%c0_18, %c0_19] : memref<2x256xf32, #tpu.memory_space<vmem>>, vector<2x256xf32>
    %38 = arith.mulf %26, %37 : vector<2x256xf32>
    %39 = arith.mulf %18, %28 : vector<2x256xf32>
    %40 = arith.addf %38, %39 : vector<2x256xf32>
    %41 = math.tanh %40 : vector<2x256xf32>
    %42 = arith.mulf %36, %41 : vector<2x256xf32>
    %c0_20 = arith.constant 0 : index
    %c0_21 = arith.constant 0 : index
    %43 = vector.load %arg9[%c0_20, %c0_21] : memref<2x256xf32, #tpu.memory_space<vmem>>, vector<2x256xf32>
    tpu.vector_store %arg9[%c0_20, %c0_21], %40 {strides = array<i32>} : memref<2x256xf32, #tpu.memory_space<vmem>>, vector<2x256xf32>,
    %c0_22 = arith.constant 0 : index
    %c0_23 = arith.constant 0 : index
    %44 = vector.load %arg8[%c0_22, %c0_23] : memref<2x256xf32, #tpu.memory_space<vmem>>, vector<2x256xf32>
    tpu.vector_store %arg8[%c0_22, %c0_23], %42 {strides = array<i32>} : memref<2x256xf32, #tpu.memory_space<vmem>>, vector<2x256xf32>,
    %c0_24 = arith.constant 0 : index
    %c0_25 = arith.constant 0 : index
    %c0_26 = arith.constant 0 : index
    %c0_27 = arith.constant 0 : index
    %45 = vector.load %arg6[%c0_24, %c0_25, %c0_26, %c0_27] : memref<1x1x2x256xf32, #tpu.memory_space<vmem>>, vector<1x1x2x256xf32>
    %46 = vector.shape_cast %45 : vector<1x1x2x256xf32> to vector<2x256xf32>
    %47 = vector.shape_cast %42 : vector<2x256xf32> to vector<1x1x2x256xf32>
    tpu.vector_store %arg6[%c0_24, %c0_25, %c0_26, %c0_27], %47 {strides = array<i32>} : memref<1x1x2x256xf32, #tpu.memory_space<vmem>>, vector<1x1x2x256xf32>,
    %c0_28 = arith.constant 0 : index
    %c0_29 = arith.constant 0 : index
    %c0_30 = arith.constant 0 : index
    %c0_31 = arith.constant 0 : index
    %48 = vector.load %arg3[%c0_28, %c0_29, %c0_30, %c0_31] : memref<1x1x2x1024xf32, #tpu.memory_space<vmem>>, vector<1x1x2x1024xf32>
    %49 = vector.shape_cast %48 : vector<1x1x2x1024xf32> to vector<2x1024xf32>
    %c0_32 = arith.constant 0 : index
    %c0_33 = arith.constant 0 : index
    %c0_34 = arith.constant 0 : index
    %50 = vector.load %arg5[%c0_32, %c0_33, %c0_34] : memref<1x256x1024xbf16, #tpu.memory_space<vmem>>, vector<1x256x1024xbf16>
    %51 = vector.shape_cast %50 : vector<1x256x1024xbf16> to vector<256x1024xbf16>
    %c0_35 = arith.constant 0 : index
    %c0_36 = arith.constant 0 : index
    %52 = vector.load %arg10[%c0_35, %c0_36] : memref<2x256xf32, #tpu.memory_space<vmem>>, vector<2x256xf32>
    %53 = arith.truncf %52 : vector<2x256xf32> to vector<2x256xbf16>
    %cst_37 = arith.constant dense<0.000000e+00> : vector<2x1024xf32>
    %54 = tpu.matmul %53, %51, %cst_37 {dimension_numbers = #tpu.dot_dimension_numbers<[1], [0], [0], [1], [0, 0, 1, 1], [], []>} : vector<2x256xbf16>, vector<256x1024xbf16>, vector<2x1024xf32> -> vector<2x1024xf32>
    %55 = arith.addf %49, %54 : vector<2x1024xf32>
    %56 = vector.extract_strided_slice %55 {offsets = [0, 0], sizes = [2, 256], strides = [1, 1]} : vector<2x1024xf32> to vector<2x256xf32>
    %cst_38 = arith.constant 5.000000e-01 : f32
    %57 = vector.broadcast %cst_38 : f32 to vector<2x256xf32>
    %58 = arith.mulf %57, %56 : vector<2x256xf32>
    %59 = math.tanh %58 : vector<2x256xf32>
    %cst_39 = arith.constant 5.000000e-01 : f32
    %60 = vector.broadcast %cst_39 : f32 to vector<2x256xf32>
    %61 = arith.mulf %60, %59 : vector<2x256xf32>
    %cst_40 = arith.constant 5.000000e-01 : f32
    %62 = vector.broadcast %cst_40 : f32 to vector<2x256xf32>
    %63 = arith.addf %61, %62 : vector<2x256xf32>
    %64 = vector.extract_strided_slice %55 {offsets = [0, 256], sizes = [2, 256], strides = [1, 1]} : vector<2x1024xf32> to vector<2x256xf32>
    %cst_41 = arith.constant 5.000000e-01 : f32
    %65 = vector.broadcast %cst_41 : f32 to vector<2x256xf32>
    %66 = arith.mulf %65, %64 : vector<2x256xf32>
    %67 = math.tanh %66 : vector<2x256xf32>
    %cst_42 = arith.constant 5.000000e-01 : f32
    %68 = vector.broadcast %cst_42 : f32 to vector<2x256xf32>
    %69 = arith.mulf %68, %67 : vector<2x256xf32>
    %cst_43 = arith.constant 5.000000e-01 : f32
    %70 = vector.broadcast %cst_43 : f32 to vector<2x256xf32>
    %71 = arith.addf %69, %70 : vector<2x256xf32>
    %72 = vector.extract_strided_slice %55 {offsets = [0, 512], sizes = [2, 256], strides = [1, 1]} : vector<2x1024xf32> to vector<2x256xf32>
    %73 = math.tanh %72 : vector<2x256xf32>
    %74 = vector.extract_strided_slice %55 {offsets = [0, 768], sizes = [2, 256], strides = [1, 1]} : vector<2x1024xf32> to vector<2x256xf32>
    %cst_44 = arith.constant 5.000000e-01 : f32
    %75 = vector.broadcast %cst_44 : f32 to vector<2x256xf32>
    %76 = arith.mulf %75, %74 : vector<2x256xf32>
    %77 = math.tanh %76 : vector<2x256xf32>
    %cst_45 = arith.constant 5.000000e-01 : f32
    %78 = vector.broadcast %cst_45 : f32 to vector<2x256xf32>
    %79 = arith.mulf %78, %77 : vector<2x256xf32>
    %cst_46 = arith.constant 5.000000e-01 : f32
    %80 = vector.broadcast %cst_46 : f32 to vector<2x256xf32>
    %81 = arith.addf %79, %80 : vector<2x256xf32>
    %c0_47 = arith.constant 0 : index
    %c0_48 = arith.constant 0 : index
    %82 = vector.load %arg11[%c0_47, %c0_48] : memref<2x256xf32, #tpu.memory_space<vmem>>, vector<2x256xf32>
    %83 = arith.mulf %71, %82 : vector<2x256xf32>
    %84 = arith.mulf %63, %73 : vector<2x256xf32>
    %85 = arith.addf %83, %84 : vector<2x256xf32>
    %86 = math.tanh %85 : vector<2x256xf32>
    %87 = arith.mulf %81, %86 : vector<2x256xf32>
    %c0_49 = arith.constant 0 : index
    %c0_50 = arith.constant 0 : index
    %88 = vector.load %arg11[%c0_49, %c0_50] : memref<2x256xf32, #tpu.memory_space<vmem>>, vector<2x256xf32>
    tpu.vector_store %arg11[%c0_49, %c0_50], %85 {strides = array<i32>} : memref<2x256xf32, #tpu.memory_space<vmem>>, vector<2x256xf32>,
    %c0_51 = arith.constant 0 : index
    %c0_52 = arith.constant 0 : index
    %89 = vector.load %arg10[%c0_51, %c0_52] : memref<2x256xf32, #tpu.memory_space<vmem>>, vector<2x256xf32>
    tpu.vector_store %arg10[%c0_51, %c0_52], %87 {strides = array<i32>} : memref<2x256xf32, #tpu.memory_space<vmem>>, vector<2x256xf32>,
    %c0_53 = arith.constant 0 : index
    %c0_54 = arith.constant 0 : index
    %c0_55 = arith.constant 0 : index
    %c0_56 = arith.constant 0 : index
    %90 = vector.load %arg7[%c0_53, %c0_54, %c0_55, %c0_56] : memref<1x1x2x256xf32, #tpu.memory_space<vmem>>, vector<1x1x2x256xf32>
    %91 = vector.shape_cast %90 : vector<1x1x2x256xf32> to vector<2x256xf32>
    %92 = vector.shape_cast %87 : vector<2x256xf32> to vector<1x1x2x256xf32>
    tpu.vector_store %arg7[%c0_53, %c0_54, %c0_55, %c0_56], %92 {strides = array<i32>} : memref<1x1x2x256xf32, #tpu.memory_space<vmem>>, vector<1x1x2x256xf32>,
    return
  }
  func.func @transform_0(%arg0: i32, %arg1: i32) -> (i32, i32, i32, i32) {
    %c0_i32 = arith.constant 0 : i32
    %c0_i32_0 = arith.constant 0 : i32
    %c0_i32_1 = arith.constant 0 : i32
    return %arg1, %arg0, %c0_i32, %c0_i32_0 : i32, i32, i32, i32
  }
  func.func @transform_1(%arg0: i32, %arg1: i32) -> (i32, i32, i32, i32) {
    %c6_i32 = arith.constant 6 : i32
    %0 = arith.subi %c6_i32, %arg1 : i32
    %c0_i32 = arith.constant 0 : i32
    %c0_i32_0 = arith.constant 0 : i32
    %c0_i32_1 = arith.constant 0 : i32
    return %0, %arg0, %c0_i32, %c0_i32_0 : i32, i32, i32, i32
  }
  func.func @transform_2(%arg0: i32, %arg1: i32) -> (i32, i32, i32) {
    %c0_i32 = arith.constant 0 : i32
    %c0_i32_0 = arith.constant 0 : i32
    %c0_i32_1 = arith.constant 0 : i32
    return %arg0, %c0_i32, %c0_i32_0 : i32, i32, i32
  }
  func.func @transform_3(%arg0: i32, %arg1: i32) -> (i32, i32, i32) {
    %c0_i32 = arith.constant 0 : i32
    %c0_i32_0 = arith.constant 0 : i32
    %c0_i32_1 = arith.constant 0 : i32
    return %arg0, %c0_i32, %c0_i32_0 : i32, i32, i32
  }
  func.func @transform_4(%arg0: i32, %arg1: i32) -> (i32, i32, i32, i32) {
    %c0_i32 = arith.constant 0 : i32
    %c0_i32_0 = arith.constant 0 : i32
    %c0_i32_1 = arith.constant 0 : i32
    return %arg1, %arg0, %c0_i32, %c0_i32_0 : i32, i32, i32, i32
  }
  func.func @transform_5(%arg0: i32, %arg1: i32) -> (i32, i32, i32, i32) {
    %c6_i32 = arith.constant 6 : i32
    %0 = arith.subi %c6_i32, %arg1 : i32
    %c0_i32 = arith.constant 0 : i32
    %c0_i32_0 = arith.constant 0 : i32
    %c0_i32_1 = arith.constant 0 : i32
    return %0, %arg0, %c0_i32, %c0_i32_0 : i32, i32, i32, i32
  }
}

module attributes {stable_mosaic.version = 11 : i64} {
  func.func @_batched_linear_kernel(%arg0: i32, %arg1: memref<1x14x512xf32, #tpu.memory_space<vmem>>, %arg2: memref<1x512x2048xbf16, #tpu.memory_space<vmem>>, %arg3: memref<1x1x2048xf32, #tpu.memory_space<vmem>>, %arg4: memref<1x14x2048xf32, #tpu.memory_space<vmem>>) attributes {dimension_semantics = [#tpu.dimension_semantics<parallel>], iteration_bounds = array<i64: 2>, scalar_prefetch = 0 : i64, scratch_operands = 0 : i64, tpu.core_type = #tpu.core_type<tc>, window_params = [{transform_indices = @transform_0, window_bounds = array<i64: 1, 14, 512>}, {transform_indices = @transform_1, window_bounds = array<i64: 1, 512, 2048>}, {transform_indices = @transform_2, window_bounds = array<i64: 1, 1, 2048>}, {transform_indices = @transform_3, window_bounds = array<i64: 1, 14, 2048>}]} {
    %c0 = arith.constant 0 : index
    %c0_0 = arith.constant 0 : index
    %c0_1 = arith.constant 0 : index
    %0 = vector.load %arg1[%c0, %c0_0, %c0_1] : memref<1x14x512xf32, #tpu.memory_space<vmem>>, vector<1x14x512xf32>
    %1 = vector.shape_cast %0 : vector<1x14x512xf32> to vector<14x512xf32>
    %2 = arith.truncf %1 : vector<14x512xf32> to vector<14x512xbf16>
    %c0_2 = arith.constant 0 : index
    %c0_3 = arith.constant 0 : index
    %c0_4 = arith.constant 0 : index
    %3 = vector.load %arg2[%c0_2, %c0_3, %c0_4] : memref<1x512x2048xbf16, #tpu.memory_space<vmem>>, vector<1x512x2048xbf16>
    %4 = vector.shape_cast %3 : vector<1x512x2048xbf16> to vector<512x2048xbf16>
    %cst = arith.constant dense<0.000000e+00> : vector<14x2048xf32>
    %5 = tpu.matmul %2, %4, %cst {dimension_numbers = #tpu.dot_dimension_numbers<[1], [0], [0], [1], [0, 0, 1, 1], [], []>} : vector<14x512xbf16>, vector<512x2048xbf16>, vector<14x2048xf32> -> vector<14x2048xf32>
    %c0_5 = arith.constant 0 : index
    %c0_6 = arith.constant 0 : index
    %c0_7 = arith.constant 0 : index
    %6 = vector.load %arg3[%c0_5, %c0_6, %c0_7] : memref<1x1x2048xf32, #tpu.memory_space<vmem>>, vector<1x1x2048xf32>
    %7 = vector.shape_cast %6 : vector<1x1x2048xf32> to vector<1x2048xf32>
    %8 = vector.broadcast %7 : vector<1x2048xf32> to vector<14x2048xf32>
    %9 = arith.addf %5, %8 : vector<14x2048xf32>
    %c0_8 = arith.constant 0 : index
    %c0_9 = arith.constant 0 : index
    %c0_10 = arith.constant 0 : index
    %10 = vector.load %arg4[%c0_8, %c0_9, %c0_10] : memref<1x14x2048xf32, #tpu.memory_space<vmem>>, vector<1x14x2048xf32>
    %11 = vector.shape_cast %10 : vector<1x14x2048xf32> to vector<14x2048xf32>
    %12 = vector.shape_cast %9 : vector<14x2048xf32> to vector<1x14x2048xf32>
    tpu.vector_store %arg4[%c0_8, %c0_9, %c0_10], %12 {strides = array<i32>} : memref<1x14x2048xf32, #tpu.memory_space<vmem>>, vector<1x14x2048xf32>,
    return
  }
  func.func @transform_0(%arg0: i32) -> (i32, i32, i32) {
    %c0_i32 = arith.constant 0 : i32
    %c0_i32_0 = arith.constant 0 : i32
    %c0_i32_1 = arith.constant 0 : i32
    return %arg0, %c0_i32, %c0_i32_0 : i32, i32, i32
  }
  func.func @transform_1(%arg0: i32) -> (i32, i32, i32) {
    %c0_i32 = arith.constant 0 : i32
    %c0_i32_0 = arith.constant 0 : i32
    %c0_i32_1 = arith.constant 0 : i32
    return %arg0, %c0_i32, %c0_i32_0 : i32, i32, i32
  }
  func.func @transform_2(%arg0: i32) -> (i32, i32, i32) {
    %c0_i32 = arith.constant 0 : i32
    %c0_i32_0 = arith.constant 0 : i32
    %c0_i32_1 = arith.constant 0 : i32
    return %arg0, %c0_i32, %c0_i32_0 : i32, i32, i32
  }
  func.func @transform_3(%arg0: i32) -> (i32, i32, i32) {
    %c0_i32 = arith.constant 0 : i32
    %c0_i32_0 = arith.constant 0 : i32
    %c0_i32_1 = arith.constant 0 : i32
    return %arg0, %c0_i32, %c0_i32_0 : i32, i32, i32
  }
}

module attributes {stable_mosaic.version = 11 : i64} {
  func.func @_head_kernel(%arg0: memref<14x512xf32, #tpu.memory_space<vmem>>, %arg1: memref<512x256xbf16, #tpu.memory_space<vmem>>, %arg2: memref<1x256xf32, #tpu.memory_space<vmem>>, %arg3: memref<256x4xbf16, #tpu.memory_space<vmem>>, %arg4: memref<1x4xf32, #tpu.memory_space<vmem>>, %arg5: memref<14x4xf32, #tpu.memory_space<vmem>>) attributes {dimension_semantics = [], scalar_prefetch = 0 : i64, scratch_operands = 0 : i64, tpu.core_type = #tpu.core_type<tc>} {
    %c0 = arith.constant 0 : index
    %c0_0 = arith.constant 0 : index
    %0 = vector.load %arg0[%c0, %c0_0] : memref<14x512xf32, #tpu.memory_space<vmem>>, vector<14x512xf32>
    %1 = arith.truncf %0 : vector<14x512xf32> to vector<14x512xbf16>
    %c0_1 = arith.constant 0 : index
    %c0_2 = arith.constant 0 : index
    %2 = vector.load %arg1[%c0_1, %c0_2] : memref<512x256xbf16, #tpu.memory_space<vmem>>, vector<512x256xbf16>
    %cst = arith.constant dense<0.000000e+00> : vector<14x256xf32>
    %3 = tpu.matmul %1, %2, %cst {dimension_numbers = #tpu.dot_dimension_numbers<[1], [0], [0], [1], [0, 0, 1, 1], [], []>} : vector<14x512xbf16>, vector<512x256xbf16>, vector<14x256xf32> -> vector<14x256xf32>
    %c0_3 = arith.constant 0 : index
    %c0_4 = arith.constant 0 : index
    %4 = vector.load %arg2[%c0_3, %c0_4] : memref<1x256xf32, #tpu.memory_space<vmem>>, vector<1x256xf32>
    %5 = vector.broadcast %4 : vector<1x256xf32> to vector<14x256xf32>
    %6 = arith.addf %3, %5 : vector<14x256xf32>
    %cst_5 = arith.constant 0.000000e+00 : f32
    %7 = vector.broadcast %cst_5 : f32 to vector<14x256xf32>
    %8 = arith.cmpf oge, %6, %7 : vector<14x256xf32>
    %cst_6 = arith.constant 1.000000e-01 : f32
    %9 = vector.broadcast %cst_6 : f32 to vector<14x256xf32>
    %10 = arith.mulf %9, %6 : vector<14x256xf32>
    %11 = arith.select %8, %6, %10 : vector<14x256xi1>, vector<14x256xf32>
    %12 = arith.truncf %11 : vector<14x256xf32> to vector<14x256xbf16>
    %c0_7 = arith.constant 0 : index
    %c0_8 = arith.constant 0 : index
    %13 = vector.load %arg3[%c0_7, %c0_8] : memref<256x4xbf16, #tpu.memory_space<vmem>>, vector<256x4xbf16>
    %cst_9 = arith.constant dense<0.000000e+00> : vector<14x4xf32>
    %14 = tpu.matmul %12, %13, %cst_9 {dimension_numbers = #tpu.dot_dimension_numbers<[1], [0], [0], [1], [0, 0, 1, 1], [], []>} : vector<14x256xbf16>, vector<256x4xbf16>, vector<14x4xf32> -> vector<14x4xf32>
    %c0_10 = arith.constant 0 : index
    %c0_11 = arith.constant 0 : index
    %15 = vector.load %arg4[%c0_10, %c0_11] : memref<1x4xf32, #tpu.memory_space<vmem>>, vector<1x4xf32>
    %16 = vector.broadcast %15 : vector<1x4xf32> to vector<14x4xf32>
    %17 = arith.addf %14, %16 : vector<14x4xf32>
    %c0_12 = arith.constant 0 : index
    %c0_13 = arith.constant 0 : index
    %18 = vector.load %arg5[%c0_12, %c0_13] : memref<14x4xf32, #tpu.memory_space<vmem>>, vector<14x4xf32>
    tpu.vector_store %arg5[%c0_12, %c0_13], %17 {strides = array<i32>} : memref<14x4xf32, #tpu.memory_space<vmem>>, vector<14x4xf32>,
    return
  }
}

module attributes {stable_mosaic.version = 11 : i64} {
  func.func @_head_kernel(%arg0: memref<2x512xf32, #tpu.memory_space<vmem>>, %arg1: memref<512x256xbf16, #tpu.memory_space<vmem>>, %arg2: memref<1x256xf32, #tpu.memory_space<vmem>>, %arg3: memref<256x1xbf16, #tpu.memory_space<vmem>>, %arg4: memref<1x1xf32, #tpu.memory_space<vmem>>, %arg5: memref<2x1xf32, #tpu.memory_space<vmem>>) attributes {dimension_semantics = [], scalar_prefetch = 0 : i64, scratch_operands = 0 : i64, tpu.core_type = #tpu.core_type<tc>} {
    %c0 = arith.constant 0 : index
    %c0_0 = arith.constant 0 : index
    %0 = vector.load %arg0[%c0, %c0_0] : memref<2x512xf32, #tpu.memory_space<vmem>>, vector<2x512xf32>
    %1 = arith.truncf %0 : vector<2x512xf32> to vector<2x512xbf16>
    %c0_1 = arith.constant 0 : index
    %c0_2 = arith.constant 0 : index
    %2 = vector.load %arg1[%c0_1, %c0_2] : memref<512x256xbf16, #tpu.memory_space<vmem>>, vector<512x256xbf16>
    %cst = arith.constant dense<0.000000e+00> : vector<2x256xf32>
    %3 = tpu.matmul %1, %2, %cst {dimension_numbers = #tpu.dot_dimension_numbers<[1], [0], [0], [1], [0, 0, 1, 1], [], []>} : vector<2x512xbf16>, vector<512x256xbf16>, vector<2x256xf32> -> vector<2x256xf32>
    %c0_3 = arith.constant 0 : index
    %c0_4 = arith.constant 0 : index
    %4 = vector.load %arg2[%c0_3, %c0_4] : memref<1x256xf32, #tpu.memory_space<vmem>>, vector<1x256xf32>
    %5 = vector.broadcast %4 : vector<1x256xf32> to vector<2x256xf32>
    %6 = arith.addf %3, %5 : vector<2x256xf32>
    %cst_5 = arith.constant 0.000000e+00 : f32
    %7 = vector.broadcast %cst_5 : f32 to vector<2x256xf32>
    %8 = arith.cmpf oge, %6, %7 : vector<2x256xf32>
    %cst_6 = arith.constant 1.000000e-01 : f32
    %9 = vector.broadcast %cst_6 : f32 to vector<2x256xf32>
    %10 = arith.mulf %9, %6 : vector<2x256xf32>
    %11 = arith.select %8, %6, %10 : vector<2x256xi1>, vector<2x256xf32>
    %12 = arith.truncf %11 : vector<2x256xf32> to vector<2x256xbf16>
    %c0_7 = arith.constant 0 : index
    %c0_8 = arith.constant 0 : index
    %13 = vector.load %arg3[%c0_7, %c0_8] : memref<256x1xbf16, #tpu.memory_space<vmem>>, vector<256x1xbf16>
    %cst_9 = arith.constant dense<0.000000e+00> : vector<2x1xf32>
    %14 = tpu.matmul %12, %13, %cst_9 {dimension_numbers = #tpu.dot_dimension_numbers<[1], [0], [0], [1], [0, 0, 1, 1], [], []>} : vector<2x256xbf16>, vector<256x1xbf16>, vector<2x1xf32> -> vector<2x1xf32>
    %c0_10 = arith.constant 0 : index
    %c0_11 = arith.constant 0 : index
    %15 = vector.load %arg4[%c0_10, %c0_11] : memref<1x1xf32, #tpu.memory_space<vmem>>, vector<1x1xf32>
    %16 = vector.broadcast %15 : vector<1x1xf32> to vector<2x1xf32>
    %17 = arith.addf %14, %16 : vector<2x1xf32>
    %c0_12 = arith.constant 0 : index
    %c0_13 = arith.constant 0 : index
    %18 = vector.load %arg5[%c0_12, %c0_13] : memref<2x1xf32, #tpu.memory_space<vmem>>, vector<2x1xf32>
    tpu.vector_store %arg5[%c0_12, %c0_13], %17 {strides = array<i32>} : memref<2x1xf32, #tpu.memory_space<vmem>>, vector<2x1xf32>,
    return
  }
}

</mosaic_0001>

<llo_original>
// kernel: forward.7
$region0: #{forward.7}
  #allocation0 [shape = 'u32[]', space=smem, size = 0x4, offset = 0x4, fixed_abs, tag = 'smem constant byte address 0x4 - core index']
  #allocation1 [shape = 'u32[72,128]{1,0:T(1,128)}', space=vmem, size = 0x9000, scoped, tag = 'internal scratch']
  %s0 = inlined_call_operand.vmem [shape: f32[14,1024], index: 0, kind: input, shape index: {}]
  %s1 = inlined_call_operand.hbm [shape: bf16[1024,128], index: 1, kind: input, shape index: {}]
  %s2 = inlined_call_operand.hbm [shape: f32[1,128], index: 2, kind: input, shape index: {}]
  %s3 = inlined_call_operand.vmem [shape: f32[14,128], index: 3, kind: output, shape index: {}]
  %s4 = sld [smem:[#allocation0]]
  $region30: #{forward.7} parent=0
    _
  %s6 = ssub.s32 1, %s4
  %s7 = scalar_select 0, %s6, %s4
  $region1: #{forward.7} parent=0
    #allocation2 [shape = 'u8[262144]{0}', space=vmem, size = 0x40000, scoped, tag = 'input window, operand 1, single buffered']
    #allocation3 [shape = 's32[1]{0}', space=sflag, size = 0x4, scoped, tag = 'scoped memory for forward.7']
    #allocation4 [shape = 'u8[512]{0}', space=vmem, size = 0x400, scoped, tag = 'input window, operand 2, single buffered']
    #allocation5 [shape = 's32[1]{0}', space=sflag, size = 0x4, scoped, tag = 'scoped memory for forward.7']
    %8 = vsyncpa [#allocation3], 0
    %9 = vsyncpa [#allocation5], 0
    // Predicated region
    $region2: #{forward.7} parent=1 // pred_check
      _
    $region3: #{forward.7} parent=1 // pred_check_branch
      %11 = sbr.rel (0) target = $region5
    $region4: #{forward.7} parent=1 // pred_region
      _
    $region5: #{forward.7} parent=1 // pred_fallthru
      _
    // Predicated region
    $region6: #{forward.7} parent=1 // pred_check
      _
    $region7: #{forward.7} parent=1 // pred_check_branch
      %13 = sbr.rel (0) target = $region9
    $region8: #{forward.7} parent=1 // pred_region
      %15 = vsyncadd [#allocation3], 0
      %s16 = sshll.u32 %s1, 4
      %s17 = int_to_ptr.hbm [resolvable:$true] %s16
      %s18 = sshll.u32 [#allocation2], 4
      %s19 = int_to_ptr.vmem [resolvable:$true] %s18
      %24 = dma.hbm_to_vmem [thread:$0]  %s17, 8192, %s19, [#allocation3], 64, 64, 4
    $region9: #{forward.7} parent=1 // pred_fallthru
      _
    // Predicated region
    $region10: #{forward.7} parent=1 // pred_check
      _
    $region11: #{forward.7} parent=1 // pred_check_branch
      %26 = sbr.rel (0) target = $region13
    $region12: #{forward.7} parent=1 // pred_region
      %28 = vsyncadd [#allocation5], 0
      %s30 = sshll.u32 %s2, 4
      %s31 = int_to_ptr.hbm [resolvable:$true] %s30
      %s32 = sshll.u32 [#allocation4], 4
      %s33 = int_to_ptr.vmem [resolvable:$true] %s32
      %35 = dma.hbm_to_vmem [thread:$0]  %s31, 16, %s33, [#allocation5]
    $region13: #{forward.7} parent=1 // pred_fallthru
      _
    // Predicated region
    $region14: #{forward.7} parent=1 // pred_check
      _
    $region15: #{forward.7} parent=1 // pred_check_branch
      %37 = sbr.rel (0) target = $region17
    $region16: #{forward.7} parent=1 // pred_region
      %39 = dma.done [#allocation3], 8192
    $region17: #{forward.7} parent=1 // pred_fallthru
      _
    // Predicated region
    $region18: #{forward.7} parent=1 // pred_check
      _
    $region19: #{forward.7} parent=1 // pred_check_branch
      %41 = sbr.rel (0) target = $region21
    $region20: #{forward.7} parent=1 // pred_region
      %43 = dma.done [#allocation5], 16
    $region21: #{forward.7} parent=1 // pred_fallthru
      _
    %v44 = vld [vmem:[%s0] sm:$0xff]
    %v45 = vld [vmem:[%s0 + $0x8] sm:$0xff]
    %v46 = vld [vmem:[%s0 + $0x10] sm:$0xff]
    %v47 = vld [vmem:[%s0 + $0x18] sm:$0xff]
    %v48 = vld [vmem:[%s0 + $0x20] sm:$0xff]
    %v49 = vld [vmem:[%s0 + $0x28] sm:$0xff]
    %v50 = vld [vmem:[%s0 + $0x30] sm:$0xff]
    %v51 = vld [vmem:[%s0 + $0x38] sm:$0xff]
    %v52 = vld [vmem:[%s0 + $0x40] sm:$0x3f]
    %v53 = vld [vmem:[%s0 + $0x48] sm:$0x3f]
    %v54 = vld [vmem:[%s0 + $0x50] sm:$0x3f]
    %v55 = vld [vmem:[%s0 + $0x58] sm:$0x3f]
    %v56 = vld [vmem:[%s0 + $0x60] sm:$0x3f]
    %v57 = vld [vmem:[%s0 + $0x68] sm:$0x3f]
    %v58 = vld [vmem:[%s0 + $0x70] sm:$0x3f]
    %v59 = vld [vmem:[%s0 + $0x78] sm:$0x3f]
    %v60 = vpack.c.bf16 %v52, %v44
    %v61 = vpack.c.bf16 %v53, %v45
    %v62 = vpack.c.bf16 %v54, %v46
    %v63 = vpack.c.bf16 %v55, %v47
    %v64 = vpack.c.bf16 %v56, %v48
    %v65 = vpack.c.bf16 %v57, %v49
    %v66 = vpack.c.bf16 %v58, %v50
    %v67 = vpack.c.bf16 %v59, %v51
    %v68 = vld [vmem:[#allocation2] sm:$0xf]
    %v69 = vld [vmem:[#allocation2 + $0x4] sm:$0xf]
    %v70 = vld [vmem:[#allocation2 + $0x8] sm:$0xf]
    %v71 = vld [vmem:[#allocation2 + $0xc] sm:$0xf]
    %v72 = vld [vmem:[#allocation2 + $0x10] sm:$0xf]
    %v73 = vld [vmem:[#allocation2 + $0x14] sm:$0xf]
    %v74 = vld [vmem:[#allocation2 + $0x18] sm:$0xf]
    %v75 = vld [vmem:[#allocation2 + $0x1c] sm:$0xf]
    %v76 = vld [vmem:[#allocation2 + $0x20] sm:$0xf]
    %v77 = vld [vmem:[#allocation2 + $0x24] sm:$0xf]
    %v78 = vld [vmem:[#allocation2 + $0x28] sm:$0xf]
    %v79 = vld [vmem:[#allocation2 + $0x2c] sm:$0xf]
    %v80 = vld [vmem:[#allocation2 + $0x30] sm:$0xf]
    %v81 = vld [vmem:[#allocation2 + $0x34] sm:$0xf]
    %v82 = vld [vmem:[#allocation2 + $0x38] sm:$0xf]
    %v83 = vld [vmem:[#allocation2 + $0x3c] sm:$0xf]
    %v84 = vld [vmem:[#allocation2 + $0x40] sm:$0xf]
    %v85 = vld [vmem:[#allocation2 + $0x44] sm:$0xf]
    %v86 = vld [vmem:[#allocation2 + $0x48] sm:$0xf]
    %v87 = vld [vmem:[#allocation2 + $0x4c] sm:$0xf]
    %v88 = vld [vmem:[#allocation2 + $0x50] sm:$0xf]
    %v89 = vld [vmem:[#allocation2 + $0x54] sm:$0xf]
    %v90 = vld [vmem:[#allocation2 + $0x58] sm:$0xf]
    %v91 = vld [vmem:[#allocation2 + $0x5c] sm:$0xf]
    %v92 = vld [vmem:[#allocation2 + $0x60] sm:$0xf]
    %v93 = vld [vmem:[#allocation2 + $0x64] sm:$0xf]
    %v94 = vld [vmem:[#allocation2 + $0x68] sm:$0xf]
    %v95 = vld [vmem:[#allocation2 + $0x6c] sm:$0xf]
    %v96 = vld [vmem:[#allocation2 + $0x70] sm:$0xf]
    %v97 = vld [vmem:[#allocation2 + $0x74] sm:$0xf]
    %v98 = vld [vmem:[#allocation2 + $0x78] sm:$0xf]
    %v99 = vld [vmem:[#allocation2 + $0x7c] sm:$0xf]
    %v100 = vld [vmem:[#allocation2 + $0x80] sm:$0xf]
    %v101 = vld [vmem:[#allocation2 + $0x84] sm:$0xf]
    %v102 = vld [vmem:[#allocation2 + $0x88] sm:$0xf]
    %v103 = vld [vmem:[#allocation2 + $0x8c] sm:$0xf]
    %v104 = vld [vmem:[#allocation2 + $0x90] sm:$0xf]
    %v105 = vld [vmem:[#allocation2 + $0x94] sm:$0xf]
    %v106 = vld [vmem:[#allocation2 + $0x98] sm:$0xf]
    %v107 = vld [vmem:[#allocation2 + $0x9c] sm:$0xf]
    %v108 = vld [vmem:[#allocation2 + $0xa0] sm:$0xf]
    %v109 = vld [vmem:[#allocation2 + $0xa4] sm:$0xf]
    %v110 = vld [vmem:[#allocation2 + $0xa8] sm:$0xf]
    %v111 = vld [vmem:[#allocation2 + $0xac] sm:$0xf]
    %v112 = vld [vmem:[#allocation2 + $0xb0] sm:$0xf]
    %v113 = vld [vmem:[#allocation2 + $0xb4] sm:$0xf]
    %v114 = vld [vmem:[#allocation2 + $0xb8] sm:$0xf]
    %v115 = vld [vmem:[#allocation2 + $0xbc] sm:$0xf]
    %v116 = vld [vmem:[#allocation2 + $0xc0] sm:$0xf]
    %v117 = vld [vmem:[#allocation2 + $0xc4] sm:$0xf]
    %v118 = vld [vmem:[#allocation2 + $0xc8] sm:$0xf]
    %v119 = vld [vmem:[#allocation2 + $0xcc] sm:$0xf]
    %v120 = vld [vmem:[#allocation2 + $0xd0] sm:$0xf]
    %v121 = vld [vmem:[#allocation2 + $0xd4] sm:$0xf]
    %v122 = vld [vmem:[#allocation2 + $0xd8] sm:$0xf]
    %v123 = vld [vmem:[#allocation2 + $0xdc] sm:$0xf]
    %v124 = vld [vmem:[#allocation2 + $0xe0] sm:$0xf]
    %v125 = vld [vmem:[#allocation2 + $0xe4] sm:$0xf]
    %v126 = vld [vmem:[#allocation2 + $0xe8] sm:$0xf]
    %v127 = vld [vmem:[#allocation2 + $0xec] sm:$0xf]
    %v128 = vld [vmem:[#allocation2 + $0xf0] sm:$0xf]
    %v129 = vld [vmem:[#allocation2 + $0xf4] sm:$0xf]
    %v130 = vld [vmem:[#allocation2 + $0xf8] sm:$0xf]
    %v131 = vld [vmem:[#allocation2 + $0xfc] sm:$0xf]
    %v132 = vld [vmem:[#allocation2 + $0x100] sm:$0xf]
    %v133 = vld [vmem:[#allocation2 + $0x104] sm:$0xf]
    %v134 = vld [vmem:[#allocation2 + $0x108] sm:$0xf]
    %v135 = vld [vmem:[#allocation2 + $0x10c] sm:$0xf]
    %v136 = vld [vmem:[#allocation2 + $0x110] sm:$0xf]
    %v137 = vld [vmem:[#allocation2 + $0x114] sm:$0xf]
    %v138 = vld [vmem:[#allocation2 + $0x118] sm:$0xf]
    %v139 = vld [vmem:[#allocation2 + $0x11c] sm:$0xf]
    %v140 = vld [vmem:[#allocation2 + $0x120] sm:$0xf]
    %v141 = vld [vmem:[#allocation2 + $0x124] sm:$0xf]
    %v142 = vld [vmem:[#allocation2 + $0x128] sm:$0xf]
    %v143 = vld [vmem:[#allocation2 + $0x12c] sm:$0xf]
    %v144 = vld [vmem:[#allocation2 + $0x130] sm:$0xf]
    %v145 = vld [vmem:[#allocation2 + $0x134] sm:$0xf]
    %v146 = vld [vmem:[#allocation2 + $0x138] sm:$0xf]
    %v147 = vld [vmem:[#allocation2 + $0x13c] sm:$0xf]
    %v148 = vld [vmem:[#allocation2 + $0x140] sm:$0xf]
    %v149 = vld [vmem:[#allocation2 + $0x144] sm:$0xf]
    %v150 = vld [vmem:[#allocation2 + $0x148] sm:$0xf]
    %v151 = vld [vmem:[#allocation2 + $0x14c] sm:$0xf]
    %v152 = vld [vmem:[#allocation2 + $0x150] sm:$0xf]
    %v153 = vld [vmem:[#allocation2 + $0x154] sm:$0xf]
    %v154 = vld [vmem:[#allocation2 + $0x158] sm:$0xf]
    %v155 = vld [vmem:[#allocation2 + $0x15c] sm:$0xf]
    %v156 = vld [vmem:[#allocation2 + $0x160] sm:$0xf]
    %v157 = vld [vmem:[#allocation2 + $0x164] sm:$0xf]
    %v158 = vld [vmem:[#allocation2 + $0x168] sm:$0xf]
    %v159 = vld [vmem:[#allocation2 + $0x16c] sm:$0xf]
    %v160 = vld [vmem:[#allocation2 + $0x170] sm:$0xf]
    %v161 = vld [vmem:[#allocation2 + $0x174] sm:$0xf]
    %v162 = vld [vmem:[#allocation2 + $0x178] sm:$0xf]
    %v163 = vld [vmem:[#allocation2 + $0x17c] sm:$0xf]
    %v164 = vld [vmem:[#allocation2 + $0x180] sm:$0xf]
    %v165 = vld [vmem:[#allocation2 + $0x184] sm:$0xf]
    %v166 = vld [vmem:[#allocation2 + $0x188] sm:$0xf]
    %v167 = vld [vmem:[#allocation2 + $0x18c] sm:$0xf]
    %v168 = vld [vmem:[#allocation2 + $0x190] sm:$0xf]
    %v169 = vld [vmem:[#allocation2 + $0x194] sm:$0xf]
    %v170 = vld [vmem:[#allocation2 + $0x198] sm:$0xf]
    %v171 = vld [vmem:[#allocation2 + $0x19c] sm:$0xf]
    %v172 = vld [vmem:[#allocation2 + $0x1a0] sm:$0xf]
    %v173 = vld [vmem:[#allocation2 + $0x1a4] sm:$0xf]
    %v174 = vld [vmem:[#allocation2 + $0x1a8] sm:$0xf]
    %v175 = vld [vmem:[#allocation2 + $0x1ac] sm:$0xf]
    %v176 = vld [vmem:[#allocation2 + $0x1b0] sm:$0xf]
    %v177 = vld [vmem:[#allocation2 + $0x1b4] sm:$0xf]
    %v178 = vld [vmem:[#allocation2 + $0x1b8] sm:$0xf]
    %v179 = vld [vmem:[#allocation2 + $0x1bc] sm:$0xf]
    %v180 = vld [vmem:[#allocation2 + $0x1c0] sm:$0xf]
    %v181 = vld [vmem:[#allocation2 + $0x1c4] sm:$0xf]
    %v182 = vld [vmem:[#allocation2 + $0x1c8] sm:$0xf]
    %v183 = vld [vmem:[#allocation2 + $0x1cc] sm:$0xf]
    %v184 = vld [vmem:[#allocation2 + $0x1d0] sm:$0xf]
    %v185 = vld [vmem:[#allocation2 + $0x1d4] sm:$0xf]
    %v186 = vld [vmem:[#allocation2 + $0x1d8] sm:$0xf]
    %v187 = vld [vmem:[#allocation2 + $0x1dc] sm:$0xf]
    %v188 = vld [vmem:[#allocation2 + $0x1e0] sm:$0xf]
    %v189 = vld [vmem:[#allocation2 + $0x1e4] sm:$0xf]
    %v190 = vld [vmem:[#allocation2 + $0x1e8] sm:$0xf]
    %v191 = vld [vmem:[#allocation2 + $0x1ec] sm:$0xf]
    %v192 = vld [vmem:[#allocation2 + $0x1f0] sm:$0xf]
    %v193 = vld [vmem:[#allocation2 + $0x1f4] sm:$0xf]
    %v194 = vld [vmem:[#allocation2 + $0x1f8] sm:$0xf]
    %v195 = vld [vmem:[#allocation2 + $0x1fc] sm:$0xf]
    %v196 = vld [vmem:[#allocation4] sm:$0x1]
    %v198 = vperm.slane %v196, 0
    %v328 = vunpack.c.l.b16 %v68
    %v329 = vunpack.c.l.b16 %v69
    %v330 = vunpack.c.l.b16 %v70
    %v331 = vunpack.c.l.b16 %v71
    %v332 = vunpack.c.l.b16 %v72
    %v333 = vunpack.c.l.b16 %v73
    %v334 = vunpack.c.l.b16 %v74
    %v335 = vunpack.c.l.b16 %v75
    %v336 = vunpack.c.l.b16 %v76
    %v337 = vunpack.c.l.b16 %v77
    %v338 = vunpack.c.l.b16 %v78
    %v339 = vunpack.c.l.b16 %v79
    %v340 = vunpack.c.l.b16 %v80
    %v341 = vunpack.c.l.b16 %v81
    %v342 = vunpack.c.l.b16 %v82
    %v343 = vunpack.c.l.b16 %v83
    %v344 = vunpack.c.l.b16 %v84
    %v345 = vunpack.c.l.b16 %v85
    %v346 = vunpack.c.l.b16 %v86
    %v347 = vunpack.c.l.b16 %v87
    %v348 = vunpack.c.l.b16 %v88
    %v349 = vunpack.c.l.b16 %v89
    %v350 = vunpack.c.l.b16 %v90
    %v351 = vunpack.c.l.b16 %v91
    %v352 = vunpack.c.l.b16 %v92
    %v353 = vunpack.c.l.b16 %v93
    %v354 = vunpack.c.l.b16 %v94
    %v355 = vunpack.c.l.b16 %v95
    %v356 = vunpack.c.l.b16 %v96
    %v357 = vunpack.c.l.b16 %v97
    %v358 = vunpack.c.l.b16 %v98
    %v359 = vunpack.c.l.b16 %v99
    %v360 = vunpack.c.l.b16 %v100
    %v361 = vunpack.c.l.b16 %v101
    %v362 = vunpack.c.l.b16 %v102
    %v363 = vunpack.c.l.b16 %v103
    %v364 = vunpack.c.l.b16 %v104
    %v365 = vunpack.c.l.b16 %v105
    %v366 = vunpack.c.l.b16 %v106
    %v367 = vunpack.c.l.b16 %v107
    %v368 = vunpack.c.l.b16 %v108
    %v369 = vunpack.c.l.b16 %v109
    %v370 = vunpack.c.l.b16 %v110
    %v371 = vunpack.c.l.b16 %v111
    %v372 = vunpack.c.l.b16 %v112
    %v373 = vunpack.c.l.b16 %v113
    %v374 = vunpack.c.l.b16 %v114
    %v375 = vunpack.c.l.b16 %v115
    %v376 = vunpack.c.l.b16 %v116
    %v377 = vunpack.c.l.b16 %v117
    %v378 = vunpack.c.l.b16 %v118
    %v379 = vunpack.c.l.b16 %v119
    %v380 = vunpack.c.l.b16 %v120
    %v381 = vunpack.c.l.b16 %v121
    %v382 = vunpack.c.l.b16 %v122
    %v383 = vunpack.c.l.b16 %v123
    %v384 = vunpack.c.l.b16 %v124
    %v385 = vunpack.c.l.b16 %v125
    %v386 = vunpack.c.l.b16 %v126
    %v387 = vunpack.c.l.b16 %v127
    %v388 = vunpack.c.l.b16 %v128
    %v389 = vunpack.c.l.b16 %v129
    %v390 = vunpack.c.l.b16 %v130
    %v391 = vunpack.c.l.b16 %v131
    %v392 = vunpack.c.l.b16 %v132
    %v393 = vunpack.c.l.b16 %v133
    %v394 = vunpack.c.l.b16 %v134
    %v395 = vunpack.c.l.b16 %v135
    %v396 = vunpack.c.l.b16 %v136
    %v397 = vunpack.c.l.b16 %v137
    %v398 = vunpack.c.l.b16 %v138
    %v399 = vunpack.c.l.b16 %v139
    %v400 = vunpack.c.l.b16 %v140
    %v401 = vunpack.c.l.b16 %v141
    %v402 = vunpack.c.l.b16 %v142
    %v403 = vunpack.c.l.b16 %v143
    %v404 = vunpack.c.l.b16 %v144
    %v405 = vunpack.c.l.b16 %v145
    %v406 = vunpack.c.l.b16 %v146
    %v407 = vunpack.c.l.b16 %v147
    %v408 = vunpack.c.l.b16 %v148
    %v409 = vunpack.c.l.b16 %v149
    %v410 = vunpack.c.l.b16 %v150
    %v411 = vunpack.c.l.b16 %v151
    %v412 = vunpack.c.l.b16 %v152
    %v413 = vunpack.c.l.b16 %v153
    %v414 = vunpack.c.l.b16 %v154
    %v415 = vunpack.c.l.b16 %v155
    %v416 = vunpack.c.l.b16 %v156
    %v417 = vunpack.c.l.b16 %v157
    %v418 = vunpack.c.l.b16 %v158
    %v419 = vunpack.c.l.b16 %v159
    %v420 = vunpack.c.l.b16 %v160
    %v421 = vunpack.c.l.b16 %v161
    %v422 = vunpack.c.l.b16 %v162
    %v423 = vunpack.c.l.b16 %v163
    %v424 = vunpack.c.l.b16 %v164
    %v425 = vunpack.c.l.b16 %v165
    %v426 = vunpack.c.l.b16 %v166
    %v427 = vunpack.c.l.b16 %v167
    %v428 = vunpack.c.l.b16 %v168
    %v429 = vunpack.c.l.b16 %v169
    %v430 = vunpack.c.l.b16 %v170
    %v431 = vunpack.c.l.b16 %v171
    %v432 = vunpack.c.l.b16 %v172
    %v433 = vunpack.c.l.b16 %v173
    %v434 = vunpack.c.l.b16 %v174
    %v435 = vunpack.c.l.b16 %v175
    %v436 = vunpack.c.l.b16 %v176
    %v437 = vunpack.c.l.b16 %v177
    %v438 = vunpack.c.l.b16 %v178
    %v439 = vunpack.c.l.b16 %v179
    %v440 = vunpack.c.l.b16 %v180
    %v441 = vunpack.c.l.b16 %v181
    %v442 = vunpack.c.l.b16 %v182
    %v443 = vunpack.c.l.b16 %v183
    %v444 = vunpack.c.l.b16 %v184
    %v445 = vunpack.c.l.b16 %v185
    %v446 = vunpack.c.l.b16 %v186
    %v447 = vunpack.c.l.b16 %v187
    %v448 = vunpack.c.l.b16 %v188
    %v449 = vunpack.c.l.b16 %v189
    %v450 = vunpack.c.l.b16 %v190
    %v451 = vunpack.c.l.b16 %v191
    %v452 = vunpack.c.l.b16 %v192
    %v453 = vunpack.c.l.b16 %v193
    %v454 = vunpack.c.l.b16 %v194
    %v455 = vunpack.c.l.b16 %v195
    %v456 = vpack.c.b16 %v329, %v328
    %v457 = vpack.c.b16 %v331, %v330
    %v458 = vpack.c.b16 %v333, %v332
    %v459 = vpack.c.b16 %v335, %v334
    %v460 = vpack.c.b16 %v337, %v336
    %v461 = vpack.c.b16 %v339, %v338
    %v462 = vpack.c.b16 %v341, %v340
    %v463 = vpack.c.b16 %v343, %v342
    %v464 = vpack.c.b16 %v345, %v344
    %v465 = vpack.c.b16 %v347, %v346
    %v466 = vpack.c.b16 %v349, %v348
    %v467 = vpack.c.b16 %v351, %v350
    %v468 = vpack.c.b16 %v353, %v352
    %v469 = vpack.c.b16 %v355, %v354
    %v470 = vpack.c.b16 %v357, %v356
    %v471 = vpack.c.b16 %v359, %v358
    %v472 = vpack.c.b16 %v361, %v360
    %v473 = vpack.c.b16 %v363, %v362
    %v474 = vpack.c.b16 %v365, %v364
    %v475 = vpack.c.b16 %v367, %v366
    %v476 = vpack.c.b16 %v369, %v368
    %v477 = vpack.c.b16 %v371, %v370
    %v478 = vpack.c.b16 %v373, %v372
    %v479 = vpack.c.b16 %v375, %v374
    %v480 = vpack.c.b16 %v377, %v376
    %v481 = vpack.c.b16 %v379, %v378
    %v482 = vpack.c.b16 %v381, %v380
    %v483 = vpack.c.b16 %v383, %v382
    %v484 = vpack.c.b16 %v385, %v384
    %v485 = vpack.c.b16 %v387, %v386
    %v486 = vpack.c.b16 %v389, %v388
    %v487 = vpack.c.b16 %v391, %v390
    %v488 = vpack.c.b16 %v393, %v392
    %v489 = vpack.c.b16 %v395, %v394
    %v490 = vpack.c.b16 %v397, %v396
    %v491 = vpack.c.b16 %v399, %v398
    %v492 = vpack.c.b16 %v401, %v400
    %v493 = vpack.c.b16 %v403, %v402
    %v494 = vpack.c.b16 %v405, %v404
    %v495 = vpack.c.b16 %v407, %v406
    %v496 = vpack.c.b16 %v409, %v408
    %v497 = vpack.c.b16 %v411, %v410
    %v498 = vpack.c.b16 %v413, %v412
    %v499 = vpack.c.b16 %v415, %v414
    %v500 = vpack.c.b16 %v417, %v416
    %v501 = vpack.c.b16 %v419, %v418
    %v502 = vpack.c.b16 %v421, %v420
    %v503 = vpack.c.b16 %v423, %v422
    %v504 = vpack.c.b16 %v425, %v424
    %v505 = vpack.c.b16 %v427, %v426
    %v506 = vpack.c.b16 %v429, %v428
    %v507 = vpack.c.b16 %v431, %v430
    %v508 = vpack.c.b16 %v433, %v432
    %v509 = vpack.c.b16 %v435, %v434
    %v510 = vpack.c.b16 %v437, %v436
    %v511 = vpack.c.b16 %v439, %v438
    %v512 = vpack.c.b16 %v441, %v440
    %v513 = vpack.c.b16 %v443, %v442
    %v514 = vpack.c.b16 %v445, %v444
    %v515 = vpack.c.b16 %v447, %v446
    %v516 = vpack.c.b16 %v449, %v448
    %v517 = vpack.c.b16 %v451, %v450
    %v518 = vpack.c.b16 %v453, %v452
    %v519 = vpack.c.b16 %v455, %v454
    %584 = vmatpush.bf16.msra.mxu0 %v463
    %585 = vmatpush.bf16.msra.mxu0 %v462
    %586 = vmatpush.bf16.msra.mxu0 %v461
    %587 = vmatpush.bf16.msra.mxu0 %v460
    %588 = vmatpush.bf16.msra.mxu0 %v459
    %589 = vmatpush.bf16.msra.mxu0 %v458
    %590 = vmatpush.bf16.msra.mxu0 %v457
    %591 = vmatpush.bf16.msra.mxu0 %v456
    %592 = vmatmul.bf16.gmra.mxu0 %v60
    %v593 = vpop.f32.mrf.mxu0
    %v594 = vadd.f32 %v198, %v593
    %v595 = vpop.f32.mrf.mxu0
    %v596 = vadd.f32 %v198, %v595
    %597 = vdwg.mxu0
    %598 = vmatpush.bf16.msra.mxu0 %v471
    %599 = vmatpush.bf16.msra.mxu0 %v470
    %600 = vmatpush.bf16.msra.mxu0 %v469
    %601 = vmatpush.bf16.msra.mxu0 %v468
    %602 = vmatpush.bf16.msra.mxu0 %v467
    %603 = vmatpush.bf16.msra.mxu0 %v466
    %604 = vmatpush.bf16.msra.mxu0 %v465
    %605 = vmatpush.bf16.msra.mxu0 %v464
    %606 = vmatmul.bf16.gmra.mxu0 %v61
    %v607 = vpop.f32.mrf.mxu0
    %v608 = vadd.f32 %v594, %v607
    %v609 = vpop.f32.mrf.mxu0
    %v610 = vadd.f32 %v596, %v609
    %611 = vdwg.mxu0
    %612 = vmatpush.bf16.msra.mxu0 %v479
    %613 = vmatpush.bf16.msra.mxu0 %v478
    %614 = vmatpush.bf16.msra.mxu0 %v477
    %615 = vmatpush.bf16.msra.mxu0 %v476
    %616 = vmatpush.bf16.msra.mxu0 %v475
    %617 = vmatpush.bf16.msra.mxu0 %v474
    %618 = vmatpush.bf16.msra.mxu0 %v473
    %619 = vmatpush.bf16.msra.mxu0 %v472
    %620 = vmatmul.bf16.gmra.mxu0 %v62
    %v621 = vpop.f32.mrf.mxu0
    %v622 = vadd.f32 %v608, %v621
    %v623 = vpop.f32.mrf.mxu0
    %v624 = vadd.f32 %v610, %v623
    %625 = vdwg.mxu0
    %626 = vmatpush.bf16.msra.mxu0 %v487
    %627 = vmatpush.bf16.msra.mxu0 %v486
    %628 = vmatpush.bf16.msra.mxu0 %v485
    %629 = vmatpush.bf16.msra.mxu0 %v484
    %630 = vmatpush.bf16.msra.mxu0 %v483
    %631 = vmatpush.bf16.msra.mxu0 %v482
    %632 = vmatpush.bf16.msra.mxu0 %v481
    %633 = vmatpush.bf16.msra.mxu0 %v480
    %634 = vmatmul.bf16.gmra.mxu0 %v63
    %v635 = vpop.f32.mrf.mxu0
    %v636 = vadd.f32 %v622, %v635
    %v637 = vpop.f32.mrf.mxu0
    %v638 = vadd.f32 %v624, %v637
    %639 = vdwg.mxu0
    %640 = vmatpush.bf16.msra.mxu0 %v495
    %641 = vmatpush.bf16.msra.mxu0 %v494
    %642 = vmatpush.bf16.msra.mxu0 %v493
    %643 = vmatpush.bf16.msra.mxu0 %v492
    %644 = vmatpush.bf16.msra.mxu0 %v491
    %645 = vmatpush.bf16.msra.mxu0 %v490
    %646 = vmatpush.bf16.msra.mxu0 %v489
    %647 = vmatpush.bf16.msra.mxu0 %v488
    %648 = vmatmul.bf16.gmra.mxu0 %v64
    %v649 = vpop.f32.mrf.mxu0
    %v650 = vadd.f32 %v636, %v649
    %v651 = vpop.f32.mrf.mxu0
    %v652 = vadd.f32 %v638, %v651
    %653 = vdwg.mxu0
    %654 = vmatpush.bf16.msra.mxu0 %v503
    %655 = vmatpush.bf16.msra.mxu0 %v502
    %656 = vmatpush.bf16.msra.mxu0 %v501
    %657 = vmatpush.bf16.msra.mxu0 %v500
    %658 = vmatpush.bf16.msra.mxu0 %v499
    %659 = vmatpush.bf16.msra.mxu0 %v498
    %660 = vmatpush.bf16.msra.mxu0 %v497
    %661 = vmatpush.bf16.msra.mxu0 %v496
    %662 = vmatmul.bf16.gmra.mxu0 %v65
    %v663 = vpop.f32.mrf.mxu0
    %v664 = vadd.f32 %v650, %v663
    %v665 = vpop.f32.mrf.mxu0
    %v666 = vadd.f32 %v652, %v665
    %667 = vdwg.mxu0
    %668 = vmatpush.bf16.msra.mxu0 %v511
    %669 = vmatpush.bf16.msra.mxu0 %v510
    %670 = vmatpush.bf16.msra.mxu0 %v509
    %671 = vmatpush.bf16.msra.mxu0 %v508
    %672 = vmatpush.bf16.msra.mxu0 %v507
    %673 = vmatpush.bf16.msra.mxu0 %v506
    %674 = vmatpush.bf16.msra.mxu0 %v505
    %675 = vmatpush.bf16.msra.mxu0 %v504
    %676 = vmatmul.bf16.gmra.mxu0 %v66
    %v677 = vpop.f32.mrf.mxu0
    %v678 = vadd.f32 %v664, %v677
    %v679 = vpop.f32.mrf.mxu0
    %v680 = vadd.f32 %v666, %v679
    %681 = vdwg.mxu0
    %682 = vmatpush.bf16.msra.mxu0 %v519
    %683 = vmatpush.bf16.msra.mxu0 %v518
    %684 = vmatpush.bf16.msra.mxu0 %v517
    %685 = vmatpush.bf16.msra.mxu0 %v516
    %686 = vmatpush.bf16.msra.mxu0 %v515
    %687 = vmatpush.bf16.msra.mxu0 %v514
    %688 = vmatpush.bf16.msra.mxu0 %v513
    %689 = vmatpush.bf16.msra.mxu0 %v512
    %690 = vmatmul.bf16.gmra.mxu0 %v67
    %v691 = vpop.f32.mrf.mxu0
    %v692 = vadd.f32 %v678, %v691
    %v693 = vpop.f32.mrf.mxu0
    %v694 = vadd.f32 %v680, %v693
    %695 = vdwg.mxu0
    %v696 = vmax.f32 %v692, 0.0
    %v697 = vmax.f32 %v694, 0.0
    %698 = vst [vmem:[%s3] sm:$0xff] %v696
    %699 = vst [vmem:[%s3 + $0x8] sm:$0x3f] %v697
    // Predicated region
    $region22: #{forward.7} parent=1 // pred_check
      _
    $region23: #{forward.7} parent=1 // pred_check_branch
      %701 = sbr.rel (0) target = $region25
    $region24: #{forward.7} parent=1 // pred_region
      _
    $region25: #{forward.7} parent=1 // pred_fallthru
      _
    // Predicated region
    $region26: #{forward.7} parent=1 // pred_check
      _
    $region27: #{forward.7} parent=1 // pred_check_branch
      %703 = sbr.rel (0) target = $region29
    $region28: #{forward.7} parent=1 // pred_region
      _
    $region29: #{forward.7} parent=1 // pred_fallthru
      _
    %704 = vsyncpa [#allocation3], 1
    %705 = vsyncpa [#allocation5], 1

// kernel: forward.8
$region0: #{forward.8}
  #allocation0 [shape = 'u32[]', space=smem, size = 0x4, offset = 0x4, fixed_abs, tag = 'smem constant byte address 0x4 - core index']
  #allocation1 [shape = 'u32[72,128]{1,0:T(1,128)}', space=vmem, size = 0x9000, scoped, tag = 'internal scratch']
  %s0 = inlined_call_operand.vmem [shape: f32[14,128], index: 0, kind: input, shape index: {}]
  %s1 = inlined_call_operand.hbm [shape: bf16[128,4096], index: 1, kind: input, shape index: {}]
  %s2 = inlined_call_operand.hbm [shape: f32[1,4096], index: 2, kind: input, shape index: {}]
  %s3 = inlined_call_operand.vmem [shape: f32[14,4096], index: 3, kind: output, shape index: {}]
  %s4 = sld [smem:[#allocation0]]
  $region30: #{forward.8} parent=0
    _
  %s6 = ssub.s32 1, %s4
  %s7 = scalar_select 0, %s6, %s4
  $region1: #{forward.8} parent=0
    #allocation2 [shape = 'u8[1048576]{0}', space=vmem, size = 0x100000, scoped, tag = 'input window, operand 1, single buffered']
    #allocation3 [shape = 's32[1]{0}', space=sflag, size = 0x4, scoped, tag = 'scoped memory for forward.8']
    #allocation4 [shape = 'u8[16384]{0}', space=vmem, size = 0x4000, scoped, tag = 'input window, operand 2, single buffered']
    #allocation5 [shape = 's32[1]{0}', space=sflag, size = 0x4, scoped, tag = 'scoped memory for forward.8']
    %8 = vsyncpa [#allocation3], 0
    %9 = vsyncpa [#allocation5], 0
    // Predicated region
    $region2: #{forward.8} parent=1 // pred_check
      _
    $region3: #{forward.8} parent=1 // pred_check_branch
      %11 = sbr.rel (0) target = $region5
    $region4: #{forward.8} parent=1 // pred_region
      _
    $region5: #{forward.8} parent=1 // pred_fallthru
      _
    // Predicated region
    $region6: #{forward.8} parent=1 // pred_check
      _
    $region7: #{forward.8} parent=1 // pred_check_branch
      %13 = sbr.rel (0) target = $region9
    $region8: #{forward.8} parent=1 // pred_region
      %15 = vsyncadd [#allocation3], 0
      %s16 = sshll.u32 %s1, 4
      %s17 = int_to_ptr.hbm [resolvable:$true] %s16
      %s18 = sshll.u32 [#allocation2], 4
      %s19 = int_to_ptr.vmem [resolvable:$true] %s18
      %24 = dma.hbm_to_vmem [thread:$0]  %s17, 32768, %s19, [#allocation3], 2048, 2048, 128
    $region9: #{forward.8} parent=1 // pred_fallthru
      _
    // Predicated region
    $region10: #{forward.8} parent=1 // pred_check
      _
    $region11: #{forward.8} parent=1 // pred_check_branch
      %26 = sbr.rel (0) target = $region13
    $region12: #{forward.8} parent=1 // pred_region
      %28 = vsyncadd [#allocation5], 0
      %s30 = sshll.u32 %s2, 4
      %s31 = int_to_ptr.hbm [resolvable:$true] %s30
      %s32 = sshll.u32 [#allocation4], 4
      %s33 = int_to_ptr.vmem [resolvable:$true] %s32
      %35 = dma.hbm_to_vmem [thread:$0]  %s31, 512, %s33, [#allocation5]
    $region13: #{forward.8} parent=1 // pred_fallthru
      _
    // Predicated region
    $region14: #{forward.8} parent=1 // pred_check
      _
    $region15: #{forward.8} parent=1 // pred_check_branch
      %37 = sbr.rel (0) target = $region17
    $region16: #{forward.8} parent=1 // pred_region
      %39 = dma.done [#allocation3], 32768
    $region17: #{forward.8} parent=1 // pred_fallthru
      _
    // Predicated region
    $region18: #{forward.8} parent=1 // pred_check
      _
    $region19: #{forward.8} parent=1 // pred_check_branch
      %41 = sbr.rel (0) target = $region21
    $region20: #{forward.8} parent=1 // pred_region
      %43 = dma.done [#allocation5], 512
    $region21: #{forward.8} parent=1 // pred_fallthru
      _
    %v44 = vld [vmem:[%s0] sm:$0xff]
    %v45 = vld [vmem:[%s0 + $0x8] sm:$0x3f]
    %v46 = vpack.c.bf16 %v45, %v44
    %v47 = vld [vmem:[#allocation2] sm:$0xff]
    %v48 = vld [vmem:[#allocation2 + $0x8] sm:$0xff]
    %v49 = vld [vmem:[#allocation2 + $0x10] sm:$0xff]
    %v50 = vld [vmem:[#allocation2 + $0x18] sm:$0xff]
    %v51 = vld [vmem:[#allocation2 + $0x20] sm:$0xff]
    %v52 = vld [vmem:[#allocation2 + $0x28] sm:$0xff]
    %v53 = vld [vmem:[#allocation2 + $0x30] sm:$0xff]
    %v54 = vld [vmem:[#allocation2 + $0x38] sm:$0xff]
    %v55 = vld [vmem:[#allocation2 + $0x40] sm:$0xff]
    %v56 = vld [vmem:[#allocation2 + $0x48] sm:$0xff]
    %v57 = vld [vmem:[#allocation2 + $0x50] sm:$0xff]
    %v58 = vld [vmem:[#allocation2 + $0x58] sm:$0xff]
    %v59 = vld [vmem:[#allocation2 + $0x60] sm:$0xff]
    %v60 = vld [vmem:[#allocation2 + $0x68] sm:$0xff]
    %v61 = vld [vmem:[#allocation2 + $0x70] sm:$0xff]
    %v62 = vld [vmem:[#allocation2 + $0x78] sm:$0xff]
    %v63 = vld [vmem:[#allocation2 + $0x80] sm:$0xff]
    %v64 = vld [vmem:[#allocation2 + $0x88] sm:$0xff]
    %v65 = vld [vmem:[#allocation2 + $0x90] sm:$0xff]
    %v66 = vld [vmem:[#allocation2 + $0x98] sm:$0xff]
    %v67 = vld [vmem:[#allocation2 + $0xa0] sm:$0xff]
    %v68 = vld [vmem:[#allocation2 + $0xa8] sm:$0xff]
    %v69 = vld [vmem:[#allocation2 + $0xb0] sm:$0xff]
    %v70 = vld [vmem:[#allocation2 + $0xb8] sm:$0xff]
    %v71 = vld [vmem:[#allocation2 + $0xc0] sm:$0xff]
    %v72 = vld [vmem:[#allocation2 + $0xc8] sm:$0xff]
    %v73 = vld [vmem:[#allocation2 + $0xd0] sm:$0xff]
    %v74 = vld [vmem:[#allocation2 + $0xd8] sm:$0xff]
    %v75 = vld [vmem:[#allocation2 + $0xe0] sm:$0xff]
    %v76 = vld [vmem:[#allocation2 + $0xe8] sm:$0xff]
    %v77 = vld [vmem:[#allocation2 + $0xf0] sm:$0xff]
    %v78 = vld [vmem:[#allocation2 + $0xf8] sm:$0xff]
    %v79 = vld [vmem:[#allocation2 + $0x100] sm:$0xff]
    %v80 = vld [vmem:[#allocation2 + $0x108] sm:$0xff]
    %v81 = vld [vmem:[#allocation2 + $0x110] sm:$0xff]
    %v82 = vld [vmem:[#allocation2 + $0x118] sm:$0xff]
    %v83 = vld [vmem:[#allocation2 + $0x120] sm:$0xff]
    %v84 = vld [vmem:[#allocation2 + $0x128] sm:$0xff]
    %v85 = vld [vmem:[#allocation2 + $0x130] sm:$0xff]
    %v86 = vld [vmem:[#allocation2 + $0x138] sm:$0xff]
    %v87 = vld [vmem:[#allocation2 + $0x140] sm:$0xff]
    %v88 = vld [vmem:[#allocation2 + $0x148] sm:$0xff]
    %v89 = vld [vmem:[#allocation2 + $0x150] sm:$0xff]
    %v90 = vld [vmem:[#allocation2 + $0x158] sm:$0xff]
    %v91 = vld [vmem:[#allocation2 + $0x160] sm:$0xff]
    %v92 = vld [vmem:[#allocation2 + $0x168] sm:$0xff]
    %v93 = vld [vmem:[#allocation2 + $0x170] sm:$0xff]
    %v94 = vld [vmem:[#allocation2 + $0x178] sm:$0xff]
    %v95 = vld [vmem:[#allocation2 + $0x180] sm:$0xff]
    %v96 = vld [vmem:[#allocation2 + $0x188] sm:$0xff]
    %v97 = vld [vmem:[#allocation2 + $0x190] sm:$0xff]
    %v98 = vld [vmem:[#allocation2 + $0x198] sm:$0xff]
    %v99 = vld [vmem:[#allocation2 + $0x1a0] sm:$0xff]
    %v100 = vld [vmem:[#allocation2 + $0x1a8] sm:$0xff]
    %v101 = vld [vmem:[#allocation2 + $0x1b0] sm:$0xff]
    %v102 = vld [vmem:[#allocation2 + $0x1b8] sm:$0xff]
    %v103 = vld [vmem:[#allocation2 + $0x1c0] sm:$0xff]
    %v104 = vld [vmem:[#allocation2 + $0x1c8] sm:$0xff]
    %v105 = vld [vmem:[#allocation2 + $0x1d0] sm:$0xff]
    %v106 = vld [vmem:[#allocation2 + $0x1d8] sm:$0xff]
    %v107 = vld [vmem:[#allocation2 + $0x1e0] sm:$0xff]
    %v108 = vld [vmem:[#allocation2 + $0x1e8] sm:$0xff]
    %v109 = vld [vmem:[#allocation2 + $0x1f0] sm:$0xff]
    %v110 = vld [vmem:[#allocation2 + $0x1f8] sm:$0xff]
    %v111 = vld [vmem:[#allocation2 + $0x200] sm:$0xff]
    %v112 = vld [vmem:[#allocation2 + $0x208] sm:$0xff]
    %v113 = vld [vmem:[#allocation2 + $0x210] sm:$0xff]
    %v114 = vld [vmem:[#allocation2 + $0x218] sm:$0xff]
    %v115 = vld [vmem:[#allocation2 + $0x220] sm:$0xff]
    %v116 = vld [vmem:[#allocation2 + $0x228] sm:$0xff]
    %v117 = vld [vmem:[#allocation2 + $0x230] sm:$0xff]
    %v118 = vld [vmem:[#allocation2 + $0x238] sm:$0xff]
    %v119 = vld [vmem:[#allocation2 + $0x240] sm:$0xff]
    %v120 = vld [vmem:[#allocation2 + $0x248] sm:$0xff]
    %v121 = vld [vmem:[#allocation2 + $0x250] sm:$0xff]
    %v122 = vld [vmem:[#allocation2 + $0x258] sm:$0xff]
    %v123 = vld [vmem:[#allocation2 + $0x260] sm:$0xff]
    %v124 = vld [vmem:[#allocation2 + $0x268] sm:$0xff]
    %v125 = vld [vmem:[#allocation2 + $0x270] sm:$0xff]
    %v126 = vld [vmem:[#allocation2 + $0x278] sm:$0xff]
    %v127 = vld [vmem:[#allocation2 + $0x280] sm:$0xff]
    %v128 = vld [vmem:[#allocation2 + $0x288] sm:$0xff]
    %v129 = vld [vmem:[#allocation2 + $0x290] sm:$0xff]
    %v130 = vld [vmem:[#allocation2 + $0x298] sm:$0xff]
    %v131 = vld [vmem:[#allocation2 + $0x2a0] sm:$0xff]
    %v132 = vld [vmem:[#allocation2 + $0x2a8] sm:$0xff]
    %v133 = vld [vmem:[#allocation2 + $0x2b0] sm:$0xff]
    %v134 = vld [vmem:[#allocation2 + $0x2b8] sm:$0xff]
    %v135 = vld [vmem:[#allocation2 + $0x2c0] sm:$0xff]
    %v136 = vld [vmem:[#allocation2 + $0x2c8] sm:$0xff]
    %v137 = vld [vmem:[#allocation2 + $0x2d0] sm:$0xff]
    %v138 = vld [vmem:[#allocation2 + $0x2d8] sm:$0xff]
    %v139 = vld [vmem:[#allocation2 + $0x2e0] sm:$0xff]
    %v140 = vld [vmem:[#allocation2 + $0x2e8] sm:$0xff]
    %v141 = vld [vmem:[#allocation2 + $0x2f0] sm:$0xff]
    %v142 = vld [vmem:[#allocation2 + $0x2f8] sm:$0xff]
    %v143 = vld [vmem:[#allocation2 + $0x300] sm:$0xff]
    %v144 = vld [vmem:[#allocation2 + $0x308] sm:$0xff]
    %v145 = vld [vmem:[#allocation2 + $0x310] sm:$0xff]
    %v146 = vld [vmem:[#allocation2 + $0x318] sm:$0xff]
    %v147 = vld [vmem:[#allocation2 + $0x320] sm:$0xff]
    %v148 = vld [vmem:[#allocation2 + $0x328] sm:$0xff]
    %v149 = vld [vmem:[#allocation2 + $0x330] sm:$0xff]
    %v150 = vld [vmem:[#allocation2 + $0x338] sm:$0xff]
    %v151 = vld [vmem:[#allocation2 + $0x340] sm:$0xff]
    %v152 = vld [vmem:[#allocation2 + $0x348] sm:$0xff]
    %v153 = vld [vmem:[#allocation2 + $0x350] sm:$0xff]
    %v154 = vld [vmem:[#allocation2 + $0x358] sm:$0xff]
    %v155 = vld [vmem:[#allocation2 + $0x360] sm:$0xff]
    %v156 = vld [vmem:[#allocation2 + $0x368] sm:$0xff]
    %v157 = vld [vmem:[#allocation2 + $0x370] sm:$0xff]
    %v158 = vld [vmem:[#allocation2 + $0x378] sm:$0xff]
    %v159 = vld [vmem:[#allocation2 + $0x380] sm:$0xff]
    %v160 = vld [vmem:[#allocation2 + $0x388] sm:$0xff]
    %v161 = vld [vmem:[#allocation2 + $0x390] sm:$0xff]
    %v162 = vld [vmem:[#allocation2 + $0x398] sm:$0xff]
    %v163 = vld [vmem:[#allocation2 + $0x3a0] sm:$0xff]
    %v164 = vld [vmem:[#allocation2 + $0x3a8] sm:$0xff]
    %v165 = vld [vmem:[#allocation2 + $0x3b0] sm:$0xff]
    %v166 = vld [vmem:[#allocation2 + $0x3b8] sm:$0xff]
    %v167 = vld [vmem:[#allocation2 + $0x3c0] sm:$0xff]
    %v168 = vld [vmem:[#allocation2 + $0x3c8] sm:$0xff]
    %v169 = vld [vmem:[#allocation2 + $0x3d0] sm:$0xff]
    %v170 = vld [vmem:[#allocation2 + $0x3d8] sm:$0xff]
    %v171 = vld [vmem:[#allocation2 + $0x3e0] sm:$0xff]
    %v172 = vld [vmem:[#allocation2 + $0x3e8] sm:$0xff]
    %v173 = vld [vmem:[#allocation2 + $0x3f0] sm:$0xff]
    %v174 = vld [vmem:[#allocation2 + $0x3f8] sm:$0xff]
    %v175 = vld [vmem:[#allocation2 + $0x400] sm:$0xff]
    %v176 = vld [vmem:[#allocation2 + $0x408] sm:$0xff]
    %v177 = vld [vmem:[#allocation2 + $0x410] sm:$0xff]
    %v178 = vld [vmem:[#allocation2 + $0x418] sm:$0xff]
    %v179 = vld [vmem:[#allocation2 + $0x420] sm:$0xff]
    %v180 = vld [vmem:[#allocation2 + $0x428] sm:$0xff]
    %v181 = vld [vmem:[#allocation2 + $0x430] sm:$0xff]
    %v182 = vld [vmem:[#allocation2 + $0x438] sm:$0xff]
    %v183 = vld [vmem:[#allocation2 + $0x440] sm:$0xff]
    %v184 = vld [vmem:[#allocation2 + $0x448] sm:$0xff]
    %v185 = vld [vmem:[#allocation2 + $0x450] sm:$0xff]
    %v186 = vld [vmem:[#allocation2 + $0x458] sm:$0xff]
    %v187 = vld [vmem:[#allocation2 + $0x460] sm:$0xff]
    %v188 = vld [vmem:[#allocation2 + $0x468] sm:$0xff]
    %v189 = vld [vmem:[#allocation2 + $0x470] sm:$0xff]
    %v190 = vld [vmem:[#allocation2 + $0x478] sm:$0xff]
    %v191 = vld [vmem:[#allocation2 + $0x480] sm:$0xff]
    %v192 = vld [vmem:[#allocation2 + $0x488] sm:$0xff]
    %v193 = vld [vmem:[#allocation2 + $0x490] sm:$0xff]
    %v194 = vld [vmem:[#allocation2 + $0x498] sm:$0xff]
    %v195 = vld [vmem:[#allocation2 + $0x4a0] sm:$0xff]
    %v196 = vld [vmem:[#allocation2 + $0x4a8] sm:$0xff]
    %v197 = vld [vmem:[#allocation2 + $0x4b0] sm:$0xff]
    %v198 = vld [vmem:[#allocation2 + $0x4b8] sm:$0xff]
    %v199 = vld [vmem:[#allocation2 + $0x4c0] sm:$0xff]
    %v200 = vld [vmem:[#allocation2 + $0x4c8] sm:$0xff]
    %v201 = vld [vmem:[#allocation2 + $0x4d0] sm:$0xff]
    %v202 = vld [vmem:[#allocation2 + $0x4d8] sm:$0xff]
    %v203 = vld [vmem:[#allocation2 + $0x4e0] sm:$0xff]
    %v204 = vld [vmem:[#allocation2 + $0x4e8] sm:$0xff]
    %v205 = vld [vmem:[#allocation2 + $0x4f0] sm:$0xff]
    %v206 = vld [vmem:[#allocation2 + $0x4f8] sm:$0xff]
    %v207 = vld [vmem:[#allocation2 + $0x500] sm:$0xff]
    %v208 = vld [vmem:[#allocation2 + $0x508] sm:$0xff]
    %v209 = vld [vmem:[#allocation2 + $0x510] sm:$0xff]
    %v210 = vld [vmem:[#allocation2 + $0x518] sm:$0xff]
    %v211 = vld [vmem:[#allocation2 + $0x520] sm:$0xff]
    %v212 = vld [vmem:[#allocation2 + $0x528] sm:$0xff]
    %v213 = vld [vmem:[#allocation2 + $0x530] sm:$0xff]
    %v214 = vld [vmem:[#allocation2 + $0x538] sm:$0xff]
    %v215 = vld [vmem:[#allocation2 + $0x540] sm:$0xff]
    %v216 = vld [vmem:[#allocation2 + $0x548] sm:$0xff]
    %v217 = vld [vmem:[#allocation2 + $0x550] sm:$0xff]
    %v218 = vld [vmem:[#allocation2 + $0x558] sm:$0xff]
    %v219 = vld [vmem:[#allocation2 + $0x560] sm:$0xff]
    %v220 = vld [vmem:[#allocation2 + $0x568] sm:$0xff]
    %v221 = vld [vmem:[#allocation2 + $0x570] sm:$0xff]
    %v222 = vld [vmem:[#allocation2 + $0x578] sm:$0xff]
    %v223 = vld [vmem:[#allocation2 + $0x580] sm:$0xff]
    %v224 = vld [vmem:[#allocation2 + $0x588] sm:$0xff]
    %v225 = vld [vmem:[#allocation2 + $0x590] sm:$0xff]
    %v226 = vld [vmem:[#allocation2 + $0x598] sm:$0xff]
    %v227 = vld [vmem:[#allocation2 + $0x5a0] sm:$0xff]
    %v228 = vld [vmem:[#allocation2 + $0x5a8] sm:$0xff]
    %v229 = vld [vmem:[#allocation2 + $0x5b0] sm:$0xff]
    %v230 = vld [vmem:[#allocation2 + $0x5b8] sm:$0xff]
    %v231 = vld [vmem:[#allocation2 + $0x5c0] sm:$0xff]
    %v232 = vld [vmem:[#allocation2 + $0x5c8] sm:$0xff]
    %v233 = vld [vmem:[#allocation2 + $0x5d0] sm:$0xff]
    %v234 = vld [vmem:[#allocation2 + $0x5d8] sm:$0xff]
    %v235 = vld [vmem:[#allocation2 + $0x5e0] sm:$0xff]
    %v236 = vld [vmem:[#allocation2 + $0x5e8] sm:$0xff]
    %v237 = vld [vmem:[#allocation2 + $0x5f0] sm:$0xff]
    %v238 = vld [vmem:[#allocation2 + $0x5f8] sm:$0xff]
    %v239 = vld [vmem:[#allocation2 + $0x600] sm:$0xff]
    %v240 = vld [vmem:[#allocation2 + $0x608] sm:$0xff]
    %v241 = vld [vmem:[#allocation2 + $0x610] sm:$0xff]
    %v242 = vld [vmem:[#allocation2 + $0x618] sm:$0xff]
    %v243 = vld [vmem:[#allocation2 + $0x620] sm:$0xff]
    %v244 = vld [vmem:[#allocation2 + $0x628] sm:$0xff]
    %v245 = vld [vmem:[#allocation2 + $0x630] sm:$0xff]
    %v246 = vld [vmem:[#allocation2 + $0x638] sm:$0xff]
    %v247 = vld [vmem:[#allocation2 + $0x640] sm:$0xff]
    %v248 = vld [vmem:[#allocation2 + $0x648] sm:$0xff]
    %v249 = vld [vmem:[#allocation2 + $0x650] sm:$0xff]
    %v250 = vld [vmem:[#allocation2 + $0x658] sm:$0xff]
    %v251 = vld [vmem:[#allocation2 + $0x660] sm:$0xff]
    %v252 = vld [vmem:[#allocation2 + $0x668] sm:$0xff]
    %v253 = vld [vmem:[#allocation2 + $0x670] sm:$0xff]
    %v254 = vld [vmem:[#allocation2 + $0x678] sm:$0xff]
    %v255 = vld [vmem:[#allocation2 + $0x680] sm:$0xff]
    %v256 = vld [vmem:[#allocation2 + $0x688] sm:$0xff]
    %v257 = vld [vmem:[#allocation2 + $0x690] sm:$0xff]
    %v258 = vld [vmem:[#allocation2 + $0x698] sm:$0xff]
    %v259 = vld [vmem:[#allocation2 + $0x6a0] sm:$0xff]
    %v260 = vld [vmem:[#allocation2 + $0x6a8] sm:$0xff]
    %v261 = vld [vmem:[#allocation2 + $0x6b0] sm:$0xff]
    %v262 = vld [vmem:[#allocation2 + $0x6b8] sm:$0xff]
    %v263 = vld [vmem:[#allocation2 + $0x6c0] sm:$0xff]
    %v264 = vld [vmem:[#allocation2 + $0x6c8] sm:$0xff]
    %v265 = vld [vmem:[#allocation2 + $0x6d0] sm:$0xff]
    %v266 = vld [vmem:[#allocation2 + $0x6d8] sm:$0xff]
    %v267 = vld [vmem:[#allocation2 + $0x6e0] sm:$0xff]
    %v268 = vld [vmem:[#allocation2 + $0x6e8] sm:$0xff]
    %v269 = vld [vmem:[#allocation2 + $0x6f0] sm:$0xff]
    %v270 = vld [vmem:[#allocation2 + $0x6f8] sm:$0xff]
    %v271 = vld [vmem:[#allocation2 + $0x700] sm:$0xff]
    %v272 = vld [vmem:[#allocation2 + $0x708] sm:$0xff]
    %v273 = vld [vmem:[#allocation2 + $0x710] sm:$0xff]
    %v274 = vld [vmem:[#allocation2 + $0x718] sm:$0xff]
    %v275 = vld [vmem:[#allocation2 + $0x720] sm:$0xff]
    %v276 = vld [vmem:[#allocation2 + $0x728] sm:$0xff]
    %v277 = vld [vmem:[#allocation2 + $0x730] sm:$0xff]
    %v278 = vld [vmem:[#allocation2 + $0x738] sm:$0xff]
    %v279 = vld [vmem:[#allocation2 + $0x740] sm:$0xff]
    %v280 = vld [vmem:[#allocation2 + $0x748] sm:$0xff]
    %v281 = vld [vmem:[#allocation2 + $0x750] sm:$0xff]
    %v282 = vld [vmem:[#allocation2 + $0x758] sm:$0xff]
    %v283 = vld [vmem:[#allocation2 + $0x760] sm:$0xff]
    %v284 = vld [vmem:[#allocation2 + $0x768] sm:$0xff]
    %v285 = vld [vmem:[#allocation2 + $0x770] sm:$0xff]
    %v286 = vld [vmem:[#allocation2 + $0x778] sm:$0xff]
    %v287 = vld [vmem:[#allocation2 + $0x780] sm:$0xff]
    %v288 = vld [vmem:[#allocation2 + $0x788] sm:$0xff]
    %v289 = vld [vmem:[#allocation2 + $0x790] sm:$0xff]
    %v290 = vld [vmem:[#allocation2 + $0x798] sm:$0xff]
    %v291 = vld [vmem:[#allocation2 + $0x7a0] sm:$0xff]
    %v292 = vld [vmem:[#allocation2 + $0x7a8] sm:$0xff]
    %v293 = vld [vmem:[#allocation2 + $0x7b0] sm:$0xff]
    %v294 = vld [vmem:[#allocation2 + $0x7b8] sm:$0xff]
    %v295 = vld [vmem:[#allocation2 + $0x7c0] sm:$0xff]
    %v296 = vld [vmem:[#allocation2 + $0x7c8] sm:$0xff]
    %v297 = vld [vmem:[#allocation2 + $0x7d0] sm:$0xff]
    %v298 = vld [vmem:[#allocation2 + $0x7d8] sm:$0xff]
    %v299 = vld [vmem:[#allocation2 + $0x7e0] sm:$0xff]
    %v300 = vld [vmem:[#allocation2 + $0x7e8] sm:$0xff]
    %v301 = vld [vmem:[#allocation2 + $0x7f0] sm:$0xff]
    %v302 = vld [vmem:[#allocation2 + $0x7f8] sm:$0xff]
    %v303 = vld [vmem:[#allocation4] sm:$0xff]
    %v304 = vld [vmem:[#allocation4 + $0x8] sm:$0xff]
    %v305 = vld [vmem:[#allocation4 + $0x10] sm:$0xff]
    %v306 = vld [vmem:[#allocation4 + $0x18] sm:$0xff]
    %v311 = vperm.slane %v303, 0
    %v312 = vperm.slane %v303, 1
    %v313 = vperm.slane %v303, 2
    %v314 = vperm.slane %v303, 3
    %v315 = vperm.slane %v303, 4
    %v316 = vperm.slane %v303, 5
    %v317 = vperm.slane %v303, 6
    %v318 = vperm.slane %v303, 7
    %v319 = vperm.slane %v304, 0
    %v320 = vperm.slane %v304, 1
    %v321 = vperm.slane %v304, 2
    %v322 = vperm.slane %v304, 3
    %v323 = vperm.slane %v304, 4
    %v324 = vperm.slane %v304, 5
    %v325 = vperm.slane %v304, 6
    %v326 = vperm.slane %v304, 7
    %v327 = vperm.slane %v305, 0
    %v328 = vperm.slane %v305, 1
    %v329 = vperm.slane %v305, 2
    %v330 = vperm.slane %v305, 3
    %v331 = vperm.slane %v305, 4
    %v332 = vperm.slane %v305, 5
    %v333 = vperm.slane %v305, 6
    %v334 = vperm.slane %v305, 7
    %v335 = vperm.slane %v306, 0
    %v336 = vperm.slane %v306, 1
    %v337 = vperm.slane %v306, 2
    %v338 = vperm.slane %v306, 3
    %v339 = vperm.slane %v306, 4
    %v340 = vperm.slane %v306, 5
    %v341 = vperm.slane %v306, 6
    %v342 = vperm.slane %v306, 7
    %v631 = vunpack.c.l.b16 %v47
    %v632 = vunpack.c.h.b16 %v47
    %v633 = vunpack.c.l.b16 %v48
    %v634 = vunpack.c.h.b16 %v48
    %v635 = vunpack.c.l.b16 %v49
    %v636 = vunpack.c.h.b16 %v49
    %v637 = vunpack.c.l.b16 %v50
    %v638 = vunpack.c.h.b16 %v50
    %v639 = vunpack.c.l.b16 %v51
    %v640 = vunpack.c.h.b16 %v51
    %v641 = vunpack.c.l.b16 %v52
    %v642 = vunpack.c.h.b16 %v52
    %v643 = vunpack.c.l.b16 %v53
    %v644 = vunpack.c.h.b16 %v53
    %v645 = vunpack.c.l.b16 %v54
    %v646 = vunpack.c.h.b16 %v54
    %v647 = vunpack.c.l.b16 %v55
    %v648 = vunpack.c.h.b16 %v55
    %v649 = vunpack.c.l.b16 %v56
    %v650 = vunpack.c.h.b16 %v56
    %v651 = vunpack.c.l.b16 %v57
    %v652 = vunpack.c.h.b16 %v57
    %v653 = vunpack.c.l.b16 %v58
    %v654 = vunpack.c.h.b16 %v58
    %v655 = vunpack.c.l.b16 %v59
    %v656 = vunpack.c.h.b16 %v59
    %v657 = vunpack.c.l.b16 %v60
    %v658 = vunpack.c.h.b16 %v60
    %v659 = vunpack.c.l.b16 %v61
    %v660 = vunpack.c.h.b16 %v61
    %v661 = vunpack.c.l.b16 %v62
    %v662 = vunpack.c.h.b16 %v62
    %v663 = vunpack.c.l.b16 %v63
    %v664 = vunpack.c.h.b16 %v63
    %v665 = vunpack.c.l.b16 %v64
    %v666 = vunpack.c.h.b16 %v64
    %v667 = vunpack.c.l.b16 %v65
    %v668 = vunpack.c.h.b16 %v65
    %v669 = vunpack.c.l.b16 %v66
    %v670 = vunpack.c.h.b16 %v66
    %v671 = vunpack.c.l.b16 %v67
    %v672 = vunpack.c.h.b16 %v67
    %v673 = vunpack.c.l.b16 %v68
    %v674 = vunpack.c.h.b16 %v68
    %v675 = vunpack.c.l.b16 %v69
    %v676 = vunpack.c.h.b16 %v69
    %v677 = vunpack.c.l.b16 %v70
    %v678 = vunpack.c.h.b16 %v70
    %v679 = vunpack.c.l.b16 %v71
    %v680 = vunpack.c.h.b16 %v71
    %v681 = vunpack.c.l.b16 %v72
    %v682 = vunpack.c.h.b16 %v72
    %v683 = vunpack.c.l.b16 %v73
    %v684 = vunpack.c.h.b16 %v73
    %v685 = vunpack.c.l.b16 %v74
    %v686 = vunpack.c.h.b16 %v74
    %v687 = vunpack.c.l.b16 %v75
    %v688 = vunpack.c.h.b16 %v75
    %v689 = vunpack.c.l.b16 %v76
    %v690 = vunpack.c.h.b16 %v76
    %v691 = vunpack.c.l.b16 %v77
    %v692 = vunpack.c.h.b16 %v77
    %v693 = vunpack.c.l.b16 %v78
    %v694 = vunpack.c.h.b16 %v78
    %v695 = vunpack.c.l.b16 %v79
    %v696 = vunpack.c.h.b16 %v79
    %v697 = vunpack.c.l.b16 %v80
    %v698 = vunpack.c.h.b16 %v80
    %v699 = vunpack.c.l.b16 %v81
    %v700 = vunpack.c.h.b16 %v81
    %v701 = vunpack.c.l.b16 %v82
    %v702 = vunpack.c.h.b16 %v82
    %v703 = vunpack.c.l.b16 %v83
    %v704 = vunpack.c.h.b16 %v83
    %v705 = vunpack.c.l.b16 %v84
    %v706 = vunpack.c.h.b16 %v84
    %v707 = vunpack.c.l.b16 %v85
    %v708 = vunpack.c.h.b16 %v85
    %v709 = vunpack.c.l.b16 %v86
    %v710 = vunpack.c.h.b16 %v86
    %v711 = vunpack.c.l.b16 %v87
    %v712 = vunpack.c.h.b16 %v87
    %v713 = vunpack.c.l.b16 %v88
    %v714 = vunpack.c.h.b16 %v88
    %v715 = vunpack.c.l.b16 %v89
    %v716 = vunpack.c.h.b16 %v89
    %v717 = vunpack.c.l.b16 %v90
    %v718 = vunpack.c.h.b16 %v90
    %v719 = vunpack.c.l.b16 %v91
    %v720 = vunpack.c.h.b16 %v91
    %v721 = vunpack.c.l.b16 %v92
    %v722 = vunpack.c.h.b16 %v92
    %v723 = vunpack.c.l.b16 %v93
    %v724 = vunpack.c.h.b16 %v93
    %v725 = vunpack.c.l.b16 %v94
    %v726 = vunpack.c.h.b16 %v94
    %v727 = vunpack.c.l.b16 %v95
    %v728 = vunpack.c.h.b16 %v95
    %v729 = vunpack.c.l.b16 %v96
    %v730 = vunpack.c.h.b16 %v96
    %v731 = vunpack.c.l.b16 %v97
    %v732 = vunpack.c.h.b16 %v97
    %v733 = vunpack.c.l.b16 %v98
    %v734 = vunpack.c.h.b16 %v98
    %v735 = vunpack.c.l.b16 %v99
    %v736 = vunpack.c.h.b16 %v99
    %v737 = vunpack.c.l.b16 %v100
    %v738 = vunpack.c.h.b16 %v100
    %v739 = vunpack.c.l.b16 %v101
    %v740 = vunpack.c.h.b16 %v101
    %v741 = vunpack.c.l.b16 %v102
    %v742 = vunpack.c.h.b16 %v102
    %v743 = vunpack.c.l.b16 %v103
    %v744 = vunpack.c.h.b16 %v103
    %v745 = vunpack.c.l.b16 %v104
    %v746 = vunpack.c.h.b16 %v104
    %v747 = vunpack.c.l.b16 %v105
    %v748 = vunpack.c.h.b16 %v105
    %v749 = vunpack.c.l.b16 %v106
    %v750 = vunpack.c.h.b16 %v106
    %v751 = vunpack.c.l.b16 %v107
    %v752 = vunpack.c.h.b16 %v107
    %v753 = vunpack.c.l.b16 %v108
    %v754 = vunpack.c.h.b16 %v108
    %v755 = vunpack.c.l.b16 %v109
    %v756 = vunpack.c.h.b16 %v109
    %v757 = vunpack.c.l.b16 %v110
    %v758 = vunpack.c.h.b16 %v110
    %v759 = vunpack.c.l.b16 %v111
    %v760 = vunpack.c.h.b16 %v111
    %v761 = vunpack.c.l.b16 %v112
    %v762 = vunpack.c.h.b16 %v112
    %v763 = vunpack.c.l.b16 %v113
    %v764 = vunpack.c.h.b16 %v113
    %v765 = vunpack.c.l.b16 %v114
    %v766 = vunpack.c.h.b16 %v114
    %v767 = vunpack.c.l.b16 %v115
    %v768 = vunpack.c.h.b16 %v115
    %v769 = vunpack.c.l.b16 %v116
    %v770 = vunpack.c.h.b16 %v116
    %v771 = vunpack.c.l.b16 %v117
    %v772 = vunpack.c.h.b16 %v117
    %v773 = vunpack.c.l.b16 %v118
    %v774 = vunpack.c.h.b16 %v118
    %v775 = vunpack.c.l.b16 %v119
    %v776 = vunpack.c.h.b16 %v119
    %v777 = vunpack.c.l.b16 %v120
    %v778 = vunpack.c.h.b16 %v120
    %v779 = vunpack.c.l.b16 %v121
    %v780 = vunpack.c.h.b16 %v121
    %v781 = vunpack.c.l.b16 %v122
    %v782 = vunpack.c.h.b16 %v122
    %v783 = vunpack.c.l.b16 %v123
    %v784 = vunpack.c.h.b16 %v123
    %v785 = vunpack.c.l.b16 %v124
    %v786 = vunpack.c.h.b16 %v124
    %v787 = vunpack.c.l.b16 %v125
    %v788 = vunpack.c.h.b16 %v125
    %v789 = vunpack.c.l.b16 %v126
    %v790 = vunpack.c.h.b16 %v126
    %v791 = vunpack.c.l.b16 %v127
    %v792 = vunpack.c.h.b16 %v127
    %v793 = vunpack.c.l.b16 %v128
    %v794 = vunpack.c.h.b16 %v128
    %v795 = vunpack.c.l.b16 %v129
    %v796 = vunpack.c.h.b16 %v129
    %v797 = vunpack.c.l.b16 %v130
    %v798 = vunpack.c.h.b16 %v130
    %v799 = vunpack.c.l.b16 %v131
    %v800 = vunpack.c.h.b16 %v131
    %v801 = vunpack.c.l.b16 %v132
    %v802 = vunpack.c.h.b16 %v132
    %v803 = vunpack.c.l.b16 %v133
    %v804 = vunpack.c.h.b16 %v133
    %v805 = vunpack.c.l.b16 %v134
    %v806 = vunpack.c.h.b16 %v134
    %v807 = vunpack.c.l.b16 %v135
    %v808 = vunpack.c.h.b16 %v135
    %v809 = vunpack.c.l.b16 %v136
    %v810 = vunpack.c.h.b16 %v136
    %v811 = vunpack.c.l.b16 %v137
    %v812 = vunpack.c.h.b16 %v137
    %v813 = vunpack.c.l.b16 %v138
    %v814 = vunpack.c.h.b16 %v138
    %v815 = vunpack.c.l.b16 %v139
    %v816 = vunpack.c.h.b16 %v139
    %v817 = vunpack.c.l.b16 %v140
    %v818 = vunpack.c.h.b16 %v140
    %v819 = vunpack.c.l.b16 %v141
    %v820 = vunpack.c.h.b16 %v141
    %v821 = vunpack.c.l.b16 %v142
    %v822 = vunpack.c.h.b16 %v142
    %v823 = vunpack.c.l.b16 %v143
    %v824 = vunpack.c.h.b16 %v143
    %v825 = vunpack.c.l.b16 %v144
    %v826 = vunpack.c.h.b16 %v144
    %v827 = vunpack.c.l.b16 %v145
    %v828 = vunpack.c.h.b16 %v145
    %v829 = vunpack.c.l.b16 %v146
    %v830 = vunpack.c.h.b16 %v146
    %v831 = vunpack.c.l.b16 %v147
    %v832 = vunpack.c.h.b16 %v147
    %v833 = vunpack.c.l.b16 %v148
    %v834 = vunpack.c.h.b16 %v148
    %v835 = vunpack.c.l.b16 %v149
    %v836 = vunpack.c.h.b16 %v149
    %v837 = vunpack.c.l.b16 %v150
    %v838 = vunpack.c.h.b16 %v150
    %v839 = vunpack.c.l.b16 %v151
    %v840 = vunpack.c.h.b16 %v151
    %v841 = vunpack.c.l.b16 %v152
    %v842 = vunpack.c.h.b16 %v152
    %v843 = vunpack.c.l.b16 %v153
    %v844 = vunpack.c.h.b16 %v153
    %v845 = vunpack.c.l.b16 %v154
    %v846 = vunpack.c.h.b16 %v154
    %v847 = vunpack.c.l.b16 %v155
    %v848 = vunpack.c.h.b16 %v155
    %v849 = vunpack.c.l.b16 %v156
    %v850 = vunpack.c.h.b16 %v156
    %v851 = vunpack.c.l.b16 %v157
    %v852 = vunpack.c.h.b16 %v157
    %v853 = vunpack.c.l.b16 %v158
    %v854 = vunpack.c.h.b16 %v158
    %v855 = vunpack.c.l.b16 %v159
    %v856 = vunpack.c.h.b16 %v159
    %v857 = vunpack.c.l.b16 %v160
    %v858 = vunpack.c.h.b16 %v160
    %v859 = vunpack.c.l.b16 %v161
    %v860 = vunpack.c.h.b16 %v161
    %v861 = vunpack.c.l.b16 %v162
    %v862 = vunpack.c.h.b16 %v162
    %v863 = vunpack.c.l.b16 %v163
    %v864 = vunpack.c.h.b16 %v163
    %v865 = vunpack.c.l.b16 %v164
    %v866 = vunpack.c.h.b16 %v164
    %v867 = vunpack.c.l.b16 %v165
    %v868 = vunpack.c.h.b16 %v165
    %v869 = vunpack.c.l.b16 %v166
    %v870 = vunpack.c.h.b16 %v166
    %v871 = vunpack.c.l.b16 %v167
    %v872 = vunpack.c.h.b16 %v167
    %v873 = vunpack.c.l.b16 %v168
    %v874 = vunpack.c.h.b16 %v168
    %v875 = vunpack.c.l.b16 %v169
    %v876 = vunpack.c.h.b16 %v169
    %v877 = vunpack.c.l.b16 %v170
    %v878 = vunpack.c.h.b16 %v170
    %v879 = vunpack.c.l.b16 %v171
    %v880 = vunpack.c.h.b16 %v171
    %v881 = vunpack.c.l.b16 %v172
    %v882 = vunpack.c.h.b16 %v172
    %v883 = vunpack.c.l.b16 %v173
    %v884 = vunpack.c.h.b16 %v173
    %v885 = vunpack.c.l.b16 %v174
    %v886 = vunpack.c.h.b16 %v174
    %v887 = vunpack.c.l.b16 %v175
    %v888 = vunpack.c.h.b16 %v175
    %v889 = vunpack.c.l.b16 %v176
    %v890 = vunpack.c.h.b16 %v176
    %v891 = vunpack.c.l.b16 %v177
    %v892 = vunpack.c.h.b16 %v177
    %v893 = vunpack.c.l.b16 %v178
    %v894 = vunpack.c.h.b16 %v178
    %v895 = vunpack.c.l.b16 %v179
    %v896 = vunpack.c.h.b16 %v179
    %v897 = vunpack.c.l.b16 %v180
    %v898 = vunpack.c.h.b16 %v180
    %v899 = vunpack.c.l.b16 %v181
    %v900 = vunpack.c.h.b16 %v181
    %v901 = vunpack.c.l.b16 %v182
    %v902 = vunpack.c.h.b16 %v182
    %v903 = vunpack.c.l.b16 %v183
    %v904 = vunpack.c.h.b16 %v183
    %v905 = vunpack.c.l.b16 %v184
    %v906 = vunpack.c.h.b16 %v184
    %v907 = vunpack.c.l.b16 %v185
    %v908 = vunpack.c.h.b16 %v185
    %v909 = vunpack.c.l.b16 %v186
    %v910 = vunpack.c.h.b16 %v186
    %v911 = vunpack.c.l.b16 %v187
    %v912 = vunpack.c.h.b16 %v187
    %v913 = vunpack.c.l.b16 %v188
    %v914 = vunpack.c.h.b16 %v188
    %v915 = vunpack.c.l.b16 %v189
    %v916 = vunpack.c.h.b16 %v189
    %v917 = vunpack.c.l.b16 %v190
    %v918 = vunpack.c.h.b16 %v190
    %v919 = vunpack.c.l.b16 %v191
    %v920 = vunpack.c.h.b16 %v191
    %v921 = vunpack.c.l.b16 %v192
    %v922 = vunpack.c.h.b16 %v192
    %v923 = vunpack.c.l.b16 %v193
    %v924 = vunpack.c.h.b16 %v193
    %v925 = vunpack.c.l.b16 %v194
    %v926 = vunpack.c.h.b16 %v194
    %v927 = vunpack.c.l.b16 %v195
    %v928 = vunpack.c.h.b16 %v195
    %v929 = vunpack.c.l.b16 %v196
    %v930 = vunpack.c.h.b16 %v196
    %v931 = vunpack.c.l.b16 %v197
    %v932 = vunpack.c.h.b16 %v197
    %v933 = vunpack.c.l.b16 %v198
    %v934 = vunpack.c.h.b16 %v198
    %v935 = vunpack.c.l.b16 %v199
    %v936 = vunpack.c.h.b16 %v199
    %v937 = vunpack.c.l.b16 %v200
    %v938 = vunpack.c.h.b16 %v200
    %v939 = vunpack.c.l.b16 %v201
    %v940 = vunpack.c.h.b16 %v201
    %v941 = vunpack.c.l.b16 %v202
    %v942 = vunpack.c.h.b16 %v202
    %v943 = vunpack.c.l.b16 %v203
    %v944 = vunpack.c.h.b16 %v203
    %v945 = vunpack.c.l.b16 %v204
    %v946 = vunpack.c.h.b16 %v204
    %v947 = vunpack.c.l.b16 %v205
    %v948 = vunpack.c.h.b16 %v205
    %v949 = vunpack.c.l.b16 %v206
    %v950 = vunpack.c.h.b16 %v206
    %v951 = vunpack.c.l.b16 %v207
    %v952 = vunpack.c.h.b16 %v207
    %v953 = vunpack.c.l.b16 %v208
    %v954 = vunpack.c.h.b16 %v208
    %v955 = vunpack.c.l.b16 %v209
    %v956 = vunpack.c.h.b16 %v209
    %v957 = vunpack.c.l.b16 %v210
    %v958 = vunpack.c.h.b16 %v210
    %v959 = vunpack.c.l.b16 %v211
    %v960 = vunpack.c.h.b16 %v211
    %v961 = vunpack.c.l.b16 %v212
    %v962 = vunpack.c.h.b16 %v212
    %v963 = vunpack.c.l.b16 %v213
    %v964 = vunpack.c.h.b16 %v213
    %v965 = vunpack.c.l.b16 %v214
    %v966 = vunpack.c.h.b16 %v214
    %v967 = vunpack.c.l.b16 %v215
    %v968 = vunpack.c.h.b16 %v215
    %v969 = vunpack.c.l.b16 %v216
    %v970 = vunpack.c.h.b16 %v216
    %v971 = vunpack.c.l.b16 %v217
    %v972 = vunpack.c.h.b16 %v217
    %v973 = vunpack.c.l.b16 %v218
    %v974 = vunpack.c.h.b16 %v218
    %v975 = vunpack.c.l.b16 %v219
    %v976 = vunpack.c.h.b16 %v219
    %v977 = vunpack.c.l.b16 %v220
    %v978 = vunpack.c.h.b16 %v220
    %v979 = vunpack.c.l.b16 %v221
    %v980 = vunpack.c.h.b16 %v221
    %v981 = vunpack.c.l.b16 %v222
    %v982 = vunpack.c.h.b16 %v222
    %v983 = vunpack.c.l.b16 %v223
    %v984 = vunpack.c.h.b16 %v223
    %v985 = vunpack.c.l.b16 %v224
    %v986 = vunpack.c.h.b16 %v224
    %v987 = vunpack.c.l.b16 %v225
    %v988 = vunpack.c.h.b16 %v225
    %v989 = vunpack.c.l.b16 %v226
    %v990 = vunpack.c.h.b16 %v226
    %v991 = vunpack.c.l.b16 %v227
    %v992 = vunpack.c.h.b16 %v227
    %v993 = vunpack.c.l.b16 %v228
    %v994 = vunpack.c.h.b16 %v228
    %v995 = vunpack.c.l.b16 %v229
    %v996 = vunpack.c.h.b16 %v229
    %v997 = vunpack.c.l.b16 %v230
    %v998 = vunpack.c.h.b16 %v230
    %v999 = vunpack.c.l.b16 %v231
    %v1000 = vunpack.c.h.b16 %v231
    %v1001 = vunpack.c.l.b16 %v232
    %v1002 = vunpack.c.h.b16 %v232
    %v1003 = vunpack.c.l.b16 %v233
    %v1004 = vunpack.c.h.b16 %v233
    %v1005 = vunpack.c.l.b16 %v234
    %v1006 = vunpack.c.h.b16 %v234
    %v1007 = vunpack.c.l.b16 %v235
    %v1008 = vunpack.c.h.b16 %v235
    %v1009 = vunpack.c.l.b16 %v236
    %v1010 = vunpack.c.h.b16 %v236
    %v1011 = vunpack.c.l.b16 %v237
    %v1012 = vunpack.c.h.b16 %v237
    %v1013 = vunpack.c.l.b16 %v238
    %v1014 = vunpack.c.h.b16 %v238
    %v1015 = vunpack.c.l.b16 %v239
    %v1016 = vunpack.c.h.b16 %v239
    %v1017 = vunpack.c.l.b16 %v240
    %v1018 = vunpack.c.h.b16 %v240
    %v1019 = vunpack.c.l.b16 %v241
    %v1020 = vunpack.c.h.b16 %v241
    %v1021 = vunpack.c.l.b16 %v242
    %v1022 = vunpack.c.h.b16 %v242
    %v1023 = vunpack.c.l.b16 %v243
    %v1024 = vunpack.c.h.b16 %v243
    %v1025 = vunpack.c.l.b16 %v244
    %v1026 = vunpack.c.h.b16 %v244
    %v1027 = vunpack.c.l.b16 %v245
    %v1028 = vunpack.c.h.b16 %v245
    %v1029 = vunpack.c.l.b16 %v246
    %v1030 = vunpack.c.h.b16 %v246
    %v1031 = vunpack.c.l.b16 %v247
    %v1032 = vunpack.c.h.b16 %v247
    %v1033 = vunpack.c.l.b16 %v248
    %v1034 = vunpack.c.h.b16 %v248
    %v1035 = vunpack.c.l.b16 %v249
    %v1036 = vunpack.c.h.b16 %v249
    %v1037 = vunpack.c.l.b16 %v250
    %v1038 = vunpack.c.h.b16 %v250
    %v1039 = vunpack.c.l.b16 %v251
    %v1040 = vunpack.c.h.b16 %v251
    %v1041 = vunpack.c.l.b16 %v252
    %v1042 = vunpack.c.h.b16 %v252
    %v1043 = vunpack.c.l.b16 %v253
    %v1044 = vunpack.c.h.b16 %v253
    %v1045 = vunpack.c.l.b16 %v254
    %v1046 = vunpack.c.h.b16 %v254
    %v1047 = vunpack.c.l.b16 %v255
    %v1048 = vunpack.c.h.b16 %v255
    %v1049 = vunpack.c.l.b16 %v256
    %v1050 = vunpack.c.h.b16 %v256
    %v1051 = vunpack.c.l.b16 %v257
    %v1052 = vunpack.c.h.b16 %v257
    %v1053 = vunpack.c.l.b16 %v258
    %v1054 = vunpack.c.h.b16 %v258
    %v1055 = vunpack.c.l.b16 %v259
    %v1056 = vunpack.c.h.b16 %v259
    %v1057 = vunpack.c.l.b16 %v260
    %v1058 = vunpack.c.h.b16 %v260
    %v1059 = vunpack.c.l.b16 %v261
    %v1060 = vunpack.c.h.b16 %v261
    %v1061 = vunpack.c.l.b16 %v262
    %v1062 = vunpack.c.h.b16 %v262
    %v1063 = vunpack.c.l.b16 %v263
    %v1064 = vunpack.c.h.b16 %v263
    %v1065 = vunpack.c.l.b16 %v264
    %v1066 = vunpack.c.h.b16 %v264
    %v1067 = vunpack.c.l.b16 %v265
    %v1068 = vunpack.c.h.b16 %v265
    %v1069 = vunpack.c.l.b16 %v266
    %v1070 = vunpack.c.h.b16 %v266
    %v1071 = vunpack.c.l.b16 %v267
    %v1072 = vunpack.c.h.b16 %v267
    %v1073 = vunpack.c.l.b16 %v268
    %v1074 = vunpack.c.h.b16 %v268
    %v1075 = vunpack.c.l.b16 %v269
    %v1076 = vunpack.c.h.b16 %v269
    %v1077 = vunpack.c.l.b16 %v270
    %v1078 = vunpack.c.h.b16 %v270
    %v1079 = vunpack.c.l.b16 %v271
    %v1080 = vunpack.c.h.b16 %v271
    %v1081 = vunpack.c.l.b16 %v272
    %v1082 = vunpack.c.h.b16 %v272
    %v1083 = vunpack.c.l.b16 %v273
    %v1084 = vunpack.c.h.b16 %v273
    %v1085 = vunpack.c.l.b16 %v274
    %v1086 = vunpack.c.h.b16 %v274
    %v1087 = vunpack.c.l.b16 %v275
    %v1088 = vunpack.c.h.b16 %v275
    %v1089 = vunpack.c.l.b16 %v276
    %v1090 = vunpack.c.h.b16 %v276
    %v1091 = vunpack.c.l.b16 %v277
    %v1092 = vunpack.c.h.b16 %v277
    %v1093 = vunpack.c.l.b16 %v278
    %v1094 = vunpack.c.h.b16 %v278
    %v1095 = vunpack.c.l.b16 %v279
    %v1096 = vunpack.c.h.b16 %v279
    %v1097 = vunpack.c.l.b16 %v280
    %v1098 = vunpack.c.h.b16 %v280
    %v1099 = vunpack.c.l.b16 %v281
    %v1100 = vunpack.c.h.b16 %v281
    %v1101 = vunpack.c.l.b16 %v282
    %v1102 = vunpack.c.h.b16 %v282
    %v1103 = vunpack.c.l.b16 %v283
    %v1104 = vunpack.c.h.b16 %v283
    %v1105 = vunpack.c.l.b16 %v284
    %v1106 = vunpack.c.h.b16 %v284
    %v1107 = vunpack.c.l.b16 %v285
    %v1108 = vunpack.c.h.b16 %v285
    %v1109 = vunpack.c.l.b16 %v286
    %v1110 = vunpack.c.h.b16 %v286
    %v1111 = vunpack.c.l.b16 %v287
    %v1112 = vunpack.c.h.b16 %v287
    %v1113 = vunpack.c.l.b16 %v288
    %v1114 = vunpack.c.h.b16 %v288
    %v1115 = vunpack.c.l.b16 %v289
    %v1116 = vunpack.c.h.b16 %v289
    %v1117 = vunpack.c.l.b16 %v290
    %v1118 = vunpack.c.h.b16 %v290
    %v1119 = vunpack.c.l.b16 %v291
    %v1120 = vunpack.c.h.b16 %v291
    %v1121 = vunpack.c.l.b16 %v292
    %v1122 = vunpack.c.h.b16 %v292
    %v1123 = vunpack.c.l.b16 %v293
    %v1124 = vunpack.c.h.b16 %v293
    %v1125 = vunpack.c.l.b16 %v294
    %v1126 = vunpack.c.h.b16 %v294
    %v1127 = vunpack.c.l.b16 %v295
    %v1128 = vunpack.c.h.b16 %v295
    %v1129 = vunpack.c.l.b16 %v296
    %v1130 = vunpack.c.h.b16 %v296
    %v1131 = vunpack.c.l.b16 %v297
    %v1132 = vunpack.c.h.b16 %v297
    %v1133 = vunpack.c.l.b16 %v298
    %v1134 = vunpack.c.h.b16 %v298
    %v1135 = vunpack.c.l.b16 %v299
    %v1136 = vunpack.c.h.b16 %v299
    %v1137 = vunpack.c.l.b16 %v300
    %v1138 = vunpack.c.h.b16 %v300
    %v1139 = vunpack.c.l.b16 %v301
    %v1140 = vunpack.c.h.b16 %v301
    %v1141 = vunpack.c.l.b16 %v302
    %v1142 = vunpack.c.h.b16 %v302
    %v1143 = vpack.c.b16 %v663, %v631
    %v1144 = vpack.c.b16 %v664, %v632
    %v1145 = vpack.c.b16 %v665, %v633
    %v1146 = vpack.c.b16 %v666, %v634
    %v1147 = vpack.c.b16 %v667, %v635
    %v1148 = vpack.c.b16 %v668, %v636
    %v1149 = vpack.c.b16 %v669, %v637
    %v1150 = vpack.c.b16 %v670, %v638
    %v1151 = vpack.c.b16 %v671, %v639
    %v1152 = vpack.c.b16 %v672, %v640
    %v1153 = vpack.c.b16 %v673, %v641
    %v1154 = vpack.c.b16 %v674, %v642
    %v1155 = vpack.c.b16 %v675, %v643
    %v1156 = vpack.c.b16 %v676, %v644
    %v1157 = vpack.c.b16 %v677, %v645
    %v1158 = vpack.c.b16 %v678, %v646
    %v1159 = vpack.c.b16 %v679, %v647
    %v1160 = vpack.c.b16 %v680, %v648
    %v1161 = vpack.c.b16 %v681, %v649
    %v1162 = vpack.c.b16 %v682, %v650
    %v1163 = vpack.c.b16 %v683, %v651
    %v1164 = vpack.c.b16 %v684, %v652
    %v1165 = vpack.c.b16 %v685, %v653
    %v1166 = vpack.c.b16 %v686, %v654
    %v1167 = vpack.c.b16 %v687, %v655
    %v1168 = vpack.c.b16 %v688, %v656
    %v1169 = vpack.c.b16 %v689, %v657
    %v1170 = vpack.c.b16 %v690, %v658
    %v1171 = vpack.c.b16 %v691, %v659
    %v1172 = vpack.c.b16 %v692, %v660
    %v1173 = vpack.c.b16 %v693, %v661
    %v1174 = vpack.c.b16 %v694, %v662
    %v1175 = vpack.c.b16 %v727, %v695
    %v1176 = vpack.c.b16 %v728, %v696
    %v1177 = vpack.c.b16 %v729, %v697
    %v1178 = vpack.c.b16 %v730, %v698
    %v1179 = vpack.c.b16 %v731, %v699
    %v1180 = vpack.c.b16 %v732, %v700
    %v1181 = vpack.c.b16 %v733, %v701
    %v1182 = vpack.c.b16 %v734, %v702
    %v1183 = vpack.c.b16 %v735, %v703
    %v1184 = vpack.c.b16 %v736, %v704
    %v1185 = vpack.c.b16 %v737, %v705
    %v1186 = vpack.c.b16 %v738, %v706
    %v1187 = vpack.c.b16 %v739, %v707
    %v1188 = vpack.c.b16 %v740, %v708
    %v1189 = vpack.c.b16 %v741, %v709
    %v1190 = vpack.c.b16 %v742, %v710
    %v1191 = vpack.c.b16 %v743, %v711
    %v1192 = vpack.c.b16 %v744, %v712
    %v1193 = vpack.c.b16 %v745, %v713
    %v1194 = vpack.c.b16 %v746, %v714
    %v1195 = vpack.c.b16 %v747, %v715
    %v1196 = vpack.c.b16 %v748, %v716
    %v1197 = vpack.c.b16 %v749, %v717
    %v1198 = vpack.c.b16 %v750, %v718
    %v1199 = vpack.c.b16 %v751, %v719
    %v1200 = vpack.c.b16 %v752, %v720
    %v1201 = vpack.c.b16 %v753, %v721
    %v1202 = vpack.c.b16 %v754, %v722
    %v1203 = vpack.c.b16 %v755, %v723
    %v1204 = vpack.c.b16 %v756, %v724
    %v1205 = vpack.c.b16 %v757, %v725
    %v1206 = vpack.c.b16 %v758, %v726
    %v1207 = vpack.c.b16 %v791, %v759
    %v1208 = vpack.c.b16 %v792, %v760
    %v1209 = vpack.c.b16 %v793, %v761
    %v1210 = vpack.c.b16 %v794, %v762
    %v1211 = vpack.c.b16 %v795, %v763
    %v1212 = vpack.c.b16 %v796, %v764
    %v1213 = vpack.c.b16 %v797, %v765
    %v1214 = vpack.c.b16 %v798, %v766
    %v1215 = vpack.c.b16 %v799, %v767
    %v1216 = vpack.c.b16 %v800, %v768
    %v1217 = vpack.c.b16 %v801, %v769
    %v1218 = vpack.c.b16 %v802, %v770
    %v1219 = vpack.c.b16 %v803, %v771
    %v1220 = vpack.c.b16 %v804, %v772
    %v1221 = vpack.c.b16 %v805, %v773
    %v1222 = vpack.c.b16 %v806, %v774
    %v1223 = vpack.c.b16 %v807, %v775
    %v1224 = vpack.c.b16 %v808, %v776
    %v1225 = vpack.c.b16 %v809, %v777
    %v1226 = vpack.c.b16 %v810, %v778
    %v1227 = vpack.c.b16 %v811, %v779
    %v1228 = vpack.c.b16 %v812, %v780
    %v1229 = vpack.c.b16 %v813, %v781
    %v1230 = vpack.c.b16 %v814, %v782
    %v1231 = vpack.c.b16 %v815, %v783
    %v1232 = vpack.c.b16 %v816, %v784
    %v1233 = vpack.c.b16 %v817, %v785
    %v1234 = vpack.c.b16 %v818, %v786
    %v1235 = vpack.c.b16 %v819, %v787
    %v1236 = vpack.c.b16 %v820, %v788
    %v1237 = vpack.c.b16 %v821, %v789
    %v1238 = vpack.c.b16 %v822, %v790
    %v1239 = vpack.c.b16 %v855, %v823
    %v1240 = vpack.c.b16 %v856, %v824
    %v1241 = vpack.c.b16 %v857, %v825
    %v1242 = vpack.c.b16 %v858, %v826
    %v1243 = vpack.c.b16 %v859, %v827
    %v1244 = vpack.c.b16 %v860, %v828
    %v1245 = vpack.c.b16 %v861, %v829
    %v1246 = vpack.c.b16 %v862, %v830
    %v1247 = vpack.c.b16 %v863, %v831
    %v1248 = vpack.c.b16 %v864, %v832
    %v1249 = vpack.c.b16 %v865, %v833
    %v1250 = vpack.c.b16 %v866, %v834
    %v1251 = vpack.c.b16 %v867, %v835
    %v1252 = vpack.c.b16 %v868, %v836
    %v1253 = vpack.c.b16 %v869, %v837
    %v1254 = vpack.c.b16 %v870, %v838
    %v1255 = vpack.c.b16 %v871, %v839
    %v1256 = vpack.c.b16 %v872, %v840
    %v1257 = vpack.c.b16 %v873, %v841
    %v1258 = vpack.c.b16 %v874, %v842
    %v1259 = vpack.c.b16 %v875, %v843
    %v1260 = vpack.c.b16 %v876, %v844
    %v1261 = vpack.c.b16 %v877, %v845
    %v1262 = vpack.c.b16 %v878, %v846
    %v1263 = vpack.c.b16 %v879, %v847
    %v1264 = vpack.c.b16 %v880, %v848
    %v1265 = vpack.c.b16 %v881, %v849
    %v1266 = vpack.c.b16 %v882, %v850
    %v1267 = vpack.c.b16 %v883, %v851
    %v1268 = vpack.c.b16 %v884, %v852
    %v1269 = vpack.c.b16 %v885, %v853
    %v1270 = vpack.c.b16 %v886, %v854
    %v1271 = vpack.c.b16 %v919, %v887
    %v1272 = vpack.c.b16 %v920, %v888
    %v1273 = vpack.c.b16 %v921, %v889
    %v1274 = vpack.c.b16 %v922, %v890
    %v1275 = vpack.c.b16 %v923, %v891
    %v1276 = vpack.c.b16 %v924, %v892
    %v1277 = vpack.c.b16 %v925, %v893
    %v1278 = vpack.c.b16 %v926, %v894
    %v1279 = vpack.c.b16 %v927, %v895
    %v1280 = vpack.c.b16 %v928, %v896
    %v1281 = vpack.c.b16 %v929, %v897
    %v1282 = vpack.c.b16 %v930, %v898
    %v1283 = vpack.c.b16 %v931, %v899
    %v1284 = vpack.c.b16 %v932, %v900
    %v1285 = vpack.c.b16 %v933, %v901
    %v1286 = vpack.c.b16 %v934, %v902
    %v1287 = vpack.c.b16 %v935, %v903
    %v1288 = vpack.c.b16 %v936, %v904
    %v1289 = vpack.c.b16 %v937, %v905
    %v1290 = vpack.c.b16 %v938, %v906
    %v1291 = vpack.c.b16 %v939, %v907
    %v1292 = vpack.c.b16 %v940, %v908
    %v1293 = vpack.c.b16 %v941, %v909
    %v1294 = vpack.c.b16 %v942, %v910
    %v1295 = vpack.c.b16 %v943, %v911
    %v1296 = vpack.c.b16 %v944, %v912
    %v1297 = vpack.c.b16 %v945, %v913
    %v1298 = vpack.c.b16 %v946, %v914
    %v1299 = vpack.c.b16 %v947, %v915
    %v1300 = vpack.c.b16 %v948, %v916
    %v1301 = vpack.c.b16 %v949, %v917
    %v1302 = vpack.c.b16 %v950, %v918
    %v1303 = vpack.c.b16 %v983, %v951
    %v1304 = vpack.c.b16 %v984, %v952
    %v1305 = vpack.c.b16 %v985, %v953
    %v1306 = vpack.c.b16 %v986, %v954
    %v1307 = vpack.c.b16 %v987, %v955
    %v1308 = vpack.c.b16 %v988, %v956
    %v1309 = vpack.c.b16 %v989, %v957
    %v1310 = vpack.c.b16 %v990, %v958
    %v1311 = vpack.c.b16 %v991, %v959
    %v1312 = vpack.c.b16 %v992, %v960
    %v1313 = vpack.c.b16 %v993, %v961
    %v1314 = vpack.c.b16 %v994, %v962
    %v1315 = vpack.c.b16 %v995, %v963
    %v1316 = vpack.c.b16 %v996, %v964
    %v1317 = vpack.c.b16 %v997, %v965
    %v1318 = vpack.c.b16 %v998, %v966
    %v1319 = vpack.c.b16 %v999, %v967
    %v1320 = vpack.c.b16 %v1000, %v968
    %v1321 = vpack.c.b16 %v1001, %v969
    %v1322 = vpack.c.b16 %v1002, %v970
    %v1323 = vpack.c.b16 %v1003, %v971
    %v1324 = vpack.c.b16 %v1004, %v972
    %v1325 = vpack.c.b16 %v1005, %v973
    %v1326 = vpack.c.b16 %v1006, %v974
    %v1327 = vpack.c.b16 %v1007, %v975
    %v1328 = vpack.c.b16 %v1008, %v976
    %v1329 = vpack.c.b16 %v1009, %v977
    %v1330 = vpack.c.b16 %v1010, %v978
    %v1331 = vpack.c.b16 %v1011, %v979
    %v1332 = vpack.c.b16 %v1012, %v980
    %v1333 = vpack.c.b16 %v1013, %v981
    %v1334 = vpack.c.b16 %v1014, %v982
    %v1335 = vpack.c.b16 %v1047, %v1015
    %v1336 = vpack.c.b16 %v1048, %v1016
    %v1337 = vpack.c.b16 %v1049, %v1017
    %v1338 = vpack.c.b16 %v1050, %v1018
    %v1339 = vpack.c.b16 %v1051, %v1019
    %v1340 = vpack.c.b16 %v1052, %v1020
    %v1341 = vpack.c.b16 %v1053, %v1021
    %v1342 = vpack.c.b16 %v1054, %v1022
    %v1343 = vpack.c.b16 %v1055, %v1023
    %v1344 = vpack.c.b16 %v1056, %v1024
    %v1345 = vpack.c.b16 %v1057, %v1025
    %v1346 = vpack.c.b16 %v1058, %v1026
    %v1347 = vpack.c.b16 %v1059, %v1027
    %v1348 = vpack.c.b16 %v1060, %v1028
    %v1349 = vpack.c.b16 %v1061, %v1029
    %v1350 = vpack.c.b16 %v1062, %v1030
    %v1351 = vpack.c.b16 %v1063, %v1031
    %v1352 = vpack.c.b16 %v1064, %v1032
    %v1353 = vpack.c.b16 %v1065, %v1033
    %v1354 = vpack.c.b16 %v1066, %v1034
    %v1355 = vpack.c.b16 %v1067, %v1035
    %v1356 = vpack.c.b16 %v1068, %v1036
    %v1357 = vpack.c.b16 %v1069, %v1037
    %v1358 = vpack.c.b16 %v1070, %v1038
    %v1359 = vpack.c.b16 %v1071, %v1039
    %v1360 = vpack.c.b16 %v1072, %v1040
    %v1361 = vpack.c.b16 %v1073, %v1041
    %v1362 = vpack.c.b16 %v1074, %v1042
    %v1363 = vpack.c.b16 %v1075, %v1043
    %v1364 = vpack.c.b16 %v1076, %v1044
    %v1365 = vpack.c.b16 %v1077, %v1045
    %v1366 = vpack.c.b16 %v1078, %v1046
    %v1367 = vpack.c.b16 %v1111, %v1079
    %v1368 = vpack.c.b16 %v1112, %v1080
    %v1369 = vpack.c.b16 %v1113, %v1081
    %v1370 = vpack.c.b16 %v1114, %v1082
    %v1371 = vpack.c.b16 %v1115, %v1083
    %v1372 = vpack.c.b16 %v1116, %v1084
    %v1373 = vpack.c.b16 %v1117, %v1085
    %v1374 = vpack.c.b16 %v1118, %v1086
    %v1375 = vpack.c.b16 %v1119, %v1087
    %v1376 = vpack.c.b16 %v1120, %v1088
    %v1377 = vpack.c.b16 %v1121, %v1089
    %v1378 = vpack.c.b16 %v1122, %v1090
    %v1379 = vpack.c.b16 %v1123, %v1091
    %v1380 = vpack.c.b16 %v1124, %v1092
    %v1381 = vpack.c.b16 %v1125, %v1093
    %v1382 = vpack.c.b16 %v1126, %v1094
    %v1383 = vpack.c.b16 %v1127, %v1095
    %v1384 = vpack.c.b16 %v1128, %v1096
    %v1385 = vpack.c.b16 %v1129, %v1097
    %v1386 = vpack.c.b16 %v1130, %v1098
    %v1387 = vpack.c.b16 %v1131, %v1099
    %v1388 = vpack.c.b16 %v1132, %v1100
    %v1389 = vpack.c.b16 %v1133, %v1101
    %v1390 = vpack.c.b16 %v1134, %v1102
    %v1391 = vpack.c.b16 %v1135, %v1103
    %v1392 = vpack.c.b16 %v1136, %v1104
    %v1393 = vpack.c.b16 %v1137, %v1105
    %v1394 = vpack.c.b16 %v1138, %v1106
    %v1395 = vpack.c.b16 %v1139, %v1107
    %v1396 = vpack.c.b16 %v1140, %v1108
    %v1397 = vpack.c.b16 %v1141, %v1109
    %v1398 = vpack.c.b16 %v1142, %v1110
    %1655 = vmatpush.bf16.msra.mxu0 %v1367
    %1656 = vmatpush.bf16.msra.mxu0 %v1335
    %1657 = vmatpush.bf16.msra.mxu0 %v1303
    %1658 = vmatpush.bf16.msra.mxu0 %v1271
    %1659 = vmatpush.bf16.msra.mxu0 %v1239
    %1660 = vmatpush.bf16.msra.mxu0 %v1207
    %1661 = vmatpush.bf16.msra.mxu0 %v1175
    %1662 = vmatpush.bf16.msra.mxu0 %v1143
    %1663 = vmatmul.bf16.gmra.mxu0 %v46
    %v1664 = vpop.f32.mrf.mxu0
    %v1665 = vadd.f32 %v311, %v1664
    %v1666 = vpop.f32.mrf.mxu0
    %v1667 = vadd.f32 %v311, %v1666
    %1668 = vdwg.mxu0
    %1669 = vmatpush.bf16.msra.mxu0 %v1368
    %1670 = vmatpush.bf16.msra.mxu0 %v1336
    %1671 = vmatpush.bf16.msra.mxu0 %v1304
    %1672 = vmatpush.bf16.msra.mxu0 %v1272
    %1673 = vmatpush.bf16.msra.mxu0 %v1240
    %1674 = vmatpush.bf16.msra.mxu0 %v1208
    %1675 = vmatpush.bf16.msra.mxu0 %v1176
    %1676 = vmatpush.bf16.msra.mxu0 %v1144
    %1677 = vmatmul.bf16.gmra.mxu0 %v46
    %v1678 = vpop.f32.mrf.mxu0
    %v1679 = vadd.f32 %v312, %v1678
    %v1680 = vpop.f32.mrf.mxu0
    %v1681 = vadd.f32 %v312, %v1680
    %1682 = vdwg.mxu0
    %1683 = vmatpush.bf16.msra.mxu0 %v1369
    %1684 = vmatpush.bf16.msra.mxu0 %v1337
    %1685 = vmatpush.bf16.msra.mxu0 %v1305
    %1686 = vmatpush.bf16.msra.mxu0 %v1273
    %1687 = vmatpush.bf16.msra.mxu0 %v1241
    %1688 = vmatpush.bf16.msra.mxu0 %v1209
    %1689 = vmatpush.bf16.msra.mxu0 %v1177
    %1690 = vmatpush.bf16.msra.mxu0 %v1145
    %1691 = vmatmul.bf16.gmra.mxu0 %v46
    %v1692 = vpop.f32.mrf.mxu0
    %v1693 = vadd.f32 %v313, %v1692
    %v1694 = vpop.f32.mrf.mxu0
    %v1695 = vadd.f32 %v313, %v1694
    %1696 = vdwg.mxu0
    %1697 = vmatpush.bf16.msra.mxu0 %v1370
    %1698 = vmatpush.bf16.msra.mxu0 %v1338
    %1699 = vmatpush.bf16.msra.mxu0 %v1306
    %1700 = vmatpush.bf16.msra.mxu0 %v1274
    %1701 = vmatpush.bf16.msra.mxu0 %v1242
    %1702 = vmatpush.bf16.msra.mxu0 %v1210
    %1703 = vmatpush.bf16.msra.mxu0 %v1178
    %1704 = vmatpush.bf16.msra.mxu0 %v1146
    %1705 = vmatmul.bf16.gmra.mxu0 %v46
    %v1706 = vpop.f32.mrf.mxu0
    %v1707 = vadd.f32 %v314, %v1706
    %v1708 = vpop.f32.mrf.mxu0
    %v1709 = vadd.f32 %v314, %v1708
    %1710 = vdwg.mxu0
    %1711 = vmatpush.bf16.msra.mxu0 %v1371
    %1712 = vmatpush.bf16.msra.mxu0 %v1339
    %1713 = vmatpush.bf16.msra.mxu0 %v1307
    %1714 = vmatpush.bf16.msra.mxu0 %v1275
    %1715 = vmatpush.bf16.msra.mxu0 %v1243
    %1716 = vmatpush.bf16.msra.mxu0 %v1211
    %1717 = vmatpush.bf16.msra.mxu0 %v1179
    %1718 = vmatpush.bf16.msra.mxu0 %v1147
    %1719 = vmatmul.bf16.gmra.mxu0 %v46
    %v1720 = vpop.f32.mrf.mxu0
    %v1721 = vadd.f32 %v315, %v1720
    %v1722 = vpop.f32.mrf.mxu0
    %v1723 = vadd.f32 %v315, %v1722
    %1724 = vdwg.mxu0
    %1725 = vmatpush.bf16.msra.mxu0 %v1372
    %1726 = vmatpush.bf16.msra.mxu0 %v1340
    %1727 = vmatpush.bf16.msra.mxu0 %v1308
    %1728 = vmatpush.bf16.msra.mxu0 %v1276
    %1729 = vmatpush.bf16.msra.mxu0 %v1244
    %1730 = vmatpush.bf16.msra.mxu0 %v1212
    %1731 = vmatpush.bf16.msra.mxu0 %v1180
    %1732 = vmatpush.bf16.msra.mxu0 %v1148
    %1733 = vmatmul.bf16.gmra.mxu0 %v46
    %v1734 = vpop.f32.mrf.mxu0
    %v1735 = vadd.f32 %v316, %v1734
    %v1736 = vpop.f32.mrf.mxu0
    %v1737 = vadd.f32 %v316, %v1736
    %1738 = vdwg.mxu0
    %1739 = vmatpush.bf16.msra.mxu0 %v1373
    %1740 = vmatpush.bf16.msra.mxu0 %v1341
    %1741 = vmatpush.bf16.msra.mxu0 %v1309
    %1742 = vmatpush.bf16.msra.mxu0 %v1277
    %1743 = vmatpush.bf16.msra.mxu0 %v1245
    %1744 = vmatpush.bf16.msra.mxu0 %v1213
    %1745 = vmatpush.bf16.msra.mxu0 %v1181
    %1746 = vmatpush.bf16.msra.mxu0 %v1149
    %1747 = vmatmul.bf16.gmra.mxu0 %v46
    %v1748 = vpop.f32.mrf.mxu0
    %v1749 = vadd.f32 %v317, %v1748
    %v1750 = vpop.f32.mrf.mxu0
    %v1751 = vadd.f32 %v317, %v1750
    %1752 = vdwg.mxu0
    %1753 = vmatpush.bf16.msra.mxu0 %v1374
    %1754 = vmatpush.bf16.msra.mxu0 %v1342
    %1755 = vmatpush.bf16.msra.mxu0 %v1310
    %1756 = vmatpush.bf16.msra.mxu0 %v1278
    %1757 = vmatpush.bf16.msra.mxu0 %v1246
    %1758 = vmatpush.bf16.msra.mxu0 %v1214
    %1759 = vmatpush.bf16.msra.mxu0 %v1182
    %1760 = vmatpush.bf16.msra.mxu0 %v1150
    %1761 = vmatmul.bf16.gmra.mxu0 %v46
    %v1762 = vpop.f32.mrf.mxu0
    %v1763 = vadd.f32 %v318, %v1762
    %v1764 = vpop.f32.mrf.mxu0
    %v1765 = vadd.f32 %v318, %v1764
    %1766 = vdwg.mxu0
    %1767 = vmatpush.bf16.msra.mxu0 %v1375
    %1768 = vmatpush.bf16.msra.mxu0 %v1343
    %1769 = vmatpush.bf16.msra.mxu0 %v1311
    %1770 = vmatpush.bf16.msra.mxu0 %v1279
    %1771 = vmatpush.bf16.msra.mxu0 %v1247
    %1772 = vmatpush.bf16.msra.mxu0 %v1215
    %1773 = vmatpush.bf16.msra.mxu0 %v1183
    %1774 = vmatpush.bf16.msra.mxu0 %v1151
    %1775 = vmatmul.bf16.gmra.mxu0 %v46
    %v1776 = vpop.f32.mrf.mxu0
    %v1777 = vadd.f32 %v319, %v1776
    %v1778 = vpop.f32.mrf.mxu0
    %v1779 = vadd.f32 %v319, %v1778
    %1780 = vdwg.mxu0
    %1781 = vmatpush.bf16.msra.mxu0 %v1376
    %1782 = vmatpush.bf16.msra.mxu0 %v1344
    %1783 = vmatpush.bf16.msra.mxu0 %v1312
    %1784 = vmatpush.bf16.msra.mxu0 %v1280
    %1785 = vmatpush.bf16.msra.mxu0 %v1248
    %1786 = vmatpush.bf16.msra.mxu0 %v1216
    %1787 = vmatpush.bf16.msra.mxu0 %v1184
    %1788 = vmatpush.bf16.msra.mxu0 %v1152
    %1789 = vmatmul.bf16.gmra.mxu0 %v46
    %v1790 = vpop.f32.mrf.mxu0
    %v1791 = vadd.f32 %v320, %v1790
    %v1792 = vpop.f32.mrf.mxu0
    %v1793 = vadd.f32 %v320, %v1792
    %1794 = vdwg.mxu0
    %1795 = vmatpush.bf16.msra.mxu0 %v1377
    %1796 = vmatpush.bf16.msra.mxu0 %v1345
    %1797 = vmatpush.bf16.msra.mxu0 %v1313
    %1798 = vmatpush.bf16.msra.mxu0 %v1281
    %1799 = vmatpush.bf16.msra.mxu0 %v1249
    %1800 = vmatpush.bf16.msra.mxu0 %v1217
    %1801 = vmatpush.bf16.msra.mxu0 %v1185
    %1802 = vmatpush.bf16.msra.mxu0 %v1153
    %1803 = vmatmul.bf16.gmra.mxu0 %v46
    %v1804 = vpop.f32.mrf.mxu0
    %v1805 = vadd.f32 %v321, %v1804
    %v1806 = vpop.f32.mrf.mxu0
    %v1807 = vadd.f32 %v321, %v1806
    %1808 = vdwg.mxu0
    %1809 = vmatpush.bf16.msra.mxu0 %v1378
    %1810 = vmatpush.bf16.msra.mxu0 %v1346
    %1811 = vmatpush.bf16.msra.mxu0 %v1314
    %1812 = vmatpush.bf16.msra.mxu0 %v1282
    %1813 = vmatpush.bf16.msra.mxu0 %v1250
    %1814 = vmatpush.bf16.msra.mxu0 %v1218
    %1815 = vmatpush.bf16.msra.mxu0 %v1186
    %1816 = vmatpush.bf16.msra.mxu0 %v1154
    %1817 = vmatmul.bf16.gmra.mxu0 %v46
    %v1818 = vpop.f32.mrf.mxu0
    %v1819 = vadd.f32 %v322, %v1818
    %v1820 = vpop.f32.mrf.mxu0
    %v1821 = vadd.f32 %v322, %v1820
    %1822 = vdwg.mxu0
    %1823 = vmatpush.bf16.msra.mxu0 %v1379
    %1824 = vmatpush.bf16.msra.mxu0 %v1347
    %1825 = vmatpush.bf16.msra.mxu0 %v1315
    %1826 = vmatpush.bf16.msra.mxu0 %v1283
    %1827 = vmatpush.bf16.msra.mxu0 %v1251
    %1828 = vmatpush.bf16.msra.mxu0 %v1219
    %1829 = vmatpush.bf16.msra.mxu0 %v1187
    %1830 = vmatpush.bf16.msra.mxu0 %v1155
    %1831 = vmatmul.bf16.gmra.mxu0 %v46
    %v1832 = vpop.f32.mrf.mxu0
    %v1833 = vadd.f32 %v323, %v1832
    %v1834 = vpop.f32.mrf.mxu0
    %v1835 = vadd.f32 %v323, %v1834
    %1836 = vdwg.mxu0
    %1837 = vmatpush.bf16.msra.mxu0 %v1380
    %1838 = vmatpush.bf16.msra.mxu0 %v1348
    %1839 = vmatpush.bf16.msra.mxu0 %v1316
    %1840 = vmatpush.bf16.msra.mxu0 %v1284
    %1841 = vmatpush.bf16.msra.mxu0 %v1252
    %1842 = vmatpush.bf16.msra.mxu0 %v1220
    %1843 = vmatpush.bf16.msra.mxu0 %v1188
    %1844 = vmatpush.bf16.msra.mxu0 %v1156
    %1845 = vmatmul.bf16.gmra.mxu0 %v46
    %v1846 = vpop.f32.mrf.mxu0
    %v1847 = vadd.f32 %v324, %v1846
    %v1848 = vpop.f32.mrf.mxu0
    %v1849 = vadd.f32 %v324, %v1848
    %1850 = vdwg.mxu0
    %1851 = vmatpush.bf16.msra.mxu0 %v1381
    %1852 = vmatpush.bf16.msra.mxu0 %v1349
    %1853 = vmatpush.bf16.msra.mxu0 %v1317
    %1854 = vmatpush.bf16.msra.mxu0 %v1285
    %1855 = vmatpush.bf16.msra.mxu0 %v1253
    %1856 = vmatpush.bf16.msra.mxu0 %v1221
    %1857 = vmatpush.bf16.msra.mxu0 %v1189
    %1858 = vmatpush.bf16.msra.mxu0 %v1157
    %1859 = vmatmul.bf16.gmra.mxu0 %v46
    %v1860 = vpop.f32.mrf.mxu0
    %v1861 = vadd.f32 %v325, %v1860
    %v1862 = vpop.f32.mrf.mxu0
    %v1863 = vadd.f32 %v325, %v1862
    %1864 = vdwg.mxu0
    %1865 = vmatpush.bf16.msra.mxu0 %v1382
    %1866 = vmatpush.bf16.msra.mxu0 %v1350
    %1867 = vmatpush.bf16.msra.mxu0 %v1318
    %1868 = vmatpush.bf16.msra.mxu0 %v1286
    %1869 = vmatpush.bf16.msra.mxu0 %v1254
    %1870 = vmatpush.bf16.msra.mxu0 %v1222
    %1871 = vmatpush.bf16.msra.mxu0 %v1190
    %1872 = vmatpush.bf16.msra.mxu0 %v1158
    %1873 = vmatmul.bf16.gmra.mxu0 %v46
    %v1874 = vpop.f32.mrf.mxu0
    %v1875 = vadd.f32 %v326, %v1874
    %v1876 = vpop.f32.mrf.mxu0
    %v1877 = vadd.f32 %v326, %v1876
    %1878 = vdwg.mxu0
    %1879 = vmatpush.bf16.msra.mxu0 %v1383
    %1880 = vmatpush.bf16.msra.mxu0 %v1351
    %1881 = vmatpush.bf16.msra.mxu0 %v1319
    %1882 = vmatpush.bf16.msra.mxu0 %v1287
    %1883 = vmatpush.bf16.msra.mxu0 %v1255
    %1884 = vmatpush.bf16.msra.mxu0 %v1223
    %1885 = vmatpush.bf16.msra.mxu0 %v1191
    %1886 = vmatpush.bf16.msra.mxu0 %v1159
    %1887 = vmatmul.bf16.gmra.mxu0 %v46
    %v1888 = vpop.f32.mrf.mxu0
    %v1889 = vadd.f32 %v327, %v1888
    %v1890 = vpop.f32.mrf.mxu0
    %v1891 = vadd.f32 %v327, %v1890
    %1892 = vdwg.mxu0
    %1893 = vmatpush.bf16.msra.mxu0 %v1384
    %1894 = vmatpush.bf16.msra.mxu0 %v1352
    %1895 = vmatpush.bf16.msra.mxu0 %v1320
    %1896 = vmatpush.bf16.msra.mxu0 %v1288
    %1897 = vmatpush.bf16.msra.mxu0 %v1256
    %1898 = vmatpush.bf16.msra.mxu0 %v1224
    %1899 = vmatpush.bf16.msra.mxu0 %v1192
    %1900 = vmatpush.bf16.msra.mxu0 %v1160
    %1901 = vmatmul.bf16.gmra.mxu0 %v46
    %v1902 = vpop.f32.mrf.mxu0
    %v1903 = vadd.f32 %v328, %v1902
    %v1904 = vpop.f32.mrf.mxu0
    %v1905 = vadd.f32 %v328, %v1904
    %1906 = vdwg.mxu0
    %1907 = vmatpush.bf16.msra.mxu0 %v1385
    %1908 = vmatpush.bf16.msra.mxu0 %v1353
    %1909 = vmatpush.bf16.msra.mxu0 %v1321
    %1910 = vmatpush.bf16.msra.mxu0 %v1289
    %1911 = vmatpush.bf16.msra.mxu0 %v1257
    %1912 = vmatpush.bf16.msra.mxu0 %v1225
    %1913 = vmatpush.bf16.msra.mxu0 %v1193
    %1914 = vmatpush.bf16.msra.mxu0 %v1161
    %1915 = vmatmul.bf16.gmra.mxu0 %v46
    %v1916 = vpop.f32.mrf.mxu0
    %v1917 = vadd.f32 %v329, %v1916
    %v1918 = vpop.f32.mrf.mxu0
    %v1919 = vadd.f32 %v329, %v1918
    %1920 = vdwg.mxu0
    %1921 = vmatpush.bf16.msra.mxu0 %v1386
    %1922 = vmatpush.bf16.msra.mxu0 %v1354
    %1923 = vmatpush.bf16.msra.mxu0 %v1322
    %1924 = vmatpush.bf16.msra.mxu0 %v1290
    %1925 = vmatpush.bf16.msra.mxu0 %v1258
    %1926 = vmatpush.bf16.msra.mxu0 %v1226
    %1927 = vmatpush.bf16.msra.mxu0 %v1194
    %1928 = vmatpush.bf16.msra.mxu0 %v1162
    %1929 = vmatmul.bf16.gmra.mxu0 %v46
    %v1930 = vpop.f32.mrf.mxu0
    %v1931 = vadd.f32 %v330, %v1930
    %v1932 = vpop.f32.mrf.mxu0
    %v1933 = vadd.f32 %v330, %v1932
    %1934 = vdwg.mxu0
    %1935 = vmatpush.bf16.msra.mxu0 %v1387
    %1936 = vmatpush.bf16.msra.mxu0 %v1355
    %1937 = vmatpush.bf16.msra.mxu0 %v1323
    %1938 = vmatpush.bf16.msra.mxu0 %v1291
    %1939 = vmatpush.bf16.msra.mxu0 %v1259
    %1940 = vmatpush.bf16.msra.mxu0 %v1227
    %1941 = vmatpush.bf16.msra.mxu0 %v1195
    %1942 = vmatpush.bf16.msra.mxu0 %v1163
    %1943 = vmatmul.bf16.gmra.mxu0 %v46
    %v1944 = vpop.f32.mrf.mxu0
    %v1945 = vadd.f32 %v331, %v1944
    %v1946 = vpop.f32.mrf.mxu0
    %v1947 = vadd.f32 %v331, %v1946
    %1948 = vdwg.mxu0
    %1949 = vmatpush.bf16.msra.mxu0 %v1388
    %1950 = vmatpush.bf16.msra.mxu0 %v1356
    %1951 = vmatpush.bf16.msra.mxu0 %v1324
    %1952 = vmatpush.bf16.msra.mxu0 %v1292
    %1953 = vmatpush.bf16.msra.mxu0 %v1260
    %1954 = vmatpush.bf16.msra.mxu0 %v1228
    %1955 = vmatpush.bf16.msra.mxu0 %v1196
    %1956 = vmatpush.bf16.msra.mxu0 %v1164
    %1957 = vmatmul.bf16.gmra.mxu0 %v46
    %v1958 = vpop.f32.mrf.mxu0
    %v1959 = vadd.f32 %v332, %v1958
    %v1960 = vpop.f32.mrf.mxu0
    %v1961 = vadd.f32 %v332, %v1960
    %1962 = vdwg.mxu0
    %1963 = vmatpush.bf16.msra.mxu0 %v1389
    %1964 = vmatpush.bf16.msra.mxu0 %v1357
    %1965 = vmatpush.bf16.msra.mxu0 %v1325
    %1966 = vmatpush.bf16.msra.mxu0 %v1293
    %1967 = vmatpush.bf16.msra.mxu0 %v1261
    %1968 = vmatpush.bf16.msra.mxu0 %v1229
    %1969 = vmatpush.bf16.msra.mxu0 %v1197
    %1970 = vmatpush.bf16.msra.mxu0 %v1165
    %1971 = vmatmul.bf16.gmra.mxu0 %v46
    %v1972 = vpop.f32.mrf.mxu0
    %v1973 = vadd.f32 %v333, %v1972
    %v1974 = vpop.f32.mrf.mxu0
    %v1975 = vadd.f32 %v333, %v1974
    %1976 = vdwg.mxu0
    %1977 = vmatpush.bf16.msra.mxu0 %v1390
    %1978 = vmatpush.bf16.msra.mxu0 %v1358
    %1979 = vmatpush.bf16.msra.mxu0 %v1326
    %1980 = vmatpush.bf16.msra.mxu0 %v1294
    %1981 = vmatpush.bf16.msra.mxu0 %v1262
    %1982 = vmatpush.bf16.msra.mxu0 %v1230
    %1983 = vmatpush.bf16.msra.mxu0 %v1198
    %1984 = vmatpush.bf16.msra.mxu0 %v1166
    %1985 = vmatmul.bf16.gmra.mxu0 %v46
    %v1986 = vpop.f32.mrf.mxu0
    %v1987 = vadd.f32 %v334, %v1986
    %v1988 = vpop.f32.mrf.mxu0
    %v1989 = vadd.f32 %v334, %v1988
    %1990 = vdwg.mxu0
    %1991 = vmatpush.bf16.msra.mxu0 %v1391
    %1992 = vmatpush.bf16.msra.mxu0 %v1359
    %1993 = vmatpush.bf16.msra.mxu0 %v1327
    %1994 = vmatpush.bf16.msra.mxu0 %v1295
    %1995 = vmatpush.bf16.msra.mxu0 %v1263
    %1996 = vmatpush.bf16.msra.mxu0 %v1231
    %1997 = vmatpush.bf16.msra.mxu0 %v1199
    %1998 = vmatpush.bf16.msra.mxu0 %v1167
    %1999 = vmatmul.bf16.gmra.mxu0 %v46
    %v2000 = vpop.f32.mrf.mxu0
    %v2001 = vadd.f32 %v335, %v2000
    %v2002 = vpop.f32.mrf.mxu0
    %v2003 = vadd.f32 %v335, %v2002
    %2004 = vdwg.mxu0
    %2005 = vmatpush.bf16.msra.mxu0 %v1392
    %2006 = vmatpush.bf16.msra.mxu0 %v1360
    %2007 = vmatpush.bf16.msra.mxu0 %v1328
    %2008 = vmatpush.bf16.msra.mxu0 %v1296
    %2009 = vmatpush.bf16.msra.mxu0 %v1264
    %2010 = vmatpush.bf16.msra.mxu0 %v1232
    %2011 = vmatpush.bf16.msra.mxu0 %v1200
    %2012 = vmatpush.bf16.msra.mxu0 %v1168
    %2013 = vmatmul.bf16.gmra.mxu0 %v46
    %v2014 = vpop.f32.mrf.mxu0
    %v2015 = vadd.f32 %v336, %v2014
    %v2016 = vpop.f32.mrf.mxu0
    %v2017 = vadd.f32 %v336, %v2016
    %2018 = vdwg.mxu0
    %2019 = vmatpush.bf16.msra.mxu0 %v1393
    %2020 = vmatpush.bf16.msra.mxu0 %v1361
    %2021 = vmatpush.bf16.msra.mxu0 %v1329
    %2022 = vmatpush.bf16.msra.mxu0 %v1297
    %2023 = vmatpush.bf16.msra.mxu0 %v1265
    %2024 = vmatpush.bf16.msra.mxu0 %v1233
    %2025 = vmatpush.bf16.msra.mxu0 %v1201
    %2026 = vmatpush.bf16.msra.mxu0 %v1169
    %2027 = vmatmul.bf16.gmra.mxu0 %v46
    %v2028 = vpop.f32.mrf.mxu0
    %v2029 = vadd.f32 %v337, %v2028
    %v2030 = vpop.f32.mrf.mxu0
    %v2031 = vadd.f32 %v337, %v2030
    %2032 = vdwg.mxu0
    %2033 = vmatpush.bf16.msra.mxu0 %v1394
    %2034 = vmatpush.bf16.msra.mxu0 %v1362
    %2035 = vmatpush.bf16.msra.mxu0 %v1330
    %2036 = vmatpush.bf16.msra.mxu0 %v1298
    %2037 = vmatpush.bf16.msra.mxu0 %v1266
    %2038 = vmatpush.bf16.msra.mxu0 %v1234
    %2039 = vmatpush.bf16.msra.mxu0 %v1202
    %2040 = vmatpush.bf16.msra.mxu0 %v1170
    %2041 = vmatmul.bf16.gmra.mxu0 %v46
    %v2042 = vpop.f32.mrf.mxu0
    %v2043 = vadd.f32 %v338, %v2042
    %v2044 = vpop.f32.mrf.mxu0
    %v2045 = vadd.f32 %v338, %v2044
    %2046 = vdwg.mxu0
    %2047 = vmatpush.bf16.msra.mxu0 %v1395
    %2048 = vmatpush.bf16.msra.mxu0 %v1363
    %2049 = vmatpush.bf16.msra.mxu0 %v1331
    %2050 = vmatpush.bf16.msra.mxu0 %v1299
    %2051 = vmatpush.bf16.msra.mxu0 %v1267
    %2052 = vmatpush.bf16.msra.mxu0 %v1235
    %2053 = vmatpush.bf16.msra.mxu0 %v1203
    %2054 = vmatpush.bf16.msra.mxu0 %v1171
    %2055 = vmatmul.bf16.gmra.mxu0 %v46
    %v2056 = vpop.f32.mrf.mxu0
    %v2057 = vadd.f32 %v339, %v2056
    %v2058 = vpop.f32.mrf.mxu0
    %v2059 = vadd.f32 %v339, %v2058
    %2060 = vdwg.mxu0
    %2061 = vmatpush.bf16.msra.mxu0 %v1396
    %2062 = vmatpush.bf16.msra.mxu0 %v1364
    %2063 = vmatpush.bf16.msra.mxu0 %v1332
    %2064 = vmatpush.bf16.msra.mxu0 %v1300
    %2065 = vmatpush.bf16.msra.mxu0 %v1268
    %2066 = vmatpush.bf16.msra.mxu0 %v1236
    %2067 = vmatpush.bf16.msra.mxu0 %v1204
    %2068 = vmatpush.bf16.msra.mxu0 %v1172
    %2069 = vmatmul.bf16.gmra.mxu0 %v46
    %v2070 = vpop.f32.mrf.mxu0
    %v2071 = vadd.f32 %v340, %v2070
    %v2072 = vpop.f32.mrf.mxu0
    %v2073 = vadd.f32 %v340, %v2072
    %2074 = vdwg.mxu0
    %2075 = vmatpush.bf16.msra.mxu0 %v1397
    %2076 = vmatpush.bf16.msra.mxu0 %v1365
    %2077 = vmatpush.bf16.msra.mxu0 %v1333
    %2078 = vmatpush.bf16.msra.mxu0 %v1301
    %2079 = vmatpush.bf16.msra.mxu0 %v1269
    %2080 = vmatpush.bf16.msra.mxu0 %v1237
    %2081 = vmatpush.bf16.msra.mxu0 %v1205
    %2082 = vmatpush.bf16.msra.mxu0 %v1173
    %2083 = vmatmul.bf16.gmra.mxu0 %v46
    %v2084 = vpop.f32.mrf.mxu0
    %v2085 = vadd.f32 %v341, %v2084
    %v2086 = vpop.f32.mrf.mxu0
    %v2087 = vadd.f32 %v341, %v2086
    %2088 = vdwg.mxu0
    %2089 = vmatpush.bf16.msra.mxu0 %v1398
    %2090 = vmatpush.bf16.msra.mxu0 %v1366
    %2091 = vmatpush.bf16.msra.mxu0 %v1334
    %2092 = vmatpush.bf16.msra.mxu0 %v1302
    %2093 = vmatpush.bf16.msra.mxu0 %v1270
    %2094 = vmatpush.bf16.msra.mxu0 %v1238
    %2095 = vmatpush.bf16.msra.mxu0 %v1206
    %2096 = vmatpush.bf16.msra.mxu0 %v1174
    %2097 = vmatmul.bf16.gmra.mxu0 %v46
    %v2098 = vpop.f32.mrf.mxu0
    %v2099 = vadd.f32 %v342, %v2098
    %v2100 = vpop.f32.mrf.mxu0
    %v2101 = vadd.f32 %v342, %v2100
    %2102 = vdwg.mxu0
    %2103 = vst [vmem:[%s3] sm:$0xff] %v1665
    %2104 = vst [vmem:[%s3 + $0x8] sm:$0xff] %v1679
    %2105 = vst [vmem:[%s3 + $0x10] sm:$0xff] %v1693
    %2106 = vst [vmem:[%s3 + $0x18] sm:$0xff] %v1707
    %2107 = vst [vmem:[%s3 + $0x20] sm:$0xff] %v1721
    %2108 = vst [vmem:[%s3 + $0x28] sm:$0xff] %v1735
    %2109 = vst [vmem:[%s3 + $0x30] sm:$0xff] %v1749
    %2110 = vst [vmem:[%s3 + $0x38] sm:$0xff] %v1763
    %2111 = vst [vmem:[%s3 + $0x40] sm:$0xff] %v1777
    %2112 = vst [vmem:[%s3 + $0x48] sm:$0xff] %v1791
    %2113 = vst [vmem:[%s3 + $0x50] sm:$0xff] %v1805
    %2114 = vst [vmem:[%s3 + $0x58] sm:$0xff] %v1819
    %2115 = vst [vmem:[%s3 + $0x60] sm:$0xff] %v1833
    %2116 = vst [vmem:[%s3 + $0x68] sm:$0xff] %v1847
    %2117 = vst [vmem:[%s3 + $0x70] sm:$0xff] %v1861
    %2118 = vst [vmem:[%s3 + $0x78] sm:$0xff] %v1875
    %2119 = vst [vmem:[%s3 + $0x80] sm:$0xff] %v1889
    %2120 = vst [vmem:[%s3 + $0x88] sm:$0xff] %v1903
    %2121 = vst [vmem:[%s3 + $0x90] sm:$0xff] %v1917
    %2122 = vst [vmem:[%s3 + $0x98] sm:$0xff] %v1931
    %2123 = vst [vmem:[%s3 + $0xa0] sm:$0xff] %v1945
    %2124 = vst [vmem:[%s3 + $0xa8] sm:$0xff] %v1959
    %2125 = vst [vmem:[%s3 + $0xb0] sm:$0xff] %v1973
    %2126 = vst [vmem:[%s3 + $0xb8] sm:$0xff] %v1987
    %2127 = vst [vmem:[%s3 + $0xc0] sm:$0xff] %v2001
    %2128 = vst [vmem:[%s3 + $0xc8] sm:$0xff] %v2015
    %2129 = vst [vmem:[%s3 + $0xd0] sm:$0xff] %v2029
    %2130 = vst [vmem:[%s3 + $0xd8] sm:$0xff] %v2043
    %2131 = vst [vmem:[%s3 + $0xe0] sm:$0xff] %v2057
    %2132 = vst [vmem:[%s3 + $0xe8] sm:$0xff] %v2071
    %2133 = vst [vmem:[%s3 + $0xf0] sm:$0xff] %v2085
    %2134 = vst [vmem:[%s3 + $0xf8] sm:$0xff] %v2099
    %2135 = vst [vmem:[%s3 + $0x100] sm:$0x3f] %v1667
    %2136 = vst [vmem:[%s3 + $0x108] sm:$0x3f] %v1681
    %2137 = vst [vmem:[%s3 + $0x110] sm:$0x3f] %v1695
    %2138 = vst [vmem:[%s3 + $0x118] sm:$0x3f] %v1709
    %2139 = vst [vmem:[%s3 + $0x120] sm:$0x3f] %v1723
    %2140 = vst [vmem:[%s3 + $0x128] sm:$0x3f] %v1737
    %2141 = vst [vmem:[%s3 + $0x130] sm:$0x3f] %v1751
    %2142 = vst [vmem:[%s3 + $0x138] sm:$0x3f] %v1765
    %2143 = vst [vmem:[%s3 + $0x140] sm:$0x3f] %v1779
    %2144 = vst [vmem:[%s3 + $0x148] sm:$0x3f] %v1793
    %2145 = vst [vmem:[%s3 + $0x150] sm:$0x3f] %v1807
    %2146 = vst [vmem:[%s3 + $0x158] sm:$0x3f] %v1821
    %2147 = vst [vmem:[%s3 + $0x160] sm:$0x3f] %v1835
    %2148 = vst [vmem:[%s3 + $0x168] sm:$0x3f] %v1849
    %2149 = vst [vmem:[%s3 + $0x170] sm:$0x3f] %v1863
    %2150 = vst [vmem:[%s3 + $0x178] sm:$0x3f] %v1877
    %2151 = vst [vmem:[%s3 + $0x180] sm:$0x3f] %v1891
    %2152 = vst [vmem:[%s3 + $0x188] sm:$0x3f] %v1905
    %2153 = vst [vmem:[%s3 + $0x190] sm:$0x3f] %v1919
    %2154 = vst [vmem:[%s3 + $0x198] sm:$0x3f] %v1933
    %2155 = vst [vmem:[%s3 + $0x1a0] sm:$0x3f] %v1947
    %2156 = vst [vmem:[%s3 + $0x1a8] sm:$0x3f] %v1961
    %2157 = vst [vmem:[%s3 + $0x1b0] sm:$0x3f] %v1975
    %2158 = vst [vmem:[%s3 + $0x1b8] sm:$0x3f] %v1989
    %2159 = vst [vmem:[%s3 + $0x1c0] sm:$0x3f] %v2003
    %2160 = vst [vmem:[%s3 + $0x1c8] sm:$0x3f] %v2017
    %2161 = vst [vmem:[%s3 + $0x1d0] sm:$0x3f] %v2031
    %2162 = vst [vmem:[%s3 + $0x1d8] sm:$0x3f] %v2045
    %2163 = vst [vmem:[%s3 + $0x1e0] sm:$0x3f] %v2059
    %2164 = vst [vmem:[%s3 + $0x1e8] sm:$0x3f] %v2073
    %2165 = vst [vmem:[%s3 + $0x1f0] sm:$0x3f] %v2087
    %2166 = vst [vmem:[%s3 + $0x1f8] sm:$0x3f] %v2101
    // Predicated region
    $region22: #{forward.8} parent=1 // pred_check
      _
    $region23: #{forward.8} parent=1 // pred_check_branch
      %2168 = sbr.rel (0) target = $region25
    $region24: #{forward.8} parent=1 // pred_region
      _
    $region25: #{forward.8} parent=1 // pred_fallthru
      _
    // Predicated region
    $region26: #{forward.8} parent=1 // pred_check
      _
    $region27: #{forward.8} parent=1 // pred_check_branch
      %2170 = sbr.rel (0) target = $region29
    $region28: #{forward.8} parent=1 // pred_region
      _
    $region29: #{forward.8} parent=1 // pred_fallthru
      _
    %2171 = vsyncpa [#allocation3], 1
    %2172 = vsyncpa [#allocation5], 1

// kernel: forward.9
$region0: #{forward.9}
  #allocation0 [shape = 'u32[]', space=smem, size = 0x4, offset = 0x4, fixed_abs, tag = 'smem constant byte address 0x4 - core index']
  #allocation1 [shape = 'u32[72,128]{1,0:T(1,128)}', space=vmem, size = 0x9000, scoped, tag = 'internal scratch']
  #allocation2 [shape = 'f32[2,256]{1,0:T(2,128)}', space=vmem, size = 0x800, scoped, tag = 'scratch operand']
  #allocation3 [shape = 'f32[2,256]{1,0:T(2,128)}', space=vmem, size = 0x800, scoped, tag = 'scratch operand']
  #allocation4 [shape = 'f32[2,256]{1,0:T(2,128)}', space=vmem, size = 0x800, scoped, tag = 'scratch operand']
  #allocation5 [shape = 'f32[2,256]{1,0:T(2,128)}', space=vmem, size = 0x800, scoped, tag = 'scratch operand']
  %s0 = inlined_call_operand.vmem [shape: f32[7,2,2,1024], index: 0, kind: input, shape index: {}]
  %s1 = inlined_call_operand.vmem [shape: f32[7,2,2,1024], index: 1, kind: input, shape index: {}]
  %s2 = inlined_call_operand.hbm [shape: bf16[2,256,1024], index: 2, kind: input, shape index: {}]
  %s3 = inlined_call_operand.hbm [shape: bf16[2,256,1024], index: 3, kind: input, shape index: {}]
  %s4 = inlined_call_operand.vmem [shape: f32[7,2,2,256], index: 4, kind: output, shape index: {0}]
  %s5 = inlined_call_operand.vmem [shape: f32[7,2,2,256], index: 5, kind: output, shape index: {1}]
  %6 = xla_tuple %s4, %s5
  %s7 = sld [smem:[#allocation0]]
  $region69: #{forward.9} parent=0
    _
  %s9 = ssub.s32 1, %s7
  %s10 = scalar_select 0, %s9, %s7
  $region1: #{forward.9} parent=0
    #allocation6 [shape = 'u8[1048576]{0}', space=vmem, size = 0x100000, scoped, tag = 'input window, operand 2']
    #allocation7 [shape = 's32[2]{0}', space=sflag, size = 0x8, scoped, tag = 'scoped memory for forward.9']
    #allocation8 [shape = 'u8[1048576]{0}', space=vmem, size = 0x100000, scoped, tag = 'input window, operand 3']
    #allocation9 [shape = 's32[2]{0}', space=sflag, size = 0x8, scoped, tag = 'scoped memory for forward.9']
    %11 = vsyncpa [#allocation7], 0
    %s12 = scalar_lea.sflag [#allocation7], 1
    %13 = vsyncpa %s12, 0
    %14 = vsyncpa [#allocation9], 0
    %s15 = scalar_lea.sflag [#allocation9], 1
    %16 = vsyncpa %s15, 0
    loop: start=0, step=1, limit=16
    $region2: #{forward.9} parent=1 // loop_pre_header
      _
    $region3: #{forward.9} parent=1 // loop_header
      %s18 = sphi 0, %s22
      %p19 = scmp.ge.s32.totalorder %s18, 16
      %s25 = sphi 0, %s37
      %s26 = sphi 0, %s33
      %s27 = sphi 0, %s25
      %s28 = sphi 0, %s26
      %s29 = sphi 0, %s27
      %s30 = sphi 0, %s28
      %s42 = sphi 0, %s44
      %s45 = sphi 0, %s42
      %s46 = sphi 0, %s45
      %s62 = sphi 0, %s46
      %s72 = sphi 0, %s74
      %s75 = sphi 0, %s72
      %s76 = sphi 0, %s75
      %s92 = sphi 0, %s76
      %s98 = sphi 0, %s100
      %s101 = sphi 0, %s98
      %s102 = sphi 0, %s101
      %s118 = sphi 0, %s102
      %s124 = sphi 0, %s126
      %s127 = sphi 0, %s124
      %s128 = sphi 0, %s127
      %s144 = sphi 0, %s128
      %s152 = sphi 0, %s154
      %s155 = sphi 0, %s152
      %s156 = sphi 0, %s155
      %s172 = sphi 0, %s156
      %s182 = sphi 0, %s184
      %s185 = sphi 0, %s182
      %s186 = sphi 0, %s185
      %s202 = sphi 0, %s186
    $region4: #{forward.9} parent=1 // loop_header_branch
      %21 = sbr.rel (%p19) target = $region8
    $region5: #{forward.9} parent=1 // loop_body
      %s23 = ssub.s32 %s18, 1
      %s24 = ssub.s32 %s18, 2
      %s31 = sadd.s32 1, %s26
      %p32 = scmp.ge.s32.totalorder %s31, 7
      %s33 = scalar_select %p32, 0, %s31
      %s34 = sadd.s32 1, %s25
      %s35 = scalar_select %p32, %s34, %s25
      %p36 = scmp.ge.s32.totalorder %s35, 2
      %s37 = scalar_select %p36, 0, %s35
      %s38 = ssub.s32 %s26, %s33
      %s39 = ssub.s32 %s25, %s37
      %s40 = sor.u32 %s38, %s39
      %p41 = scmp.eq.s32.totalorder %s40, 0
      %s43 = sadd.s32 %s42, 1
      %s44 = scalar_select %p41, %s42, %s43
      %p47 = pneg %p41
      %p48 = scmp.eq.s32.totalorder %s18, 13
      %p49 = por %p47, %p48
      %p50 = scmp.ne.s32.totalorder %s42, %s45
      %p51 = scmp.eq.s32.totalorder %s18, 0
      %p52 = por %p50, %p51
      %p53 = scmp.ne.s32.totalorder %s42, %s45
      %p54 = scmp.eq.s32.totalorder %s23, 13
      %p55 = por %p53, %p54
      %p56 = scmp.ne.s32.totalorder %s45, %s46
      %p57 = scmp.eq.s32.totalorder %s23, 0
      %p58 = por %p56, %p57
      %p59 = scmp.ne.s32.totalorder %s45, %s46
      %p60 = scmp.eq.s32.totalorder %s24, 13
      %p61 = por %p59, %p60
      %p63 = scmp.ne.s32.totalorder %s46, %s62
      %p64 = scmp.eq.s32.totalorder %s24, 0
      %p65 = por %p63, %p64
      %s66 = ssub.s32 6, %s26
      %s67 = ssub.s32 6, %s33
      %s68 = ssub.s32 %s66, %s67
      %s69 = ssub.s32 %s25, %s37
      %s70 = sor.u32 %s68, %s69
      %p71 = scmp.eq.s32.totalorder %s70, 0
      %s73 = sadd.s32 %s72, 1
      %s74 = scalar_select %p71, %s72, %s73
      %p77 = pneg %p71
      %p78 = scmp.eq.s32.totalorder %s18, 13
      %p79 = por %p77, %p78
      %p80 = scmp.ne.s32.totalorder %s72, %s75
      %p81 = scmp.eq.s32.totalorder %s18, 0
      %p82 = por %p80, %p81
      %p83 = scmp.ne.s32.totalorder %s72, %s75
      %p84 = scmp.eq.s32.totalorder %s23, 13
      %p85 = por %p83, %p84
      %p86 = scmp.ne.s32.totalorder %s75, %s76
      %p87 = scmp.eq.s32.totalorder %s23, 0
      %p88 = por %p86, %p87
      %p89 = scmp.ne.s32.totalorder %s75, %s76
      %p90 = scmp.eq.s32.totalorder %s24, 13
      %p91 = por %p89, %p90
      %p93 = scmp.ne.s32.totalorder %s76, %s92
      %p94 = scmp.eq.s32.totalorder %s24, 0
      %p95 = por %p93, %p94
      %s96 = ssub.s32 %s25, %s37
      %p97 = scmp.eq.s32.totalorder %s96, 0
      %s99 = sadd.s32 %s98, 1
      %s100 = scalar_select %p97, %s98, %s99
      %p103 = pneg %p97
      %p104 = scmp.eq.s32.totalorder %s18, 13
      %p105 = por %p103, %p104
      %p106 = scmp.ne.s32.totalorder %s98, %s101
      %p107 = scmp.eq.s32.totalorder %s18, 0
      %p108 = por %p106, %p107
      %p109 = scmp.ne.s32.totalorder %s98, %s101
      %p110 = scmp.eq.s32.totalorder %s23, 13
      %p111 = por %p109, %p110
      %p112 = scmp.ne.s32.totalorder %s101, %s102
      %p113 = scmp.eq.s32.totalorder %s23, 0
      %p114 = por %p112, %p113
      %p115 = scmp.ne.s32.totalorder %s101, %s102
      %p116 = scmp.eq.s32.totalorder %s24, 13
      %p117 = por %p115, %p116
      %p119 = scmp.ne.s32.totalorder %s102, %s118
      %p120 = scmp.eq.s32.totalorder %s24, 0
      %p121 = por %p119, %p120
      %s122 = ssub.s32 %s25, %s37
      %p123 = scmp.eq.s32.totalorder %s122, 0
      %s125 = sadd.s32 %s124, 1
      %s126 = scalar_select %p123, %s124, %s125
      %p129 = pneg %p123
      %p130 = scmp.eq.s32.totalorder %s18, 13
      %p131 = por %p129, %p130
      %p132 = scmp.ne.s32.totalorder %s124, %s127
      %p133 = scmp.eq.s32.totalorder %s18, 0
      %p134 = por %p132, %p133
      %p135 = scmp.ne.s32.totalorder %s124, %s127
      %p136 = scmp.eq.s32.totalorder %s23, 13
      %p137 = por %p135, %p136
      %p138 = scmp.ne.s32.totalorder %s127, %s128
      %p139 = scmp.eq.s32.totalorder %s23, 0
      %p140 = por %p138, %p139
      %p141 = scmp.ne.s32.totalorder %s127, %s128
      %p142 = scmp.eq.s32.totalorder %s24, 13
      %p143 = por %p141, %p142
      %p145 = scmp.ne.s32.totalorder %s128, %s144
      %p146 = scmp.eq.s32.totalorder %s24, 0
      %p147 = por %p145, %p146
      %s148 = ssub.s32 %s26, %s33
      %s149 = ssub.s32 %s25, %s37
      %s150 = sor.u32 %s148, %s149
      %p151 = scmp.eq.s32.totalorder %s150, 0
      %s153 = sadd.s32 %s152, 1
      %s154 = scalar_select %p151, %s152, %s153
      %p157 = pneg %p151
      %p158 = scmp.eq.s32.totalorder %s18, 13
      %p159 = por %p157, %p158
      %p160 = scmp.ne.s32.totalorder %s152, %s155
      %p161 = scmp.eq.s32.totalorder %s18, 0
      %p162 = por %p160, %p161
      %p163 = scmp.ne.s32.totalorder %s152, %s155
      %p164 = scmp.eq.s32.totalorder %s23, 13
      %p165 = por %p163, %p164
      %p166 = scmp.ne.s32.totalorder %s155, %s156
      %p167 = scmp.eq.s32.totalorder %s23, 0
      %p168 = por %p166, %p167
      %p169 = scmp.ne.s32.totalorder %s155, %s156
      %p170 = scmp.eq.s32.totalorder %s24, 13
      %p171 = por %p169, %p170
      %p173 = scmp.ne.s32.totalorder %s156, %s172
      %p174 = scmp.eq.s32.totalorder %s24, 0
      %p175 = por %p173, %p174
      %s176 = ssub.s32 6, %s26
      %s177 = ssub.s32 6, %s33
      %s178 = ssub.s32 %s176, %s177
      %s179 = ssub.s32 %s25, %s37
      %s180 = sor.u32 %s178, %s179
      %p181 = scmp.eq.s32.totalorder %s180, 0
      %s183 = sadd.s32 %s182, 1
      %s184 = scalar_select %p181, %s182, %s183
      %p187 = pneg %p181
      %p188 = scmp.eq.s32.totalorder %s18, 13
      %p189 = por %p187, %p188
      %p190 = scmp.ne.s32.totalorder %s182, %s185
      %p191 = scmp.eq.s32.totalorder %s18, 0
      %p192 = por %p190, %p191
      %p193 = scmp.ne.s32.totalorder %s182, %s185
      %p194 = scmp.eq.s32.totalorder %s23, 13
      %p195 = por %p193, %p194
      %p196 = scmp.ne.s32.totalorder %s185, %s186
      %p197 = scmp.eq.s32.totalorder %s23, 0
      %p198 = por %p196, %p197
      %p199 = scmp.ne.s32.totalorder %s185, %s186
      %p200 = scmp.eq.s32.totalorder %s24, 13
      %p201 = por %p199, %p200
      %p203 = scmp.ne.s32.totalorder %s186, %s202
      %p204 = scmp.eq.s32.totalorder %s24, 0
      %p205 = por %p203, %p204
      %p206 = scmp.le.s32.totalorder 1, %s18
      %p207 = scmp.lt.s32.totalorder %s18, 15
      %p208 = pnand %p206, %p207
      %p209 = pneg %p208
      // Predicated region
      $region9: #{forward.9} parent=5 // pred_check
        _
      $region10: #{forward.9} parent=5 // pred_check_branch
        %211 = sbr.rel (%p208) target = $region12
      $region11: #{forward.9} parent=5 // pred_region
        %s212 = ssub.s32 %s18, 1
      $region12: #{forward.9} parent=5 // pred_fallthru
        _
      %p213 = scmp.lt.s32.totalorder %s18, 14
      // Predicated region
      $region13: #{forward.9} parent=5 // pred_check
        %p214 = pneg %p213
      $region14: #{forward.9} parent=5 // pred_check_branch
        %216 = sbr.rel (%p214) target = $region16
      $region15: #{forward.9} parent=5 // pred_region
        // Predicated region
        $region17: #{forward.9} parent=15 // pred_check
          %p217 = pneg %p52
        $region18: #{forward.9} parent=15 // pred_check_branch
          %219 = sbr.rel (%p217) target = $region20
        $region19: #{forward.9} parent=15 // pred_region
          %p220 = scmp.lt.s32.totalorder %s26, 6
          %s221 = scalar_select %p220, %s26, 6
          %p222 = scmp.lt.s32.totalorder %s25, 1
          %s223 = scalar_select %p222, %s25, 1
          %s224 = smul.addr %s223, 8
          %s225 = smul.addr %s221, 16
          %s226 = sadd.s32 %s224, %s225
          %s227 = smul.addr %s226, 2
          %s228 = scalar_lea.vmem %s0, %s227
        $region20: #{forward.9} parent=15 // pred_fallthru
          _
        // Predicated region
        $region21: #{forward.9} parent=15 // pred_check
          %p229 = pneg %p82
        $region22: #{forward.9} parent=15 // pred_check_branch
          %231 = sbr.rel (%p229) target = $region24
        $region23: #{forward.9} parent=15 // pred_region
          %s232 = ssub.s32 6, %s26
          %p233 = scmp.lt.s32.totalorder %s232, 6
          %s234 = scalar_select %p233, %s232, 6
          %p235 = scmp.lt.s32.totalorder %s25, 1
          %s236 = scalar_select %p235, %s25, 1
          %s237 = smul.addr %s236, 8
          %s238 = smul.addr %s234, 16
          %s239 = sadd.s32 %s237, %s238
          %s240 = smul.addr %s239, 2
          %s241 = scalar_lea.vmem %s1, %s240
          %s242 = ssub.s32 6, %s26
        $region24: #{forward.9} parent=15 // pred_fallthru
          _
        // Predicated region
        $region25: #{forward.9} parent=15 // pred_check
          %p243 = pneg %p108
        $region26: #{forward.9} parent=15 // pred_check_branch
          %245 = sbr.rel (%p243) target = $region28
        $region27: #{forward.9} parent=15 // pred_region
          %s246 = sand.u32 %s98, 1
          %s247 = scalar_lea.sflag [#allocation7], %s246
          %s248 = sand.u32 %s98, 1
          %s249 = smul.addr %s248, 1024
          %s250 = scalar_lea.vmem [#allocation6], %s249
          %252 = vsyncadd %s247, 0
          %s253 = smul.addr %s25, 256
          %s254 = smul.addr %s253, 4
          %s255 = scalar_lea.hbm %s2, %s254
          %s256 = sshll.u32 %s255, 4
          %s257 = int_to_ptr.hbm [resolvable:$true] %s256
          %s258 = sshll.u32 %s250, 4
          %s259 = int_to_ptr.vmem [resolvable:$true] %s258
          %264 = dma.hbm_to_vmem [thread:$0]  %s257, 16384, %s259, %s247, 512, 512, 32
        $region28: #{forward.9} parent=15 // pred_fallthru
          _
        // Predicated region
        $region29: #{forward.9} parent=15 // pred_check
          %p265 = pneg %p134
        $region30: #{forward.9} parent=15 // pred_check_branch
          %267 = sbr.rel (%p265) target = $region32
        $region31: #{forward.9} parent=15 // pred_region
          %s268 = sand.u32 %s124, 1
          %s269 = scalar_lea.sflag [#allocation9], %s268
          %s270 = sand.u32 %s124, 1
          %s271 = smul.addr %s270, 1024
          %s272 = scalar_lea.vmem [#allocation8], %s271
          %274 = vsyncadd %s269, 0
          %s275 = smul.addr %s25, 256
          %s276 = smul.addr %s275, 4
          %s277 = scalar_lea.hbm %s3, %s276
          %s278 = sshll.u32 %s277, 4
          %s279 = int_to_ptr.hbm [resolvable:$true] %s278
          %s280 = sshll.u32 %s272, 4
          %s281 = int_to_ptr.vmem [resolvable:$true] %s280
          %286 = dma.hbm_to_vmem [thread:$0]  %s279, 16384, %s281, %s269, 512, 512, 32
        $region32: #{forward.9} parent=15 // pred_fallthru
          _
      $region16: #{forward.9} parent=5 // pred_fallthru
        _
      %p287 = scmp.le.s32.totalorder 1, %s18
      %p288 = scmp.lt.s32.totalorder %s18, 15
      %p289 = pnand %p287, %p288
      %p290 = pneg %p289
      // Predicated region
      $region33: #{forward.9} parent=5 // pred_check
        _
      $region34: #{forward.9} parent=5 // pred_check_branch
        %292 = sbr.rel (%p289) target = $region36
      $region35: #{forward.9} parent=5 // pred_region
        %s293 = ssub.s32 %s18, 1
        %s294 = sand.u32 %s101, 1
        %s295 = scalar_lea.sflag [#allocation7], %s294
        %s296 = sand.u32 %s101, 1
        %s297 = smul.addr %s296, 1024
        %s298 = scalar_lea.vmem [#allocation6], %s297
        // Predicated region
        $region37: #{forward.9} parent=35 // pred_check
          %p299 = pneg %p114
        $region38: #{forward.9} parent=35 // pred_check_branch
          %301 = sbr.rel (%p299) target = $region40
        $region39: #{forward.9} parent=35 // pred_region
          %303 = dma.done %s295, 16384
        $region40: #{forward.9} parent=35 // pred_fallthru
          _
        %s304 = sand.u32 %s127, 1
        %s305 = scalar_lea.sflag [#allocation9], %s304
        %s306 = sand.u32 %s127, 1
        %s307 = smul.addr %s306, 1024
        %s308 = scalar_lea.vmem [#allocation8], %s307
        // Predicated region
        $region41: #{forward.9} parent=35 // pred_check
          %p309 = pneg %p140
        $region42: #{forward.9} parent=35 // pred_check_branch
          %311 = sbr.rel (%p309) target = $region44
        $region43: #{forward.9} parent=35 // pred_region
          %313 = dma.done %s305, 16384
        $region44: #{forward.9} parent=35 // pred_fallthru
          _
        %p314 = scmp.lt.s32.totalorder %s28, 6
        %s315 = scalar_select %p314, %s28, 6
        %p316 = scmp.lt.s32.totalorder %s27, 1
        %s317 = scalar_select %p316, %s27, 1
        %s318 = smul.addr %s317, 8
        %s319 = smul.addr %s315, 16
        %s320 = sadd.s32 %s318, %s319
        %s321 = smul.addr %s320, 2
        %s322 = scalar_lea.vmem %s0, %s321
        %p323 = pneg %p58
        %p324 = pneg %p55
        %s325 = ssub.s32 6, %s28
        %p326 = scmp.lt.s32.totalorder %s325, 6
        %s327 = scalar_select %p326, %s325, 6
        %p328 = scmp.lt.s32.totalorder %s27, 1
        %s329 = scalar_select %p328, %s27, 1
        %s330 = smul.addr %s329, 8
        %s331 = smul.addr %s327, 16
        %s332 = sadd.s32 %s330, %s331
        %s333 = smul.addr %s332, 2
        %s334 = scalar_lea.vmem %s1, %s333
        %p335 = pneg %p88
        %p336 = pneg %p85
        %s337 = sand.u32 %s101, 1
        %s338 = scalar_lea.sflag [#allocation7], %s337
        %s339 = sand.u32 %s101, 1
        %s340 = smul.addr %s339, 1024
        %s341 = scalar_lea.vmem [#allocation6], %s340
        %p342 = pneg %p114
        %p343 = pneg %p111
        %s344 = sand.u32 %s127, 1
        %s345 = scalar_lea.sflag [#allocation9], %s344
        %s346 = sand.u32 %s127, 1
        %s347 = smul.addr %s346, 1024
        %s348 = scalar_lea.vmem [#allocation8], %s347
        %p349 = pneg %p140
        %p350 = pneg %p137
        %p351 = pneg %p168
        %p352 = pneg %p165
        %p353 = scmp.lt.s32.totalorder %s28, 6
        %s354 = scalar_select %p353, %s28, 6
        %p355 = scmp.lt.s32.totalorder %s27, 1
        %s356 = scalar_select %p355, %s27, 1
        %s357 = smul.addr %s356, 2
        %s358 = smul.addr %s354, 4
        %s359 = sadd.s32 %s357, %s358
        %s360 = smul.addr %s359, 2
        %s361 = scalar_lea.vmem %s4, %s360
        %p362 = pneg %p198
        %p363 = pneg %p195
        %s364 = ssub.s32 6, %s28
        %p365 = scmp.lt.s32.totalorder %s364, 6
        %s366 = scalar_select %p365, %s364, 6
        %p367 = scmp.lt.s32.totalorder %s27, 1
        %s368 = scalar_select %p367, %s27, 1
        %s369 = smul.addr %s368, 2
        %s370 = smul.addr %s366, 4
        %s371 = sadd.s32 %s369, %s370
        %s372 = smul.addr %s371, 2
        %s373 = scalar_lea.vmem %s5, %s372
        %p374 = scmp.lt.s32.totalorder %s28, 6
        %s375 = scalar_select %p374, %s28, 6
        %p376 = scmp.lt.s32.totalorder %s27, 1
        %s377 = scalar_select %p376, %s27, 1
        %s378 = smul.addr %s377, 8
        %s379 = smul.addr %s375, 16
        %s380 = sadd.s32 %s378, %s379
        %s381 = smul.addr %s380, 2
        %s382 = scalar_lea.vmem %s0, %s381
        %s383 = ssub.s32 6, %s28
        %p384 = scmp.lt.s32.totalorder %s383, 6
        %s385 = scalar_select %p384, %s383, 6
        %p386 = scmp.lt.s32.totalorder %s27, 1
        %s387 = scalar_select %p386, %s27, 1
        %s388 = smul.addr %s387, 8
        %s389 = smul.addr %s385, 16
        %s390 = sadd.s32 %s388, %s389
        %s391 = smul.addr %s390, 2
        %s392 = scalar_lea.vmem %s1, %s391
        %s393 = ssub.s32 6, %s28
        %p394 = scmp.lt.s32.totalorder %s28, 6
        %s395 = scalar_select %p394, %s28, 6
        %p396 = scmp.lt.s32.totalorder %s27, 1
        %s397 = scalar_select %p396, %s27, 1
        %s398 = smul.addr %s397, 2
        %s399 = smul.addr %s395, 4
        %s400 = sadd.s32 %s398, %s399
        %s401 = smul.addr %s400, 2
        %s402 = scalar_lea.vmem %s4, %s401
        %s403 = ssub.s32 6, %s28
        %p404 = scmp.lt.s32.totalorder %s403, 6
        %s405 = scalar_select %p404, %s403, 6
        %p406 = scmp.lt.s32.totalorder %s27, 1
        %s407 = scalar_select %p406, %s27, 1
        %s408 = smul.addr %s407, 2
        %s409 = smul.addr %s405, 4
        %s410 = sadd.s32 %s408, %s409
        %s411 = smul.addr %s410, 2
        %s412 = scalar_lea.vmem %s5, %s411
        %s413 = ssub.s32 6, %s28
        %p414 = scmp.eq.s32.totalorder %s28, 0
        // Predicated region
        $region45: #{forward.9} parent=35 // pred_check
          %p415 = pneg %p414
        $region46: #{forward.9} parent=35 // pred_check_branch
          %417 = sbr.rel (%p415) target = $region48
        $region47: #{forward.9} parent=35 // pred_region
          %418 = vst [vmem:[#allocation2] sm:$0xf] 0.0
          %419 = vst [vmem:[#allocation3] sm:$0xf] 0.0
          %420 = vst [vmem:[#allocation4] sm:$0xf] 0.0
          %421 = vst [vmem:[#allocation5] sm:$0xf] 0.0
        $region48: #{forward.9} parent=35 // pred_fallthru
          _
        %v422 = vld [vmem:[%s382] sm:$0xff]
        %v423 = vld [vmem:[%s382 + $0x8] sm:$0xff]
        %v424 = vld [vmem:[%s298] sm:$0xff]
        %v425 = vld [vmem:[%s298 + $0x8] sm:$0xff]
        %v426 = vld [vmem:[%s298 + $0x10] sm:$0xff]
        %v427 = vld [vmem:[%s298 + $0x18] sm:$0xff]
        %v428 = vld [vmem:[%s298 + $0x20] sm:$0xff]
        %v429 = vld [vmem:[%s298 + $0x28] sm:$0xff]
        %v430 = vld [vmem:[%s298 + $0x30] sm:$0xff]
        %v431 = vld [vmem:[%s298 + $0x38] sm:$0xff]
        %v432 = vld [vmem:[%s298 + $0x40] sm:$0xff]
        %v433 = vld [vmem:[%s298 + $0x48] sm:$0xff]
        %v434 = vld [vmem:[%s298 + $0x50] sm:$0xff]
        %v435 = vld [vmem:[%s298 + $0x58] sm:$0xff]
        %v436 = vld [vmem:[%s298 + $0x60] sm:$0xff]
        %v437 = vld [vmem:[%s298 + $0x68] sm:$0xff]
        %v438 = vld [vmem:[%s298 + $0x70] sm:$0xff]
        %v439 = vld [vmem:[%s298 + $0x78] sm:$0xff]
        %v440 = vld [vmem:[%s298 + $0x80] sm:$0xff]
        %v441 = vld [vmem:[%s298 + $0x88] sm:$0xff]
        %v442 = vld [vmem:[%s298 + $0x90] sm:$0xff]
        %v443 = vld [vmem:[%s298 + $0x98] sm:$0xff]
        %v444 = vld [vmem:[%s298 + $0xa0] sm:$0xff]
        %v445 = vld [vmem:[%s298 + $0xa8] sm:$0xff]
        %v446 = vld [vmem:[%s298 + $0xb0] sm:$0xff]
        %v447 = vld [vmem:[%s298 + $0xb8] sm:$0xff]
        %v448 = vld [vmem:[%s298 + $0xc0] sm:$0xff]
        %v449 = vld [vmem:[%s298 + $0xc8] sm:$0xff]
        %v450 = vld [vmem:[%s298 + $0xd0] sm:$0xff]
        %v451 = vld [vmem:[%s298 + $0xd8] sm:$0xff]
        %v452 = vld [vmem:[%s298 + $0xe0] sm:$0xff]
        %v453 = vld [vmem:[%s298 + $0xe8] sm:$0xff]
        %v454 = vld [vmem:[%s298 + $0xf0] sm:$0xff]
        %v455 = vld [vmem:[%s298 + $0xf8] sm:$0xff]
        %v456 = vld [vmem:[%s298 + $0x100] sm:$0xff]
        %v457 = vld [vmem:[%s298 + $0x108] sm:$0xff]
        %v458 = vld [vmem:[%s298 + $0x110] sm:$0xff]
        %v459 = vld [vmem:[%s298 + $0x118] sm:$0xff]
        %v460 = vld [vmem:[%s298 + $0x120] sm:$0xff]
        %v461 = vld [vmem:[%s298 + $0x128] sm:$0xff]
        %v462 = vld [vmem:[%s298 + $0x130] sm:$0xff]
        %v463 = vld [vmem:[%s298 + $0x138] sm:$0xff]
        %v464 = vld [vmem:[%s298 + $0x140] sm:$0xff]
        %v465 = vld [vmem:[%s298 + $0x148] sm:$0xff]
        %v466 = vld [vmem:[%s298 + $0x150] sm:$0xff]
        %v467 = vld [vmem:[%s298 + $0x158] sm:$0xff]
        %v468 = vld [vmem:[%s298 + $0x160] sm:$0xff]
        %v469 = vld [vmem:[%s298 + $0x168] sm:$0xff]
        %v470 = vld [vmem:[%s298 + $0x170] sm:$0xff]
        %v471 = vld [vmem:[%s298 + $0x178] sm:$0xff]
        %v472 = vld [vmem:[%s298 + $0x180] sm:$0xff]
        %v473 = vld [vmem:[%s298 + $0x188] sm:$0xff]
        %v474 = vld [vmem:[%s298 + $0x190] sm:$0xff]
        %v475 = vld [vmem:[%s298 + $0x198] sm:$0xff]
        %v476 = vld [vmem:[%s298 + $0x1a0] sm:$0xff]
        %v477 = vld [vmem:[%s298 + $0x1a8] sm:$0xff]
        %v478 = vld [vmem:[%s298 + $0x1b0] sm:$0xff]
        %v479 = vld [vmem:[%s298 + $0x1b8] sm:$0xff]
        %v480 = vld [vmem:[%s298 + $0x1c0] sm:$0xff]
        %v481 = vld [vmem:[%s298 + $0x1c8] sm:$0xff]
        %v482 = vld [vmem:[%s298 + $0x1d0] sm:$0xff]
        %v483 = vld [vmem:[%s298 + $0x1d8] sm:$0xff]
        %v484 = vld [vmem:[%s298 + $0x1e0] sm:$0xff]
        %v485 = vld [vmem:[%s298 + $0x1e8] sm:$0xff]
        %v486 = vld [vmem:[%s298 + $0x1f0] sm:$0xff]
        %v487 = vld [vmem:[%s298 + $0x1f8] sm:$0xff]
        %v488 = vld [vmem:[%s298 + $0x200] sm:$0xff]
        %v489 = vld [vmem:[%s298 + $0x208] sm:$0xff]
        %v490 = vld [vmem:[%s298 + $0x210] sm:$0xff]
        %v491 = vld [vmem:[%s298 + $0x218] sm:$0xff]
        %v492 = vld [vmem:[%s298 + $0x220] sm:$0xff]
        %v493 = vld [vmem:[%s298 + $0x228] sm:$0xff]
        %v494 = vld [vmem:[%s298 + $0x230] sm:$0xff]
        %v495 = vld [vmem:[%s298 + $0x238] sm:$0xff]
        %v496 = vld [vmem:[%s298 + $0x240] sm:$0xff]
        %v497 = vld [vmem:[%s298 + $0x248] sm:$0xff]
        %v498 = vld [vmem:[%s298 + $0x250] sm:$0xff]
        %v499 = vld [vmem:[%s298 + $0x258] sm:$0xff]
        %v500 = vld [vmem:[%s298 + $0x260] sm:$0xff]
        %v501 = vld [vmem:[%s298 + $0x268] sm:$0xff]
        %v502 = vld [vmem:[%s298 + $0x270] sm:$0xff]
        %v503 = vld [vmem:[%s298 + $0x278] sm:$0xff]
        %v504 = vld [vmem:[%s298 + $0x280] sm:$0xff]
        %v505 = vld [vmem:[%s298 + $0x288] sm:$0xff]
        %v506 = vld [vmem:[%s298 + $0x290] sm:$0xff]
        %v507 = vld [vmem:[%s298 + $0x298] sm:$0xff]
        %v508 = vld [vmem:[%s298 + $0x2a0] sm:$0xff]
        %v509 = vld [vmem:[%s298 + $0x2a8] sm:$0xff]
        %v510 = vld [vmem:[%s298 + $0x2b0] sm:$0xff]
        %v511 = vld [vmem:[%s298 + $0x2b8] sm:$0xff]
        %v512 = vld [vmem:[%s298 + $0x2c0] sm:$0xff]
        %v513 = vld [vmem:[%s298 + $0x2c8] sm:$0xff]
        %v514 = vld [vmem:[%s298 + $0x2d0] sm:$0xff]
        %v515 = vld [vmem:[%s298 + $0x2d8] sm:$0xff]
        %v516 = vld [vmem:[%s298 + $0x2e0] sm:$0xff]
        %v517 = vld [vmem:[%s298 + $0x2e8] sm:$0xff]
        %v518 = vld [vmem:[%s298 + $0x2f0] sm:$0xff]
        %v519 = vld [vmem:[%s298 + $0x2f8] sm:$0xff]
        %v520 = vld [vmem:[%s298 + $0x300] sm:$0xff]
        %v521 = vld [vmem:[%s298 + $0x308] sm:$0xff]
        %v522 = vld [vmem:[%s298 + $0x310] sm:$0xff]
        %v523 = vld [vmem:[%s298 + $0x318] sm:$0xff]
        %v524 = vld [vmem:[%s298 + $0x320] sm:$0xff]
        %v525 = vld [vmem:[%s298 + $0x328] sm:$0xff]
        %v526 = vld [vmem:[%s298 + $0x330] sm:$0xff]
        %v527 = vld [vmem:[%s298 + $0x338] sm:$0xff]
        %v528 = vld [vmem:[%s298 + $0x340] sm:$0xff]
        %v529 = vld [vmem:[%s298 + $0x348] sm:$0xff]
        %v530 = vld [vmem:[%s298 + $0x350] sm:$0xff]
        %v531 = vld [vmem:[%s298 + $0x358] sm:$0xff]
        %v532 = vld [vmem:[%s298 + $0x360] sm:$0xff]
        %v533 = vld [vmem:[%s298 + $0x368] sm:$0xff]
        %v534 = vld [vmem:[%s298 + $0x370] sm:$0xff]
        %v535 = vld [vmem:[%s298 + $0x378] sm:$0xff]
        %v536 = vld [vmem:[%s298 + $0x380] sm:$0xff]
        %v537 = vld [vmem:[%s298 + $0x388] sm:$0xff]
        %v538 = vld [vmem:[%s298 + $0x390] sm:$0xff]
        %v539 = vld [vmem:[%s298 + $0x398] sm:$0xff]
        %v540 = vld [vmem:[%s298 + $0x3a0] sm:$0xff]
        %v541 = vld [vmem:[%s298 + $0x3a8] sm:$0xff]
        %v542 = vld [vmem:[%s298 + $0x3b0] sm:$0xff]
        %v543 = vld [vmem:[%s298 + $0x3b8] sm:$0xff]
        %v544 = vld [vmem:[%s298 + $0x3c0] sm:$0xff]
        %v545 = vld [vmem:[%s298 + $0x3c8] sm:$0xff]
        %v546 = vld [vmem:[%s298 + $0x3d0] sm:$0xff]
        %v547 = vld [vmem:[%s298 + $0x3d8] sm:$0xff]
        %v548 = vld [vmem:[%s298 + $0x3e0] sm:$0xff]
        %v549 = vld [vmem:[%s298 + $0x3e8] sm:$0xff]
        %v550 = vld [vmem:[%s298 + $0x3f0] sm:$0xff]
        %v551 = vld [vmem:[%s298 + $0x3f8] sm:$0xff]
        %v552 = vld [vmem:[#allocation2] sm:$0xf]
        %554 = vst [vmem:[#allocation1] ss:$4 sm:$0xff] %v552
        %v555 = vld.sshfl [vmem:[#allocation1] sm:$0xff pattern:$0x73625140]
        %v556 = vld.sshfl [vmem:[#allocation1 + $0x8] sm:$0xff pattern:$0x73625140]
        %v559 = vpack.c.bf16 %v555, %v555
        %v560 = vpack.c.bf16 %v556, %v556
        %v689 = vunpack.c.l.b16 %v424
        %v690 = vunpack.c.h.b16 %v424
        %v691 = vunpack.c.l.b16 %v425
        %v692 = vunpack.c.h.b16 %v425
        %v693 = vunpack.c.l.b16 %v426
        %v694 = vunpack.c.h.b16 %v426
        %v695 = vunpack.c.l.b16 %v427
        %v696 = vunpack.c.h.b16 %v427
        %v697 = vunpack.c.l.b16 %v428
        %v698 = vunpack.c.h.b16 %v428
        %v699 = vunpack.c.l.b16 %v429
        %v700 = vunpack.c.h.b16 %v429
        %v701 = vunpack.c.l.b16 %v430
        %v702 = vunpack.c.h.b16 %v430
        %v703 = vunpack.c.l.b16 %v431
        %v704 = vunpack.c.h.b16 %v431
        %v705 = vunpack.c.l.b16 %v432
        %v706 = vunpack.c.h.b16 %v432
        %v707 = vunpack.c.l.b16 %v433
        %v708 = vunpack.c.h.b16 %v433
        %v709 = vunpack.c.l.b16 %v434
        %v710 = vunpack.c.h.b16 %v434
        %v711 = vunpack.c.l.b16 %v435
        %v712 = vunpack.c.h.b16 %v435
        %v713 = vunpack.c.l.b16 %v436
        %v714 = vunpack.c.h.b16 %v436
        %v715 = vunpack.c.l.b16 %v437
        %v716 = vunpack.c.h.b16 %v437
        %v717 = vunpack.c.l.b16 %v438
        %v718 = vunpack.c.h.b16 %v438
        %v719 = vunpack.c.l.b16 %v439
        %v720 = vunpack.c.h.b16 %v439
        %v721 = vunpack.c.l.b16 %v440
        %v722 = vunpack.c.h.b16 %v440
        %v723 = vunpack.c.l.b16 %v441
        %v724 = vunpack.c.h.b16 %v441
        %v725 = vunpack.c.l.b16 %v442
        %v726 = vunpack.c.h.b16 %v442
        %v727 = vunpack.c.l.b16 %v443
        %v728 = vunpack.c.h.b16 %v443
        %v729 = vunpack.c.l.b16 %v444
        %v730 = vunpack.c.h.b16 %v444
        %v731 = vunpack.c.l.b16 %v445
        %v732 = vunpack.c.h.b16 %v445
        %v733 = vunpack.c.l.b16 %v446
        %v734 = vunpack.c.h.b16 %v446
        %v735 = vunpack.c.l.b16 %v447
        %v736 = vunpack.c.h.b16 %v447
        %v737 = vunpack.c.l.b16 %v448
        %v738 = vunpack.c.h.b16 %v448
        %v739 = vunpack.c.l.b16 %v449
        %v740 = vunpack.c.h.b16 %v449
        %v741 = vunpack.c.l.b16 %v450
        %v742 = vunpack.c.h.b16 %v450
        %v743 = vunpack.c.l.b16 %v451
        %v744 = vunpack.c.h.b16 %v451
        %v745 = vunpack.c.l.b16 %v452
        %v746 = vunpack.c.h.b16 %v452
        %v747 = vunpack.c.l.b16 %v453
        %v748 = vunpack.c.h.b16 %v453
        %v749 = vunpack.c.l.b16 %v454
        %v750 = vunpack.c.h.b16 %v454
        %v751 = vunpack.c.l.b16 %v455
        %v752 = vunpack.c.h.b16 %v455
        %v753 = vunpack.c.l.b16 %v456
        %v754 = vunpack.c.h.b16 %v456
        %v755 = vunpack.c.l.b16 %v457
        %v756 = vunpack.c.h.b16 %v457
        %v757 = vunpack.c.l.b16 %v458
        %v758 = vunpack.c.h.b16 %v458
        %v759 = vunpack.c.l.b16 %v459
        %v760 = vunpack.c.h.b16 %v459
        %v761 = vunpack.c.l.b16 %v460
        %v762 = vunpack.c.h.b16 %v460
        %v763 = vunpack.c.l.b16 %v461
        %v764 = vunpack.c.h.b16 %v461
        %v765 = vunpack.c.l.b16 %v462
        %v766 = vunpack.c.h.b16 %v462
        %v767 = vunpack.c.l.b16 %v463
        %v768 = vunpack.c.h.b16 %v463
        %v769 = vunpack.c.l.b16 %v464
        %v770 = vunpack.c.h.b16 %v464
        %v771 = vunpack.c.l.b16 %v465
        %v772 = vunpack.c.h.b16 %v465
        %v773 = vunpack.c.l.b16 %v466
        %v774 = vunpack.c.h.b16 %v466
        %v775 = vunpack.c.l.b16 %v467
        %v776 = vunpack.c.h.b16 %v467
        %v777 = vunpack.c.l.b16 %v468
        %v778 = vunpack.c.h.b16 %v468
        %v779 = vunpack.c.l.b16 %v469
        %v780 = vunpack.c.h.b16 %v469
        %v781 = vunpack.c.l.b16 %v470
        %v782 = vunpack.c.h.b16 %v470
        %v783 = vunpack.c.l.b16 %v471
        %v784 = vunpack.c.h.b16 %v471
        %v785 = vunpack.c.l.b16 %v472
        %v786 = vunpack.c.h.b16 %v472
        %v787 = vunpack.c.l.b16 %v473
        %v788 = vunpack.c.h.b16 %v473
        %v789 = vunpack.c.l.b16 %v474
        %v790 = vunpack.c.h.b16 %v474
        %v791 = vunpack.c.l.b16 %v475
        %v792 = vunpack.c.h.b16 %v475
        %v793 = vunpack.c.l.b16 %v476
        %v794 = vunpack.c.h.b16 %v476
        %v795 = vunpack.c.l.b16 %v477
        %v796 = vunpack.c.h.b16 %v477
        %v797 = vunpack.c.l.b16 %v478
        %v798 = vunpack.c.h.b16 %v478
        %v799 = vunpack.c.l.b16 %v479
        %v800 = vunpack.c.h.b16 %v479
        %v801 = vunpack.c.l.b16 %v480
        %v802 = vunpack.c.h.b16 %v480
        %v803 = vunpack.c.l.b16 %v481
        %v804 = vunpack.c.h.b16 %v481
        %v805 = vunpack.c.l.b16 %v482
        %v806 = vunpack.c.h.b16 %v482
        %v807 = vunpack.c.l.b16 %v483
        %v808 = vunpack.c.h.b16 %v483
        %v809 = vunpack.c.l.b16 %v484
        %v810 = vunpack.c.h.b16 %v484
        %v811 = vunpack.c.l.b16 %v485
        %v812 = vunpack.c.h.b16 %v485
        %v813 = vunpack.c.l.b16 %v486
        %v814 = vunpack.c.h.b16 %v486
        %v815 = vunpack.c.l.b16 %v487
        %v816 = vunpack.c.h.b16 %v487
        %v817 = vunpack.c.l.b16 %v488
        %v818 = vunpack.c.h.b16 %v488
        %v819 = vunpack.c.l.b16 %v489
        %v820 = vunpack.c.h.b16 %v489
        %v821 = vunpack.c.l.b16 %v490
        %v822 = vunpack.c.h.b16 %v490
        %v823 = vunpack.c.l.b16 %v491
        %v824 = vunpack.c.h.b16 %v491
        %v825 = vunpack.c.l.b16 %v492
        %v826 = vunpack.c.h.b16 %v492
        %v827 = vunpack.c.l.b16 %v493
        %v828 = vunpack.c.h.b16 %v493
        %v829 = vunpack.c.l.b16 %v494
        %v830 = vunpack.c.h.b16 %v494
        %v831 = vunpack.c.l.b16 %v495
        %v832 = vunpack.c.h.b16 %v495
        %v833 = vunpack.c.l.b16 %v496
        %v834 = vunpack.c.h.b16 %v496
        %v835 = vunpack.c.l.b16 %v497
        %v836 = vunpack.c.h.b16 %v497
        %v837 = vunpack.c.l.b16 %v498
        %v838 = vunpack.c.h.b16 %v498
        %v839 = vunpack.c.l.b16 %v499
        %v840 = vunpack.c.h.b16 %v499
        %v841 = vunpack.c.l.b16 %v500
        %v842 = vunpack.c.h.b16 %v500
        %v843 = vunpack.c.l.b16 %v501
        %v844 = vunpack.c.h.b16 %v501
        %v845 = vunpack.c.l.b16 %v502
        %v846 = vunpack.c.h.b16 %v502
        %v847 = vunpack.c.l.b16 %v503
        %v848 = vunpack.c.h.b16 %v503
        %v849 = vunpack.c.l.b16 %v504
        %v850 = vunpack.c.h.b16 %v504
        %v851 = vunpack.c.l.b16 %v505
        %v852 = vunpack.c.h.b16 %v505
        %v853 = vunpack.c.l.b16 %v506
        %v854 = vunpack.c.h.b16 %v506
        %v855 = vunpack.c.l.b16 %v507
        %v856 = vunpack.c.h.b16 %v507
        %v857 = vunpack.c.l.b16 %v508
        %v858 = vunpack.c.h.b16 %v508
        %v859 = vunpack.c.l.b16 %v509
        %v860 = vunpack.c.h.b16 %v509
        %v861 = vunpack.c.l.b16 %v510
        %v862 = vunpack.c.h.b16 %v510
        %v863 = vunpack.c.l.b16 %v511
        %v864 = vunpack.c.h.b16 %v511
        %v865 = vunpack.c.l.b16 %v512
        %v866 = vunpack.c.h.b16 %v512
        %v867 = vunpack.c.l.b16 %v513
        %v868 = vunpack.c.h.b16 %v513
        %v869 = vunpack.c.l.b16 %v514
        %v870 = vunpack.c.h.b16 %v514
        %v871 = vunpack.c.l.b16 %v515
        %v872 = vunpack.c.h.b16 %v515
        %v873 = vunpack.c.l.b16 %v516
        %v874 = vunpack.c.h.b16 %v516
        %v875 = vunpack.c.l.b16 %v517
        %v876 = vunpack.c.h.b16 %v517
        %v877 = vunpack.c.l.b16 %v518
        %v878 = vunpack.c.h.b16 %v518
        %v879 = vunpack.c.l.b16 %v519
        %v880 = vunpack.c.h.b16 %v519
        %v881 = vunpack.c.l.b16 %v520
        %v882 = vunpack.c.h.b16 %v520
        %v883 = vunpack.c.l.b16 %v521
        %v884 = vunpack.c.h.b16 %v521
        %v885 = vunpack.c.l.b16 %v522
        %v886 = vunpack.c.h.b16 %v522
        %v887 = vunpack.c.l.b16 %v523
        %v888 = vunpack.c.h.b16 %v523
        %v889 = vunpack.c.l.b16 %v524
        %v890 = vunpack.c.h.b16 %v524
        %v891 = vunpack.c.l.b16 %v525
        %v892 = vunpack.c.h.b16 %v525
        %v893 = vunpack.c.l.b16 %v526
        %v894 = vunpack.c.h.b16 %v526
        %v895 = vunpack.c.l.b16 %v527
        %v896 = vunpack.c.h.b16 %v527
        %v897 = vunpack.c.l.b16 %v528
        %v898 = vunpack.c.h.b16 %v528
        %v899 = vunpack.c.l.b16 %v529
        %v900 = vunpack.c.h.b16 %v529
        %v901 = vunpack.c.l.b16 %v530
        %v902 = vunpack.c.h.b16 %v530
        %v903 = vunpack.c.l.b16 %v531
        %v904 = vunpack.c.h.b16 %v531
        %v905 = vunpack.c.l.b16 %v532
        %v906 = vunpack.c.h.b16 %v532
        %v907 = vunpack.c.l.b16 %v533
        %v908 = vunpack.c.h.b16 %v533
        %v909 = vunpack.c.l.b16 %v534
        %v910 = vunpack.c.h.b16 %v534
        %v911 = vunpack.c.l.b16 %v535
        %v912 = vunpack.c.h.b16 %v535
        %v913 = vunpack.c.l.b16 %v536
        %v914 = vunpack.c.h.b16 %v536
        %v915 = vunpack.c.l.b16 %v537
        %v916 = vunpack.c.h.b16 %v537
        %v917 = vunpack.c.l.b16 %v538
        %v918 = vunpack.c.h.b16 %v538
        %v919 = vunpack.c.l.b16 %v539
        %v920 = vunpack.c.h.b16 %v539
        %v921 = vunpack.c.l.b16 %v540
        %v922 = vunpack.c.h.b16 %v540
        %v923 = vunpack.c.l.b16 %v541
        %v924 = vunpack.c.h.b16 %v541
        %v925 = vunpack.c.l.b16 %v542
        %v926 = vunpack.c.h.b16 %v542
        %v927 = vunpack.c.l.b16 %v543
        %v928 = vunpack.c.h.b16 %v543
        %v929 = vunpack.c.l.b16 %v544
        %v930 = vunpack.c.h.b16 %v544
        %v931 = vunpack.c.l.b16 %v545
        %v932 = vunpack.c.h.b16 %v545
        %v933 = vunpack.c.l.b16 %v546
        %v934 = vunpack.c.h.b16 %v546
        %v935 = vunpack.c.l.b16 %v547
        %v936 = vunpack.c.h.b16 %v547
        %v937 = vunpack.c.l.b16 %v548
        %v938 = vunpack.c.h.b16 %v548
        %v939 = vunpack.c.l.b16 %v549
        %v940 = vunpack.c.h.b16 %v549
        %v941 = vunpack.c.l.b16 %v550
        %v942 = vunpack.c.h.b16 %v550
        %v943 = vunpack.c.l.b16 %v551
        %v944 = vunpack.c.h.b16 %v551
        %v945 = vpack.c.b16 %v697, %v689
        %v946 = vpack.c.b16 %v698, %v690
        %v947 = vpack.c.b16 %v699, %v691
        %v948 = vpack.c.b16 %v700, %v692
        %v949 = vpack.c.b16 %v701, %v693
        %v950 = vpack.c.b16 %v702, %v694
        %v951 = vpack.c.b16 %v703, %v695
        %v952 = vpack.c.b16 %v704, %v696
        %v953 = vpack.c.b16 %v713, %v705
        %v954 = vpack.c.b16 %v714, %v706
        %v955 = vpack.c.b16 %v715, %v707
        %v956 = vpack.c.b16 %v716, %v708
        %v957 = vpack.c.b16 %v717, %v709
        %v958 = vpack.c.b16 %v718, %v710
        %v959 = vpack.c.b16 %v719, %v711
        %v960 = vpack.c.b16 %v720, %v712
        %v961 = vpack.c.b16 %v729, %v721
        %v962 = vpack.c.b16 %v730, %v722
        %v963 = vpack.c.b16 %v731, %v723
        %v964 = vpack.c.b16 %v732, %v724
        %v965 = vpack.c.b16 %v733, %v725
        %v966 = vpack.c.b16 %v734, %v726
        %v967 = vpack.c.b16 %v735, %v727
        %v968 = vpack.c.b16 %v736, %v728
        %v969 = vpack.c.b16 %v745, %v737
        %v970 = vpack.c.b16 %v746, %v738
        %v971 = vpack.c.b16 %v747, %v739
        %v972 = vpack.c.b16 %v748, %v740
        %v973 = vpack.c.b16 %v749, %v741
        %v974 = vpack.c.b16 %v750, %v742
        %v975 = vpack.c.b16 %v751, %v743
        %v976 = vpack.c.b16 %v752, %v744
        %v977 = vpack.c.b16 %v761, %v753
        %v978 = vpack.c.b16 %v762, %v754
        %v979 = vpack.c.b16 %v763, %v755
        %v980 = vpack.c.b16 %v764, %v756
        %v981 = vpack.c.b16 %v765, %v757
        %v982 = vpack.c.b16 %v766, %v758
        %v983 = vpack.c.b16 %v767, %v759
        %v984 = vpack.c.b16 %v768, %v760
        %v985 = vpack.c.b16 %v777, %v769
        %v986 = vpack.c.b16 %v778, %v770
        %v987 = vpack.c.b16 %v779, %v771
        %v988 = vpack.c.b16 %v780, %v772
        %v989 = vpack.c.b16 %v781, %v773
        %v990 = vpack.c.b16 %v782, %v774
        %v991 = vpack.c.b16 %v783, %v775
        %v992 = vpack.c.b16 %v784, %v776
        %v993 = vpack.c.b16 %v793, %v785
        %v994 = vpack.c.b16 %v794, %v786
        %v995 = vpack.c.b16 %v795, %v787
        %v996 = vpack.c.b16 %v796, %v788
        %v997 = vpack.c.b16 %v797, %v789
        %v998 = vpack.c.b16 %v798, %v790
        %v999 = vpack.c.b16 %v799, %v791
        %v1000 = vpack.c.b16 %v800, %v792
        %v1001 = vpack.c.b16 %v809, %v801
        %v1002 = vpack.c.b16 %v810, %v802
        %v1003 = vpack.c.b16 %v811, %v803
        %v1004 = vpack.c.b16 %v812, %v804
        %v1005 = vpack.c.b16 %v813, %v805
        %v1006 = vpack.c.b16 %v814, %v806
        %v1007 = vpack.c.b16 %v815, %v807
        %v1008 = vpack.c.b16 %v816, %v808
        %v1009 = vpack.c.b16 %v825, %v817
        %v1010 = vpack.c.b16 %v826, %v818
        %v1011 = vpack.c.b16 %v827, %v819
        %v1012 = vpack.c.b16 %v828, %v820
        %v1013 = vpack.c.b16 %v829, %v821
        %v1014 = vpack.c.b16 %v830, %v822
        %v1015 = vpack.c.b16 %v831, %v823
        %v1016 = vpack.c.b16 %v832, %v824
        %v1017 = vpack.c.b16 %v841, %v833
        %v1018 = vpack.c.b16 %v842, %v834
        %v1019 = vpack.c.b16 %v843, %v835
        %v1020 = vpack.c.b16 %v844, %v836
        %v1021 = vpack.c.b16 %v845, %v837
        %v1022 = vpack.c.b16 %v846, %v838
        %v1023 = vpack.c.b16 %v847, %v839
        %v1024 = vpack.c.b16 %v848, %v840
        %v1025 = vpack.c.b16 %v857, %v849
        %v1026 = vpack.c.b16 %v858, %v850
        %v1027 = vpack.c.b16 %v859, %v851
        %v1028 = vpack.c.b16 %v860, %v852
        %v1029 = vpack.c.b16 %v861, %v853
        %v1030 = vpack.c.b16 %v862, %v854
        %v1031 = vpack.c.b16 %v863, %v855
        %v1032 = vpack.c.b16 %v864, %v856
        %v1033 = vpack.c.b16 %v873, %v865
        %v1034 = vpack.c.b16 %v874, %v866
        %v1035 = vpack.c.b16 %v875, %v867
        %v1036 = vpack.c.b16 %v876, %v868
        %v1037 = vpack.c.b16 %v877, %v869
        %v1038 = vpack.c.b16 %v878, %v870
        %v1039 = vpack.c.b16 %v879, %v871
        %v1040 = vpack.c.b16 %v880, %v872
        %v1041 = vpack.c.b16 %v889, %v881
        %v1042 = vpack.c.b16 %v890, %v882
        %v1043 = vpack.c.b16 %v891, %v883
        %v1044 = vpack.c.b16 %v892, %v884
        %v1045 = vpack.c.b16 %v893, %v885
        %v1046 = vpack.c.b16 %v894, %v886
        %v1047 = vpack.c.b16 %v895, %v887
        %v1048 = vpack.c.b16 %v896, %v888
        %v1049 = vpack.c.b16 %v905, %v897
        %v1050 = vpack.c.b16 %v906, %v898
        %v1051 = vpack.c.b16 %v907, %v899
        %v1052 = vpack.c.b16 %v908, %v900
        %v1053 = vpack.c.b16 %v909, %v901
        %v1054 = vpack.c.b16 %v910, %v902
        %v1055 = vpack.c.b16 %v911, %v903
        %v1056 = vpack.c.b16 %v912, %v904
        %v1057 = vpack.c.b16 %v921, %v913
        %v1058 = vpack.c.b16 %v922, %v914
        %v1059 = vpack.c.b16 %v923, %v915
        %v1060 = vpack.c.b16 %v924, %v916
        %v1061 = vpack.c.b16 %v925, %v917
        %v1062 = vpack.c.b16 %v926, %v918
        %v1063 = vpack.c.b16 %v927, %v919
        %v1064 = vpack.c.b16 %v928, %v920
        %v1065 = vpack.c.b16 %v937, %v929
        %v1066 = vpack.c.b16 %v938, %v930
        %v1067 = vpack.c.b16 %v939, %v931
        %v1068 = vpack.c.b16 %v940, %v932
        %v1069 = vpack.c.b16 %v941, %v933
        %v1070 = vpack.c.b16 %v942, %v934
        %v1071 = vpack.c.b16 %v943, %v935
        %v1072 = vpack.c.b16 %v944, %v936
        %1201 = vmatpush.bf16.msra.mxu0 %v1001
        %1202 = vmatpush.bf16.msra.mxu0 %v993
        %1203 = vmatpush.bf16.msra.mxu0 %v985
        %1204 = vmatpush.bf16.msra.mxu0 %v977
        %1205 = vmatpush.bf16.msra.mxu0 %v969
        %1206 = vmatpush.bf16.msra.mxu0 %v961
        %1207 = vmatpush.bf16.msra.mxu0 %v953
        %1208 = vmatpush.bf16.msra.mxu0 %v945
        %1209 = vmatmul.bf16.gmra.mxu0 %v559
        %v1210 = vpop.f32.mrf.mxu0
        %v1211 = vadd.f32 0.0, %v1210
        %v1212 = vpop.f32.mrf.mxu0
        %1213 = vdwg.mxu0
        %1214 = vmatpush.bf16.msra.mxu0 %v1065
        %1215 = vmatpush.bf16.msra.mxu0 %v1057
        %1216 = vmatpush.bf16.msra.mxu0 %v1049
        %1217 = vmatpush.bf16.msra.mxu0 %v1041
        %1218 = vmatpush.bf16.msra.mxu0 %v1033
        %1219 = vmatpush.bf16.msra.mxu0 %v1025
        %1220 = vmatpush.bf16.msra.mxu0 %v1017
        %1221 = vmatpush.bf16.msra.mxu0 %v1009
        %1222 = vmatmul.bf16.gmra.mxu0 %v560
        %v1223 = vpop.f32.mrf.mxu0
        %v1224 = vadd.f32 %v1211, %v1223
        %v1225 = vpop.f32.mrf.mxu0
        %1226 = vdwg.mxu0
        %1227 = vmatpush.bf16.msra.mxu0 %v1002
        %1228 = vmatpush.bf16.msra.mxu0 %v994
        %1229 = vmatpush.bf16.msra.mxu0 %v986
        %1230 = vmatpush.bf16.msra.mxu0 %v978
        %1231 = vmatpush.bf16.msra.mxu0 %v970
        %1232 = vmatpush.bf16.msra.mxu0 %v962
        %1233 = vmatpush.bf16.msra.mxu0 %v954
        %1234 = vmatpush.bf16.msra.mxu0 %v946
        %1235 = vmatmul.bf16.gmra.mxu0 %v559
        %v1236 = vpop.f32.mrf.mxu0
        %v1237 = vadd.f32 0.0, %v1236
        %v1238 = vpop.f32.mrf.mxu0
        %1239 = vdwg.mxu0
        %1240 = vmatpush.bf16.msra.mxu0 %v1066
        %1241 = vmatpush.bf16.msra.mxu0 %v1058
        %1242 = vmatpush.bf16.msra.mxu0 %v1050
        %1243 = vmatpush.bf16.msra.mxu0 %v1042
        %1244 = vmatpush.bf16.msra.mxu0 %v1034
        %1245 = vmatpush.bf16.msra.mxu0 %v1026
        %1246 = vmatpush.bf16.msra.mxu0 %v1018
        %1247 = vmatpush.bf16.msra.mxu0 %v1010
        %1248 = vmatmul.bf16.gmra.mxu0 %v560
        %v1249 = vpop.f32.mrf.mxu0
        %v1250 = vadd.f32 %v1237, %v1249
        %v1251 = vpop.f32.mrf.mxu0
        %1252 = vdwg.mxu0
        %1253 = vmatpush.bf16.msra.mxu0 %v1003
        %1254 = vmatpush.bf16.msra.mxu0 %v995
        %1255 = vmatpush.bf16.msra.mxu0 %v987
        %1256 = vmatpush.bf16.msra.mxu0 %v979
        %1257 = vmatpush.bf16.msra.mxu0 %v971
        %1258 = vmatpush.bf16.msra.mxu0 %v963
        %1259 = vmatpush.bf16.msra.mxu0 %v955
        %1260 = vmatpush.bf16.msra.mxu0 %v947
        %1261 = vmatmul.bf16.gmra.mxu0 %v559
        %v1262 = vpop.f32.mrf.mxu0
        %v1263 = vadd.f32 0.0, %v1262
        %v1264 = vpop.f32.mrf.mxu0
        %1265 = vdwg.mxu0
        %1266 = vmatpush.bf16.msra.mxu0 %v1067
        %1267 = vmatpush.bf16.msra.mxu0 %v1059
        %1268 = vmatpush.bf16.msra.mxu0 %v1051
        %1269 = vmatpush.bf16.msra.mxu0 %v1043
        %1270 = vmatpush.bf16.msra.mxu0 %v1035
        %1271 = vmatpush.bf16.msra.mxu0 %v1027
        %1272 = vmatpush.bf16.msra.mxu0 %v1019
        %1273 = vmatpush.bf16.msra.mxu0 %v1011
        %1274 = vmatmul.bf16.gmra.mxu0 %v560
        %v1275 = vpop.f32.mrf.mxu0
        %v1276 = vadd.f32 %v1263, %v1275
        %v1277 = vpop.f32.mrf.mxu0
        %1278 = vdwg.mxu0
        %1279 = vmatpush.bf16.msra.mxu0 %v1004
        %1280 = vmatpush.bf16.msra.mxu0 %v996
        %1281 = vmatpush.bf16.msra.mxu0 %v988
        %1282 = vmatpush.bf16.msra.mxu0 %v980
        %1283 = vmatpush.bf16.msra.mxu0 %v972
        %1284 = vmatpush.bf16.msra.mxu0 %v964
        %1285 = vmatpush.bf16.msra.mxu0 %v956
        %1286 = vmatpush.bf16.msra.mxu0 %v948
        %1287 = vmatmul.bf16.gmra.mxu0 %v559
        %v1288 = vpop.f32.mrf.mxu0
        %v1289 = vadd.f32 0.0, %v1288
        %v1290 = vpop.f32.mrf.mxu0
        %1291 = vdwg.mxu0
        %1292 = vmatpush.bf16.msra.mxu0 %v1068
        %1293 = vmatpush.bf16.msra.mxu0 %v1060
        %1294 = vmatpush.bf16.msra.mxu0 %v1052
        %1295 = vmatpush.bf16.msra.mxu0 %v1044
        %1296 = vmatpush.bf16.msra.mxu0 %v1036
        %1297 = vmatpush.bf16.msra.mxu0 %v1028
        %1298 = vmatpush.bf16.msra.mxu0 %v1020
        %1299 = vmatpush.bf16.msra.mxu0 %v1012
        %1300 = vmatmul.bf16.gmra.mxu0 %v560
        %v1301 = vpop.f32.mrf.mxu0
        %v1302 = vadd.f32 %v1289, %v1301
        %v1303 = vpop.f32.mrf.mxu0
        %1304 = vdwg.mxu0
        %1305 = vmatpush.bf16.msra.mxu0 %v1005
        %1306 = vmatpush.bf16.msra.mxu0 %v997
        %1307 = vmatpush.bf16.msra.mxu0 %v989
        %1308 = vmatpush.bf16.msra.mxu0 %v981
        %1309 = vmatpush.bf16.msra.mxu0 %v973
        %1310 = vmatpush.bf16.msra.mxu0 %v965
        %1311 = vmatpush.bf16.msra.mxu0 %v957
        %1312 = vmatpush.bf16.msra.mxu0 %v949
        %1313 = vmatmul.bf16.gmra.mxu0 %v559
        %v1314 = vpop.f32.mrf.mxu0
        %v1315 = vadd.f32 0.0, %v1314
        %v1316 = vpop.f32.mrf.mxu0
        %1317 = vdwg.mxu0
        %1318 = vmatpush.bf16.msra.mxu0 %v1069
        %1319 = vmatpush.bf16.msra.mxu0 %v1061
        %1320 = vmatpush.bf16.msra.mxu0 %v1053
        %1321 = vmatpush.bf16.msra.mxu0 %v1045
        %1322 = vmatpush.bf16.msra.mxu0 %v1037
        %1323 = vmatpush.bf16.msra.mxu0 %v1029
        %1324 = vmatpush.bf16.msra.mxu0 %v1021
        %1325 = vmatpush.bf16.msra.mxu0 %v1013
        %1326 = vmatmul.bf16.gmra.mxu0 %v560
        %v1327 = vpop.f32.mrf.mxu0
        %v1328 = vadd.f32 %v1315, %v1327
        %v1329 = vpop.f32.mrf.mxu0
        %1330 = vdwg.mxu0
        %1331 = vmatpush.bf16.msra.mxu0 %v1006
        %1332 = vmatpush.bf16.msra.mxu0 %v998
        %1333 = vmatpush.bf16.msra.mxu0 %v990
        %1334 = vmatpush.bf16.msra.mxu0 %v982
        %1335 = vmatpush.bf16.msra.mxu0 %v974
        %1336 = vmatpush.bf16.msra.mxu0 %v966
        %1337 = vmatpush.bf16.msra.mxu0 %v958
        %1338 = vmatpush.bf16.msra.mxu0 %v950
        %1339 = vmatmul.bf16.gmra.mxu0 %v559
        %v1340 = vpop.f32.mrf.mxu0
        %v1341 = vadd.f32 0.0, %v1340
        %v1342 = vpop.f32.mrf.mxu0
        %1343 = vdwg.mxu0
        %1344 = vmatpush.bf16.msra.mxu0 %v1070
        %1345 = vmatpush.bf16.msra.mxu0 %v1062
        %1346 = vmatpush.bf16.msra.mxu0 %v1054
        %1347 = vmatpush.bf16.msra.mxu0 %v1046
        %1348 = vmatpush.bf16.msra.mxu0 %v1038
        %1349 = vmatpush.bf16.msra.mxu0 %v1030
        %1350 = vmatpush.bf16.msra.mxu0 %v1022
        %1351 = vmatpush.bf16.msra.mxu0 %v1014
        %1352 = vmatmul.bf16.gmra.mxu0 %v560
        %v1353 = vpop.f32.mrf.mxu0
        %v1354 = vadd.f32 %v1341, %v1353
        %v1355 = vpop.f32.mrf.mxu0
        %1356 = vdwg.mxu0
        %1357 = vmatpush.bf16.msra.mxu0 %v1007
        %1358 = vmatpush.bf16.msra.mxu0 %v999
        %1359 = vmatpush.bf16.msra.mxu0 %v991
        %1360 = vmatpush.bf16.msra.mxu0 %v983
        %1361 = vmatpush.bf16.msra.mxu0 %v975
        %1362 = vmatpush.bf16.msra.mxu0 %v967
        %1363 = vmatpush.bf16.msra.mxu0 %v959
        %1364 = vmatpush.bf16.msra.mxu0 %v951
        %1365 = vmatmul.bf16.gmra.mxu0 %v559
        %v1366 = vpop.f32.mrf.mxu0
        %v1367 = vadd.f32 0.0, %v1366
        %v1368 = vpop.f32.mrf.mxu0
        %1369 = vdwg.mxu0
        %1370 = vmatpush.bf16.msra.mxu0 %v1071
        %1371 = vmatpush.bf16.msra.mxu0 %v1063
        %1372 = vmatpush.bf16.msra.mxu0 %v1055
        %1373 = vmatpush.bf16.msra.mxu0 %v1047
        %1374 = vmatpush.bf16.msra.mxu0 %v1039
        %1375 = vmatpush.bf16.msra.mxu0 %v1031
        %1376 = vmatpush.bf16.msra.mxu0 %v1023
        %1377 = vmatpush.bf16.msra.mxu0 %v1015
        %1378 = vmatmul.bf16.gmra.mxu0 %v560
        %v1379 = vpop.f32.mrf.mxu0
        %v1380 = vadd.f32 %v1367, %v1379
        %v1381 = vpop.f32.mrf.mxu0
        %1382 = vdwg.mxu0
        %1383 = vmatpush.bf16.msra.mxu0 %v1008
        %1384 = vmatpush.bf16.msra.mxu0 %v1000
        %1385 = vmatpush.bf16.msra.mxu0 %v992
        %1386 = vmatpush.bf16.msra.mxu0 %v984
        %1387 = vmatpush.bf16.msra.mxu0 %v976
        %1388 = vmatpush.bf16.msra.mxu0 %v968
        %1389 = vmatpush.bf16.msra.mxu0 %v960
        %1390 = vmatpush.bf16.msra.mxu0 %v952
        %1391 = vmatmul.bf16.gmra.mxu0 %v559
        %v1392 = vpop.f32.mrf.mxu0
        %v1393 = vadd.f32 0.0, %v1392
        %v1394 = vpop.f32.mrf.mxu0
        %1395 = vdwg.mxu0
        %1396 = vmatpush.bf16.msra.mxu0 %v1072
        %1397 = vmatpush.bf16.msra.mxu0 %v1064
        %1398 = vmatpush.bf16.msra.mxu0 %v1056
        %1399 = vmatpush.bf16.msra.mxu0 %v1048
        %1400 = vmatpush.bf16.msra.mxu0 %v1040
        %1401 = vmatpush.bf16.msra.mxu0 %v1032
        %1402 = vmatpush.bf16.msra.mxu0 %v1024
        %1403 = vmatpush.bf16.msra.mxu0 %v1016
        %1404 = vmatmul.bf16.gmra.mxu0 %v560
        %v1405 = vpop.f32.mrf.mxu0
        %v1406 = vadd.f32 %v1393, %v1405
        %v1407 = vpop.f32.mrf.mxu0
        %1408 = vdwg.mxu0
        %v1417 = vrot.slane %v1250, 6
        %v1418 = vrot.slane %v1276, 4
        %v1419 = vrot.slane %v1302, 2
        %v1420 = vrot.slane %v1354, 6
        %v1421 = vrot.slane %v1380, 4
        %v1422 = vrot.slane %v1406, 2
        %vm1423 = vcmask 1041408
        %v1424 = vsel %vm1423, %v1224, %v1417
        %vm1425 = vcmask 1045508
        %v1426 = vsel %vm1425, %v1418, %v1419
        %vm1427 = vcmask 1043456
        %v1428 = vsel %vm1427, %v1424, %v1426
        %v1429 = vsel %vm1423, %v1328, %v1420
        %v1430 = vsel %vm1425, %v1421, %v1422
        %v1431 = vsel %vm1427, %v1429, %v1430
        %v1434 = vadd.f32 %v422, %v1428
        %v1435 = vadd.f32 %v423, %v1431
        %v1436 = vmul.f32 %v1434, 0.5
        %v1437 = vtanh.pop %v1436
        %v1438 = vmul.f32 %v1437, 0.5
        %v1439 = vadd.f32 %v1438, 0.5
        %v1441 = vrot.slane %v1434, 4
        %v1443 = vmul.f32 %v1441, 0.5
        %v1444 = vtanh.pop %v1443
        %v1445 = vmul.f32 %v1444, 0.5
        %v1446 = vadd.f32 %v1445, 0.5
        %v1447 = vtanh.pop %v1435
        %v1449 = vrot.slane %v1435, 4
        %v1451 = vmul.f32 %v1449, 0.5
        %v1452 = vtanh.pop %v1451
        %v1453 = vmul.f32 %v1452, 0.5
        %v1454 = vadd.f32 %v1453, 0.5
        %v1455 = vld [vmem:[#allocation3] sm:$0xf]
        %v1456 = vmul.f32 %v1446, %v1455
        %v1457 = vmul.f32 %v1439, %v1447
        %v1458 = vadd.f32 %v1456, %v1457
        %v1459 = vtanh.pop %v1458
        %v1460 = vmul.f32 %v1454, %v1459
        %1461 = vst [vmem:[#allocation3] sm:$0xf] %v1458
        %1462 = vst [vmem:[#allocation2] sm:$0xf] %v1460
        %1463 = vst [vmem:[%s402] sm:$0xf] %v1460
        %v1464 = vld [vmem:[%s392] sm:$0xff]
        %v1465 = vld [vmem:[%s392 + $0x8] sm:$0xff]
        %v1466 = vld [vmem:[%s308] sm:$0xff]
        %v1467 = vld [vmem:[%s308 + $0x8] sm:$0xff]
        %v1468 = vld [vmem:[%s308 + $0x10] sm:$0xff]
        %v1469 = vld [vmem:[%s308 + $0x18] sm:$0xff]
        %v1470 = vld [vmem:[%s308 + $0x20] sm:$0xff]
        %v1471 = vld [vmem:[%s308 + $0x28] sm:$0xff]
        %v1472 = vld [vmem:[%s308 + $0x30] sm:$0xff]
        %v1473 = vld [vmem:[%s308 + $0x38] sm:$0xff]
        %v1474 = vld [vmem:[%s308 + $0x40] sm:$0xff]
        %v1475 = vld [vmem:[%s308 + $0x48] sm:$0xff]
        %v1476 = vld [vmem:[%s308 + $0x50] sm:$0xff]
        %v1477 = vld [vmem:[%s308 + $0x58] sm:$0xff]
        %v1478 = vld [vmem:[%s308 + $0x60] sm:$0xff]
        %v1479 = vld [vmem:[%s308 + $0x68] sm:$0xff]
        %v1480 = vld [vmem:[%s308 + $0x70] sm:$0xff]
        %v1481 = vld [vmem:[%s308 + $0x78] sm:$0xff]
        %v1482 = vld [vmem:[%s308 + $0x80] sm:$0xff]
        %v1483 = vld [vmem:[%s308 + $0x88] sm:$0xff]
        %v1484 = vld [vmem:[%s308 + $0x90] sm:$0xff]
        %v1485 = vld [vmem:[%s308 + $0x98] sm:$0xff]
        %v1486 = vld [vmem:[%s308 + $0xa0] sm:$0xff]
        %v1487 = vld [vmem:[%s308 + $0xa8] sm:$0xff]
        %v1488 = vld [vmem:[%s308 + $0xb0] sm:$0xff]
        %v1489 = vld [vmem:[%s308 + $0xb8] sm:$0xff]
        %v1490 = vld [vmem:[%s308 + $0xc0] sm:$0xff]
        %v1491 = vld [vmem:[%s308 + $0xc8] sm:$0xff]
        %v1492 = vld [vmem:[%s308 + $0xd0] sm:$0xff]
        %v1493 = vld [vmem:[%s308 + $0xd8] sm:$0xff]
        %v1494 = vld [vmem:[%s308 + $0xe0] sm:$0xff]
        %v1495 = vld [vmem:[%s308 + $0xe8] sm:$0xff]
        %v1496 = vld [vmem:[%s308 + $0xf0] sm:$0xff]
        %v1497 = vld [vmem:[%s308 + $0xf8] sm:$0xff]
        %v1498 = vld [vmem:[%s308 + $0x100] sm:$0xff]
        %v1499 = vld [vmem:[%s308 + $0x108] sm:$0xff]
        %v1500 = vld [vmem:[%s308 + $0x110] sm:$0xff]
        %v1501 = vld [vmem:[%s308 + $0x118] sm:$0xff]
        %v1502 = vld [vmem:[%s308 + $0x120] sm:$0xff]
        %v1503 = vld [vmem:[%s308 + $0x128] sm:$0xff]
        %v1504 = vld [vmem:[%s308 + $0x130] sm:$0xff]
        %v1505 = vld [vmem:[%s308 + $0x138] sm:$0xff]
        %v1506 = vld [vmem:[%s308 + $0x140] sm:$0xff]
        %v1507 = vld [vmem:[%s308 + $0x148] sm:$0xff]
        %v1508 = vld [vmem:[%s308 + $0x150] sm:$0xff]
        %v1509 = vld [vmem:[%s308 + $0x158] sm:$0xff]
        %v1510 = vld [vmem:[%s308 + $0x160] sm:$0xff]
        %v1511 = vld [vmem:[%s308 + $0x168] sm:$0xff]
        %v1512 = vld [vmem:[%s308 + $0x170] sm:$0xff]
        %v1513 = vld [vmem:[%s308 + $0x178] sm:$0xff]
        %v1514 = vld [vmem:[%s308 + $0x180] sm:$0xff]
        %v1515 = vld [vmem:[%s308 + $0x188] sm:$0xff]
        %v1516 = vld [vmem:[%s308 + $0x190] sm:$0xff]
        %v1517 = vld [vmem:[%s308 + $0x198] sm:$0xff]
        %v1518 = vld [vmem:[%s308 + $0x1a0] sm:$0xff]
        %v1519 = vld [vmem:[%s308 + $0x1a8] sm:$0xff]
        %v1520 = vld [vmem:[%s308 + $0x1b0] sm:$0xff]
        %v1521 = vld [vmem:[%s308 + $0x1b8] sm:$0xff]
        %v1522 = vld [vmem:[%s308 + $0x1c0] sm:$0xff]
        %v1523 = vld [vmem:[%s308 + $0x1c8] sm:$0xff]
        %v1524 = vld [vmem:[%s308 + $0x1d0] sm:$0xff]
        %v1525 = vld [vmem:[%s308 + $0x1d8] sm:$0xff]
        %v1526 = vld [vmem:[%s308 + $0x1e0] sm:$0xff]
        %v1527 = vld [vmem:[%s308 + $0x1e8] sm:$0xff]
        %v1528 = vld [vmem:[%s308 + $0x1f0] sm:$0xff]
        %v1529 = vld [vmem:[%s308 + $0x1f8] sm:$0xff]
        %v1530 = vld [vmem:[%s308 + $0x200] sm:$0xff]
        %v1531 = vld [vmem:[%s308 + $0x208] sm:$0xff]
        %v1532 = vld [vmem:[%s308 + $0x210] sm:$0xff]
        %v1533 = vld [vmem:[%s308 + $0x218] sm:$0xff]
        %v1534 = vld [vmem:[%s308 + $0x220] sm:$0xff]
        %v1535 = vld [vmem:[%s308 + $0x228] sm:$0xff]
        %v1536 = vld [vmem:[%s308 + $0x230] sm:$0xff]
        %v1537 = vld [vmem:[%s308 + $0x238] sm:$0xff]
        %v1538 = vld [vmem:[%s308 + $0x240] sm:$0xff]
        %v1539 = vld [vmem:[%s308 + $0x248] sm:$0xff]
        %v1540 = vld [vmem:[%s308 + $0x250] sm:$0xff]
        %v1541 = vld [vmem:[%s308 + $0x258] sm:$0xff]
        %v1542 = vld [vmem:[%s308 + $0x260] sm:$0xff]
        %v1543 = vld [vmem:[%s308 + $0x268] sm:$0xff]
        %v1544 = vld [vmem:[%s308 + $0x270] sm:$0xff]
        %v1545 = vld [vmem:[%s308 + $0x278] sm:$0xff]
        %v1546 = vld [vmem:[%s308 + $0x280] sm:$0xff]
        %v1547 = vld [vmem:[%s308 + $0x288] sm:$0xff]
        %v1548 = vld [vmem:[%s308 + $0x290] sm:$0xff]
        %v1549 = vld [vmem:[%s308 + $0x298] sm:$0xff]
        %v1550 = vld [vmem:[%s308 + $0x2a0] sm:$0xff]
        %v1551 = vld [vmem:[%s308 + $0x2a8] sm:$0xff]
        %v1552 = vld [vmem:[%s308 + $0x2b0] sm:$0xff]
        %v1553 = vld [vmem:[%s308 + $0x2b8] sm:$0xff]
        %v1554 = vld [vmem:[%s308 + $0x2c0] sm:$0xff]
        %v1555 = vld [vmem:[%s308 + $0x2c8] sm:$0xff]
        %v1556 = vld [vmem:[%s308 + $0x2d0] sm:$0xff]
        %v1557 = vld [vmem:[%s308 + $0x2d8] sm:$0xff]
        %v1558 = vld [vmem:[%s308 + $0x2e0] sm:$0xff]
        %v1559 = vld [vmem:[%s308 + $0x2e8] sm:$0xff]
        %v1560 = vld [vmem:[%s308 + $0x2f0] sm:$0xff]
        %v1561 = vld [vmem:[%s308 + $0x2f8] sm:$0xff]
        %v1562 = vld [vmem:[%s308 + $0x300] sm:$0xff]
        %v1563 = vld [vmem:[%s308 + $0x308] sm:$0xff]
        %v1564 = vld [vmem:[%s308 + $0x310] sm:$0xff]
        %v1565 = vld [vmem:[%s308 + $0x318] sm:$0xff]
        %v1566 = vld [vmem:[%s308 + $0x320] sm:$0xff]
        %v1567 = vld [vmem:[%s308 + $0x328] sm:$0xff]
        %v1568 = vld [vmem:[%s308 + $0x330] sm:$0xff]
        %v1569 = vld [vmem:[%s308 + $0x338] sm:$0xff]
        %v1570 = vld [vmem:[%s308 + $0x340] sm:$0xff]
        %v1571 = vld [vmem:[%s308 + $0x348] sm:$0xff]
        %v1572 = vld [vmem:[%s308 + $0x350] sm:$0xff]
        %v1573 = vld [vmem:[%s308 + $0x358] sm:$0xff]
        %v1574 = vld [vmem:[%s308 + $0x360] sm:$0xff]
        %v1575 = vld [vmem:[%s308 + $0x368] sm:$0xff]
        %v1576 = vld [vmem:[%s308 + $0x370] sm:$0xff]
        %v1577 = vld [vmem:[%s308 + $0x378] sm:$0xff]
        %v1578 = vld [vmem:[%s308 + $0x380] sm:$0xff]
        %v1579 = vld [vmem:[%s308 + $0x388] sm:$0xff]
        %v1580 = vld [vmem:[%s308 + $0x390] sm:$0xff]
        %v1581 = vld [vmem:[%s308 + $0x398] sm:$0xff]
        %v1582 = vld [vmem:[%s308 + $0x3a0] sm:$0xff]
        %v1583 = vld [vmem:[%s308 + $0x3a8] sm:$0xff]
        %v1584 = vld [vmem:[%s308 + $0x3b0] sm:$0xff]
        %v1585 = vld [vmem:[%s308 + $0x3b8] sm:$0xff]
        %v1586 = vld [vmem:[%s308 + $0x3c0] sm:$0xff]
        %v1587 = vld [vmem:[%s308 + $0x3c8] sm:$0xff]
        %v1588 = vld [vmem:[%s308 + $0x3d0] sm:$0xff]
        %v1589 = vld [vmem:[%s308 + $0x3d8] sm:$0xff]
        %v1590 = vld [vmem:[%s308 + $0x3e0] sm:$0xff]
        %v1591 = vld [vmem:[%s308 + $0x3e8] sm:$0xff]
        %v1592 = vld [vmem:[%s308 + $0x3f0] sm:$0xff]
        %v1593 = vld [vmem:[%s308 + $0x3f8] sm:$0xff]
        %v1594 = vld [vmem:[#allocation4] sm:$0xf]
        %1596 = vst [vmem:[#allocation1] ss:$4 sm:$0xff] %v1594
        %v1597 = vld.sshfl [vmem:[#allocation1] sm:$0xff pattern:$0x73625140]
        %v1598 = vld.sshfl [vmem:[#allocation1 + $0x8] sm:$0xff pattern:$0x73625140]
        %v1601 = vpack.c.bf16 %v1597, %v1597
        %v1602 = vpack.c.bf16 %v1598, %v1598
        %v1731 = vunpack.c.l.b16 %v1466
        %v1732 = vunpack.c.h.b16 %v1466
        %v1733 = vunpack.c.l.b16 %v1467
        %v1734 = vunpack.c.h.b16 %v1467
        %v1735 = vunpack.c.l.b16 %v1468
        %v1736 = vunpack.c.h.b16 %v1468
        %v1737 = vunpack.c.l.b16 %v1469
        %v1738 = vunpack.c.h.b16 %v1469
        %v1739 = vunpack.c.l.b16 %v1470
        %v1740 = vunpack.c.h.b16 %v1470
        %v1741 = vunpack.c.l.b16 %v1471
        %v1742 = vunpack.c.h.b16 %v1471
        %v1743 = vunpack.c.l.b16 %v1472
        %v1744 = vunpack.c.h.b16 %v1472
        %v1745 = vunpack.c.l.b16 %v1473
        %v1746 = vunpack.c.h.b16 %v1473
        %v1747 = vunpack.c.l.b16 %v1474
        %v1748 = vunpack.c.h.b16 %v1474
        %v1749 = vunpack.c.l.b16 %v1475
        %v1750 = vunpack.c.h.b16 %v1475
        %v1751 = vunpack.c.l.b16 %v1476
        %v1752 = vunpack.c.h.b16 %v1476
        %v1753 = vunpack.c.l.b16 %v1477
        %v1754 = vunpack.c.h.b16 %v1477
        %v1755 = vunpack.c.l.b16 %v1478
        %v1756 = vunpack.c.h.b16 %v1478
        %v1757 = vunpack.c.l.b16 %v1479
        %v1758 = vunpack.c.h.b16 %v1479
        %v1759 = vunpack.c.l.b16 %v1480
        %v1760 = vunpack.c.h.b16 %v1480
        %v1761 = vunpack.c.l.b16 %v1481
        %v1762 = vunpack.c.h.b16 %v1481
        %v1763 = vunpack.c.l.b16 %v1482
        %v1764 = vunpack.c.h.b16 %v1482
        %v1765 = vunpack.c.l.b16 %v1483
        %v1766 = vunpack.c.h.b16 %v1483
        %v1767 = vunpack.c.l.b16 %v1484
        %v1768 = vunpack.c.h.b16 %v1484
        %v1769 = vunpack.c.l.b16 %v1485
        %v1770 = vunpack.c.h.b16 %v1485
        %v1771 = vunpack.c.l.b16 %v1486
        %v1772 = vunpack.c.h.b16 %v1486
        %v1773 = vunpack.c.l.b16 %v1487
        %v1774 = vunpack.c.h.b16 %v1487
        %v1775 = vunpack.c.l.b16 %v1488
        %v1776 = vunpack.c.h.b16 %v1488
        %v1777 = vunpack.c.l.b16 %v1489
        %v1778 = vunpack.c.h.b16 %v1489
        %v1779 = vunpack.c.l.b16 %v1490
        %v1780 = vunpack.c.h.b16 %v1490
        %v1781 = vunpack.c.l.b16 %v1491
        %v1782 = vunpack.c.h.b16 %v1491
        %v1783 = vunpack.c.l.b16 %v1492
        %v1784 = vunpack.c.h.b16 %v1492
        %v1785 = vunpack.c.l.b16 %v1493
        %v1786 = vunpack.c.h.b16 %v1493
        %v1787 = vunpack.c.l.b16 %v1494
        %v1788 = vunpack.c.h.b16 %v1494
        %v1789 = vunpack.c.l.b16 %v1495
        %v1790 = vunpack.c.h.b16 %v1495
        %v1791 = vunpack.c.l.b16 %v1496
        %v1792 = vunpack.c.h.b16 %v1496
        %v1793 = vunpack.c.l.b16 %v1497
        %v1794 = vunpack.c.h.b16 %v1497
        %v1795 = vunpack.c.l.b16 %v1498
        %v1796 = vunpack.c.h.b16 %v1498
        %v1797 = vunpack.c.l.b16 %v1499
        %v1798 = vunpack.c.h.b16 %v1499
        %v1799 = vunpack.c.l.b16 %v1500
        %v1800 = vunpack.c.h.b16 %v1500
        %v1801 = vunpack.c.l.b16 %v1501
        %v1802 = vunpack.c.h.b16 %v1501
        %v1803 = vunpack.c.l.b16 %v1502
        %v1804 = vunpack.c.h.b16 %v1502
        %v1805 = vunpack.c.l.b16 %v1503
        %v1806 = vunpack.c.h.b16 %v1503
        %v1807 = vunpack.c.l.b16 %v1504
        %v1808 = vunpack.c.h.b16 %v1504
        %v1809 = vunpack.c.l.b16 %v1505
        %v1810 = vunpack.c.h.b16 %v1505
        %v1811 = vunpack.c.l.b16 %v1506
        %v1812 = vunpack.c.h.b16 %v1506
        %v1813 = vunpack.c.l.b16 %v1507
        %v1814 = vunpack.c.h.b16 %v1507
        %v1815 = vunpack.c.l.b16 %v1508
        %v1816 = vunpack.c.h.b16 %v1508
        %v1817 = vunpack.c.l.b16 %v1509
        %v1818 = vunpack.c.h.b16 %v1509
        %v1819 = vunpack.c.l.b16 %v1510
        %v1820 = vunpack.c.h.b16 %v1510
        %v1821 = vunpack.c.l.b16 %v1511
        %v1822 = vunpack.c.h.b16 %v1511
        %v1823 = vunpack.c.l.b16 %v1512
        %v1824 = vunpack.c.h.b16 %v1512
        %v1825 = vunpack.c.l.b16 %v1513
        %v1826 = vunpack.c.h.b16 %v1513
        %v1827 = vunpack.c.l.b16 %v1514
        %v1828 = vunpack.c.h.b16 %v1514
        %v1829 = vunpack.c.l.b16 %v1515
        %v1830 = vunpack.c.h.b16 %v1515
        %v1831 = vunpack.c.l.b16 %v1516
        %v1832 = vunpack.c.h.b16 %v1516
        %v1833 = vunpack.c.l.b16 %v1517
        %v1834 = vunpack.c.h.b16 %v1517
        %v1835 = vunpack.c.l.b16 %v1518
        %v1836 = vunpack.c.h.b16 %v1518
        %v1837 = vunpack.c.l.b16 %v1519
        %v1838 = vunpack.c.h.b16 %v1519
        %v1839 = vunpack.c.l.b16 %v1520
        %v1840 = vunpack.c.h.b16 %v1520
        %v1841 = vunpack.c.l.b16 %v1521
        %v1842 = vunpack.c.h.b16 %v1521
        %v1843 = vunpack.c.l.b16 %v1522
        %v1844 = vunpack.c.h.b16 %v1522
        %v1845 = vunpack.c.l.b16 %v1523
        %v1846 = vunpack.c.h.b16 %v1523
        %v1847 = vunpack.c.l.b16 %v1524
        %v1848 = vunpack.c.h.b16 %v1524
        %v1849 = vunpack.c.l.b16 %v1525
        %v1850 = vunpack.c.h.b16 %v1525
        %v1851 = vunpack.c.l.b16 %v1526
        %v1852 = vunpack.c.h.b16 %v1526
        %v1853 = vunpack.c.l.b16 %v1527
        %v1854 = vunpack.c.h.b16 %v1527
        %v1855 = vunpack.c.l.b16 %v1528
        %v1856 = vunpack.c.h.b16 %v1528
        %v1857 = vunpack.c.l.b16 %v1529
        %v1858 = vunpack.c.h.b16 %v1529
        %v1859 = vunpack.c.l.b16 %v1530
        %v1860 = vunpack.c.h.b16 %v1530
        %v1861 = vunpack.c.l.b16 %v1531
        %v1862 = vunpack.c.h.b16 %v1531
        %v1863 = vunpack.c.l.b16 %v1532
        %v1864 = vunpack.c.h.b16 %v1532
        %v1865 = vunpack.c.l.b16 %v1533
        %v1866 = vunpack.c.h.b16 %v1533
        %v1867 = vunpack.c.l.b16 %v1534
        %v1868 = vunpack.c.h.b16 %v1534
        %v1869 = vunpack.c.l.b16 %v1535
        %v1870 = vunpack.c.h.b16 %v1535
        %v1871 = vunpack.c.l.b16 %v1536
        %v1872 = vunpack.c.h.b16 %v1536
        %v1873 = vunpack.c.l.b16 %v1537
        %v1874 = vunpack.c.h.b16 %v1537
        %v1875 = vunpack.c.l.b16 %v1538
        %v1876 = vunpack.c.h.b16 %v1538
        %v1877 = vunpack.c.l.b16 %v1539
        %v1878 = vunpack.c.h.b16 %v1539
        %v1879 = vunpack.c.l.b16 %v1540
        %v1880 = vunpack.c.h.b16 %v1540
        %v1881 = vunpack.c.l.b16 %v1541
        %v1882 = vunpack.c.h.b16 %v1541
        %v1883 = vunpack.c.l.b16 %v1542
        %v1884 = vunpack.c.h.b16 %v1542
        %v1885 = vunpack.c.l.b16 %v1543
        %v1886 = vunpack.c.h.b16 %v1543
        %v1887 = vunpack.c.l.b16 %v1544
        %v1888 = vunpack.c.h.b16 %v1544
        %v1889 = vunpack.c.l.b16 %v1545
        %v1890 = vunpack.c.h.b16 %v1545
        %v1891 = vunpack.c.l.b16 %v1546
        %v1892 = vunpack.c.h.b16 %v1546
        %v1893 = vunpack.c.l.b16 %v1547
        %v1894 = vunpack.c.h.b16 %v1547
        %v1895 = vunpack.c.l.b16 %v1548
        %v1896 = vunpack.c.h.b16 %v1548
        %v1897 = vunpack.c.l.b16 %v1549
        %v1898 = vunpack.c.h.b16 %v1549
        %v1899 = vunpack.c.l.b16 %v1550
        %v1900 = vunpack.c.h.b16 %v1550
        %v1901 = vunpack.c.l.b16 %v1551
        %v1902 = vunpack.c.h.b16 %v1551
        %v1903 = vunpack.c.l.b16 %v1552
        %v1904 = vunpack.c.h.b16 %v1552
        %v1905 = vunpack.c.l.b16 %v1553
        %v1906 = vunpack.c.h.b16 %v1553
        %v1907 = vunpack.c.l.b16 %v1554
        %v1908 = vunpack.c.h.b16 %v1554
        %v1909 = vunpack.c.l.b16 %v1555
        %v1910 = vunpack.c.h.b16 %v1555
        %v1911 = vunpack.c.l.b16 %v1556
        %v1912 = vunpack.c.h.b16 %v1556
        %v1913 = vunpack.c.l.b16 %v1557
        %v1914 = vunpack.c.h.b16 %v1557
        %v1915 = vunpack.c.l.b16 %v1558
        %v1916 = vunpack.c.h.b16 %v1558
        %v1917 = vunpack.c.l.b16 %v1559
        %v1918 = vunpack.c.h.b16 %v1559
        %v1919 = vunpack.c.l.b16 %v1560
        %v1920 = vunpack.c.h.b16 %v1560
        %v1921 = vunpack.c.l.b16 %v1561
        %v1922 = vunpack.c.h.b16 %v1561
        %v1923 = vunpack.c.l.b16 %v1562
        %v1924 = vunpack.c.h.b16 %v1562
        %v1925 = vunpack.c.l.b16 %v1563
        %v1926 = vunpack.c.h.b16 %v1563
        %v1927 = vunpack.c.l.b16 %v1564
        %v1928 = vunpack.c.h.b16 %v1564
        %v1929 = vunpack.c.l.b16 %v1565
        %v1930 = vunpack.c.h.b16 %v1565
        %v1931 = vunpack.c.l.b16 %v1566
        %v1932 = vunpack.c.h.b16 %v1566
        %v1933 = vunpack.c.l.b16 %v1567
        %v1934 = vunpack.c.h.b16 %v1567
        %v1935 = vunpack.c.l.b16 %v1568
        %v1936 = vunpack.c.h.b16 %v1568
        %v1937 = vunpack.c.l.b16 %v1569
        %v1938 = vunpack.c.h.b16 %v1569
        %v1939 = vunpack.c.l.b16 %v1570
        %v1940 = vunpack.c.h.b16 %v1570
        %v1941 = vunpack.c.l.b16 %v1571
        %v1942 = vunpack.c.h.b16 %v1571
        %v1943 = vunpack.c.l.b16 %v1572
        %v1944 = vunpack.c.h.b16 %v1572
        %v1945 = vunpack.c.l.b16 %v1573
        %v1946 = vunpack.c.h.b16 %v1573
        %v1947 = vunpack.c.l.b16 %v1574
        %v1948 = vunpack.c.h.b16 %v1574
        %v1949 = vunpack.c.l.b16 %v1575
        %v1950 = vunpack.c.h.b16 %v1575
        %v1951 = vunpack.c.l.b16 %v1576
        %v1952 = vunpack.c.h.b16 %v1576
        %v1953 = vunpack.c.l.b16 %v1577
        %v1954 = vunpack.c.h.b16 %v1577
        %v1955 = vunpack.c.l.b16 %v1578
        %v1956 = vunpack.c.h.b16 %v1578
        %v1957 = vunpack.c.l.b16 %v1579
        %v1958 = vunpack.c.h.b16 %v1579
        %v1959 = vunpack.c.l.b16 %v1580
        %v1960 = vunpack.c.h.b16 %v1580
        %v1961 = vunpack.c.l.b16 %v1581
        %v1962 = vunpack.c.h.b16 %v1581
        %v1963 = vunpack.c.l.b16 %v1582
        %v1964 = vunpack.c.h.b16 %v1582
        %v1965 = vunpack.c.l.b16 %v1583
        %v1966 = vunpack.c.h.b16 %v1583
        %v1967 = vunpack.c.l.b16 %v1584
        %v1968 = vunpack.c.h.b16 %v1584
        %v1969 = vunpack.c.l.b16 %v1585
        %v1970 = vunpack.c.h.b16 %v1585
        %v1971 = vunpack.c.l.b16 %v1586
        %v1972 = vunpack.c.h.b16 %v1586
        %v1973 = vunpack.c.l.b16 %v1587
        %v1974 = vunpack.c.h.b16 %v1587
        %v1975 = vunpack.c.l.b16 %v1588
        %v1976 = vunpack.c.h.b16 %v1588
        %v1977 = vunpack.c.l.b16 %v1589
        %v1978 = vunpack.c.h.b16 %v1589
        %v1979 = vunpack.c.l.b16 %v1590
        %v1980 = vunpack.c.h.b16 %v1590
        %v1981 = vunpack.c.l.b16 %v1591
        %v1982 = vunpack.c.h.b16 %v1591
        %v1983 = vunpack.c.l.b16 %v1592
        %v1984 = vunpack.c.h.b16 %v1592
        %v1985 = vunpack.c.l.b16 %v1593
        %v1986 = vunpack.c.h.b16 %v1593
        %v1987 = vpack.c.b16 %v1739, %v1731
        %v1988 = vpack.c.b16 %v1740, %v1732
        %v1989 = vpack.c.b16 %v1741, %v1733
        %v1990 = vpack.c.b16 %v1742, %v1734
        %v1991 = vpack.c.b16 %v1743, %v1735
        %v1992 = vpack.c.b16 %v1744, %v1736
        %v1993 = vpack.c.b16 %v1745, %v1737
        %v1994 = vpack.c.b16 %v1746, %v1738
        %v1995 = vpack.c.b16 %v1755, %v1747
        %v1996 = vpack.c.b16 %v1756, %v1748
        %v1997 = vpack.c.b16 %v1757, %v1749
        %v1998 = vpack.c.b16 %v1758, %v1750
        %v1999 = vpack.c.b16 %v1759, %v1751
        %v2000 = vpack.c.b16 %v1760, %v1752
        %v2001 = vpack.c.b16 %v1761, %v1753
        %v2002 = vpack.c.b16 %v1762, %v1754
        %v2003 = vpack.c.b16 %v1771, %v1763
        %v2004 = vpack.c.b16 %v1772, %v1764
        %v2005 = vpack.c.b16 %v1773, %v1765
        %v2006 = vpack.c.b16 %v1774, %v1766
        %v2007 = vpack.c.b16 %v1775, %v1767
        %v2008 = vpack.c.b16 %v1776, %v1768
        %v2009 = vpack.c.b16 %v1777, %v1769
        %v2010 = vpack.c.b16 %v1778, %v1770
        %v2011 = vpack.c.b16 %v1787, %v1779
        %v2012 = vpack.c.b16 %v1788, %v1780
        %v2013 = vpack.c.b16 %v1789, %v1781
        %v2014 = vpack.c.b16 %v1790, %v1782
        %v2015 = vpack.c.b16 %v1791, %v1783
        %v2016 = vpack.c.b16 %v1792, %v1784
        %v2017 = vpack.c.b16 %v1793, %v1785
        %v2018 = vpack.c.b16 %v1794, %v1786
        %v2019 = vpack.c.b16 %v1803, %v1795
        %v2020 = vpack.c.b16 %v1804, %v1796
        %v2021 = vpack.c.b16 %v1805, %v1797
        %v2022 = vpack.c.b16 %v1806, %v1798
        %v2023 = vpack.c.b16 %v1807, %v1799
        %v2024 = vpack.c.b16 %v1808, %v1800
        %v2025 = vpack.c.b16 %v1809, %v1801
        %v2026 = vpack.c.b16 %v1810, %v1802
        %v2027 = vpack.c.b16 %v1819, %v1811
        %v2028 = vpack.c.b16 %v1820, %v1812
        %v2029 = vpack.c.b16 %v1821, %v1813
        %v2030 = vpack.c.b16 %v1822, %v1814
        %v2031 = vpack.c.b16 %v1823, %v1815
        %v2032 = vpack.c.b16 %v1824, %v1816
        %v2033 = vpack.c.b16 %v1825, %v1817
        %v2034 = vpack.c.b16 %v1826, %v1818
        %v2035 = vpack.c.b16 %v1835, %v1827
        %v2036 = vpack.c.b16 %v1836, %v1828
        %v2037 = vpack.c.b16 %v1837, %v1829
        %v2038 = vpack.c.b16 %v1838, %v1830
        %v2039 = vpack.c.b16 %v1839, %v1831
        %v2040 = vpack.c.b16 %v1840, %v1832
        %v2041 = vpack.c.b16 %v1841, %v1833
        %v2042 = vpack.c.b16 %v1842, %v1834
        %v2043 = vpack.c.b16 %v1851, %v1843
        %v2044 = vpack.c.b16 %v1852, %v1844
        %v2045 = vpack.c.b16 %v1853, %v1845
        %v2046 = vpack.c.b16 %v1854, %v1846
        %v2047 = vpack.c.b16 %v1855, %v1847
        %v2048 = vpack.c.b16 %v1856, %v1848
        %v2049 = vpack.c.b16 %v1857, %v1849
        %v2050 = vpack.c.b16 %v1858, %v1850
        %v2051 = vpack.c.b16 %v1867, %v1859
        %v2052 = vpack.c.b16 %v1868, %v1860
        %v2053 = vpack.c.b16 %v1869, %v1861
        %v2054 = vpack.c.b16 %v1870, %v1862
        %v2055 = vpack.c.b16 %v1871, %v1863
        %v2056 = vpack.c.b16 %v1872, %v1864
        %v2057 = vpack.c.b16 %v1873, %v1865
        %v2058 = vpack.c.b16 %v1874, %v1866
        %v2059 = vpack.c.b16 %v1883, %v1875
        %v2060 = vpack.c.b16 %v1884, %v1876
        %v2061 = vpack.c.b16 %v1885, %v1877
        %v2062 = vpack.c.b16 %v1886, %v1878
        %v2063 = vpack.c.b16 %v1887, %v1879
        %v2064 = vpack.c.b16 %v1888, %v1880
        %v2065 = vpack.c.b16 %v1889, %v1881
        %v2066 = vpack.c.b16 %v1890, %v1882
        %v2067 = vpack.c.b16 %v1899, %v1891
        %v2068 = vpack.c.b16 %v1900, %v1892
        %v2069 = vpack.c.b16 %v1901, %v1893
        %v2070 = vpack.c.b16 %v1902, %v1894
        %v2071 = vpack.c.b16 %v1903, %v1895
        %v2072 = vpack.c.b16 %v1904, %v1896
        %v2073 = vpack.c.b16 %v1905, %v1897
        %v2074 = vpack.c.b16 %v1906, %v1898
        %v2075 = vpack.c.b16 %v1915, %v1907
        %v2076 = vpack.c.b16 %v1916, %v1908
        %v2077 = vpack.c.b16 %v1917, %v1909
        %v2078 = vpack.c.b16 %v1918, %v1910
        %v2079 = vpack.c.b16 %v1919, %v1911
        %v2080 = vpack.c.b16 %v1920, %v1912
        %v2081 = vpack.c.b16 %v1921, %v1913
        %v2082 = vpack.c.b16 %v1922, %v1914
        %v2083 = vpack.c.b16 %v1931, %v1923
        %v2084 = vpack.c.b16 %v1932, %v1924
        %v2085 = vpack.c.b16 %v1933, %v1925
        %v2086 = vpack.c.b16 %v1934, %v1926
        %v2087 = vpack.c.b16 %v1935, %v1927
        %v2088 = vpack.c.b16 %v1936, %v1928
        %v2089 = vpack.c.b16 %v1937, %v1929
        %v2090 = vpack.c.b16 %v1938, %v1930
        %v2091 = vpack.c.b16 %v1947, %v1939
        %v2092 = vpack.c.b16 %v1948, %v1940
        %v2093 = vpack.c.b16 %v1949, %v1941
        %v2094 = vpack.c.b16 %v1950, %v1942
        %v2095 = vpack.c.b16 %v1951, %v1943
        %v2096 = vpack.c.b16 %v1952, %v1944
        %v2097 = vpack.c.b16 %v1953, %v1945
        %v2098 = vpack.c.b16 %v1954, %v1946
        %v2099 = vpack.c.b16 %v1963, %v1955
        %v2100 = vpack.c.b16 %v1964, %v1956
        %v2101 = vpack.c.b16 %v1965, %v1957
        %v2102 = vpack.c.b16 %v1966, %v1958
        %v2103 = vpack.c.b16 %v1967, %v1959
        %v2104 = vpack.c.b16 %v1968, %v1960
        %v2105 = vpack.c.b16 %v1969, %v1961
        %v2106 = vpack.c.b16 %v1970, %v1962
        %v2107 = vpack.c.b16 %v1979, %v1971
        %v2108 = vpack.c.b16 %v1980, %v1972
        %v2109 = vpack.c.b16 %v1981, %v1973
        %v2110 = vpack.c.b16 %v1982, %v1974
        %v2111 = vpack.c.b16 %v1983, %v1975
        %v2112 = vpack.c.b16 %v1984, %v1976
        %v2113 = vpack.c.b16 %v1985, %v1977
        %v2114 = vpack.c.b16 %v1986, %v1978
        %2243 = vmatpush.bf16.msra.mxu0 %v2043
        %2244 = vmatpush.bf16.msra.mxu0 %v2035
        %2245 = vmatpush.bf16.msra.mxu0 %v2027
        %2246 = vmatpush.bf16.msra.mxu0 %v2019
        %2247 = vmatpush.bf16.msra.mxu0 %v2011
        %2248 = vmatpush.bf16.msra.mxu0 %v2003
        %2249 = vmatpush.bf16.msra.mxu0 %v1995
        %2250 = vmatpush.bf16.msra.mxu0 %v1987
        %2251 = vmatmul.bf16.gmra.mxu0 %v1601
        %v2252 = vpop.f32.mrf.mxu0
        %v2253 = vadd.f32 0.0, %v2252
        %v2254 = vpop.f32.mrf.mxu0
        %2255 = vdwg.mxu0
        %2256 = vmatpush.bf16.msra.mxu0 %v2107
        %2257 = vmatpush.bf16.msra.mxu0 %v2099
        %2258 = vmatpush.bf16.msra.mxu0 %v2091
        %2259 = vmatpush.bf16.msra.mxu0 %v2083
        %2260 = vmatpush.bf16.msra.mxu0 %v2075
        %2261 = vmatpush.bf16.msra.mxu0 %v2067
        %2262 = vmatpush.bf16.msra.mxu0 %v2059
        %2263 = vmatpush.bf16.msra.mxu0 %v2051
        %2264 = vmatmul.bf16.gmra.mxu0 %v1602
        %v2265 = vpop.f32.mrf.mxu0
        %v2266 = vadd.f32 %v2253, %v2265
        %v2267 = vpop.f32.mrf.mxu0
        %2268 = vdwg.mxu0
        %2269 = vmatpush.bf16.msra.mxu0 %v2044
        %2270 = vmatpush.bf16.msra.mxu0 %v2036
        %2271 = vmatpush.bf16.msra.mxu0 %v2028
        %2272 = vmatpush.bf16.msra.mxu0 %v2020
        %2273 = vmatpush.bf16.msra.mxu0 %v2012
        %2274 = vmatpush.bf16.msra.mxu0 %v2004
        %2275 = vmatpush.bf16.msra.mxu0 %v1996
        %2276 = vmatpush.bf16.msra.mxu0 %v1988
        %2277 = vmatmul.bf16.gmra.mxu0 %v1601
        %v2278 = vpop.f32.mrf.mxu0
        %v2279 = vadd.f32 0.0, %v2278
        %v2280 = vpop.f32.mrf.mxu0
        %2281 = vdwg.mxu0
        %2282 = vmatpush.bf16.msra.mxu0 %v2108
        %2283 = vmatpush.bf16.msra.mxu0 %v2100
        %2284 = vmatpush.bf16.msra.mxu0 %v2092
        %2285 = vmatpush.bf16.msra.mxu0 %v2084
        %2286 = vmatpush.bf16.msra.mxu0 %v2076
        %2287 = vmatpush.bf16.msra.mxu0 %v2068
        %2288 = vmatpush.bf16.msra.mxu0 %v2060
        %2289 = vmatpush.bf16.msra.mxu0 %v2052
        %2290 = vmatmul.bf16.gmra.mxu0 %v1602
        %v2291 = vpop.f32.mrf.mxu0
        %v2292 = vadd.f32 %v2279, %v2291
        %v2293 = vpop.f32.mrf.mxu0
        %2294 = vdwg.mxu0
        %2295 = vmatpush.bf16.msra.mxu0 %v2045
        %2296 = vmatpush.bf16.msra.mxu0 %v2037
        %2297 = vmatpush.bf16.msra.mxu0 %v2029
        %2298 = vmatpush.bf16.msra.mxu0 %v2021
        %2299 = vmatpush.bf16.msra.mxu0 %v2013
        %2300 = vmatpush.bf16.msra.mxu0 %v2005
        %2301 = vmatpush.bf16.msra.mxu0 %v1997
        %2302 = vmatpush.bf16.msra.mxu0 %v1989
        %2303 = vmatmul.bf16.gmra.mxu0 %v1601
        %v2304 = vpop.f32.mrf.mxu0
        %v2305 = vadd.f32 0.0, %v2304
        %v2306 = vpop.f32.mrf.mxu0
        %2307 = vdwg.mxu0
        %2308 = vmatpush.bf16.msra.mxu0 %v2109
        %2309 = vmatpush.bf16.msra.mxu0 %v2101
        %2310 = vmatpush.bf16.msra.mxu0 %v2093
        %2311 = vmatpush.bf16.msra.mxu0 %v2085
        %2312 = vmatpush.bf16.msra.mxu0 %v2077
        %2313 = vmatpush.bf16.msra.mxu0 %v2069
        %2314 = vmatpush.bf16.msra.mxu0 %v2061
        %2315 = vmatpush.bf16.msra.mxu0 %v2053
        %2316 = vmatmul.bf16.gmra.mxu0 %v1602
        %v2317 = vpop.f32.mrf.mxu0
        %v2318 = vadd.f32 %v2305, %v2317
        %v2319 = vpop.f32.mrf.mxu0
        %2320 = vdwg.mxu0
        %2321 = vmatpush.bf16.msra.mxu0 %v2046
        %2322 = vmatpush.bf16.msra.mxu0 %v2038
        %2323 = vmatpush.bf16.msra.mxu0 %v2030
        %2324 = vmatpush.bf16.msra.mxu0 %v2022
        %2325 = vmatpush.bf16.msra.mxu0 %v2014
        %2326 = vmatpush.bf16.msra.mxu0 %v2006
        %2327 = vmatpush.bf16.msra.mxu0 %v1998
        %2328 = vmatpush.bf16.msra.mxu0 %v1990
        %2329 = vmatmul.bf16.gmra.mxu0 %v1601
        %v2330 = vpop.f32.mrf.mxu0
        %v2331 = vadd.f32 0.0, %v2330
        %v2332 = vpop.f32.mrf.mxu0
        %2333 = vdwg.mxu0
        %2334 = vmatpush.bf16.msra.mxu0 %v2110
        %2335 = vmatpush.bf16.msra.mxu0 %v2102
        %2336 = vmatpush.bf16.msra.mxu0 %v2094
        %2337 = vmatpush.bf16.msra.mxu0 %v2086
        %2338 = vmatpush.bf16.msra.mxu0 %v2078
        %2339 = vmatpush.bf16.msra.mxu0 %v2070
        %2340 = vmatpush.bf16.msra.mxu0 %v2062
        %2341 = vmatpush.bf16.msra.mxu0 %v2054
        %2342 = vmatmul.bf16.gmra.mxu0 %v1602
        %v2343 = vpop.f32.mrf.mxu0
        %v2344 = vadd.f32 %v2331, %v2343
        %v2345 = vpop.f32.mrf.mxu0
        %2346 = vdwg.mxu0
        %2347 = vmatpush.bf16.msra.mxu0 %v2047
        %2348 = vmatpush.bf16.msra.mxu0 %v2039
        %2349 = vmatpush.bf16.msra.mxu0 %v2031
        %2350 = vmatpush.bf16.msra.mxu0 %v2023
        %2351 = vmatpush.bf16.msra.mxu0 %v2015
        %2352 = vmatpush.bf16.msra.mxu0 %v2007
        %2353 = vmatpush.bf16.msra.mxu0 %v1999
        %2354 = vmatpush.bf16.msra.mxu0 %v1991
        %2355 = vmatmul.bf16.gmra.mxu0 %v1601
        %v2356 = vpop.f32.mrf.mxu0
        %v2357 = vadd.f32 0.0, %v2356
        %v2358 = vpop.f32.mrf.mxu0
        %2359 = vdwg.mxu0
        %2360 = vmatpush.bf16.msra.mxu0 %v2111
        %2361 = vmatpush.bf16.msra.mxu0 %v2103
        %2362 = vmatpush.bf16.msra.mxu0 %v2095
        %2363 = vmatpush.bf16.msra.mxu0 %v2087
        %2364 = vmatpush.bf16.msra.mxu0 %v2079
        %2365 = vmatpush.bf16.msra.mxu0 %v2071
        %2366 = vmatpush.bf16.msra.mxu0 %v2063
        %2367 = vmatpush.bf16.msra.mxu0 %v2055
        %2368 = vmatmul.bf16.gmra.mxu0 %v1602
        %v2369 = vpop.f32.mrf.mxu0
        %v2370 = vadd.f32 %v2357, %v2369
        %v2371 = vpop.f32.mrf.mxu0
        %2372 = vdwg.mxu0
        %2373 = vmatpush.bf16.msra.mxu0 %v2048
        %2374 = vmatpush.bf16.msra.mxu0 %v2040
        %2375 = vmatpush.bf16.msra.mxu0 %v2032
        %2376 = vmatpush.bf16.msra.mxu0 %v2024
        %2377 = vmatpush.bf16.msra.mxu0 %v2016
        %2378 = vmatpush.bf16.msra.mxu0 %v2008
        %2379 = vmatpush.bf16.msra.mxu0 %v2000
        %2380 = vmatpush.bf16.msra.mxu0 %v1992
        %2381 = vmatmul.bf16.gmra.mxu0 %v1601
        %v2382 = vpop.f32.mrf.mxu0
        %v2383 = vadd.f32 0.0, %v2382
        %v2384 = vpop.f32.mrf.mxu0
        %2385 = vdwg.mxu0
        %2386 = vmatpush.bf16.msra.mxu0 %v2112
        %2387 = vmatpush.bf16.msra.mxu0 %v2104
        %2388 = vmatpush.bf16.msra.mxu0 %v2096
        %2389 = vmatpush.bf16.msra.mxu0 %v2088
        %2390 = vmatpush.bf16.msra.mxu0 %v2080
        %2391 = vmatpush.bf16.msra.mxu0 %v2072
        %2392 = vmatpush.bf16.msra.mxu0 %v2064
        %2393 = vmatpush.bf16.msra.mxu0 %v2056
        %2394 = vmatmul.bf16.gmra.mxu0 %v1602
        %v2395 = vpop.f32.mrf.mxu0
        %v2396 = vadd.f32 %v2383, %v2395
        %v2397 = vpop.f32.mrf.mxu0
        %2398 = vdwg.mxu0
        %2399 = vmatpush.bf16.msra.mxu0 %v2049
        %2400 = vmatpush.bf16.msra.mxu0 %v2041
        %2401 = vmatpush.bf16.msra.mxu0 %v2033
        %2402 = vmatpush.bf16.msra.mxu0 %v2025
        %2403 = vmatpush.bf16.msra.mxu0 %v2017
        %2404 = vmatpush.bf16.msra.mxu0 %v2009
        %2405 = vmatpush.bf16.msra.mxu0 %v2001
        %2406 = vmatpush.bf16.msra.mxu0 %v1993
        %2407 = vmatmul.bf16.gmra.mxu0 %v1601
        %v2408 = vpop.f32.mrf.mxu0
        %v2409 = vadd.f32 0.0, %v2408
        %v2410 = vpop.f32.mrf.mxu0
        %2411 = vdwg.mxu0
        %2412 = vmatpush.bf16.msra.mxu0 %v2113
        %2413 = vmatpush.bf16.msra.mxu0 %v2105
        %2414 = vmatpush.bf16.msra.mxu0 %v2097
        %2415 = vmatpush.bf16.msra.mxu0 %v2089
        %2416 = vmatpush.bf16.msra.mxu0 %v2081
        %2417 = vmatpush.bf16.msra.mxu0 %v2073
        %2418 = vmatpush.bf16.msra.mxu0 %v2065
        %2419 = vmatpush.bf16.msra.mxu0 %v2057
        %2420 = vmatmul.bf16.gmra.mxu0 %v1602
        %v2421 = vpop.f32.mrf.mxu0
        %v2422 = vadd.f32 %v2409, %v2421
        %v2423 = vpop.f32.mrf.mxu0
        %2424 = vdwg.mxu0
        %2425 = vmatpush.bf16.msra.mxu0 %v2050
        %2426 = vmatpush.bf16.msra.mxu0 %v2042
        %2427 = vmatpush.bf16.msra.mxu0 %v2034
        %2428 = vmatpush.bf16.msra.mxu0 %v2026
        %2429 = vmatpush.bf16.msra.mxu0 %v2018
        %2430 = vmatpush.bf16.msra.mxu0 %v2010
        %2431 = vmatpush.bf16.msra.mxu0 %v2002
        %2432 = vmatpush.bf16.msra.mxu0 %v1994
        %2433 = vmatmul.bf16.gmra.mxu0 %v1601
        %v2434 = vpop.f32.mrf.mxu0
        %v2435 = vadd.f32 0.0, %v2434
        %v2436 = vpop.f32.mrf.mxu0
        %2437 = vdwg.mxu0
        %2438 = vmatpush.bf16.msra.mxu0 %v2114
        %2439 = vmatpush.bf16.msra.mxu0 %v2106
        %2440 = vmatpush.bf16.msra.mxu0 %v2098
        %2441 = vmatpush.bf16.msra.mxu0 %v2090
        %2442 = vmatpush.bf16.msra.mxu0 %v2082
        %2443 = vmatpush.bf16.msra.mxu0 %v2074
        %2444 = vmatpush.bf16.msra.mxu0 %v2066
        %2445 = vmatpush.bf16.msra.mxu0 %v2058
        %2446 = vmatmul.bf16.gmra.mxu0 %v1602
        %v2447 = vpop.f32.mrf.mxu0
        %v2448 = vadd.f32 %v2435, %v2447
        %v2449 = vpop.f32.mrf.mxu0
        %2450 = vdwg.mxu0
        %v2459 = vrot.slane %v2292, 6
        %v2460 = vrot.slane %v2318, 4
        %v2461 = vrot.slane %v2344, 2
        %v2462 = vrot.slane %v2396, 6
        %v2463 = vrot.slane %v2422, 4
        %v2464 = vrot.slane %v2448, 2
        %v2465 = vsel %vm1423, %v2266, %v2459
        %v2466 = vsel %vm1425, %v2460, %v2461
        %v2467 = vsel %vm1427, %v2465, %v2466
        %v2468 = vsel %vm1423, %v2370, %v2462
        %v2469 = vsel %vm1425, %v2463, %v2464
        %v2470 = vsel %vm1427, %v2468, %v2469
        %v2473 = vadd.f32 %v1464, %v2467
        %v2474 = vadd.f32 %v1465, %v2470
        %v2475 = vmul.f32 %v2473, 0.5
        %v2476 = vtanh.pop %v2475
        %v2477 = vmul.f32 %v2476, 0.5
        %v2478 = vadd.f32 %v2477, 0.5
        %v2480 = vrot.slane %v2473, 4
        %v2482 = vmul.f32 %v2480, 0.5
        %v2483 = vtanh.pop %v2482
        %v2484 = vmul.f32 %v2483, 0.5
        %v2485 = vadd.f32 %v2484, 0.5
        %v2486 = vtanh.pop %v2474
        %v2488 = vrot.slane %v2474, 4
        %v2490 = vmul.f32 %v2488, 0.5
        %v2491 = vtanh.pop %v2490
        %v2492 = vmul.f32 %v2491, 0.5
        %v2493 = vadd.f32 %v2492, 0.5
        %v2494 = vld [vmem:[#allocation5] sm:$0xf]
        %v2495 = vmul.f32 %v2485, %v2494
        %v2496 = vmul.f32 %v2478, %v2486
        %v2497 = vadd.f32 %v2495, %v2496
        %v2498 = vtanh.pop %v2497
        %v2499 = vmul.f32 %v2493, %v2498
        %2500 = vst [vmem:[#allocation5] sm:$0xf] %v2497
        %2501 = vst [vmem:[#allocation4] sm:$0xf] %v2499
        %2502 = vst [vmem:[%s412] sm:$0xf] %v2499
        %p2503 = scmp.lt.s32.totalorder %s28, 6
        %s2504 = scalar_select %p2503, %s28, 6
        %p2505 = scmp.lt.s32.totalorder %s27, 1
        %s2506 = scalar_select %p2505, %s27, 1
        %s2507 = smul.addr %s2506, 2
        %s2508 = smul.addr %s2504, 4
        %s2509 = sadd.s32 %s2507, %s2508
        %s2510 = smul.addr %s2509, 2
        %s2511 = scalar_lea.vmem %s4, %s2510
        %s2512 = ssub.s32 6, %s28
        %p2513 = scmp.lt.s32.totalorder %s2512, 6
        %s2514 = scalar_select %p2513, %s2512, 6
        %p2515 = scmp.lt.s32.totalorder %s27, 1
        %s2516 = scalar_select %p2515, %s27, 1
        %s2517 = smul.addr %s2516, 2
        %s2518 = smul.addr %s2514, 4
        %s2519 = sadd.s32 %s2517, %s2518
        %s2520 = smul.addr %s2519, 2
        %s2521 = scalar_lea.vmem %s5, %s2520
        // Predicated region
        $region49: #{forward.9} parent=35 // pred_check
          %p2522 = pneg %p165
        $region50: #{forward.9} parent=35 // pred_check_branch
          %2524 = sbr.rel (%p2522) target = $region52
        $region51: #{forward.9} parent=35 // pred_region
          _
        $region52: #{forward.9} parent=35 // pred_fallthru
          _
        // Predicated region
        $region53: #{forward.9} parent=35 // pred_check
          %p2525 = pneg %p195
        $region54: #{forward.9} parent=35 // pred_check_branch
          %2527 = sbr.rel (%p2525) target = $region56
        $region55: #{forward.9} parent=35 // pred_region
          %s2528 = ssub.s32 6, %s28
        $region56: #{forward.9} parent=35 // pred_fallthru
          _
      $region36: #{forward.9} parent=5 // pred_fallthru
        _
      %p2529 = scmp.le.s32.totalorder 2, %s18
      // Predicated region
      $region57: #{forward.9} parent=5 // pred_check
        %p2530 = pneg %p2529
      $region58: #{forward.9} parent=5 // pred_check_branch
        %2532 = sbr.rel (%p2530) target = $region60
      $region59: #{forward.9} parent=5 // pred_region
        %s2533 = ssub.s32 %s18, 2
        // Predicated region
        $region61: #{forward.9} parent=59 // pred_check
          %p2534 = pneg %p171
        $region62: #{forward.9} parent=59 // pred_check_branch
          %2536 = sbr.rel (%p2534) target = $region64
        $region63: #{forward.9} parent=59 // pred_region
          %p2537 = scmp.lt.s32.totalorder %s30, 6
          %s2538 = scalar_select %p2537, %s30, 6
          %p2539 = scmp.lt.s32.totalorder %s29, 1
          %s2540 = scalar_select %p2539, %s29, 1
          %s2541 = smul.addr %s2540, 2
          %s2542 = smul.addr %s2538, 4
          %s2543 = sadd.s32 %s2541, %s2542
          %s2544 = smul.addr %s2543, 2
          %s2545 = scalar_lea.vmem %s4, %s2544
        $region64: #{forward.9} parent=59 // pred_fallthru
          _
        // Predicated region
        $region65: #{forward.9} parent=59 // pred_check
          %p2546 = pneg %p201
        $region66: #{forward.9} parent=59 // pred_check_branch
          %2548 = sbr.rel (%p2546) target = $region68
        $region67: #{forward.9} parent=59 // pred_region
          %s2549 = ssub.s32 6, %s30
          %p2550 = scmp.lt.s32.totalorder %s2549, 6
          %s2551 = scalar_select %p2550, %s2549, 6
          %p2552 = scmp.lt.s32.totalorder %s29, 1
          %s2553 = scalar_select %p2552, %s29, 1
          %s2554 = smul.addr %s2553, 2
          %s2555 = smul.addr %s2551, 4
          %s2556 = sadd.s32 %s2554, %s2555
          %s2557 = smul.addr %s2556, 2
          %s2558 = scalar_lea.vmem %s5, %s2557
        $region68: #{forward.9} parent=59 // pred_fallthru
          _
      $region60: #{forward.9} parent=5 // pred_fallthru
        _
    $region6: #{forward.9} parent=1 // loop_footer
      %s22 = sadd.s32 1, %s18
    $region7: #{forward.9} parent=1 // loop_footer_branch
      %17 = sbr.rel target = $region3
    $region8: #{forward.9} parent=1 // loop_exit
      _
    %2559 = vsyncpa [#allocation7], 1
    %s2560 = scalar_lea.sflag [#allocation7], 1
    %2561 = vsyncpa %s2560, 1
    %2562 = vsyncpa [#allocation9], 1
    %s2563 = scalar_lea.sflag [#allocation9], 1
    %2564 = vsyncpa %s2563, 1

// kernel: forward.12
$region0: #{forward.12}
  #allocation0 [shape = 'u32[]', space=smem, size = 0x4, offset = 0x4, fixed_abs, tag = 'smem constant byte address 0x4 - core index']
  #allocation1 [shape = 'u32[72,128]{1,0:T(1,128)}', space=vmem, size = 0x9000, scoped, tag = 'internal scratch']
  %s0 = inlined_call_operand.vmem [shape: f32[14,512], index: 0, kind: input, shape index: {}]
  %s1 = inlined_call_operand.hbm [shape: bf16[512,256], index: 1, kind: input, shape index: {}]
  %s2 = inlined_call_operand.hbm [shape: f32[1,256], index: 2, kind: input, shape index: {}]
  %s3 = inlined_call_operand.vmem [shape: bf16[256,4], index: 3, kind: input, shape index: {}]
  %s4 = inlined_call_operand.hbm [shape: f32[1,4], index: 4, kind: input, shape index: {}]
  %s5 = inlined_call_operand.vmem [shape: f32[14,4], index: 5, kind: output, shape index: {}]
  %s6 = sld [smem:[#allocation0]]
  $region42: #{forward.12} parent=0
    _
  %s8 = ssub.s32 1, %s6
  %s9 = scalar_select 0, %s8, %s6
  $region1: #{forward.12} parent=0
    #allocation2 [shape = 'u8[262144]{0}', space=vmem, size = 0x40000, scoped, tag = 'input window, operand 1, single buffered']
    #allocation3 [shape = 's32[1]{0}', space=sflag, size = 0x4, scoped, tag = 'scoped memory for forward.12']
    #allocation4 [shape = 'u8[1024]{0}', space=vmem, size = 0x400, scoped, tag = 'input window, operand 2, single buffered']
    #allocation5 [shape = 's32[1]{0}', space=sflag, size = 0x4, scoped, tag = 'scoped memory for forward.12']
    #allocation6 [shape = 'u8[512]{0}', space=vmem, size = 0x400, scoped, tag = 'input window, operand 4, single buffered']
    %10 = vsyncpa [#allocation3], 0
    %11 = vsyncpa [#allocation5], 0
    // Predicated region
    $region2: #{forward.12} parent=1 // pred_check
      _
    $region3: #{forward.12} parent=1 // pred_check_branch
      %13 = sbr.rel (0) target = $region5
    $region4: #{forward.12} parent=1 // pred_region
      _
    $region5: #{forward.12} parent=1 // pred_fallthru
      _
    // Predicated region
    $region6: #{forward.12} parent=1 // pred_check
      _
    $region7: #{forward.12} parent=1 // pred_check_branch
      %15 = sbr.rel (0) target = $region9
    $region8: #{forward.12} parent=1 // pred_region
      %17 = vsyncadd [#allocation3], 0
      %s18 = sshll.u32 %s1, 4
      %s19 = int_to_ptr.hbm [resolvable:$true] %s18
      %s20 = sshll.u32 [#allocation2], 4
      %s21 = int_to_ptr.vmem [resolvable:$true] %s20
      %26 = dma.hbm_to_vmem [thread:$0]  %s19, 8192, %s21, [#allocation3], 128, 128, 8
    $region9: #{forward.12} parent=1 // pred_fallthru
      _
    // Predicated region
    $region10: #{forward.12} parent=1 // pred_check
      _
    $region11: #{forward.12} parent=1 // pred_check_branch
      %28 = sbr.rel (0) target = $region13
    $region12: #{forward.12} parent=1 // pred_region
      %30 = vsyncadd [#allocation5], 0
      %s32 = sshll.u32 %s2, 4
      %s33 = int_to_ptr.hbm [resolvable:$true] %s32
      %s34 = sshll.u32 [#allocation4], 4
      %s35 = int_to_ptr.vmem [resolvable:$true] %s34
      %37 = dma.hbm_to_vmem [thread:$0]  %s33, 32, %s35, [#allocation5]
    $region13: #{forward.12} parent=1 // pred_fallthru
      _
    // Predicated region
    $region14: #{forward.12} parent=1 // pred_check
      _
    $region15: #{forward.12} parent=1 // pred_check_branch
      %39 = sbr.rel (0) target = $region17
    $region16: #{forward.12} parent=1 // pred_region
      _
    $region17: #{forward.12} parent=1 // pred_fallthru
      _
    // Predicated region
    $region18: #{forward.12} parent=1 // pred_check
      _
    $region19: #{forward.12} parent=1 // pred_check_branch
      %41 = sbr.rel (0) target = $region21
    $region20: #{forward.12} parent=1 // pred_region
      %43 = vsyncadd [#allocation5], 0
      %s45 = sshll.u32 %s4, 4
      %s46 = int_to_ptr.hbm [resolvable:$true] %s45
      %s47 = sshll.u32 [#allocation6], 4
      %s48 = int_to_ptr.vmem [resolvable:$true] %s47
      %50 = dma.hbm_to_vmem [thread:$0]  %s46, 16, %s48, [#allocation5]
    $region21: #{forward.12} parent=1 // pred_fallthru
      _
    // Predicated region
    $region22: #{forward.12} parent=1 // pred_check
      _
    $region23: #{forward.12} parent=1 // pred_check_branch
      %52 = sbr.rel (0) target = $region25
    $region24: #{forward.12} parent=1 // pred_region
      %54 = dma.done [#allocation3], 8192
    $region25: #{forward.12} parent=1 // pred_fallthru
      _
    // Predicated region
    $region26: #{forward.12} parent=1 // pred_check
      _
    $region27: #{forward.12} parent=1 // pred_check_branch
      %56 = sbr.rel (0) target = $region29
    $region28: #{forward.12} parent=1 // pred_region
      %58 = dma.done [#allocation5], 32
    $region29: #{forward.12} parent=1 // pred_fallthru
      _
    // Predicated region
    $region30: #{forward.12} parent=1 // pred_check
      _
    $region31: #{forward.12} parent=1 // pred_check_branch
      %60 = sbr.rel (0) target = $region33
    $region32: #{forward.12} parent=1 // pred_region
      %62 = dma.done [#allocation5], 16
    $region33: #{forward.12} parent=1 // pred_fallthru
      _
    %v63 = vld [vmem:[%s0] sm:$0xff]
    %v64 = vld [vmem:[%s0 + $0x8] sm:$0xff]
    %v65 = vld [vmem:[%s0 + $0x10] sm:$0xff]
    %v66 = vld [vmem:[%s0 + $0x18] sm:$0xff]
    %v67 = vld [vmem:[%s0 + $0x20] sm:$0x3f]
    %v68 = vld [vmem:[%s0 + $0x28] sm:$0x3f]
    %v69 = vld [vmem:[%s0 + $0x30] sm:$0x3f]
    %v70 = vld [vmem:[%s0 + $0x38] sm:$0x3f]
    %v71 = vpack.c.bf16 %v67, %v63
    %v72 = vpack.c.bf16 %v68, %v64
    %v73 = vpack.c.bf16 %v69, %v65
    %v74 = vpack.c.bf16 %v70, %v66
    %v75 = vld [vmem:[#allocation2] sm:$0xff]
    %v76 = vld [vmem:[#allocation2 + $0x8] sm:$0xff]
    %v77 = vld [vmem:[#allocation2 + $0x10] sm:$0xff]
    %v78 = vld [vmem:[#allocation2 + $0x18] sm:$0xff]
    %v79 = vld [vmem:[#allocation2 + $0x20] sm:$0xff]
    %v80 = vld [vmem:[#allocation2 + $0x28] sm:$0xff]
    %v81 = vld [vmem:[#allocation2 + $0x30] sm:$0xff]
    %v82 = vld [vmem:[#allocation2 + $0x38] sm:$0xff]
    %v83 = vld [vmem:[#allocation2 + $0x40] sm:$0xff]
    %v84 = vld [vmem:[#allocation2 + $0x48] sm:$0xff]
    %v85 = vld [vmem:[#allocation2 + $0x50] sm:$0xff]
    %v86 = vld [vmem:[#allocation2 + $0x58] sm:$0xff]
    %v87 = vld [vmem:[#allocation2 + $0x60] sm:$0xff]
    %v88 = vld [vmem:[#allocation2 + $0x68] sm:$0xff]
    %v89 = vld [vmem:[#allocation2 + $0x70] sm:$0xff]
    %v90 = vld [vmem:[#allocation2 + $0x78] sm:$0xff]
    %v91 = vld [vmem:[#allocation2 + $0x80] sm:$0xff]
    %v92 = vld [vmem:[#allocation2 + $0x88] sm:$0xff]
    %v93 = vld [vmem:[#allocation2 + $0x90] sm:$0xff]
    %v94 = vld [vmem:[#allocation2 + $0x98] sm:$0xff]
    %v95 = vld [vmem:[#allocation2 + $0xa0] sm:$0xff]
    %v96 = vld [vmem:[#allocation2 + $0xa8] sm:$0xff]
    %v97 = vld [vmem:[#allocation2 + $0xb0] sm:$0xff]
    %v98 = vld [vmem:[#allocation2 + $0xb8] sm:$0xff]
    %v99 = vld [vmem:[#allocation2 + $0xc0] sm:$0xff]
    %v100 = vld [vmem:[#allocation2 + $0xc8] sm:$0xff]
    %v101 = vld [vmem:[#allocation2 + $0xd0] sm:$0xff]
    %v102 = vld [vmem:[#allocation2 + $0xd8] sm:$0xff]
    %v103 = vld [vmem:[#allocation2 + $0xe0] sm:$0xff]
    %v104 = vld [vmem:[#allocation2 + $0xe8] sm:$0xff]
    %v105 = vld [vmem:[#allocation2 + $0xf0] sm:$0xff]
    %v106 = vld [vmem:[#allocation2 + $0xf8] sm:$0xff]
    %v107 = vld [vmem:[#allocation2 + $0x100] sm:$0xff]
    %v108 = vld [vmem:[#allocation2 + $0x108] sm:$0xff]
    %v109 = vld [vmem:[#allocation2 + $0x110] sm:$0xff]
    %v110 = vld [vmem:[#allocation2 + $0x118] sm:$0xff]
    %v111 = vld [vmem:[#allocation2 + $0x120] sm:$0xff]
    %v112 = vld [vmem:[#allocation2 + $0x128] sm:$0xff]
    %v113 = vld [vmem:[#allocation2 + $0x130] sm:$0xff]
    %v114 = vld [vmem:[#allocation2 + $0x138] sm:$0xff]
    %v115 = vld [vmem:[#allocation2 + $0x140] sm:$0xff]
    %v116 = vld [vmem:[#allocation2 + $0x148] sm:$0xff]
    %v117 = vld [vmem:[#allocation2 + $0x150] sm:$0xff]
    %v118 = vld [vmem:[#allocation2 + $0x158] sm:$0xff]
    %v119 = vld [vmem:[#allocation2 + $0x160] sm:$0xff]
    %v120 = vld [vmem:[#allocation2 + $0x168] sm:$0xff]
    %v121 = vld [vmem:[#allocation2 + $0x170] sm:$0xff]
    %v122 = vld [vmem:[#allocation2 + $0x178] sm:$0xff]
    %v123 = vld [vmem:[#allocation2 + $0x180] sm:$0xff]
    %v124 = vld [vmem:[#allocation2 + $0x188] sm:$0xff]
    %v125 = vld [vmem:[#allocation2 + $0x190] sm:$0xff]
    %v126 = vld [vmem:[#allocation2 + $0x198] sm:$0xff]
    %v127 = vld [vmem:[#allocation2 + $0x1a0] sm:$0xff]
    %v128 = vld [vmem:[#allocation2 + $0x1a8] sm:$0xff]
    %v129 = vld [vmem:[#allocation2 + $0x1b0] sm:$0xff]
    %v130 = vld [vmem:[#allocation2 + $0x1b8] sm:$0xff]
    %v131 = vld [vmem:[#allocation2 + $0x1c0] sm:$0xff]
    %v132 = vld [vmem:[#allocation2 + $0x1c8] sm:$0xff]
    %v133 = vld [vmem:[#allocation2 + $0x1d0] sm:$0xff]
    %v134 = vld [vmem:[#allocation2 + $0x1d8] sm:$0xff]
    %v135 = vld [vmem:[#allocation2 + $0x1e0] sm:$0xff]
    %v136 = vld [vmem:[#allocation2 + $0x1e8] sm:$0xff]
    %v137 = vld [vmem:[#allocation2 + $0x1f0] sm:$0xff]
    %v138 = vld [vmem:[#allocation2 + $0x1f8] sm:$0xff]
    %v139 = vld [vmem:[#allocation4] sm:$0x3]
    %v141 = vperm.slane %v139, 0
    %v142 = vperm.slane %v139, 1
    %v209 = vunpack.c.l.b16 %v75
    %v210 = vunpack.c.h.b16 %v75
    %v211 = vunpack.c.l.b16 %v76
    %v212 = vunpack.c.h.b16 %v76
    %v213 = vunpack.c.l.b16 %v77
    %v214 = vunpack.c.h.b16 %v77
    %v215 = vunpack.c.l.b16 %v78
    %v216 = vunpack.c.h.b16 %v78
    %v217 = vunpack.c.l.b16 %v79
    %v218 = vunpack.c.h.b16 %v79
    %v219 = vunpack.c.l.b16 %v80
    %v220 = vunpack.c.h.b16 %v80
    %v221 = vunpack.c.l.b16 %v81
    %v222 = vunpack.c.h.b16 %v81
    %v223 = vunpack.c.l.b16 %v82
    %v224 = vunpack.c.h.b16 %v82
    %v225 = vunpack.c.l.b16 %v83
    %v226 = vunpack.c.h.b16 %v83
    %v227 = vunpack.c.l.b16 %v84
    %v228 = vunpack.c.h.b16 %v84
    %v229 = vunpack.c.l.b16 %v85
    %v230 = vunpack.c.h.b16 %v85
    %v231 = vunpack.c.l.b16 %v86
    %v232 = vunpack.c.h.b16 %v86
    %v233 = vunpack.c.l.b16 %v87
    %v234 = vunpack.c.h.b16 %v87
    %v235 = vunpack.c.l.b16 %v88
    %v236 = vunpack.c.h.b16 %v88
    %v237 = vunpack.c.l.b16 %v89
    %v238 = vunpack.c.h.b16 %v89
    %v239 = vunpack.c.l.b16 %v90
    %v240 = vunpack.c.h.b16 %v90
    %v241 = vunpack.c.l.b16 %v91
    %v242 = vunpack.c.h.b16 %v91
    %v243 = vunpack.c.l.b16 %v92
    %v244 = vunpack.c.h.b16 %v92
    %v245 = vunpack.c.l.b16 %v93
    %v246 = vunpack.c.h.b16 %v93
    %v247 = vunpack.c.l.b16 %v94
    %v248 = vunpack.c.h.b16 %v94
    %v249 = vunpack.c.l.b16 %v95
    %v250 = vunpack.c.h.b16 %v95
    %v251 = vunpack.c.l.b16 %v96
    %v252 = vunpack.c.h.b16 %v96
    %v253 = vunpack.c.l.b16 %v97
    %v254 = vunpack.c.h.b16 %v97
    %v255 = vunpack.c.l.b16 %v98
    %v256 = vunpack.c.h.b16 %v98
    %v257 = vunpack.c.l.b16 %v99
    %v258 = vunpack.c.h.b16 %v99
    %v259 = vunpack.c.l.b16 %v100
    %v260 = vunpack.c.h.b16 %v100
    %v261 = vunpack.c.l.b16 %v101
    %v262 = vunpack.c.h.b16 %v101
    %v263 = vunpack.c.l.b16 %v102
    %v264 = vunpack.c.h.b16 %v102
    %v265 = vunpack.c.l.b16 %v103
    %v266 = vunpack.c.h.b16 %v103
    %v267 = vunpack.c.l.b16 %v104
    %v268 = vunpack.c.h.b16 %v104
    %v269 = vunpack.c.l.b16 %v105
    %v270 = vunpack.c.h.b16 %v105
    %v271 = vunpack.c.l.b16 %v106
    %v272 = vunpack.c.h.b16 %v106
    %v273 = vunpack.c.l.b16 %v107
    %v274 = vunpack.c.h.b16 %v107
    %v275 = vunpack.c.l.b16 %v108
    %v276 = vunpack.c.h.b16 %v108
    %v277 = vunpack.c.l.b16 %v109
    %v278 = vunpack.c.h.b16 %v109
    %v279 = vunpack.c.l.b16 %v110
    %v280 = vunpack.c.h.b16 %v110
    %v281 = vunpack.c.l.b16 %v111
    %v282 = vunpack.c.h.b16 %v111
    %v283 = vunpack.c.l.b16 %v112
    %v284 = vunpack.c.h.b16 %v112
    %v285 = vunpack.c.l.b16 %v113
    %v286 = vunpack.c.h.b16 %v113
    %v287 = vunpack.c.l.b16 %v114
    %v288 = vunpack.c.h.b16 %v114
    %v289 = vunpack.c.l.b16 %v115
    %v290 = vunpack.c.h.b16 %v115
    %v291 = vunpack.c.l.b16 %v116
    %v292 = vunpack.c.h.b16 %v116
    %v293 = vunpack.c.l.b16 %v117
    %v294 = vunpack.c.h.b16 %v117
    %v295 = vunpack.c.l.b16 %v118
    %v296 = vunpack.c.h.b16 %v118
    %v297 = vunpack.c.l.b16 %v119
    %v298 = vunpack.c.h.b16 %v119
    %v299 = vunpack.c.l.b16 %v120
    %v300 = vunpack.c.h.b16 %v120
    %v301 = vunpack.c.l.b16 %v121
    %v302 = vunpack.c.h.b16 %v121
    %v303 = vunpack.c.l.b16 %v122
    %v304 = vunpack.c.h.b16 %v122
    %v305 = vunpack.c.l.b16 %v123
    %v306 = vunpack.c.h.b16 %v123
    %v307 = vunpack.c.l.b16 %v124
    %v308 = vunpack.c.h.b16 %v124
    %v309 = vunpack.c.l.b16 %v125
    %v310 = vunpack.c.h.b16 %v125
    %v311 = vunpack.c.l.b16 %v126
    %v312 = vunpack.c.h.b16 %v126
    %v313 = vunpack.c.l.b16 %v127
    %v314 = vunpack.c.h.b16 %v127
    %v315 = vunpack.c.l.b16 %v128
    %v316 = vunpack.c.h.b16 %v128
    %v317 = vunpack.c.l.b16 %v129
    %v318 = vunpack.c.h.b16 %v129
    %v319 = vunpack.c.l.b16 %v130
    %v320 = vunpack.c.h.b16 %v130
    %v321 = vunpack.c.l.b16 %v131
    %v322 = vunpack.c.h.b16 %v131
    %v323 = vunpack.c.l.b16 %v132
    %v324 = vunpack.c.h.b16 %v132
    %v325 = vunpack.c.l.b16 %v133
    %v326 = vunpack.c.h.b16 %v133
    %v327 = vunpack.c.l.b16 %v134
    %v328 = vunpack.c.h.b16 %v134
    %v329 = vunpack.c.l.b16 %v135
    %v330 = vunpack.c.h.b16 %v135
    %v331 = vunpack.c.l.b16 %v136
    %v332 = vunpack.c.h.b16 %v136
    %v333 = vunpack.c.l.b16 %v137
    %v334 = vunpack.c.h.b16 %v137
    %v335 = vunpack.c.l.b16 %v138
    %v336 = vunpack.c.h.b16 %v138
    %v337 = vpack.c.b16 %v211, %v209
    %v338 = vpack.c.b16 %v212, %v210
    %v339 = vpack.c.b16 %v215, %v213
    %v340 = vpack.c.b16 %v216, %v214
    %v341 = vpack.c.b16 %v219, %v217
    %v342 = vpack.c.b16 %v220, %v218
    %v343 = vpack.c.b16 %v223, %v221
    %v344 = vpack.c.b16 %v224, %v222
    %v345 = vpack.c.b16 %v227, %v225
    %v346 = vpack.c.b16 %v228, %v226
    %v347 = vpack.c.b16 %v231, %v229
    %v348 = vpack.c.b16 %v232, %v230
    %v349 = vpack.c.b16 %v235, %v233
    %v350 = vpack.c.b16 %v236, %v234
    %v351 = vpack.c.b16 %v239, %v237
    %v352 = vpack.c.b16 %v240, %v238
    %v353 = vpack.c.b16 %v243, %v241
    %v354 = vpack.c.b16 %v244, %v242
    %v355 = vpack.c.b16 %v247, %v245
    %v356 = vpack.c.b16 %v248, %v246
    %v357 = vpack.c.b16 %v251, %v249
    %v358 = vpack.c.b16 %v252, %v250
    %v359 = vpack.c.b16 %v255, %v253
    %v360 = vpack.c.b16 %v256, %v254
    %v361 = vpack.c.b16 %v259, %v257
    %v362 = vpack.c.b16 %v260, %v258
    %v363 = vpack.c.b16 %v263, %v261
    %v364 = vpack.c.b16 %v264, %v262
    %v365 = vpack.c.b16 %v267, %v265
    %v366 = vpack.c.b16 %v268, %v266
    %v367 = vpack.c.b16 %v271, %v269
    %v368 = vpack.c.b16 %v272, %v270
    %v369 = vpack.c.b16 %v275, %v273
    %v370 = vpack.c.b16 %v276, %v274
    %v371 = vpack.c.b16 %v279, %v277
    %v372 = vpack.c.b16 %v280, %v278
    %v373 = vpack.c.b16 %v283, %v281
    %v374 = vpack.c.b16 %v284, %v282
    %v375 = vpack.c.b16 %v287, %v285
    %v376 = vpack.c.b16 %v288, %v286
    %v377 = vpack.c.b16 %v291, %v289
    %v378 = vpack.c.b16 %v292, %v290
    %v379 = vpack.c.b16 %v295, %v293
    %v380 = vpack.c.b16 %v296, %v294
    %v381 = vpack.c.b16 %v299, %v297
    %v382 = vpack.c.b16 %v300, %v298
    %v383 = vpack.c.b16 %v303, %v301
    %v384 = vpack.c.b16 %v304, %v302
    %v385 = vpack.c.b16 %v307, %v305
    %v386 = vpack.c.b16 %v308, %v306
    %v387 = vpack.c.b16 %v311, %v309
    %v388 = vpack.c.b16 %v312, %v310
    %v389 = vpack.c.b16 %v315, %v313
    %v390 = vpack.c.b16 %v316, %v314
    %v391 = vpack.c.b16 %v319, %v317
    %v392 = vpack.c.b16 %v320, %v318
    %v393 = vpack.c.b16 %v323, %v321
    %v394 = vpack.c.b16 %v324, %v322
    %v395 = vpack.c.b16 %v327, %v325
    %v396 = vpack.c.b16 %v328, %v326
    %v397 = vpack.c.b16 %v331, %v329
    %v398 = vpack.c.b16 %v332, %v330
    %v399 = vpack.c.b16 %v335, %v333
    %v400 = vpack.c.b16 %v336, %v334
    %465 = vmatpush.bf16.msra.mxu0 %v351
    %466 = vmatpush.bf16.msra.mxu0 %v349
    %467 = vmatpush.bf16.msra.mxu0 %v347
    %468 = vmatpush.bf16.msra.mxu0 %v345
    %469 = vmatpush.bf16.msra.mxu0 %v343
    %470 = vmatpush.bf16.msra.mxu0 %v341
    %471 = vmatpush.bf16.msra.mxu0 %v339
    %472 = vmatpush.bf16.msra.mxu0 %v337
    %473 = vmatmul.bf16.gmra.mxu0 %v71
    %v474 = vpop.f32.mrf.mxu0
    %v475 = vadd.f32 %v141, %v474
    %v476 = vpop.f32.mrf.mxu0
    %v477 = vadd.f32 %v141, %v476
    %478 = vdwg.mxu0
    %479 = vmatpush.bf16.msra.mxu0 %v367
    %480 = vmatpush.bf16.msra.mxu0 %v365
    %481 = vmatpush.bf16.msra.mxu0 %v363
    %482 = vmatpush.bf16.msra.mxu0 %v361
    %483 = vmatpush.bf16.msra.mxu0 %v359
    %484 = vmatpush.bf16.msra.mxu0 %v357
    %485 = vmatpush.bf16.msra.mxu0 %v355
    %486 = vmatpush.bf16.msra.mxu0 %v353
    %487 = vmatmul.bf16.gmra.mxu0 %v72
    %v488 = vpop.f32.mrf.mxu0
    %v489 = vadd.f32 %v475, %v488
    %v490 = vpop.f32.mrf.mxu0
    %v491 = vadd.f32 %v477, %v490
    %492 = vdwg.mxu0
    %493 = vmatpush.bf16.msra.mxu0 %v383
    %494 = vmatpush.bf16.msra.mxu0 %v381
    %495 = vmatpush.bf16.msra.mxu0 %v379
    %496 = vmatpush.bf16.msra.mxu0 %v377
    %497 = vmatpush.bf16.msra.mxu0 %v375
    %498 = vmatpush.bf16.msra.mxu0 %v373
    %499 = vmatpush.bf16.msra.mxu0 %v371
    %500 = vmatpush.bf16.msra.mxu0 %v369
    %501 = vmatmul.bf16.gmra.mxu0 %v73
    %v502 = vpop.f32.mrf.mxu0
    %v503 = vadd.f32 %v489, %v502
    %v504 = vpop.f32.mrf.mxu0
    %v505 = vadd.f32 %v491, %v504
    %506 = vdwg.mxu0
    %507 = vmatpush.bf16.msra.mxu0 %v399
    %508 = vmatpush.bf16.msra.mxu0 %v397
    %509 = vmatpush.bf16.msra.mxu0 %v395
    %510 = vmatpush.bf16.msra.mxu0 %v393
    %511 = vmatpush.bf16.msra.mxu0 %v391
    %512 = vmatpush.bf16.msra.mxu0 %v389
    %513 = vmatpush.bf16.msra.mxu0 %v387
    %514 = vmatpush.bf16.msra.mxu0 %v385
    %515 = vmatmul.bf16.gmra.mxu0 %v74
    %v516 = vpop.f32.mrf.mxu0
    %v517 = vadd.f32 %v503, %v516
    %v518 = vpop.f32.mrf.mxu0
    %v519 = vadd.f32 %v505, %v518
    %520 = vdwg.mxu0
    %521 = vmatpush.bf16.msra.mxu0 %v352
    %522 = vmatpush.bf16.msra.mxu0 %v350
    %523 = vmatpush.bf16.msra.mxu0 %v348
    %524 = vmatpush.bf16.msra.mxu0 %v346
    %525 = vmatpush.bf16.msra.mxu0 %v344
    %526 = vmatpush.bf16.msra.mxu0 %v342
    %527 = vmatpush.bf16.msra.mxu0 %v340
    %528 = vmatpush.bf16.msra.mxu0 %v338
    %529 = vmatmul.bf16.gmra.mxu0 %v71
    %v530 = vpop.f32.mrf.mxu0
    %v531 = vadd.f32 %v142, %v530
    %v532 = vpop.f32.mrf.mxu0
    %v533 = vadd.f32 %v142, %v532
    %534 = vdwg.mxu0
    %535 = vmatpush.bf16.msra.mxu0 %v368
    %536 = vmatpush.bf16.msra.mxu0 %v366
    %537 = vmatpush.bf16.msra.mxu0 %v364
    %538 = vmatpush.bf16.msra.mxu0 %v362
    %539 = vmatpush.bf16.msra.mxu0 %v360
    %540 = vmatpush.bf16.msra.mxu0 %v358
    %541 = vmatpush.bf16.msra.mxu0 %v356
    %542 = vmatpush.bf16.msra.mxu0 %v354
    %543 = vmatmul.bf16.gmra.mxu0 %v72
    %v544 = vpop.f32.mrf.mxu0
    %v545 = vadd.f32 %v531, %v544
    %v546 = vpop.f32.mrf.mxu0
    %v547 = vadd.f32 %v533, %v546
    %548 = vdwg.mxu0
    %549 = vmatpush.bf16.msra.mxu0 %v384
    %550 = vmatpush.bf16.msra.mxu0 %v382
    %551 = vmatpush.bf16.msra.mxu0 %v380
    %552 = vmatpush.bf16.msra.mxu0 %v378
    %553 = vmatpush.bf16.msra.mxu0 %v376
    %554 = vmatpush.bf16.msra.mxu0 %v374
    %555 = vmatpush.bf16.msra.mxu0 %v372
    %556 = vmatpush.bf16.msra.mxu0 %v370
    %557 = vmatmul.bf16.gmra.mxu0 %v73
    %v558 = vpop.f32.mrf.mxu0
    %v559 = vadd.f32 %v545, %v558
    %v560 = vpop.f32.mrf.mxu0
    %v561 = vadd.f32 %v547, %v560
    %562 = vdwg.mxu0
    %563 = vmatpush.bf16.msra.mxu0 %v400
    %564 = vmatpush.bf16.msra.mxu0 %v398
    %565 = vmatpush.bf16.msra.mxu0 %v396
    %566 = vmatpush.bf16.msra.mxu0 %v394
    %567 = vmatpush.bf16.msra.mxu0 %v392
    %568 = vmatpush.bf16.msra.mxu0 %v390
    %569 = vmatpush.bf16.msra.mxu0 %v388
    %570 = vmatpush.bf16.msra.mxu0 %v386
    %571 = vmatmul.bf16.gmra.mxu0 %v74
    %v572 = vpop.f32.mrf.mxu0
    %v573 = vadd.f32 %v559, %v572
    %v574 = vpop.f32.mrf.mxu0
    %v575 = vadd.f32 %v561, %v574
    %576 = vdwg.mxu0
    %vm577 = vcmp.ge.f32.partialorder %v517, 0.0
    %vm578 = vcmp.ge.f32.partialorder %v573, 0.0
    %vm579 = vcmp.ge.f32.partialorder %v519, 0.0
    %vm580 = vcmp.ge.f32.partialorder %v575, 0.0
    %v581 = vmul.f32 %v517, 0.1
    %v582 = vmul.f32 %v573, 0.1
    %v583 = vmul.f32 %v519, 0.1
    %v584 = vmul.f32 %v575, 0.1
    %v585 = vsel %vm577, %v517, %v581
    %v586 = vsel %vm578, %v573, %v582
    %v587 = vsel %vm579, %v519, %v583
    %v588 = vsel %vm580, %v575, %v584
    %v589 = vpack.c.bf16 %v587, %v585
    %v590 = vpack.c.bf16 %v588, %v586
    %v591 = vld [vmem:[%s3] sm:$0xf]
    %v592 = vld [vmem:[%s3 + $0x4] sm:$0xf]
    %v593 = vld [vmem:[%s3 + $0x8] sm:$0xf]
    %v594 = vld [vmem:[%s3 + $0xc] sm:$0xf]
    %v595 = vld [vmem:[%s3 + $0x10] sm:$0xf]
    %v596 = vld [vmem:[%s3 + $0x14] sm:$0xf]
    %v597 = vld [vmem:[%s3 + $0x18] sm:$0xf]
    %v598 = vld [vmem:[%s3 + $0x1c] sm:$0xf]
    %v599 = vld [vmem:[%s3 + $0x20] sm:$0xf]
    %v600 = vld [vmem:[%s3 + $0x24] sm:$0xf]
    %v601 = vld [vmem:[%s3 + $0x28] sm:$0xf]
    %v602 = vld [vmem:[%s3 + $0x2c] sm:$0xf]
    %v603 = vld [vmem:[%s3 + $0x30] sm:$0xf]
    %v604 = vld [vmem:[%s3 + $0x34] sm:$0xf]
    %v605 = vld [vmem:[%s3 + $0x38] sm:$0xf]
    %v606 = vld [vmem:[%s3 + $0x3c] sm:$0xf]
    %v607 = vld [vmem:[%s3 + $0x40] sm:$0xf]
    %v608 = vld [vmem:[%s3 + $0x44] sm:$0xf]
    %v609 = vld [vmem:[%s3 + $0x48] sm:$0xf]
    %v610 = vld [vmem:[%s3 + $0x4c] sm:$0xf]
    %v611 = vld [vmem:[%s3 + $0x50] sm:$0xf]
    %v612 = vld [vmem:[%s3 + $0x54] sm:$0xf]
    %v613 = vld [vmem:[%s3 + $0x58] sm:$0xf]
    %v614 = vld [vmem:[%s3 + $0x5c] sm:$0xf]
    %v615 = vld [vmem:[%s3 + $0x60] sm:$0xf]
    %v616 = vld [vmem:[%s3 + $0x64] sm:$0xf]
    %v617 = vld [vmem:[%s3 + $0x68] sm:$0xf]
    %v618 = vld [vmem:[%s3 + $0x6c] sm:$0xf]
    %v619 = vld [vmem:[%s3 + $0x70] sm:$0xf]
    %v620 = vld [vmem:[%s3 + $0x74] sm:$0xf]
    %v621 = vld [vmem:[%s3 + $0x78] sm:$0xf]
    %v622 = vld [vmem:[%s3 + $0x7c] sm:$0xf]
    %v623 = vld [vmem:[#allocation6] sm:$0x1]
    %v625 = vperm.slane %v623, 0
    %v659 = vunpack.c.l.b16 %v591
    %v660 = vunpack.c.l.b16 %v592
    %v661 = vunpack.c.l.b16 %v593
    %v662 = vunpack.c.l.b16 %v594
    %v663 = vunpack.c.l.b16 %v595
    %v664 = vunpack.c.l.b16 %v596
    %v665 = vunpack.c.l.b16 %v597
    %v666 = vunpack.c.l.b16 %v598
    %v667 = vunpack.c.l.b16 %v599
    %v668 = vunpack.c.l.b16 %v600
    %v669 = vunpack.c.l.b16 %v601
    %v670 = vunpack.c.l.b16 %v602
    %v671 = vunpack.c.l.b16 %v603
    %v672 = vunpack.c.l.b16 %v604
    %v673 = vunpack.c.l.b16 %v605
    %v674 = vunpack.c.l.b16 %v606
    %v675 = vunpack.c.l.b16 %v607
    %v676 = vunpack.c.l.b16 %v608
    %v677 = vunpack.c.l.b16 %v609
    %v678 = vunpack.c.l.b16 %v610
    %v679 = vunpack.c.l.b16 %v611
    %v680 = vunpack.c.l.b16 %v612
    %v681 = vunpack.c.l.b16 %v613
    %v682 = vunpack.c.l.b16 %v614
    %v683 = vunpack.c.l.b16 %v615
    %v684 = vunpack.c.l.b16 %v616
    %v685 = vunpack.c.l.b16 %v617
    %v686 = vunpack.c.l.b16 %v618
    %v687 = vunpack.c.l.b16 %v619
    %v688 = vunpack.c.l.b16 %v620
    %v689 = vunpack.c.l.b16 %v621
    %v690 = vunpack.c.l.b16 %v622
    %v691 = vpack.c.b16 %v660, %v659
    %v692 = vpack.c.b16 %v662, %v661
    %v693 = vpack.c.b16 %v664, %v663
    %v694 = vpack.c.b16 %v666, %v665
    %v695 = vpack.c.b16 %v668, %v667
    %v696 = vpack.c.b16 %v670, %v669
    %v697 = vpack.c.b16 %v672, %v671
    %v698 = vpack.c.b16 %v674, %v673
    %v699 = vpack.c.b16 %v676, %v675
    %v700 = vpack.c.b16 %v678, %v677
    %v701 = vpack.c.b16 %v680, %v679
    %v702 = vpack.c.b16 %v682, %v681
    %v703 = vpack.c.b16 %v684, %v683
    %v704 = vpack.c.b16 %v686, %v685
    %v705 = vpack.c.b16 %v688, %v687
    %v706 = vpack.c.b16 %v690, %v689
    %723 = vmatpush.bf16.msra.mxu0 %v698
    %724 = vmatpush.bf16.msra.mxu0 %v697
    %725 = vmatpush.bf16.msra.mxu0 %v696
    %726 = vmatpush.bf16.msra.mxu0 %v695
    %727 = vmatpush.bf16.msra.mxu0 %v694
    %728 = vmatpush.bf16.msra.mxu0 %v693
    %729 = vmatpush.bf16.msra.mxu0 %v692
    %730 = vmatpush.bf16.msra.mxu0 %v691
    %731 = vmatmul.bf16.gmra.mxu0 %v589
    %v732 = vpop.f32.mrf.mxu0
    %v733 = vadd.f32 %v625, %v732
    %v734 = vpop.f32.mrf.mxu0
    %v735 = vadd.f32 %v625, %v734
    %736 = vdwg.mxu0
    %737 = vmatpush.bf16.msra.mxu0 %v706
    %738 = vmatpush.bf16.msra.mxu0 %v705
    %739 = vmatpush.bf16.msra.mxu0 %v704
    %740 = vmatpush.bf16.msra.mxu0 %v703
    %741 = vmatpush.bf16.msra.mxu0 %v702
    %742 = vmatpush.bf16.msra.mxu0 %v701
    %743 = vmatpush.bf16.msra.mxu0 %v700
    %744 = vmatpush.bf16.msra.mxu0 %v699
    %745 = vmatmul.bf16.gmra.mxu0 %v590
    %v746 = vpop.f32.mrf.mxu0
    %v747 = vadd.f32 %v733, %v746
    %v748 = vpop.f32.mrf.mxu0
    %v749 = vadd.f32 %v735, %v748
    %750 = vdwg.mxu0
    %vm751 = vcmask 31744
    %752 = vst.msk [vmem:[%s5] sm:$0xff] %vm751, %v747
    %vm753 = vcmask 29696
    %754 = vst.msk [vmem:[%s5 + $0x8] sm:$0x3f] %vm753, %v749
    // Predicated region
    $region34: #{forward.12} parent=1 // pred_check
      _
    $region35: #{forward.12} parent=1 // pred_check_branch
      %756 = sbr.rel (0) target = $region37
    $region36: #{forward.12} parent=1 // pred_region
      _
    $region37: #{forward.12} parent=1 // pred_fallthru
      _
    // Predicated region
    $region38: #{forward.12} parent=1 // pred_check
      _
    $region39: #{forward.12} parent=1 // pred_check_branch
      %758 = sbr.rel (0) target = $region41
    $region40: #{forward.12} parent=1 // pred_region
      _
    $region41: #{forward.12} parent=1 // pred_fallthru
      _
    %759 = vsyncpa [#allocation3], 1
    %760 = vsyncpa [#allocation5], 1

// kernel: forward.10
$region0: #{forward.10}
  #allocation0 [shape = 'u32[]', space=smem, size = 0x4, offset = 0x4, fixed_abs, tag = 'smem constant byte address 0x4 - core index']
  #allocation1 [shape = 'u32[72,128]{1,0:T(1,128)}', space=vmem, size = 0x9000, scoped, tag = 'internal scratch']
  %s0 = inlined_call_operand.vmem [shape: f32[2,14,512], index: 0, kind: input, shape index: {}]
  %s1 = inlined_call_operand.hbm [shape: bf16[2,512,2048], index: 1, kind: input, shape index: {}]
  %s2 = inlined_call_operand.hbm [shape: f32[2,1,2048], index: 2, kind: input, shape index: {}]
  %s3 = inlined_call_operand.vmem [shape: f32[2,14,2048], index: 3, kind: output, shape index: {}]
  %s4 = sld [smem:[#allocation0]]
  $region53: #{forward.10} parent=0
    _
  %s6 = ssub.s32 1, %s4
  %s7 = scalar_select 0, %s6, %s4
  $region1: #{forward.10} parent=0
    #allocation2 [shape = 'u8[4194304]{0}', space=vmem, size = 0x400000, scoped, tag = 'input window, operand 1']
    #allocation3 [shape = 's32[2]{0}', space=sflag, size = 0x8, scoped, tag = 'scoped memory for forward.10']
    #allocation4 [shape = 'u8[16384]{0}', space=vmem, size = 0x4000, scoped, tag = 'input window, operand 2']
    #allocation5 [shape = 's32[2]{0}', space=sflag, size = 0x8, scoped, tag = 'scoped memory for forward.10']
    %8 = vsyncpa [#allocation3], 0
    %s9 = scalar_lea.sflag [#allocation3], 1
    %10 = vsyncpa %s9, 0
    %11 = vsyncpa [#allocation5], 0
    %s12 = scalar_lea.sflag [#allocation5], 1
    %13 = vsyncpa %s12, 0
    loop: start=0, step=1, limit=4
    $region2: #{forward.10} parent=1 // loop_pre_header
      _
    $region3: #{forward.10} parent=1 // loop_header
      %s15 = sphi 0, %s19
      %p16 = scmp.ge.s32.totalorder %s15, 4
      %s25 = sphi 0, %s27
      %s28 = sphi 0, %s25
      %s29 = sphi 0, %s28
      %s45 = sphi 0, %s29
      %s51 = sphi 0, %s53
      %s54 = sphi 0, %s51
      %s55 = sphi 0, %s54
      %s71 = sphi 0, %s55
      %s77 = sphi 0, %s79
      %s80 = sphi 0, %s77
      %s81 = sphi 0, %s80
      %s97 = sphi 0, %s81
      %s103 = sphi 0, %s105
      %s106 = sphi 0, %s103
      %s107 = sphi 0, %s106
      %s123 = sphi 0, %s107
    $region4: #{forward.10} parent=1 // loop_header_branch
      %18 = sbr.rel (%p16) target = $region8
    $region5: #{forward.10} parent=1 // loop_body
      %s20 = ssub.s32 %s15, 1
      %s21 = ssub.s32 %s15, 2
      %s22 = sadd.s32 %s15, 1
      %s23 = ssub.s32 %s15, %s22
      %p24 = scmp.eq.s32.totalorder %s23, 0
      %s26 = sadd.s32 %s25, 1
      %s27 = scalar_select %p24, %s25, %s26
      %p30 = pneg %p24
      %p31 = scmp.eq.s32.totalorder %s15, 1
      %p32 = por %p30, %p31
      %p33 = scmp.ne.s32.totalorder %s25, %s28
      %p34 = scmp.eq.s32.totalorder %s15, 0
      %p35 = por %p33, %p34
      %p36 = scmp.ne.s32.totalorder %s25, %s28
      %p37 = scmp.eq.s32.totalorder %s20, 1
      %p38 = por %p36, %p37
      %p39 = scmp.ne.s32.totalorder %s28, %s29
      %p40 = scmp.eq.s32.totalorder %s20, 0
      %p41 = por %p39, %p40
      %p42 = scmp.ne.s32.totalorder %s28, %s29
      %p43 = scmp.eq.s32.totalorder %s21, 1
      %p44 = por %p42, %p43
      %p46 = scmp.ne.s32.totalorder %s29, %s45
      %p47 = scmp.eq.s32.totalorder %s21, 0
      %p48 = por %p46, %p47
      %s49 = ssub.s32 %s15, %s22
      %p50 = scmp.eq.s32.totalorder %s49, 0
      %s52 = sadd.s32 %s51, 1
      %s53 = scalar_select %p50, %s51, %s52
      %p56 = pneg %p50
      %p57 = scmp.eq.s32.totalorder %s15, 1
      %p58 = por %p56, %p57
      %p59 = scmp.ne.s32.totalorder %s51, %s54
      %p60 = scmp.eq.s32.totalorder %s15, 0
      %p61 = por %p59, %p60
      %p62 = scmp.ne.s32.totalorder %s51, %s54
      %p63 = scmp.eq.s32.totalorder %s20, 1
      %p64 = por %p62, %p63
      %p65 = scmp.ne.s32.totalorder %s54, %s55
      %p66 = scmp.eq.s32.totalorder %s20, 0
      %p67 = por %p65, %p66
      %p68 = scmp.ne.s32.totalorder %s54, %s55
      %p69 = scmp.eq.s32.totalorder %s21, 1
      %p70 = por %p68, %p69
      %p72 = scmp.ne.s32.totalorder %s55, %s71
      %p73 = scmp.eq.s32.totalorder %s21, 0
      %p74 = por %p72, %p73
      %s75 = ssub.s32 %s15, %s22
      %p76 = scmp.eq.s32.totalorder %s75, 0
      %s78 = sadd.s32 %s77, 1
      %s79 = scalar_select %p76, %s77, %s78
      %p82 = pneg %p76
      %p83 = scmp.eq.s32.totalorder %s15, 1
      %p84 = por %p82, %p83
      %p85 = scmp.ne.s32.totalorder %s77, %s80
      %p86 = scmp.eq.s32.totalorder %s15, 0
      %p87 = por %p85, %p86
      %p88 = scmp.ne.s32.totalorder %s77, %s80
      %p89 = scmp.eq.s32.totalorder %s20, 1
      %p90 = por %p88, %p89
      %p91 = scmp.ne.s32.totalorder %s80, %s81
      %p92 = scmp.eq.s32.totalorder %s20, 0
      %p93 = por %p91, %p92
      %p94 = scmp.ne.s32.totalorder %s80, %s81
      %p95 = scmp.eq.s32.totalorder %s21, 1
      %p96 = por %p94, %p95
      %p98 = scmp.ne.s32.totalorder %s81, %s97
      %p99 = scmp.eq.s32.totalorder %s21, 0
      %p100 = por %p98, %p99
      %s101 = ssub.s32 %s15, %s22
      %p102 = scmp.eq.s32.totalorder %s101, 0
      %s104 = sadd.s32 %s103, 1
      %s105 = scalar_select %p102, %s103, %s104
      %p108 = pneg %p102
      %p109 = scmp.eq.s32.totalorder %s15, 1
      %p110 = por %p108, %p109
      %p111 = scmp.ne.s32.totalorder %s103, %s106
      %p112 = scmp.eq.s32.totalorder %s15, 0
      %p113 = por %p111, %p112
      %p114 = scmp.ne.s32.totalorder %s103, %s106
      %p115 = scmp.eq.s32.totalorder %s20, 1
      %p116 = por %p114, %p115
      %p117 = scmp.ne.s32.totalorder %s106, %s107
      %p118 = scmp.eq.s32.totalorder %s20, 0
      %p119 = por %p117, %p118
      %p120 = scmp.ne.s32.totalorder %s106, %s107
      %p121 = scmp.eq.s32.totalorder %s21, 1
      %p122 = por %p120, %p121
      %p124 = scmp.ne.s32.totalorder %s107, %s123
      %p125 = scmp.eq.s32.totalorder %s21, 0
      %p126 = por %p124, %p125
      %p127 = scmp.le.s32.totalorder 1, %s15
      %p128 = scmp.lt.s32.totalorder %s15, 3
      %p129 = pnand %p127, %p128
      %p130 = pneg %p129
      // Predicated region
      $region9: #{forward.10} parent=5 // pred_check
        _
      $region10: #{forward.10} parent=5 // pred_check_branch
        %132 = sbr.rel (%p129) target = $region12
      $region11: #{forward.10} parent=5 // pred_region
        %s133 = ssub.s32 %s15, 1
      $region12: #{forward.10} parent=5 // pred_fallthru
        _
      %p134 = scmp.lt.s32.totalorder %s15, 2
      // Predicated region
      $region13: #{forward.10} parent=5 // pred_check
        %p135 = pneg %p134
      $region14: #{forward.10} parent=5 // pred_check_branch
        %137 = sbr.rel (%p135) target = $region16
      $region15: #{forward.10} parent=5 // pred_region
        // Predicated region
        $region17: #{forward.10} parent=15 // pred_check
          %p138 = pneg %p35
        $region18: #{forward.10} parent=15 // pred_check_branch
          %140 = sbr.rel (%p138) target = $region20
        $region19: #{forward.10} parent=15 // pred_region
          %p141 = scmp.lt.s32.totalorder %s15, 1
          %s142 = scalar_select %p141, %s15, 1
          %s143 = smul.addr %s142, 8
          %s144 = smul.addr %s143, 8
          %s145 = scalar_lea.vmem %s0, %s144
        $region20: #{forward.10} parent=15 // pred_fallthru
          _
        // Predicated region
        $region21: #{forward.10} parent=15 // pred_check
          %p146 = pneg %p61
        $region22: #{forward.10} parent=15 // pred_check_branch
          %148 = sbr.rel (%p146) target = $region24
        $region23: #{forward.10} parent=15 // pred_region
          %s149 = sand.u32 %s51, 1
          %s150 = scalar_lea.sflag [#allocation3], %s149
          %s151 = sand.u32 %s51, 1
          %s152 = smul.addr %s151, 4096
          %s153 = scalar_lea.vmem [#allocation2], %s152
          %155 = vsyncadd %s150, 0
          %s156 = smul.addr %s15, 1024
          %s157 = smul.addr %s156, 4
          %s158 = scalar_lea.hbm %s1, %s157
          %s159 = sshll.u32 %s158, 4
          %s160 = int_to_ptr.hbm [resolvable:$true] %s159
          %s161 = sshll.u32 %s153, 4
          %s162 = int_to_ptr.vmem [resolvable:$true] %s161
          %167 = dma.hbm_to_vmem [thread:$0]  %s160, 65536, %s162, %s150, 1024, 1024, 64
        $region24: #{forward.10} parent=15 // pred_fallthru
          _
        // Predicated region
        $region25: #{forward.10} parent=15 // pred_check
          %p168 = pneg %p87
        $region26: #{forward.10} parent=15 // pred_check_branch
          %170 = sbr.rel (%p168) target = $region28
        $region27: #{forward.10} parent=15 // pred_region
          %s171 = sand.u32 %s77, 1
          %s172 = scalar_lea.sflag [#allocation5], %s171
          %s173 = sand.u32 %s77, 1
          %s174 = smul.addr %s173, 16
          %s175 = scalar_lea.vmem [#allocation4], %s174
          %177 = vsyncadd %s172, 0
          %s178 = smul.addr %s15, 16
          %s179 = scalar_lea.hbm %s2, %s178
          %s181 = sshll.u32 %s179, 4
          %s182 = int_to_ptr.hbm [resolvable:$true] %s181
          %s183 = sshll.u32 %s175, 4
          %s184 = int_to_ptr.vmem [resolvable:$true] %s183
          %186 = dma.hbm_to_vmem [thread:$0]  %s182, 256, %s184, %s172
        $region28: #{forward.10} parent=15 // pred_fallthru
          _
      $region16: #{forward.10} parent=5 // pred_fallthru
        _
      %p187 = scmp.le.s32.totalorder 1, %s15
      %p188 = scmp.lt.s32.totalorder %s15, 3
      %p189 = pnand %p187, %p188
      %p190 = pneg %p189
      // Predicated region
      $region29: #{forward.10} parent=5 // pred_check
        _
      $region30: #{forward.10} parent=5 // pred_check_branch
        %192 = sbr.rel (%p189) target = $region32
      $region31: #{forward.10} parent=5 // pred_region
        %s193 = ssub.s32 %s15, 1
        %s194 = sand.u32 %s54, 1
        %s195 = scalar_lea.sflag [#allocation3], %s194
        %s196 = sand.u32 %s54, 1
        %s197 = smul.addr %s196, 4096
        %s198 = scalar_lea.vmem [#allocation2], %s197
        // Predicated region
        $region33: #{forward.10} parent=31 // pred_check
          %p199 = pneg %p67
        $region34: #{forward.10} parent=31 // pred_check_branch
          %201 = sbr.rel (%p199) target = $region36
        $region35: #{forward.10} parent=31 // pred_region
          %203 = dma.done %s195, 65536
        $region36: #{forward.10} parent=31 // pred_fallthru
          _
        %s204 = sand.u32 %s80, 1
        %s205 = scalar_lea.sflag [#allocation5], %s204
        %s206 = sand.u32 %s80, 1
        %s207 = smul.addr %s206, 16
        %s208 = scalar_lea.vmem [#allocation4], %s207
        // Predicated region
        $region37: #{forward.10} parent=31 // pred_check
          %p209 = pneg %p93
        $region38: #{forward.10} parent=31 // pred_check_branch
          %211 = sbr.rel (%p209) target = $region40
        $region39: #{forward.10} parent=31 // pred_region
          %213 = dma.done %s205, 256
        $region40: #{forward.10} parent=31 // pred_fallthru
          _
        %p214 = scmp.lt.s32.totalorder %s20, 1
        %s215 = scalar_select %p214, %s20, 1
        %s216 = smul.addr %s215, 8
        %s217 = smul.addr %s216, 8
        %s218 = scalar_lea.vmem %s0, %s217
        %p219 = pneg %p41
        %p220 = pneg %p38
        %s221 = sand.u32 %s54, 1
        %s222 = scalar_lea.sflag [#allocation3], %s221
        %s223 = sand.u32 %s54, 1
        %s224 = smul.addr %s223, 4096
        %s225 = scalar_lea.vmem [#allocation2], %s224
        %p226 = pneg %p67
        %p227 = pneg %p64
        %s228 = sand.u32 %s80, 1
        %s229 = scalar_lea.sflag [#allocation5], %s228
        %s230 = sand.u32 %s80, 1
        %s231 = smul.addr %s230, 16
        %s232 = scalar_lea.vmem [#allocation4], %s231
        %p233 = pneg %p93
        %p234 = pneg %p90
        %p235 = pneg %p119
        %p236 = pneg %p116
        %p237 = scmp.lt.s32.totalorder %s20, 1
        %s238 = scalar_select %p237, %s20, 1
        %s239 = smul.addr %s238, 32
        %s240 = smul.addr %s239, 8
        %s241 = scalar_lea.vmem %s3, %s240
        %p242 = scmp.lt.s32.totalorder %s20, 1
        %s243 = scalar_select %p242, %s20, 1
        %s244 = smul.addr %s243, 8
        %s245 = smul.addr %s244, 8
        %s246 = scalar_lea.vmem %s0, %s245
        %p247 = scmp.lt.s32.totalorder %s20, 1
        %s248 = scalar_select %p247, %s20, 1
        %s249 = smul.addr %s248, 32
        %s250 = smul.addr %s249, 8
        %s251 = scalar_lea.vmem %s3, %s250
        %v252 = vld [vmem:[%s246] sm:$0xff]
        %v253 = vld [vmem:[%s246 + $0x8] sm:$0xff]
        %v254 = vld [vmem:[%s246 + $0x10] sm:$0xff]
        %v255 = vld [vmem:[%s246 + $0x18] sm:$0xff]
        %v256 = vld [vmem:[%s246 + $0x20] sm:$0x3f]
        %v257 = vld [vmem:[%s246 + $0x28] sm:$0x3f]
        %v258 = vld [vmem:[%s246 + $0x30] sm:$0x3f]
        %v259 = vld [vmem:[%s246 + $0x38] sm:$0x3f]
        %v260 = vpack.c.bf16 %v256, %v252
        %v261 = vpack.c.bf16 %v257, %v253
        %v262 = vpack.c.bf16 %v258, %v254
        %v263 = vpack.c.bf16 %v259, %v255
        %v264 = vld [vmem:[%s198] sm:$0xff]
        %v265 = vld [vmem:[%s198 + $0x8] sm:$0xff]
        %v266 = vld [vmem:[%s198 + $0x10] sm:$0xff]
        %v267 = vld [vmem:[%s198 + $0x18] sm:$0xff]
        %v268 = vld [vmem:[%s198 + $0x20] sm:$0xff]
        %v269 = vld [vmem:[%s198 + $0x28] sm:$0xff]
        %v270 = vld [vmem:[%s198 + $0x30] sm:$0xff]
        %v271 = vld [vmem:[%s198 + $0x38] sm:$0xff]
        %v272 = vld [vmem:[%s198 + $0x40] sm:$0xff]
        %v273 = vld [vmem:[%s198 + $0x48] sm:$0xff]
        %v274 = vld [vmem:[%s198 + $0x50] sm:$0xff]
        %v275 = vld [vmem:[%s198 + $0x58] sm:$0xff]
        %v276 = vld [vmem:[%s198 + $0x60] sm:$0xff]
        %v277 = vld [vmem:[%s198 + $0x68] sm:$0xff]
        %v278 = vld [vmem:[%s198 + $0x70] sm:$0xff]
        %v279 = vld [vmem:[%s198 + $0x78] sm:$0xff]
        %v280 = vld [vmem:[%s198 + $0x80] sm:$0xff]
        %v281 = vld [vmem:[%s198 + $0x88] sm:$0xff]
        %v282 = vld [vmem:[%s198 + $0x90] sm:$0xff]
        %v283 = vld [vmem:[%s198 + $0x98] sm:$0xff]
        %v284 = vld [vmem:[%s198 + $0xa0] sm:$0xff]
        %v285 = vld [vmem:[%s198 + $0xa8] sm:$0xff]
        %v286 = vld [vmem:[%s198 + $0xb0] sm:$0xff]
        %v287 = vld [vmem:[%s198 + $0xb8] sm:$0xff]
        %v288 = vld [vmem:[%s198 + $0xc0] sm:$0xff]
        %v289 = vld [vmem:[%s198 + $0xc8] sm:$0xff]
        %v290 = vld [vmem:[%s198 + $0xd0] sm:$0xff]
        %v291 = vld [vmem:[%s198 + $0xd8] sm:$0xff]
        %v292 = vld [vmem:[%s198 + $0xe0] sm:$0xff]
        %v293 = vld [vmem:[%s198 + $0xe8] sm:$0xff]
        %v294 = vld [vmem:[%s198 + $0xf0] sm:$0xff]
        %v295 = vld [vmem:[%s198 + $0xf8] sm:$0xff]
        %v296 = vld [vmem:[%s198 + $0x100] sm:$0xff]
        %v297 = vld [vmem:[%s198 + $0x108] sm:$0xff]
        %v298 = vld [vmem:[%s198 + $0x110] sm:$0xff]
        %v299 = vld [vmem:[%s198 + $0x118] sm:$0xff]
        %v300 = vld [vmem:[%s198 + $0x120] sm:$0xff]
        %v301 = vld [vmem:[%s198 + $0x128] sm:$0xff]
        %v302 = vld [vmem:[%s198 + $0x130] sm:$0xff]
        %v303 = vld [vmem:[%s198 + $0x138] sm:$0xff]
        %v304 = vld [vmem:[%s198 + $0x140] sm:$0xff]
        %v305 = vld [vmem:[%s198 + $0x148] sm:$0xff]
        %v306 = vld [vmem:[%s198 + $0x150] sm:$0xff]
        %v307 = vld [vmem:[%s198 + $0x158] sm:$0xff]
        %v308 = vld [vmem:[%s198 + $0x160] sm:$0xff]
        %v309 = vld [vmem:[%s198 + $0x168] sm:$0xff]
        %v310 = vld [vmem:[%s198 + $0x170] sm:$0xff]
        %v311 = vld [vmem:[%s198 + $0x178] sm:$0xff]
        %v312 = vld [vmem:[%s198 + $0x180] sm:$0xff]
        %v313 = vld [vmem:[%s198 + $0x188] sm:$0xff]
        %v314 = vld [vmem:[%s198 + $0x190] sm:$0xff]
        %v315 = vld [vmem:[%s198 + $0x198] sm:$0xff]
        %v316 = vld [vmem:[%s198 + $0x1a0] sm:$0xff]
        %v317 = vld [vmem:[%s198 + $0x1a8] sm:$0xff]
        %v318 = vld [vmem:[%s198 + $0x1b0] sm:$0xff]
        %v319 = vld [vmem:[%s198 + $0x1b8] sm:$0xff]
        %v320 = vld [vmem:[%s198 + $0x1c0] sm:$0xff]
        %v321 = vld [vmem:[%s198 + $0x1c8] sm:$0xff]
        %v322 = vld [vmem:[%s198 + $0x1d0] sm:$0xff]
        %v323 = vld [vmem:[%s198 + $0x1d8] sm:$0xff]
        %v324 = vld [vmem:[%s198 + $0x1e0] sm:$0xff]
        %v325 = vld [vmem:[%s198 + $0x1e8] sm:$0xff]
        %v326 = vld [vmem:[%s198 + $0x1f0] sm:$0xff]
        %v327 = vld [vmem:[%s198 + $0x1f8] sm:$0xff]
        %v328 = vld [vmem:[%s198 + $0x200] sm:$0xff]
        %v329 = vld [vmem:[%s198 + $0x208] sm:$0xff]
        %v330 = vld [vmem:[%s198 + $0x210] sm:$0xff]
        %v331 = vld [vmem:[%s198 + $0x218] sm:$0xff]
        %v332 = vld [vmem:[%s198 + $0x220] sm:$0xff]
        %v333 = vld [vmem:[%s198 + $0x228] sm:$0xff]
        %v334 = vld [vmem:[%s198 + $0x230] sm:$0xff]
        %v335 = vld [vmem:[%s198 + $0x238] sm:$0xff]
        %v336 = vld [vmem:[%s198 + $0x240] sm:$0xff]
        %v337 = vld [vmem:[%s198 + $0x248] sm:$0xff]
        %v338 = vld [vmem:[%s198 + $0x250] sm:$0xff]
        %v339 = vld [vmem:[%s198 + $0x258] sm:$0xff]
        %v340 = vld [vmem:[%s198 + $0x260] sm:$0xff]
        %v341 = vld [vmem:[%s198 + $0x268] sm:$0xff]
        %v342 = vld [vmem:[%s198 + $0x270] sm:$0xff]
        %v343 = vld [vmem:[%s198 + $0x278] sm:$0xff]
        %v344 = vld [vmem:[%s198 + $0x280] sm:$0xff]
        %v345 = vld [vmem:[%s198 + $0x288] sm:$0xff]
        %v346 = vld [vmem:[%s198 + $0x290] sm:$0xff]
        %v347 = vld [vmem:[%s198 + $0x298] sm:$0xff]
        %v348 = vld [vmem:[%s198 + $0x2a0] sm:$0xff]
        %v349 = vld [vmem:[%s198 + $0x2a8] sm:$0xff]
        %v350 = vld [vmem:[%s198 + $0x2b0] sm:$0xff]
        %v351 = vld [vmem:[%s198 + $0x2b8] sm:$0xff]
        %v352 = vld [vmem:[%s198 + $0x2c0] sm:$0xff]
        %v353 = vld [vmem:[%s198 + $0x2c8] sm:$0xff]
        %v354 = vld [vmem:[%s198 + $0x2d0] sm:$0xff]
        %v355 = vld [vmem:[%s198 + $0x2d8] sm:$0xff]
        %v356 = vld [vmem:[%s198 + $0x2e0] sm:$0xff]
        %v357 = vld [vmem:[%s198 + $0x2e8] sm:$0xff]
        %v358 = vld [vmem:[%s198 + $0x2f0] sm:$0xff]
        %v359 = vld [vmem:[%s198 + $0x2f8] sm:$0xff]
        %v360 = vld [vmem:[%s198 + $0x300] sm:$0xff]
        %v361 = vld [vmem:[%s198 + $0x308] sm:$0xff]
        %v362 = vld [vmem:[%s198 + $0x310] sm:$0xff]
        %v363 = vld [vmem:[%s198 + $0x318] sm:$0xff]
        %v364 = vld [vmem:[%s198 + $0x320] sm:$0xff]
        %v365 = vld [vmem:[%s198 + $0x328] sm:$0xff]
        %v366 = vld [vmem:[%s198 + $0x330] sm:$0xff]
        %v367 = vld [vmem:[%s198 + $0x338] sm:$0xff]
        %v368 = vld [vmem:[%s198 + $0x340] sm:$0xff]
        %v369 = vld [vmem:[%s198 + $0x348] sm:$0xff]
        %v370 = vld [vmem:[%s198 + $0x350] sm:$0xff]
        %v371 = vld [vmem:[%s198 + $0x358] sm:$0xff]
        %v372 = vld [vmem:[%s198 + $0x360] sm:$0xff]
        %v373 = vld [vmem:[%s198 + $0x368] sm:$0xff]
        %v374 = vld [vmem:[%s198 + $0x370] sm:$0xff]
        %v375 = vld [vmem:[%s198 + $0x378] sm:$0xff]
        %v376 = vld [vmem:[%s198 + $0x380] sm:$0xff]
        %v377 = vld [vmem:[%s198 + $0x388] sm:$0xff]
        %v378 = vld [vmem:[%s198 + $0x390] sm:$0xff]
        %v379 = vld [vmem:[%s198 + $0x398] sm:$0xff]
        %v380 = vld [vmem:[%s198 + $0x3a0] sm:$0xff]
        %v381 = vld [vmem:[%s198 + $0x3a8] sm:$0xff]
        %v382 = vld [vmem:[%s198 + $0x3b0] sm:$0xff]
        %v383 = vld [vmem:[%s198 + $0x3b8] sm:$0xff]
        %v384 = vld [vmem:[%s198 + $0x3c0] sm:$0xff]
        %v385 = vld [vmem:[%s198 + $0x3c8] sm:$0xff]
        %v386 = vld [vmem:[%s198 + $0x3d0] sm:$0xff]
        %v387 = vld [vmem:[%s198 + $0x3d8] sm:$0xff]
        %v388 = vld [vmem:[%s198 + $0x3e0] sm:$0xff]
        %v389 = vld [vmem:[%s198 + $0x3e8] sm:$0xff]
        %v390 = vld [vmem:[%s198 + $0x3f0] sm:$0xff]
        %v391 = vld [vmem:[%s198 + $0x3f8] sm:$0xff]
        %v392 = vld [vmem:[%s198 + $0x400] sm:$0xff]
        %v393 = vld [vmem:[%s198 + $0x408] sm:$0xff]
        %v394 = vld [vmem:[%s198 + $0x410] sm:$0xff]
        %v395 = vld [vmem:[%s198 + $0x418] sm:$0xff]
        %v396 = vld [vmem:[%s198 + $0x420] sm:$0xff]
        %v397 = vld [vmem:[%s198 + $0x428] sm:$0xff]
        %v398 = vld [vmem:[%s198 + $0x430] sm:$0xff]
        %v399 = vld [vmem:[%s198 + $0x438] sm:$0xff]
        %v400 = vld [vmem:[%s198 + $0x440] sm:$0xff]
        %v401 = vld [vmem:[%s198 + $0x448] sm:$0xff]
        %v402 = vld [vmem:[%s198 + $0x450] sm:$0xff]
        %v403 = vld [vmem:[%s198 + $0x458] sm:$0xff]
        %v404 = vld [vmem:[%s198 + $0x460] sm:$0xff]
        %v405 = vld [vmem:[%s198 + $0x468] sm:$0xff]
        %v406 = vld [vmem:[%s198 + $0x470] sm:$0xff]
        %v407 = vld [vmem:[%s198 + $0x478] sm:$0xff]
        %v408 = vld [vmem:[%s198 + $0x480] sm:$0xff]
        %v409 = vld [vmem:[%s198 + $0x488] sm:$0xff]
        %v410 = vld [vmem:[%s198 + $0x490] sm:$0xff]
        %v411 = vld [vmem:[%s198 + $0x498] sm:$0xff]
        %v412 = vld [vmem:[%s198 + $0x4a0] sm:$0xff]
        %v413 = vld [vmem:[%s198 + $0x4a8] sm:$0xff]
        %v414 = vld [vmem:[%s198 + $0x4b0] sm:$0xff]
        %v415 = vld [vmem:[%s198 + $0x4b8] sm:$0xff]
        %v416 = vld [vmem:[%s198 + $0x4c0] sm:$0xff]
        %v417 = vld [vmem:[%s198 + $0x4c8] sm:$0xff]
        %v418 = vld [vmem:[%s198 + $0x4d0] sm:$0xff]
        %v419 = vld [vmem:[%s198 + $0x4d8] sm:$0xff]
        %v420 = vld [vmem:[%s198 + $0x4e0] sm:$0xff]
        %v421 = vld [vmem:[%s198 + $0x4e8] sm:$0xff]
        %v422 = vld [vmem:[%s198 + $0x4f0] sm:$0xff]
        %v423 = vld [vmem:[%s198 + $0x4f8] sm:$0xff]
        %v424 = vld [vmem:[%s198 + $0x500] sm:$0xff]
        %v425 = vld [vmem:[%s198 + $0x508] sm:$0xff]
        %v426 = vld [vmem:[%s198 + $0x510] sm:$0xff]
        %v427 = vld [vmem:[%s198 + $0x518] sm:$0xff]
        %v428 = vld [vmem:[%s198 + $0x520] sm:$0xff]
        %v429 = vld [vmem:[%s198 + $0x528] sm:$0xff]
        %v430 = vld [vmem:[%s198 + $0x530] sm:$0xff]
        %v431 = vld [vmem:[%s198 + $0x538] sm:$0xff]
        %v432 = vld [vmem:[%s198 + $0x540] sm:$0xff]
        %v433 = vld [vmem:[%s198 + $0x548] sm:$0xff]
        %v434 = vld [vmem:[%s198 + $0x550] sm:$0xff]
        %v435 = vld [vmem:[%s198 + $0x558] sm:$0xff]
        %v436 = vld [vmem:[%s198 + $0x560] sm:$0xff]
        %v437 = vld [vmem:[%s198 + $0x568] sm:$0xff]
        %v438 = vld [vmem:[%s198 + $0x570] sm:$0xff]
        %v439 = vld [vmem:[%s198 + $0x578] sm:$0xff]
        %v440 = vld [vmem:[%s198 + $0x580] sm:$0xff]
        %v441 = vld [vmem:[%s198 + $0x588] sm:$0xff]
        %v442 = vld [vmem:[%s198 + $0x590] sm:$0xff]
        %v443 = vld [vmem:[%s198 + $0x598] sm:$0xff]
        %v444 = vld [vmem:[%s198 + $0x5a0] sm:$0xff]
        %v445 = vld [vmem:[%s198 + $0x5a8] sm:$0xff]
        %v446 = vld [vmem:[%s198 + $0x5b0] sm:$0xff]
        %v447 = vld [vmem:[%s198 + $0x5b8] sm:$0xff]
        %v448 = vld [vmem:[%s198 + $0x5c0] sm:$0xff]
        %v449 = vld [vmem:[%s198 + $0x5c8] sm:$0xff]
        %v450 = vld [vmem:[%s198 + $0x5d0] sm:$0xff]
        %v451 = vld [vmem:[%s198 + $0x5d8] sm:$0xff]
        %v452 = vld [vmem:[%s198 + $0x5e0] sm:$0xff]
        %v453 = vld [vmem:[%s198 + $0x5e8] sm:$0xff]
        %v454 = vld [vmem:[%s198 + $0x5f0] sm:$0xff]
        %v455 = vld [vmem:[%s198 + $0x5f8] sm:$0xff]
        %v456 = vld [vmem:[%s198 + $0x600] sm:$0xff]
        %v457 = vld [vmem:[%s198 + $0x608] sm:$0xff]
        %v458 = vld [vmem:[%s198 + $0x610] sm:$0xff]
        %v459 = vld [vmem:[%s198 + $0x618] sm:$0xff]
        %v460 = vld [vmem:[%s198 + $0x620] sm:$0xff]
        %v461 = vld [vmem:[%s198 + $0x628] sm:$0xff]
        %v462 = vld [vmem:[%s198 + $0x630] sm:$0xff]
        %v463 = vld [vmem:[%s198 + $0x638] sm:$0xff]
        %v464 = vld [vmem:[%s198 + $0x640] sm:$0xff]
        %v465 = vld [vmem:[%s198 + $0x648] sm:$0xff]
        %v466 = vld [vmem:[%s198 + $0x650] sm:$0xff]
        %v467 = vld [vmem:[%s198 + $0x658] sm:$0xff]
        %v468 = vld [vmem:[%s198 + $0x660] sm:$0xff]
        %v469 = vld [vmem:[%s198 + $0x668] sm:$0xff]
        %v470 = vld [vmem:[%s198 + $0x670] sm:$0xff]
        %v471 = vld [vmem:[%s198 + $0x678] sm:$0xff]
        %v472 = vld [vmem:[%s198 + $0x680] sm:$0xff]
        %v473 = vld [vmem:[%s198 + $0x688] sm:$0xff]
        %v474 = vld [vmem:[%s198 + $0x690] sm:$0xff]
        %v475 = vld [vmem:[%s198 + $0x698] sm:$0xff]
        %v476 = vld [vmem:[%s198 + $0x6a0] sm:$0xff]
        %v477 = vld [vmem:[%s198 + $0x6a8] sm:$0xff]
        %v478 = vld [vmem:[%s198 + $0x6b0] sm:$0xff]
        %v479 = vld [vmem:[%s198 + $0x6b8] sm:$0xff]
        %v480 = vld [vmem:[%s198 + $0x6c0] sm:$0xff]
        %v481 = vld [vmem:[%s198 + $0x6c8] sm:$0xff]
        %v482 = vld [vmem:[%s198 + $0x6d0] sm:$0xff]
        %v483 = vld [vmem:[%s198 + $0x6d8] sm:$0xff]
        %v484 = vld [vmem:[%s198 + $0x6e0] sm:$0xff]
        %v485 = vld [vmem:[%s198 + $0x6e8] sm:$0xff]
        %v486 = vld [vmem:[%s198 + $0x6f0] sm:$0xff]
        %v487 = vld [vmem:[%s198 + $0x6f8] sm:$0xff]
        %v488 = vld [vmem:[%s198 + $0x700] sm:$0xff]
        %v489 = vld [vmem:[%s198 + $0x708] sm:$0xff]
        %v490 = vld [vmem:[%s198 + $0x710] sm:$0xff]
        %v491 = vld [vmem:[%s198 + $0x718] sm:$0xff]
        %v492 = vld [vmem:[%s198 + $0x720] sm:$0xff]
        %v493 = vld [vmem:[%s198 + $0x728] sm:$0xff]
        %v494 = vld [vmem:[%s198 + $0x730] sm:$0xff]
        %v495 = vld [vmem:[%s198 + $0x738] sm:$0xff]
        %v496 = vld [vmem:[%s198 + $0x740] sm:$0xff]
        %v497 = vld [vmem:[%s198 + $0x748] sm:$0xff]
        %v498 = vld [vmem:[%s198 + $0x750] sm:$0xff]
        %v499 = vld [vmem:[%s198 + $0x758] sm:$0xff]
        %v500 = vld [vmem:[%s198 + $0x760] sm:$0xff]
        %v501 = vld [vmem:[%s198 + $0x768] sm:$0xff]
        %v502 = vld [vmem:[%s198 + $0x770] sm:$0xff]
        %v503 = vld [vmem:[%s198 + $0x778] sm:$0xff]
        %v504 = vld [vmem:[%s198 + $0x780] sm:$0xff]
        %v505 = vld [vmem:[%s198 + $0x788] sm:$0xff]
        %v506 = vld [vmem:[%s198 + $0x790] sm:$0xff]
        %v507 = vld [vmem:[%s198 + $0x798] sm:$0xff]
        %v508 = vld [vmem:[%s198 + $0x7a0] sm:$0xff]
        %v509 = vld [vmem:[%s198 + $0x7a8] sm:$0xff]
        %v510 = vld [vmem:[%s198 + $0x7b0] sm:$0xff]
        %v511 = vld [vmem:[%s198 + $0x7b8] sm:$0xff]
        %v512 = vld [vmem:[%s198 + $0x7c0] sm:$0xff]
        %v513 = vld [vmem:[%s198 + $0x7c8] sm:$0xff]
        %v514 = vld [vmem:[%s198 + $0x7d0] sm:$0xff]
        %v515 = vld [vmem:[%s198 + $0x7d8] sm:$0xff]
        %v516 = vld [vmem:[%s198 + $0x7e0] sm:$0xff]
        %v517 = vld [vmem:[%s198 + $0x7e8] sm:$0xff]
        %v518 = vld [vmem:[%s198 + $0x7f0] sm:$0xff]
        %v519 = vld [vmem:[%s198 + $0x7f8] sm:$0xff]
        %v520 = vld [vmem:[%s198 + $0x800] sm:$0xff]
        %v521 = vld [vmem:[%s198 + $0x808] sm:$0xff]
        %v522 = vld [vmem:[%s198 + $0x810] sm:$0xff]
        %v523 = vld [vmem:[%s198 + $0x818] sm:$0xff]
        %v524 = vld [vmem:[%s198 + $0x820] sm:$0xff]
        %v525 = vld [vmem:[%s198 + $0x828] sm:$0xff]
        %v526 = vld [vmem:[%s198 + $0x830] sm:$0xff]
        %v527 = vld [vmem:[%s198 + $0x838] sm:$0xff]
        %v528 = vld [vmem:[%s198 + $0x840] sm:$0xff]
        %v529 = vld [vmem:[%s198 + $0x848] sm:$0xff]
        %v530 = vld [vmem:[%s198 + $0x850] sm:$0xff]
        %v531 = vld [vmem:[%s198 + $0x858] sm:$0xff]
        %v532 = vld [vmem:[%s198 + $0x860] sm:$0xff]
        %v533 = vld [vmem:[%s198 + $0x868] sm:$0xff]
        %v534 = vld [vmem:[%s198 + $0x870] sm:$0xff]
        %v535 = vld [vmem:[%s198 + $0x878] sm:$0xff]
        %v536 = vld [vmem:[%s198 + $0x880] sm:$0xff]
        %v537 = vld [vmem:[%s198 + $0x888] sm:$0xff]
        %v538 = vld [vmem:[%s198 + $0x890] sm:$0xff]
        %v539 = vld [vmem:[%s198 + $0x898] sm:$0xff]
        %v540 = vld [vmem:[%s198 + $0x8a0] sm:$0xff]
        %v541 = vld [vmem:[%s198 + $0x8a8] sm:$0xff]
        %v542 = vld [vmem:[%s198 + $0x8b0] sm:$0xff]
        %v543 = vld [vmem:[%s198 + $0x8b8] sm:$0xff]
        %v544 = vld [vmem:[%s198 + $0x8c0] sm:$0xff]
        %v545 = vld [vmem:[%s198 + $0x8c8] sm:$0xff]
        %v546 = vld [vmem:[%s198 + $0x8d0] sm:$0xff]
        %v547 = vld [vmem:[%s198 + $0x8d8] sm:$0xff]
        %v548 = vld [vmem:[%s198 + $0x8e0] sm:$0xff]
        %v549 = vld [vmem:[%s198 + $0x8e8] sm:$0xff]
        %v550 = vld [vmem:[%s198 + $0x8f0] sm:$0xff]
        %v551 = vld [vmem:[%s198 + $0x8f8] sm:$0xff]
        %v552 = vld [vmem:[%s198 + $0x900] sm:$0xff]
        %v553 = vld [vmem:[%s198 + $0x908] sm:$0xff]
        %v554 = vld [vmem:[%s198 + $0x910] sm:$0xff]
        %v555 = vld [vmem:[%s198 + $0x918] sm:$0xff]
        %v556 = vld [vmem:[%s198 + $0x920] sm:$0xff]
        %v557 = vld [vmem:[%s198 + $0x928] sm:$0xff]
        %v558 = vld [vmem:[%s198 + $0x930] sm:$0xff]
        %v559 = vld [vmem:[%s198 + $0x938] sm:$0xff]
        %v560 = vld [vmem:[%s198 + $0x940] sm:$0xff]
        %v561 = vld [vmem:[%s198 + $0x948] sm:$0xff]
        %v562 = vld [vmem:[%s198 + $0x950] sm:$0xff]
        %v563 = vld [vmem:[%s198 + $0x958] sm:$0xff]
        %v564 = vld [vmem:[%s198 + $0x960] sm:$0xff]
        %v565 = vld [vmem:[%s198 + $0x968] sm:$0xff]
        %v566 = vld [vmem:[%s198 + $0x970] sm:$0xff]
        %v567 = vld [vmem:[%s198 + $0x978] sm:$0xff]
        %v568 = vld [vmem:[%s198 + $0x980] sm:$0xff]
        %v569 = vld [vmem:[%s198 + $0x988] sm:$0xff]
        %v570 = vld [vmem:[%s198 + $0x990] sm:$0xff]
        %v571 = vld [vmem:[%s198 + $0x998] sm:$0xff]
        %v572 = vld [vmem:[%s198 + $0x9a0] sm:$0xff]
        %v573 = vld [vmem:[%s198 + $0x9a8] sm:$0xff]
        %v574 = vld [vmem:[%s198 + $0x9b0] sm:$0xff]
        %v575 = vld [vmem:[%s198 + $0x9b8] sm:$0xff]
        %v576 = vld [vmem:[%s198 + $0x9c0] sm:$0xff]
        %v577 = vld [vmem:[%s198 + $0x9c8] sm:$0xff]
        %v578 = vld [vmem:[%s198 + $0x9d0] sm:$0xff]
        %v579 = vld [vmem:[%s198 + $0x9d8] sm:$0xff]
        %v580 = vld [vmem:[%s198 + $0x9e0] sm:$0xff]
        %v581 = vld [vmem:[%s198 + $0x9e8] sm:$0xff]
        %v582 = vld [vmem:[%s198 + $0x9f0] sm:$0xff]
        %v583 = vld [vmem:[%s198 + $0x9f8] sm:$0xff]
        %v584 = vld [vmem:[%s198 + $0xa00] sm:$0xff]
        %v585 = vld [vmem:[%s198 + $0xa08] sm:$0xff]
        %v586 = vld [vmem:[%s198 + $0xa10] sm:$0xff]
        %v587 = vld [vmem:[%s198 + $0xa18] sm:$0xff]
        %v588 = vld [vmem:[%s198 + $0xa20] sm:$0xff]
        %v589 = vld [vmem:[%s198 + $0xa28] sm:$0xff]
        %v590 = vld [vmem:[%s198 + $0xa30] sm:$0xff]
        %v591 = vld [vmem:[%s198 + $0xa38] sm:$0xff]
        %v592 = vld [vmem:[%s198 + $0xa40] sm:$0xff]
        %v593 = vld [vmem:[%s198 + $0xa48] sm:$0xff]
        %v594 = vld [vmem:[%s198 + $0xa50] sm:$0xff]
        %v595 = vld [vmem:[%s198 + $0xa58] sm:$0xff]
        %v596 = vld [vmem:[%s198 + $0xa60] sm:$0xff]
        %v597 = vld [vmem:[%s198 + $0xa68] sm:$0xff]
        %v598 = vld [vmem:[%s198 + $0xa70] sm:$0xff]
        %v599 = vld [vmem:[%s198 + $0xa78] sm:$0xff]
        %v600 = vld [vmem:[%s198 + $0xa80] sm:$0xff]
        %v601 = vld [vmem:[%s198 + $0xa88] sm:$0xff]
        %v602 = vld [vmem:[%s198 + $0xa90] sm:$0xff]
        %v603 = vld [vmem:[%s198 + $0xa98] sm:$0xff]
        %v604 = vld [vmem:[%s198 + $0xaa0] sm:$0xff]
        %v605 = vld [vmem:[%s198 + $0xaa8] sm:$0xff]
        %v606 = vld [vmem:[%s198 + $0xab0] sm:$0xff]
        %v607 = vld [vmem:[%s198 + $0xab8] sm:$0xff]
        %v608 = vld [vmem:[%s198 + $0xac0] sm:$0xff]
        %v609 = vld [vmem:[%s198 + $0xac8] sm:$0xff]
        %v610 = vld [vmem:[%s198 + $0xad0] sm:$0xff]
        %v611 = vld [vmem:[%s198 + $0xad8] sm:$0xff]
        %v612 = vld [vmem:[%s198 + $0xae0] sm:$0xff]
        %v613 = vld [vmem:[%s198 + $0xae8] sm:$0xff]
        %v614 = vld [vmem:[%s198 + $0xaf0] sm:$0xff]
        %v615 = vld [vmem:[%s198 + $0xaf8] sm:$0xff]
        %v616 = vld [vmem:[%s198 + $0xb00] sm:$0xff]
        %v617 = vld [vmem:[%s198 + $0xb08] sm:$0xff]
        %v618 = vld [vmem:[%s198 + $0xb10] sm:$0xff]
        %v619 = vld [vmem:[%s198 + $0xb18] sm:$0xff]
        %v620 = vld [vmem:[%s198 + $0xb20] sm:$0xff]
        %v621 = vld [vmem:[%s198 + $0xb28] sm:$0xff]
        %v622 = vld [vmem:[%s198 + $0xb30] sm:$0xff]
        %v623 = vld [vmem:[%s198 + $0xb38] sm:$0xff]
        %v624 = vld [vmem:[%s198 + $0xb40] sm:$0xff]
        %v625 = vld [vmem:[%s198 + $0xb48] sm:$0xff]
        %v626 = vld [vmem:[%s198 + $0xb50] sm:$0xff]
        %v627 = vld [vmem:[%s198 + $0xb58] sm:$0xff]
        %v628 = vld [vmem:[%s198 + $0xb60] sm:$0xff]
        %v629 = vld [vmem:[%s198 + $0xb68] sm:$0xff]
        %v630 = vld [vmem:[%s198 + $0xb70] sm:$0xff]
        %v631 = vld [vmem:[%s198 + $0xb78] sm:$0xff]
        %v632 = vld [vmem:[%s198 + $0xb80] sm:$0xff]
        %v633 = vld [vmem:[%s198 + $0xb88] sm:$0xff]
        %v634 = vld [vmem:[%s198 + $0xb90] sm:$0xff]
        %v635 = vld [vmem:[%s198 + $0xb98] sm:$0xff]
        %v636 = vld [vmem:[%s198 + $0xba0] sm:$0xff]
        %v637 = vld [vmem:[%s198 + $0xba8] sm:$0xff]
        %v638 = vld [vmem:[%s198 + $0xbb0] sm:$0xff]
        %v639 = vld [vmem:[%s198 + $0xbb8] sm:$0xff]
        %v640 = vld [vmem:[%s198 + $0xbc0] sm:$0xff]
        %v641 = vld [vmem:[%s198 + $0xbc8] sm:$0xff]
        %v642 = vld [vmem:[%s198 + $0xbd0] sm:$0xff]
        %v643 = vld [vmem:[%s198 + $0xbd8] sm:$0xff]
        %v644 = vld [vmem:[%s198 + $0xbe0] sm:$0xff]
        %v645 = vld [vmem:[%s198 + $0xbe8] sm:$0xff]
        %v646 = vld [vmem:[%s198 + $0xbf0] sm:$0xff]
        %v647 = vld [vmem:[%s198 + $0xbf8] sm:$0xff]
        %v648 = vld [vmem:[%s198 + $0xc00] sm:$0xff]
        %v649 = vld [vmem:[%s198 + $0xc08] sm:$0xff]
        %v650 = vld [vmem:[%s198 + $0xc10] sm:$0xff]
        %v651 = vld [vmem:[%s198 + $0xc18] sm:$0xff]
        %v652 = vld [vmem:[%s198 + $0xc20] sm:$0xff]
        %v653 = vld [vmem:[%s198 + $0xc28] sm:$0xff]
        %v654 = vld [vmem:[%s198 + $0xc30] sm:$0xff]
        %v655 = vld [vmem:[%s198 + $0xc38] sm:$0xff]
        %v656 = vld [vmem:[%s198 + $0xc40] sm:$0xff]
        %v657 = vld [vmem:[%s198 + $0xc48] sm:$0xff]
        %v658 = vld [vmem:[%s198 + $0xc50] sm:$0xff]
        %v659 = vld [vmem:[%s198 + $0xc58] sm:$0xff]
        %v660 = vld [vmem:[%s198 + $0xc60] sm:$0xff]
        %v661 = vld [vmem:[%s198 + $0xc68] sm:$0xff]
        %v662 = vld [vmem:[%s198 + $0xc70] sm:$0xff]
        %v663 = vld [vmem:[%s198 + $0xc78] sm:$0xff]
        %v664 = vld [vmem:[%s198 + $0xc80] sm:$0xff]
        %v665 = vld [vmem:[%s198 + $0xc88] sm:$0xff]
        %v666 = vld [vmem:[%s198 + $0xc90] sm:$0xff]
        %v667 = vld [vmem:[%s198 + $0xc98] sm:$0xff]
        %v668 = vld [vmem:[%s198 + $0xca0] sm:$0xff]
        %v669 = vld [vmem:[%s198 + $0xca8] sm:$0xff]
        %v670 = vld [vmem:[%s198 + $0xcb0] sm:$0xff]
        %v671 = vld [vmem:[%s198 + $0xcb8] sm:$0xff]
        %v672 = vld [vmem:[%s198 + $0xcc0] sm:$0xff]
        %v673 = vld [vmem:[%s198 + $0xcc8] sm:$0xff]
        %v674 = vld [vmem:[%s198 + $0xcd0] sm:$0xff]
        %v675 = vld [vmem:[%s198 + $0xcd8] sm:$0xff]
        %v676 = vld [vmem:[%s198 + $0xce0] sm:$0xff]
        %v677 = vld [vmem:[%s198 + $0xce8] sm:$0xff]
        %v678 = vld [vmem:[%s198 + $0xcf0] sm:$0xff]
        %v679 = vld [vmem:[%s198 + $0xcf8] sm:$0xff]
        %v680 = vld [vmem:[%s198 + $0xd00] sm:$0xff]
        %v681 = vld [vmem:[%s198 + $0xd08] sm:$0xff]
        %v682 = vld [vmem:[%s198 + $0xd10] sm:$0xff]
        %v683 = vld [vmem:[%s198 + $0xd18] sm:$0xff]
        %v684 = vld [vmem:[%s198 + $0xd20] sm:$0xff]
        %v685 = vld [vmem:[%s198 + $0xd28] sm:$0xff]
        %v686 = vld [vmem:[%s198 + $0xd30] sm:$0xff]
        %v687 = vld [vmem:[%s198 + $0xd38] sm:$0xff]
        %v688 = vld [vmem:[%s198 + $0xd40] sm:$0xff]
        %v689 = vld [vmem:[%s198 + $0xd48] sm:$0xff]
        %v690 = vld [vmem:[%s198 + $0xd50] sm:$0xff]
        %v691 = vld [vmem:[%s198 + $0xd58] sm:$0xff]
        %v692 = vld [vmem:[%s198 + $0xd60] sm:$0xff]
        %v693 = vld [vmem:[%s198 + $0xd68] sm:$0xff]
        %v694 = vld [vmem:[%s198 + $0xd70] sm:$0xff]
        %v695 = vld [vmem:[%s198 + $0xd78] sm:$0xff]
        %v696 = vld [vmem:[%s198 + $0xd80] sm:$0xff]
        %v697 = vld [vmem:[%s198 + $0xd88] sm:$0xff]
        %v698 = vld [vmem:[%s198 + $0xd90] sm:$0xff]
        %v699 = vld [vmem:[%s198 + $0xd98] sm:$0xff]
        %v700 = vld [vmem:[%s198 + $0xda0] sm:$0xff]
        %v701 = vld [vmem:[%s198 + $0xda8] sm:$0xff]
        %v702 = vld [vmem:[%s198 + $0xdb0] sm:$0xff]
        %v703 = vld [vmem:[%s198 + $0xdb8] sm:$0xff]
        %v704 = vld [vmem:[%s198 + $0xdc0] sm:$0xff]
        %v705 = vld [vmem:[%s198 + $0xdc8] sm:$0xff]
        %v706 = vld [vmem:[%s198 + $0xdd0] sm:$0xff]
        %v707 = vld [vmem:[%s198 + $0xdd8] sm:$0xff]
        %v708 = vld [vmem:[%s198 + $0xde0] sm:$0xff]
        %v709 = vld [vmem:[%s198 + $0xde8] sm:$0xff]
        %v710 = vld [vmem:[%s198 + $0xdf0] sm:$0xff]
        %v711 = vld [vmem:[%s198 + $0xdf8] sm:$0xff]
        %v712 = vld [vmem:[%s198 + $0xe00] sm:$0xff]
        %v713 = vld [vmem:[%s198 + $0xe08] sm:$0xff]
        %v714 = vld [vmem:[%s198 + $0xe10] sm:$0xff]
        %v715 = vld [vmem:[%s198 + $0xe18] sm:$0xff]
        %v716 = vld [vmem:[%s198 + $0xe20] sm:$0xff]
        %v717 = vld [vmem:[%s198 + $0xe28] sm:$0xff]
        %v718 = vld [vmem:[%s198 + $0xe30] sm:$0xff]
        %v719 = vld [vmem:[%s198 + $0xe38] sm:$0xff]
        %v720 = vld [vmem:[%s198 + $0xe40] sm:$0xff]
        %v721 = vld [vmem:[%s198 + $0xe48] sm:$0xff]
        %v722 = vld [vmem:[%s198 + $0xe50] sm:$0xff]
        %v723 = vld [vmem:[%s198 + $0xe58] sm:$0xff]
        %v724 = vld [vmem:[%s198 + $0xe60] sm:$0xff]
        %v725 = vld [vmem:[%s198 + $0xe68] sm:$0xff]
        %v726 = vld [vmem:[%s198 + $0xe70] sm:$0xff]
        %v727 = vld [vmem:[%s198 + $0xe78] sm:$0xff]
        %v728 = vld [vmem:[%s198 + $0xe80] sm:$0xff]
        %v729 = vld [vmem:[%s198 + $0xe88] sm:$0xff]
        %v730 = vld [vmem:[%s198 + $0xe90] sm:$0xff]
        %v731 = vld [vmem:[%s198 + $0xe98] sm:$0xff]
        %v732 = vld [vmem:[%s198 + $0xea0] sm:$0xff]
        %v733 = vld [vmem:[%s198 + $0xea8] sm:$0xff]
        %v734 = vld [vmem:[%s198 + $0xeb0] sm:$0xff]
        %v735 = vld [vmem:[%s198 + $0xeb8] sm:$0xff]
        %v736 = vld [vmem:[%s198 + $0xec0] sm:$0xff]
        %v737 = vld [vmem:[%s198 + $0xec8] sm:$0xff]
        %v738 = vld [vmem:[%s198 + $0xed0] sm:$0xff]
        %v739 = vld [vmem:[%s198 + $0xed8] sm:$0xff]
        %v740 = vld [vmem:[%s198 + $0xee0] sm:$0xff]
        %v741 = vld [vmem:[%s198 + $0xee8] sm:$0xff]
        %v742 = vld [vmem:[%s198 + $0xef0] sm:$0xff]
        %v743 = vld [vmem:[%s198 + $0xef8] sm:$0xff]
        %v744 = vld [vmem:[%s198 + $0xf00] sm:$0xff]
        %v745 = vld [vmem:[%s198 + $0xf08] sm:$0xff]
        %v746 = vld [vmem:[%s198 + $0xf10] sm:$0xff]
        %v747 = vld [vmem:[%s198 + $0xf18] sm:$0xff]
        %v748 = vld [vmem:[%s198 + $0xf20] sm:$0xff]
        %v749 = vld [vmem:[%s198 + $0xf28] sm:$0xff]
        %v750 = vld [vmem:[%s198 + $0xf30] sm:$0xff]
        %v751 = vld [vmem:[%s198 + $0xf38] sm:$0xff]
        %v752 = vld [vmem:[%s198 + $0xf40] sm:$0xff]
        %v753 = vld [vmem:[%s198 + $0xf48] sm:$0xff]
        %v754 = vld [vmem:[%s198 + $0xf50] sm:$0xff]
        %v755 = vld [vmem:[%s198 + $0xf58] sm:$0xff]
        %v756 = vld [vmem:[%s198 + $0xf60] sm:$0xff]
        %v757 = vld [vmem:[%s198 + $0xf68] sm:$0xff]
        %v758 = vld [vmem:[%s198 + $0xf70] sm:$0xff]
        %v759 = vld [vmem:[%s198 + $0xf78] sm:$0xff]
        %v760 = vld [vmem:[%s198 + $0xf80] sm:$0xff]
        %v761 = vld [vmem:[%s198 + $0xf88] sm:$0xff]
        %v762 = vld [vmem:[%s198 + $0xf90] sm:$0xff]
        %v763 = vld [vmem:[%s198 + $0xf98] sm:$0xff]
        %v764 = vld [vmem:[%s198 + $0xfa0] sm:$0xff]
        %v765 = vld [vmem:[%s198 + $0xfa8] sm:$0xff]
        %v766 = vld [vmem:[%s198 + $0xfb0] sm:$0xff]
        %v767 = vld [vmem:[%s198 + $0xfb8] sm:$0xff]
        %v768 = vld [vmem:[%s198 + $0xfc0] sm:$0xff]
        %v769 = vld [vmem:[%s198 + $0xfc8] sm:$0xff]
        %v770 = vld [vmem:[%s198 + $0xfd0] sm:$0xff]
        %v771 = vld [vmem:[%s198 + $0xfd8] sm:$0xff]
        %v772 = vld [vmem:[%s198 + $0xfe0] sm:$0xff]
        %v773 = vld [vmem:[%s198 + $0xfe8] sm:$0xff]
        %v774 = vld [vmem:[%s198 + $0xff0] sm:$0xff]
        %v775 = vld [vmem:[%s198 + $0xff8] sm:$0xff]
        %v776 = vld [vmem:[%s208] sm:$0xff]
        %v777 = vld [vmem:[%s208 + $0x8] sm:$0xff]
        %v780 = vperm.slane %v776, 0
        %v781 = vperm.slane %v776, 1
        %v782 = vperm.slane %v776, 2
        %v783 = vperm.slane %v776, 3
        %v784 = vperm.slane %v776, 4
        %v785 = vperm.slane %v776, 5
        %v786 = vperm.slane %v776, 6
        %v787 = vperm.slane %v776, 7
        %v788 = vperm.slane %v777, 0
        %v789 = vperm.slane %v777, 1
        %v790 = vperm.slane %v777, 2
        %v791 = vperm.slane %v777, 3
        %v792 = vperm.slane %v777, 4
        %v793 = vperm.slane %v777, 5
        %v794 = vperm.slane %v777, 6
        %v795 = vperm.slane %v777, 7
        %v1324 = vunpack.c.l.b16 %v264
        %v1325 = vunpack.c.h.b16 %v264
        %v1326 = vunpack.c.l.b16 %v265
        %v1327 = vunpack.c.h.b16 %v265
        %v1328 = vunpack.c.l.b16 %v266
        %v1329 = vunpack.c.h.b16 %v266
        %v1330 = vunpack.c.l.b16 %v267
        %v1331 = vunpack.c.h.b16 %v267
        %v1332 = vunpack.c.l.b16 %v268
        %v1333 = vunpack.c.h.b16 %v268
        %v1334 = vunpack.c.l.b16 %v269
        %v1335 = vunpack.c.h.b16 %v269
        %v1336 = vunpack.c.l.b16 %v270
        %v1337 = vunpack.c.h.b16 %v270
        %v1338 = vunpack.c.l.b16 %v271
        %v1339 = vunpack.c.h.b16 %v271
        %v1340 = vunpack.c.l.b16 %v272
        %v1341 = vunpack.c.h.b16 %v272
        %v1342 = vunpack.c.l.b16 %v273
        %v1343 = vunpack.c.h.b16 %v273
        %v1344 = vunpack.c.l.b16 %v274
        %v1345 = vunpack.c.h.b16 %v274
        %v1346 = vunpack.c.l.b16 %v275
        %v1347 = vunpack.c.h.b16 %v275
        %v1348 = vunpack.c.l.b16 %v276
        %v1349 = vunpack.c.h.b16 %v276
        %v1350 = vunpack.c.l.b16 %v277
        %v1351 = vunpack.c.h.b16 %v277
        %v1352 = vunpack.c.l.b16 %v278
        %v1353 = vunpack.c.h.b16 %v278
        %v1354 = vunpack.c.l.b16 %v279
        %v1355 = vunpack.c.h.b16 %v279
        %v1356 = vunpack.c.l.b16 %v280
        %v1357 = vunpack.c.h.b16 %v280
        %v1358 = vunpack.c.l.b16 %v281
        %v1359 = vunpack.c.h.b16 %v281
        %v1360 = vunpack.c.l.b16 %v282
        %v1361 = vunpack.c.h.b16 %v282
        %v1362 = vunpack.c.l.b16 %v283
        %v1363 = vunpack.c.h.b16 %v283
        %v1364 = vunpack.c.l.b16 %v284
        %v1365 = vunpack.c.h.b16 %v284
        %v1366 = vunpack.c.l.b16 %v285
        %v1367 = vunpack.c.h.b16 %v285
        %v1368 = vunpack.c.l.b16 %v286
        %v1369 = vunpack.c.h.b16 %v286
        %v1370 = vunpack.c.l.b16 %v287
        %v1371 = vunpack.c.h.b16 %v287
        %v1372 = vunpack.c.l.b16 %v288
        %v1373 = vunpack.c.h.b16 %v288
        %v1374 = vunpack.c.l.b16 %v289
        %v1375 = vunpack.c.h.b16 %v289
        %v1376 = vunpack.c.l.b16 %v290
        %v1377 = vunpack.c.h.b16 %v290
        %v1378 = vunpack.c.l.b16 %v291
        %v1379 = vunpack.c.h.b16 %v291
        %v1380 = vunpack.c.l.b16 %v292
        %v1381 = vunpack.c.h.b16 %v292
        %v1382 = vunpack.c.l.b16 %v293
        %v1383 = vunpack.c.h.b16 %v293
        %v1384 = vunpack.c.l.b16 %v294
        %v1385 = vunpack.c.h.b16 %v294
        %v1386 = vunpack.c.l.b16 %v295
        %v1387 = vunpack.c.h.b16 %v295
        %v1388 = vunpack.c.l.b16 %v296
        %v1389 = vunpack.c.h.b16 %v296
        %v1390 = vunpack.c.l.b16 %v297
        %v1391 = vunpack.c.h.b16 %v297
        %v1392 = vunpack.c.l.b16 %v298
        %v1393 = vunpack.c.h.b16 %v298
        %v1394 = vunpack.c.l.b16 %v299
        %v1395 = vunpack.c.h.b16 %v299
        %v1396 = vunpack.c.l.b16 %v300
        %v1397 = vunpack.c.h.b16 %v300
        %v1398 = vunpack.c.l.b16 %v301
        %v1399 = vunpack.c.h.b16 %v301
        %v1400 = vunpack.c.l.b16 %v302
        %v1401 = vunpack.c.h.b16 %v302
        %v1402 = vunpack.c.l.b16 %v303
        %v1403 = vunpack.c.h.b16 %v303
        %v1404 = vunpack.c.l.b16 %v304
        %v1405 = vunpack.c.h.b16 %v304
        %v1406 = vunpack.c.l.b16 %v305
        %v1407 = vunpack.c.h.b16 %v305
        %v1408 = vunpack.c.l.b16 %v306
        %v1409 = vunpack.c.h.b16 %v306
        %v1410 = vunpack.c.l.b16 %v307
        %v1411 = vunpack.c.h.b16 %v307
        %v1412 = vunpack.c.l.b16 %v308
        %v1413 = vunpack.c.h.b16 %v308
        %v1414 = vunpack.c.l.b16 %v309
        %v1415 = vunpack.c.h.b16 %v309
        %v1416 = vunpack.c.l.b16 %v310
        %v1417 = vunpack.c.h.b16 %v310
        %v1418 = vunpack.c.l.b16 %v311
        %v1419 = vunpack.c.h.b16 %v311
        %v1420 = vunpack.c.l.b16 %v312
        %v1421 = vunpack.c.h.b16 %v312
        %v1422 = vunpack.c.l.b16 %v313
        %v1423 = vunpack.c.h.b16 %v313
        %v1424 = vunpack.c.l.b16 %v314
        %v1425 = vunpack.c.h.b16 %v314
        %v1426 = vunpack.c.l.b16 %v315
        %v1427 = vunpack.c.h.b16 %v315
        %v1428 = vunpack.c.l.b16 %v316
        %v1429 = vunpack.c.h.b16 %v316
        %v1430 = vunpack.c.l.b16 %v317
        %v1431 = vunpack.c.h.b16 %v317
        %v1432 = vunpack.c.l.b16 %v318
        %v1433 = vunpack.c.h.b16 %v318
        %v1434 = vunpack.c.l.b16 %v319
        %v1435 = vunpack.c.h.b16 %v319
        %v1436 = vunpack.c.l.b16 %v320
        %v1437 = vunpack.c.h.b16 %v320
        %v1438 = vunpack.c.l.b16 %v321
        %v1439 = vunpack.c.h.b16 %v321
        %v1440 = vunpack.c.l.b16 %v322
        %v1441 = vunpack.c.h.b16 %v322
        %v1442 = vunpack.c.l.b16 %v323
        %v1443 = vunpack.c.h.b16 %v323
        %v1444 = vunpack.c.l.b16 %v324
        %v1445 = vunpack.c.h.b16 %v324
        %v1446 = vunpack.c.l.b16 %v325
        %v1447 = vunpack.c.h.b16 %v325
        %v1448 = vunpack.c.l.b16 %v326
        %v1449 = vunpack.c.h.b16 %v326
        %v1450 = vunpack.c.l.b16 %v327
        %v1451 = vunpack.c.h.b16 %v327
        %v1452 = vunpack.c.l.b16 %v328
        %v1453 = vunpack.c.h.b16 %v328
        %v1454 = vunpack.c.l.b16 %v329
        %v1455 = vunpack.c.h.b16 %v329
        %v1456 = vunpack.c.l.b16 %v330
        %v1457 = vunpack.c.h.b16 %v330
        %v1458 = vunpack.c.l.b16 %v331
        %v1459 = vunpack.c.h.b16 %v331
        %v1460 = vunpack.c.l.b16 %v332
        %v1461 = vunpack.c.h.b16 %v332
        %v1462 = vunpack.c.l.b16 %v333
        %v1463 = vunpack.c.h.b16 %v333
        %v1464 = vunpack.c.l.b16 %v334
        %v1465 = vunpack.c.h.b16 %v334
        %v1466 = vunpack.c.l.b16 %v335
        %v1467 = vunpack.c.h.b16 %v335
        %v1468 = vunpack.c.l.b16 %v336
        %v1469 = vunpack.c.h.b16 %v336
        %v1470 = vunpack.c.l.b16 %v337
        %v1471 = vunpack.c.h.b16 %v337
        %v1472 = vunpack.c.l.b16 %v338
        %v1473 = vunpack.c.h.b16 %v338
        %v1474 = vunpack.c.l.b16 %v339
        %v1475 = vunpack.c.h.b16 %v339
        %v1476 = vunpack.c.l.b16 %v340
        %v1477 = vunpack.c.h.b16 %v340
        %v1478 = vunpack.c.l.b16 %v341
        %v1479 = vunpack.c.h.b16 %v341
        %v1480 = vunpack.c.l.b16 %v342
        %v1481 = vunpack.c.h.b16 %v342
        %v1482 = vunpack.c.l.b16 %v343
        %v1483 = vunpack.c.h.b16 %v343
        %v1484 = vunpack.c.l.b16 %v344
        %v1485 = vunpack.c.h.b16 %v344
        %v1486 = vunpack.c.l.b16 %v345
        %v1487 = vunpack.c.h.b16 %v345
        %v1488 = vunpack.c.l.b16 %v346
        %v1489 = vunpack.c.h.b16 %v346
        %v1490 = vunpack.c.l.b16 %v347
        %v1491 = vunpack.c.h.b16 %v347
        %v1492 = vunpack.c.l.b16 %v348
        %v1493 = vunpack.c.h.b16 %v348
        %v1494 = vunpack.c.l.b16 %v349
        %v1495 = vunpack.c.h.b16 %v349
        %v1496 = vunpack.c.l.b16 %v350
        %v1497 = vunpack.c.h.b16 %v350
        %v1498 = vunpack.c.l.b16 %v351
        %v1499 = vunpack.c.h.b16 %v351
        %v1500 = vunpack.c.l.b16 %v352
        %v1501 = vunpack.c.h.b16 %v352
        %v1502 = vunpack.c.l.b16 %v353
        %v1503 = vunpack.c.h.b16 %v353
        %v1504 = vunpack.c.l.b16 %v354
        %v1505 = vunpack.c.h.b16 %v354
        %v1506 = vunpack.c.l.b16 %v355
        %v1507 = vunpack.c.h.b16 %v355
        %v1508 = vunpack.c.l.b16 %v356
        %v1509 = vunpack.c.h.b16 %v356
        %v1510 = vunpack.c.l.b16 %v357
        %v1511 = vunpack.c.h.b16 %v357
        %v1512 = vunpack.c.l.b16 %v358
        %v1513 = vunpack.c.h.b16 %v358
        %v1514 = vunpack.c.l.b16 %v359
        %v1515 = vunpack.c.h.b16 %v359
        %v1516 = vunpack.c.l.b16 %v360
        %v1517 = vunpack.c.h.b16 %v360
        %v1518 = vunpack.c.l.b16 %v361
        %v1519 = vunpack.c.h.b16 %v361
        %v1520 = vunpack.c.l.b16 %v362
        %v1521 = vunpack.c.h.b16 %v362
        %v1522 = vunpack.c.l.b16 %v363
        %v1523 = vunpack.c.h.b16 %v363
        %v1524 = vunpack.c.l.b16 %v364
        %v1525 = vunpack.c.h.b16 %v364
        %v1526 = vunpack.c.l.b16 %v365
        %v1527 = vunpack.c.h.b16 %v365
        %v1528 = vunpack.c.l.b16 %v366
        %v1529 = vunpack.c.h.b16 %v366
        %v1530 = vunpack.c.l.b16 %v367
        %v1531 = vunpack.c.h.b16 %v367
        %v1532 = vunpack.c.l.b16 %v368
        %v1533 = vunpack.c.h.b16 %v368
        %v1534 = vunpack.c.l.b16 %v369
        %v1535 = vunpack.c.h.b16 %v369
        %v1536 = vunpack.c.l.b16 %v370
        %v1537 = vunpack.c.h.b16 %v370
        %v1538 = vunpack.c.l.b16 %v371
        %v1539 = vunpack.c.h.b16 %v371
        %v1540 = vunpack.c.l.b16 %v372
        %v1541 = vunpack.c.h.b16 %v372
        %v1542 = vunpack.c.l.b16 %v373
        %v1543 = vunpack.c.h.b16 %v373
        %v1544 = vunpack.c.l.b16 %v374
        %v1545 = vunpack.c.h.b16 %v374
        %v1546 = vunpack.c.l.b16 %v375
        %v1547 = vunpack.c.h.b16 %v375
        %v1548 = vunpack.c.l.b16 %v376
        %v1549 = vunpack.c.h.b16 %v376
        %v1550 = vunpack.c.l.b16 %v377
        %v1551 = vunpack.c.h.b16 %v377
        %v1552 = vunpack.c.l.b16 %v378
        %v1553 = vunpack.c.h.b16 %v378
        %v1554 = vunpack.c.l.b16 %v379
        %v1555 = vunpack.c.h.b16 %v379
        %v1556 = vunpack.c.l.b16 %v380
        %v1557 = vunpack.c.h.b16 %v380
        %v1558 = vunpack.c.l.b16 %v381
        %v1559 = vunpack.c.h.b16 %v381
        %v1560 = vunpack.c.l.b16 %v382
        %v1561 = vunpack.c.h.b16 %v382
        %v1562 = vunpack.c.l.b16 %v383
        %v1563 = vunpack.c.h.b16 %v383
        %v1564 = vunpack.c.l.b16 %v384
        %v1565 = vunpack.c.h.b16 %v384
        %v1566 = vunpack.c.l.b16 %v385
        %v1567 = vunpack.c.h.b16 %v385
        %v1568 = vunpack.c.l.b16 %v386
        %v1569 = vunpack.c.h.b16 %v386
        %v1570 = vunpack.c.l.b16 %v387
        %v1571 = vunpack.c.h.b16 %v387
        %v1572 = vunpack.c.l.b16 %v388
        %v1573 = vunpack.c.h.b16 %v388
        %v1574 = vunpack.c.l.b16 %v389
        %v1575 = vunpack.c.h.b16 %v389
        %v1576 = vunpack.c.l.b16 %v390
        %v1577 = vunpack.c.h.b16 %v390
        %v1578 = vunpack.c.l.b16 %v391
        %v1579 = vunpack.c.h.b16 %v391
        %v1580 = vunpack.c.l.b16 %v392
        %v1581 = vunpack.c.h.b16 %v392
        %v1582 = vunpack.c.l.b16 %v393
        %v1583 = vunpack.c.h.b16 %v393
        %v1584 = vunpack.c.l.b16 %v394
        %v1585 = vunpack.c.h.b16 %v394
        %v1586 = vunpack.c.l.b16 %v395
        %v1587 = vunpack.c.h.b16 %v395
        %v1588 = vunpack.c.l.b16 %v396
        %v1589 = vunpack.c.h.b16 %v396
        %v1590 = vunpack.c.l.b16 %v397
        %v1591 = vunpack.c.h.b16 %v397
        %v1592 = vunpack.c.l.b16 %v398
        %v1593 = vunpack.c.h.b16 %v398
        %v1594 = vunpack.c.l.b16 %v399
        %v1595 = vunpack.c.h.b16 %v399
        %v1596 = vunpack.c.l.b16 %v400
        %v1597 = vunpack.c.h.b16 %v400
        %v1598 = vunpack.c.l.b16 %v401
        %v1599 = vunpack.c.h.b16 %v401
        %v1600 = vunpack.c.l.b16 %v402
        %v1601 = vunpack.c.h.b16 %v402
        %v1602 = vunpack.c.l.b16 %v403
        %v1603 = vunpack.c.h.b16 %v403
        %v1604 = vunpack.c.l.b16 %v404
        %v1605 = vunpack.c.h.b16 %v404
        %v1606 = vunpack.c.l.b16 %v405
        %v1607 = vunpack.c.h.b16 %v405
        %v1608 = vunpack.c.l.b16 %v406
        %v1609 = vunpack.c.h.b16 %v406
        %v1610 = vunpack.c.l.b16 %v407
        %v1611 = vunpack.c.h.b16 %v407
        %v1612 = vunpack.c.l.b16 %v408
        %v1613 = vunpack.c.h.b16 %v408
        %v1614 = vunpack.c.l.b16 %v409
        %v1615 = vunpack.c.h.b16 %v409
        %v1616 = vunpack.c.l.b16 %v410
        %v1617 = vunpack.c.h.b16 %v410
        %v1618 = vunpack.c.l.b16 %v411
        %v1619 = vunpack.c.h.b16 %v411
        %v1620 = vunpack.c.l.b16 %v412
        %v1621 = vunpack.c.h.b16 %v412
        %v1622 = vunpack.c.l.b16 %v413
        %v1623 = vunpack.c.h.b16 %v413
        %v1624 = vunpack.c.l.b16 %v414
        %v1625 = vunpack.c.h.b16 %v414
        %v1626 = vunpack.c.l.b16 %v415
        %v1627 = vunpack.c.h.b16 %v415
        %v1628 = vunpack.c.l.b16 %v416
        %v1629 = vunpack.c.h.b16 %v416
        %v1630 = vunpack.c.l.b16 %v417
        %v1631 = vunpack.c.h.b16 %v417
        %v1632 = vunpack.c.l.b16 %v418
        %v1633 = vunpack.c.h.b16 %v418
        %v1634 = vunpack.c.l.b16 %v419
        %v1635 = vunpack.c.h.b16 %v419
        %v1636 = vunpack.c.l.b16 %v420
        %v1637 = vunpack.c.h.b16 %v420
        %v1638 = vunpack.c.l.b16 %v421
        %v1639 = vunpack.c.h.b16 %v421
        %v1640 = vunpack.c.l.b16 %v422
        %v1641 = vunpack.c.h.b16 %v422
        %v1642 = vunpack.c.l.b16 %v423
        %v1643 = vunpack.c.h.b16 %v423
        %v1644 = vunpack.c.l.b16 %v424
        %v1645 = vunpack.c.h.b16 %v424
        %v1646 = vunpack.c.l.b16 %v425
        %v1647 = vunpack.c.h.b16 %v425
        %v1648 = vunpack.c.l.b16 %v426
        %v1649 = vunpack.c.h.b16 %v426
        %v1650 = vunpack.c.l.b16 %v427
        %v1651 = vunpack.c.h.b16 %v427
        %v1652 = vunpack.c.l.b16 %v428
        %v1653 = vunpack.c.h.b16 %v428
        %v1654 = vunpack.c.l.b16 %v429
        %v1655 = vunpack.c.h.b16 %v429
        %v1656 = vunpack.c.l.b16 %v430
        %v1657 = vunpack.c.h.b16 %v430
        %v1658 = vunpack.c.l.b16 %v431
        %v1659 = vunpack.c.h.b16 %v431
        %v1660 = vunpack.c.l.b16 %v432
        %v1661 = vunpack.c.h.b16 %v432
        %v1662 = vunpack.c.l.b16 %v433
        %v1663 = vunpack.c.h.b16 %v433
        %v1664 = vunpack.c.l.b16 %v434
        %v1665 = vunpack.c.h.b16 %v434
        %v1666 = vunpack.c.l.b16 %v435
        %v1667 = vunpack.c.h.b16 %v435
        %v1668 = vunpack.c.l.b16 %v436
        %v1669 = vunpack.c.h.b16 %v436
        %v1670 = vunpack.c.l.b16 %v437
        %v1671 = vunpack.c.h.b16 %v437
        %v1672 = vunpack.c.l.b16 %v438
        %v1673 = vunpack.c.h.b16 %v438
        %v1674 = vunpack.c.l.b16 %v439
        %v1675 = vunpack.c.h.b16 %v439
        %v1676 = vunpack.c.l.b16 %v440
        %v1677 = vunpack.c.h.b16 %v440
        %v1678 = vunpack.c.l.b16 %v441
        %v1679 = vunpack.c.h.b16 %v441
        %v1680 = vunpack.c.l.b16 %v442
        %v1681 = vunpack.c.h.b16 %v442
        %v1682 = vunpack.c.l.b16 %v443
        %v1683 = vunpack.c.h.b16 %v443
        %v1684 = vunpack.c.l.b16 %v444
        %v1685 = vunpack.c.h.b16 %v444
        %v1686 = vunpack.c.l.b16 %v445
        %v1687 = vunpack.c.h.b16 %v445
        %v1688 = vunpack.c.l.b16 %v446
        %v1689 = vunpack.c.h.b16 %v446
        %v1690 = vunpack.c.l.b16 %v447
        %v1691 = vunpack.c.h.b16 %v447
        %v1692 = vunpack.c.l.b16 %v448
        %v1693 = vunpack.c.h.b16 %v448
        %v1694 = vunpack.c.l.b16 %v449
        %v1695 = vunpack.c.h.b16 %v449
        %v1696 = vunpack.c.l.b16 %v450
        %v1697 = vunpack.c.h.b16 %v450
        %v1698 = vunpack.c.l.b16 %v451
        %v1699 = vunpack.c.h.b16 %v451
        %v1700 = vunpack.c.l.b16 %v452
        %v1701 = vunpack.c.h.b16 %v452
        %v1702 = vunpack.c.l.b16 %v453
        %v1703 = vunpack.c.h.b16 %v453
        %v1704 = vunpack.c.l.b16 %v454
        %v1705 = vunpack.c.h.b16 %v454
        %v1706 = vunpack.c.l.b16 %v455
        %v1707 = vunpack.c.h.b16 %v455
        %v1708 = vunpack.c.l.b16 %v456
        %v1709 = vunpack.c.h.b16 %v456
        %v1710 = vunpack.c.l.b16 %v457
        %v1711 = vunpack.c.h.b16 %v457
        %v1712 = vunpack.c.l.b16 %v458
        %v1713 = vunpack.c.h.b16 %v458
        %v1714 = vunpack.c.l.b16 %v459
        %v1715 = vunpack.c.h.b16 %v459
        %v1716 = vunpack.c.l.b16 %v460
        %v1717 = vunpack.c.h.b16 %v460
        %v1718 = vunpack.c.l.b16 %v461
        %v1719 = vunpack.c.h.b16 %v461
        %v1720 = vunpack.c.l.b16 %v462
        %v1721 = vunpack.c.h.b16 %v462
        %v1722 = vunpack.c.l.b16 %v463
        %v1723 = vunpack.c.h.b16 %v463
        %v1724 = vunpack.c.l.b16 %v464
        %v1725 = vunpack.c.h.b16 %v464
        %v1726 = vunpack.c.l.b16 %v465
        %v1727 = vunpack.c.h.b16 %v465
        %v1728 = vunpack.c.l.b16 %v466
        %v1729 = vunpack.c.h.b16 %v466
        %v1730 = vunpack.c.l.b16 %v467
        %v1731 = vunpack.c.h.b16 %v467
        %v1732 = vunpack.c.l.b16 %v468
        %v1733 = vunpack.c.h.b16 %v468
        %v1734 = vunpack.c.l.b16 %v469
        %v1735 = vunpack.c.h.b16 %v469
        %v1736 = vunpack.c.l.b16 %v470
        %v1737 = vunpack.c.h.b16 %v470
        %v1738 = vunpack.c.l.b16 %v471
        %v1739 = vunpack.c.h.b16 %v471
        %v1740 = vunpack.c.l.b16 %v472
        %v1741 = vunpack.c.h.b16 %v472
        %v1742 = vunpack.c.l.b16 %v473
        %v1743 = vunpack.c.h.b16 %v473
        %v1744 = vunpack.c.l.b16 %v474
        %v1745 = vunpack.c.h.b16 %v474
        %v1746 = vunpack.c.l.b16 %v475
        %v1747 = vunpack.c.h.b16 %v475
        %v1748 = vunpack.c.l.b16 %v476
        %v1749 = vunpack.c.h.b16 %v476
        %v1750 = vunpack.c.l.b16 %v477
        %v1751 = vunpack.c.h.b16 %v477
        %v1752 = vunpack.c.l.b16 %v478
        %v1753 = vunpack.c.h.b16 %v478
        %v1754 = vunpack.c.l.b16 %v479
        %v1755 = vunpack.c.h.b16 %v479
        %v1756 = vunpack.c.l.b16 %v480
        %v1757 = vunpack.c.h.b16 %v480
        %v1758 = vunpack.c.l.b16 %v481
        %v1759 = vunpack.c.h.b16 %v481
        %v1760 = vunpack.c.l.b16 %v482
        %v1761 = vunpack.c.h.b16 %v482
        %v1762 = vunpack.c.l.b16 %v483
        %v1763 = vunpack.c.h.b16 %v483
        %v1764 = vunpack.c.l.b16 %v484
        %v1765 = vunpack.c.h.b16 %v484
        %v1766 = vunpack.c.l.b16 %v485
        %v1767 = vunpack.c.h.b16 %v485
        %v1768 = vunpack.c.l.b16 %v486
        %v1769 = vunpack.c.h.b16 %v486
        %v1770 = vunpack.c.l.b16 %v487
        %v1771 = vunpack.c.h.b16 %v487
        %v1772 = vunpack.c.l.b16 %v488
        %v1773 = vunpack.c.h.b16 %v488
        %v1774 = vunpack.c.l.b16 %v489
        %v1775 = vunpack.c.h.b16 %v489
        %v1776 = vunpack.c.l.b16 %v490
        %v1777 = vunpack.c.h.b16 %v490
        %v1778 = vunpack.c.l.b16 %v491
        %v1779 = vunpack.c.h.b16 %v491
        %v1780 = vunpack.c.l.b16 %v492
        %v1781 = vunpack.c.h.b16 %v492
        %v1782 = vunpack.c.l.b16 %v493
        %v1783 = vunpack.c.h.b16 %v493
        %v1784 = vunpack.c.l.b16 %v494
        %v1785 = vunpack.c.h.b16 %v494
        %v1786 = vunpack.c.l.b16 %v495
        %v1787 = vunpack.c.h.b16 %v495
        %v1788 = vunpack.c.l.b16 %v496
        %v1789 = vunpack.c.h.b16 %v496
        %v1790 = vunpack.c.l.b16 %v497
        %v1791 = vunpack.c.h.b16 %v497
        %v1792 = vunpack.c.l.b16 %v498
        %v1793 = vunpack.c.h.b16 %v498
        %v1794 = vunpack.c.l.b16 %v499
        %v1795 = vunpack.c.h.b16 %v499
        %v1796 = vunpack.c.l.b16 %v500
        %v1797 = vunpack.c.h.b16 %v500
        %v1798 = vunpack.c.l.b16 %v501
        %v1799 = vunpack.c.h.b16 %v501
        %v1800 = vunpack.c.l.b16 %v502
        %v1801 = vunpack.c.h.b16 %v502
        %v1802 = vunpack.c.l.b16 %v503
        %v1803 = vunpack.c.h.b16 %v503
        %v1804 = vunpack.c.l.b16 %v504
        %v1805 = vunpack.c.h.b16 %v504
        %v1806 = vunpack.c.l.b16 %v505
        %v1807 = vunpack.c.h.b16 %v505
        %v1808 = vunpack.c.l.b16 %v506
        %v1809 = vunpack.c.h.b16 %v506
        %v1810 = vunpack.c.l.b16 %v507
        %v1811 = vunpack.c.h.b16 %v507
        %v1812 = vunpack.c.l.b16 %v508
        %v1813 = vunpack.c.h.b16 %v508
        %v1814 = vunpack.c.l.b16 %v509
        %v1815 = vunpack.c.h.b16 %v509
        %v1816 = vunpack.c.l.b16 %v510
        %v1817 = vunpack.c.h.b16 %v510
        %v1818 = vunpack.c.l.b16 %v511
        %v1819 = vunpack.c.h.b16 %v511
        %v1820 = vunpack.c.l.b16 %v512
        %v1821 = vunpack.c.h.b16 %v512
        %v1822 = vunpack.c.l.b16 %v513
        %v1823 = vunpack.c.h.b16 %v513
        %v1824 = vunpack.c.l.b16 %v514
        %v1825 = vunpack.c.h.b16 %v514
        %v1826 = vunpack.c.l.b16 %v515
        %v1827 = vunpack.c.h.b16 %v515
        %v1828 = vunpack.c.l.b16 %v516
        %v1829 = vunpack.c.h.b16 %v516
        %v1830 = vunpack.c.l.b16 %v517
        %v1831 = vunpack.c.h.b16 %v517
        %v1832 = vunpack.c.l.b16 %v518
        %v1833 = vunpack.c.h.b16 %v518
        %v1834 = vunpack.c.l.b16 %v519
        %v1835 = vunpack.c.h.b16 %v519
        %v1836 = vunpack.c.l.b16 %v520
        %v1837 = vunpack.c.h.b16 %v520
        %v1838 = vunpack.c.l.b16 %v521
        %v1839 = vunpack.c.h.b16 %v521
        %v1840 = vunpack.c.l.b16 %v522
        %v1841 = vunpack.c.h.b16 %v522
        %v1842 = vunpack.c.l.b16 %v523
        %v1843 = vunpack.c.h.b16 %v523
        %v1844 = vunpack.c.l.b16 %v524
        %v1845 = vunpack.c.h.b16 %v524
        %v1846 = vunpack.c.l.b16 %v525
        %v1847 = vunpack.c.h.b16 %v525
        %v1848 = vunpack.c.l.b16 %v526
        %v1849 = vunpack.c.h.b16 %v526
        %v1850 = vunpack.c.l.b16 %v527
        %v1851 = vunpack.c.h.b16 %v527
        %v1852 = vunpack.c.l.b16 %v528
        %v1853 = vunpack.c.h.b16 %v528
        %v1854 = vunpack.c.l.b16 %v529
        %v1855 = vunpack.c.h.b16 %v529
        %v1856 = vunpack.c.l.b16 %v530
        %v1857 = vunpack.c.h.b16 %v530
        %v1858 = vunpack.c.l.b16 %v531
        %v1859 = vunpack.c.h.b16 %v531
        %v1860 = vunpack.c.l.b16 %v532
        %v1861 = vunpack.c.h.b16 %v532
        %v1862 = vunpack.c.l.b16 %v533
        %v1863 = vunpack.c.h.b16 %v533
        %v1864 = vunpack.c.l.b16 %v534
        %v1865 = vunpack.c.h.b16 %v534
        %v1866 = vunpack.c.l.b16 %v535
        %v1867 = vunpack.c.h.b16 %v535
        %v1868 = vunpack.c.l.b16 %v536
        %v1869 = vunpack.c.h.b16 %v536
        %v1870 = vunpack.c.l.b16 %v537
        %v1871 = vunpack.c.h.b16 %v537
        %v1872 = vunpack.c.l.b16 %v538
        %v1873 = vunpack.c.h.b16 %v538
        %v1874 = vunpack.c.l.b16 %v539
        %v1875 = vunpack.c.h.b16 %v539
        %v1876 = vunpack.c.l.b16 %v540
        %v1877 = vunpack.c.h.b16 %v540
        %v1878 = vunpack.c.l.b16 %v541
        %v1879 = vunpack.c.h.b16 %v541
        %v1880 = vunpack.c.l.b16 %v542
        %v1881 = vunpack.c.h.b16 %v542
        %v1882 = vunpack.c.l.b16 %v543
        %v1883 = vunpack.c.h.b16 %v543
        %v1884 = vunpack.c.l.b16 %v544
        %v1885 = vunpack.c.h.b16 %v544
        %v1886 = vunpack.c.l.b16 %v545
        %v1887 = vunpack.c.h.b16 %v545
        %v1888 = vunpack.c.l.b16 %v546
        %v1889 = vunpack.c.h.b16 %v546
        %v1890 = vunpack.c.l.b16 %v547
        %v1891 = vunpack.c.h.b16 %v547
        %v1892 = vunpack.c.l.b16 %v548
        %v1893 = vunpack.c.h.b16 %v548
        %v1894 = vunpack.c.l.b16 %v549
        %v1895 = vunpack.c.h.b16 %v549
        %v1896 = vunpack.c.l.b16 %v550
        %v1897 = vunpack.c.h.b16 %v550
        %v1898 = vunpack.c.l.b16 %v551
        %v1899 = vunpack.c.h.b16 %v551
        %v1900 = vunpack.c.l.b16 %v552
        %v1901 = vunpack.c.h.b16 %v552
        %v1902 = vunpack.c.l.b16 %v553
        %v1903 = vunpack.c.h.b16 %v553
        %v1904 = vunpack.c.l.b16 %v554
        %v1905 = vunpack.c.h.b16 %v554
        %v1906 = vunpack.c.l.b16 %v555
        %v1907 = vunpack.c.h.b16 %v555
        %v1908 = vunpack.c.l.b16 %v556
        %v1909 = vunpack.c.h.b16 %v556
        %v1910 = vunpack.c.l.b16 %v557
        %v1911 = vunpack.c.h.b16 %v557
        %v1912 = vunpack.c.l.b16 %v558
        %v1913 = vunpack.c.h.b16 %v558
        %v1914 = vunpack.c.l.b16 %v559
        %v1915 = vunpack.c.h.b16 %v559
        %v1916 = vunpack.c.l.b16 %v560
        %v1917 = vunpack.c.h.b16 %v560
        %v1918 = vunpack.c.l.b16 %v561
        %v1919 = vunpack.c.h.b16 %v561
        %v1920 = vunpack.c.l.b16 %v562
        %v1921 = vunpack.c.h.b16 %v562
        %v1922 = vunpack.c.l.b16 %v563
        %v1923 = vunpack.c.h.b16 %v563
        %v1924 = vunpack.c.l.b16 %v564
        %v1925 = vunpack.c.h.b16 %v564
        %v1926 = vunpack.c.l.b16 %v565
        %v1927 = vunpack.c.h.b16 %v565
        %v1928 = vunpack.c.l.b16 %v566
        %v1929 = vunpack.c.h.b16 %v566
        %v1930 = vunpack.c.l.b16 %v567
        %v1931 = vunpack.c.h.b16 %v567
        %v1932 = vunpack.c.l.b16 %v568
        %v1933 = vunpack.c.h.b16 %v568
        %v1934 = vunpack.c.l.b16 %v569
        %v1935 = vunpack.c.h.b16 %v569
        %v1936 = vunpack.c.l.b16 %v570
        %v1937 = vunpack.c.h.b16 %v570
        %v1938 = vunpack.c.l.b16 %v571
        %v1939 = vunpack.c.h.b16 %v571
        %v1940 = vunpack.c.l.b16 %v572
        %v1941 = vunpack.c.h.b16 %v572
        %v1942 = vunpack.c.l.b16 %v573
        %v1943 = vunpack.c.h.b16 %v573
        %v1944 = vunpack.c.l.b16 %v574
        %v1945 = vunpack.c.h.b16 %v574
        %v1946 = vunpack.c.l.b16 %v575
        %v1947 = vunpack.c.h.b16 %v575
        %v1948 = vunpack.c.l.b16 %v576
        %v1949 = vunpack.c.h.b16 %v576
        %v1950 = vunpack.c.l.b16 %v577
        %v1951 = vunpack.c.h.b16 %v577
        %v1952 = vunpack.c.l.b16 %v578
        %v1953 = vunpack.c.h.b16 %v578
        %v1954 = vunpack.c.l.b16 %v579
        %v1955 = vunpack.c.h.b16 %v579
        %v1956 = vunpack.c.l.b16 %v580
        %v1957 = vunpack.c.h.b16 %v580
        %v1958 = vunpack.c.l.b16 %v581
        %v1959 = vunpack.c.h.b16 %v581
        %v1960 = vunpack.c.l.b16 %v582
        %v1961 = vunpack.c.h.b16 %v582
        %v1962 = vunpack.c.l.b16 %v583
        %v1963 = vunpack.c.h.b16 %v583
        %v1964 = vunpack.c.l.b16 %v584
        %v1965 = vunpack.c.h.b16 %v584
        %v1966 = vunpack.c.l.b16 %v585
        %v1967 = vunpack.c.h.b16 %v585
        %v1968 = vunpack.c.l.b16 %v586
        %v1969 = vunpack.c.h.b16 %v586
        %v1970 = vunpack.c.l.b16 %v587
        %v1971 = vunpack.c.h.b16 %v587
        %v1972 = vunpack.c.l.b16 %v588
        %v1973 = vunpack.c.h.b16 %v588
        %v1974 = vunpack.c.l.b16 %v589
        %v1975 = vunpack.c.h.b16 %v589
        %v1976 = vunpack.c.l.b16 %v590
        %v1977 = vunpack.c.h.b16 %v590
        %v1978 = vunpack.c.l.b16 %v591
        %v1979 = vunpack.c.h.b16 %v591
        %v1980 = vunpack.c.l.b16 %v592
        %v1981 = vunpack.c.h.b16 %v592
        %v1982 = vunpack.c.l.b16 %v593
        %v1983 = vunpack.c.h.b16 %v593
        %v1984 = vunpack.c.l.b16 %v594
        %v1985 = vunpack.c.h.b16 %v594
        %v1986 = vunpack.c.l.b16 %v595
        %v1987 = vunpack.c.h.b16 %v595
        %v1988 = vunpack.c.l.b16 %v596
        %v1989 = vunpack.c.h.b16 %v596
        %v1990 = vunpack.c.l.b16 %v597
        %v1991 = vunpack.c.h.b16 %v597
        %v1992 = vunpack.c.l.b16 %v598
        %v1993 = vunpack.c.h.b16 %v598
        %v1994 = vunpack.c.l.b16 %v599
        %v1995 = vunpack.c.h.b16 %v599
        %v1996 = vunpack.c.l.b16 %v600
        %v1997 = vunpack.c.h.b16 %v600
        %v1998 = vunpack.c.l.b16 %v601
        %v1999 = vunpack.c.h.b16 %v601
        %v2000 = vunpack.c.l.b16 %v602
        %v2001 = vunpack.c.h.b16 %v602
        %v2002 = vunpack.c.l.b16 %v603
        %v2003 = vunpack.c.h.b16 %v603
        %v2004 = vunpack.c.l.b16 %v604
        %v2005 = vunpack.c.h.b16 %v604
        %v2006 = vunpack.c.l.b16 %v605
        %v2007 = vunpack.c.h.b16 %v605
        %v2008 = vunpack.c.l.b16 %v606
        %v2009 = vunpack.c.h.b16 %v606
        %v2010 = vunpack.c.l.b16 %v607
        %v2011 = vunpack.c.h.b16 %v607
        %v2012 = vunpack.c.l.b16 %v608
        %v2013 = vunpack.c.h.b16 %v608
        %v2014 = vunpack.c.l.b16 %v609
        %v2015 = vunpack.c.h.b16 %v609
        %v2016 = vunpack.c.l.b16 %v610
        %v2017 = vunpack.c.h.b16 %v610
        %v2018 = vunpack.c.l.b16 %v611
        %v2019 = vunpack.c.h.b16 %v611
        %v2020 = vunpack.c.l.b16 %v612
        %v2021 = vunpack.c.h.b16 %v612
        %v2022 = vunpack.c.l.b16 %v613
        %v2023 = vunpack.c.h.b16 %v613
        %v2024 = vunpack.c.l.b16 %v614
        %v2025 = vunpack.c.h.b16 %v614
        %v2026 = vunpack.c.l.b16 %v615
        %v2027 = vunpack.c.h.b16 %v615
        %v2028 = vunpack.c.l.b16 %v616
        %v2029 = vunpack.c.h.b16 %v616
        %v2030 = vunpack.c.l.b16 %v617
        %v2031 = vunpack.c.h.b16 %v617
        %v2032 = vunpack.c.l.b16 %v618
        %v2033 = vunpack.c.h.b16 %v618
        %v2034 = vunpack.c.l.b16 %v619
        %v2035 = vunpack.c.h.b16 %v619
        %v2036 = vunpack.c.l.b16 %v620
        %v2037 = vunpack.c.h.b16 %v620
        %v2038 = vunpack.c.l.b16 %v621
        %v2039 = vunpack.c.h.b16 %v621
        %v2040 = vunpack.c.l.b16 %v622
        %v2041 = vunpack.c.h.b16 %v622
        %v2042 = vunpack.c.l.b16 %v623
        %v2043 = vunpack.c.h.b16 %v623
        %v2044 = vunpack.c.l.b16 %v624
        %v2045 = vunpack.c.h.b16 %v624
        %v2046 = vunpack.c.l.b16 %v625
        %v2047 = vunpack.c.h.b16 %v625
        %v2048 = vunpack.c.l.b16 %v626
        %v2049 = vunpack.c.h.b16 %v626
        %v2050 = vunpack.c.l.b16 %v627
        %v2051 = vunpack.c.h.b16 %v627
        %v2052 = vunpack.c.l.b16 %v628
        %v2053 = vunpack.c.h.b16 %v628
        %v2054 = vunpack.c.l.b16 %v629
        %v2055 = vunpack.c.h.b16 %v629
        %v2056 = vunpack.c.l.b16 %v630
        %v2057 = vunpack.c.h.b16 %v630
        %v2058 = vunpack.c.l.b16 %v631
        %v2059 = vunpack.c.h.b16 %v631
        %v2060 = vunpack.c.l.b16 %v632
        %v2061 = vunpack.c.h.b16 %v632
        %v2062 = vunpack.c.l.b16 %v633
        %v2063 = vunpack.c.h.b16 %v633
        %v2064 = vunpack.c.l.b16 %v634
        %v2065 = vunpack.c.h.b16 %v634
        %v2066 = vunpack.c.l.b16 %v635
        %v2067 = vunpack.c.h.b16 %v635
        %v2068 = vunpack.c.l.b16 %v636
        %v2069 = vunpack.c.h.b16 %v636
        %v2070 = vunpack.c.l.b16 %v637
        %v2071 = vunpack.c.h.b16 %v637
        %v2072 = vunpack.c.l.b16 %v638
        %v2073 = vunpack.c.h.b16 %v638
        %v2074 = vunpack.c.l.b16 %v639
        %v2075 = vunpack.c.h.b16 %v639
        %v2076 = vunpack.c.l.b16 %v640
        %v2077 = vunpack.c.h.b16 %v640
        %v2078 = vunpack.c.l.b16 %v641
        %v2079 = vunpack.c.h.b16 %v641
        %v2080 = vunpack.c.l.b16 %v642
        %v2081 = vunpack.c.h.b16 %v642
        %v2082 = vunpack.c.l.b16 %v643
        %v2083 = vunpack.c.h.b16 %v643
        %v2084 = vunpack.c.l.b16 %v644
        %v2085 = vunpack.c.h.b16 %v644
        %v2086 = vunpack.c.l.b16 %v645
        %v2087 = vunpack.c.h.b16 %v645
        %v2088 = vunpack.c.l.b16 %v646
        %v2089 = vunpack.c.h.b16 %v646
        %v2090 = vunpack.c.l.b16 %v647
        %v2091 = vunpack.c.h.b16 %v647
        %v2092 = vunpack.c.l.b16 %v648
        %v2093 = vunpack.c.h.b16 %v648
        %v2094 = vunpack.c.l.b16 %v649
        %v2095 = vunpack.c.h.b16 %v649
        %v2096 = vunpack.c.l.b16 %v650
        %v2097 = vunpack.c.h.b16 %v650
        %v2098 = vunpack.c.l.b16 %v651
        %v2099 = vunpack.c.h.b16 %v651
        %v2100 = vunpack.c.l.b16 %v652
        %v2101 = vunpack.c.h.b16 %v652
        %v2102 = vunpack.c.l.b16 %v653
        %v2103 = vunpack.c.h.b16 %v653
        %v2104 = vunpack.c.l.b16 %v654
        %v2105 = vunpack.c.h.b16 %v654
        %v2106 = vunpack.c.l.b16 %v655
        %v2107 = vunpack.c.h.b16 %v655
        %v2108 = vunpack.c.l.b16 %v656
        %v2109 = vunpack.c.h.b16 %v656
        %v2110 = vunpack.c.l.b16 %v657
        %v2111 = vunpack.c.h.b16 %v657
        %v2112 = vunpack.c.l.b16 %v658
        %v2113 = vunpack.c.h.b16 %v658
        %v2114 = vunpack.c.l.b16 %v659
        %v2115 = vunpack.c.h.b16 %v659
        %v2116 = vunpack.c.l.b16 %v660
        %v2117 = vunpack.c.h.b16 %v660
        %v2118 = vunpack.c.l.b16 %v661
        %v2119 = vunpack.c.h.b16 %v661
        %v2120 = vunpack.c.l.b16 %v662
        %v2121 = vunpack.c.h.b16 %v662
        %v2122 = vunpack.c.l.b16 %v663
        %v2123 = vunpack.c.h.b16 %v663
        %v2124 = vunpack.c.l.b16 %v664
        %v2125 = vunpack.c.h.b16 %v664
        %v2126 = vunpack.c.l.b16 %v665
        %v2127 = vunpack.c.h.b16 %v665
        %v2128 = vunpack.c.l.b16 %v666
        %v2129 = vunpack.c.h.b16 %v666
        %v2130 = vunpack.c.l.b16 %v667
        %v2131 = vunpack.c.h.b16 %v667
        %v2132 = vunpack.c.l.b16 %v668
        %v2133 = vunpack.c.h.b16 %v668
        %v2134 = vunpack.c.l.b16 %v669
        %v2135 = vunpack.c.h.b16 %v669
        %v2136 = vunpack.c.l.b16 %v670
        %v2137 = vunpack.c.h.b16 %v670
        %v2138 = vunpack.c.l.b16 %v671
        %v2139 = vunpack.c.h.b16 %v671
        %v2140 = vunpack.c.l.b16 %v672
        %v2141 = vunpack.c.h.b16 %v672
        %v2142 = vunpack.c.l.b16 %v673
        %v2143 = vunpack.c.h.b16 %v673
        %v2144 = vunpack.c.l.b16 %v674
        %v2145 = vunpack.c.h.b16 %v674
        %v2146 = vunpack.c.l.b16 %v675
        %v2147 = vunpack.c.h.b16 %v675
        %v2148 = vunpack.c.l.b16 %v676
        %v2149 = vunpack.c.h.b16 %v676
        %v2150 = vunpack.c.l.b16 %v677
        %v2151 = vunpack.c.h.b16 %v677
        %v2152 = vunpack.c.l.b16 %v678
        %v2153 = vunpack.c.h.b16 %v678
        %v2154 = vunpack.c.l.b16 %v679
        %v2155 = vunpack.c.h.b16 %v679
        %v2156 = vunpack.c.l.b16 %v680
        %v2157 = vunpack.c.h.b16 %v680
        %v2158 = vunpack.c.l.b16 %v681
        %v2159 = vunpack.c.h.b16 %v681
        %v2160 = vunpack.c.l.b16 %v682
        %v2161 = vunpack.c.h.b16 %v682
        %v2162 = vunpack.c.l.b16 %v683
        %v2163 = vunpack.c.h.b16 %v683
        %v2164 = vunpack.c.l.b16 %v684
        %v2165 = vunpack.c.h.b16 %v684
        %v2166 = vunpack.c.l.b16 %v685
        %v2167 = vunpack.c.h.b16 %v685
        %v2168 = vunpack.c.l.b16 %v686
        %v2169 = vunpack.c.h.b16 %v686
        %v2170 = vunpack.c.l.b16 %v687
        %v2171 = vunpack.c.h.b16 %v687
        %v2172 = vunpack.c.l.b16 %v688
        %v2173 = vunpack.c.h.b16 %v688
        %v2174 = vunpack.c.l.b16 %v689
        %v2175 = vunpack.c.h.b16 %v689
        %v2176 = vunpack.c.l.b16 %v690
        %v2177 = vunpack.c.h.b16 %v690
        %v2178 = vunpack.c.l.b16 %v691
        %v2179 = vunpack.c.h.b16 %v691
        %v2180 = vunpack.c.l.b16 %v692
        %v2181 = vunpack.c.h.b16 %v692
        %v2182 = vunpack.c.l.b16 %v693
        %v2183 = vunpack.c.h.b16 %v693
        %v2184 = vunpack.c.l.b16 %v694
        %v2185 = vunpack.c.h.b16 %v694
        %v2186 = vunpack.c.l.b16 %v695
        %v2187 = vunpack.c.h.b16 %v695
        %v2188 = vunpack.c.l.b16 %v696
        %v2189 = vunpack.c.h.b16 %v696
        %v2190 = vunpack.c.l.b16 %v697
        %v2191 = vunpack.c.h.b16 %v697
        %v2192 = vunpack.c.l.b16 %v698
        %v2193 = vunpack.c.h.b16 %v698
        %v2194 = vunpack.c.l.b16 %v699
        %v2195 = vunpack.c.h.b16 %v699
        %v2196 = vunpack.c.l.b16 %v700
        %v2197 = vunpack.c.h.b16 %v700
        %v2198 = vunpack.c.l.b16 %v701
        %v2199 = vunpack.c.h.b16 %v701
        %v2200 = vunpack.c.l.b16 %v702
        %v2201 = vunpack.c.h.b16 %v702
        %v2202 = vunpack.c.l.b16 %v703
        %v2203 = vunpack.c.h.b16 %v703
        %v2204 = vunpack.c.l.b16 %v704
        %v2205 = vunpack.c.h.b16 %v704
        %v2206 = vunpack.c.l.b16 %v705
        %v2207 = vunpack.c.h.b16 %v705
        %v2208 = vunpack.c.l.b16 %v706
        %v2209 = vunpack.c.h.b16 %v706
        %v2210 = vunpack.c.l.b16 %v707
        %v2211 = vunpack.c.h.b16 %v707
        %v2212 = vunpack.c.l.b16 %v708
        %v2213 = vunpack.c.h.b16 %v708
        %v2214 = vunpack.c.l.b16 %v709
        %v2215 = vunpack.c.h.b16 %v709
        %v2216 = vunpack.c.l.b16 %v710
        %v2217 = vunpack.c.h.b16 %v710
        %v2218 = vunpack.c.l.b16 %v711
        %v2219 = vunpack.c.h.b16 %v711
        %v2220 = vunpack.c.l.b16 %v712
        %v2221 = vunpack.c.h.b16 %v712
        %v2222 = vunpack.c.l.b16 %v713
        %v2223 = vunpack.c.h.b16 %v713
        %v2224 = vunpack.c.l.b16 %v714
        %v2225 = vunpack.c.h.b16 %v714
        %v2226 = vunpack.c.l.b16 %v715
        %v2227 = vunpack.c.h.b16 %v715
        %v2228 = vunpack.c.l.b16 %v716
        %v2229 = vunpack.c.h.b16 %v716
        %v2230 = vunpack.c.l.b16 %v717
        %v2231 = vunpack.c.h.b16 %v717
        %v2232 = vunpack.c.l.b16 %v718
        %v2233 = vunpack.c.h.b16 %v718
        %v2234 = vunpack.c.l.b16 %v719
        %v2235 = vunpack.c.h.b16 %v719
        %v2236 = vunpack.c.l.b16 %v720
        %v2237 = vunpack.c.h.b16 %v720
        %v2238 = vunpack.c.l.b16 %v721
        %v2239 = vunpack.c.h.b16 %v721
        %v2240 = vunpack.c.l.b16 %v722
        %v2241 = vunpack.c.h.b16 %v722
        %v2242 = vunpack.c.l.b16 %v723
        %v2243 = vunpack.c.h.b16 %v723
        %v2244 = vunpack.c.l.b16 %v724
        %v2245 = vunpack.c.h.b16 %v724
        %v2246 = vunpack.c.l.b16 %v725
        %v2247 = vunpack.c.h.b16 %v725
        %v2248 = vunpack.c.l.b16 %v726
        %v2249 = vunpack.c.h.b16 %v726
        %v2250 = vunpack.c.l.b16 %v727
        %v2251 = vunpack.c.h.b16 %v727
        %v2252 = vunpack.c.l.b16 %v728
        %v2253 = vunpack.c.h.b16 %v728
        %v2254 = vunpack.c.l.b16 %v729
        %v2255 = vunpack.c.h.b16 %v729
        %v2256 = vunpack.c.l.b16 %v730
        %v2257 = vunpack.c.h.b16 %v730
        %v2258 = vunpack.c.l.b16 %v731
        %v2259 = vunpack.c.h.b16 %v731
        %v2260 = vunpack.c.l.b16 %v732
        %v2261 = vunpack.c.h.b16 %v732
        %v2262 = vunpack.c.l.b16 %v733
        %v2263 = vunpack.c.h.b16 %v733
        %v2264 = vunpack.c.l.b16 %v734
        %v2265 = vunpack.c.h.b16 %v734
        %v2266 = vunpack.c.l.b16 %v735
        %v2267 = vunpack.c.h.b16 %v735
        %v2268 = vunpack.c.l.b16 %v736
        %v2269 = vunpack.c.h.b16 %v736
        %v2270 = vunpack.c.l.b16 %v737
        %v2271 = vunpack.c.h.b16 %v737
        %v2272 = vunpack.c.l.b16 %v738
        %v2273 = vunpack.c.h.b16 %v738
        %v2274 = vunpack.c.l.b16 %v739
        %v2275 = vunpack.c.h.b16 %v739
        %v2276 = vunpack.c.l.b16 %v740
        %v2277 = vunpack.c.h.b16 %v740
        %v2278 = vunpack.c.l.b16 %v741
        %v2279 = vunpack.c.h.b16 %v741
        %v2280 = vunpack.c.l.b16 %v742
        %v2281 = vunpack.c.h.b16 %v742
        %v2282 = vunpack.c.l.b16 %v743
        %v2283 = vunpack.c.h.b16 %v743
        %v2284 = vunpack.c.l.b16 %v744
        %v2285 = vunpack.c.h.b16 %v744
        %v2286 = vunpack.c.l.b16 %v745
        %v2287 = vunpack.c.h.b16 %v745
        %v2288 = vunpack.c.l.b16 %v746
        %v2289 = vunpack.c.h.b16 %v746
        %v2290 = vunpack.c.l.b16 %v747
        %v2291 = vunpack.c.h.b16 %v747
        %v2292 = vunpack.c.l.b16 %v748
        %v2293 = vunpack.c.h.b16 %v748
        %v2294 = vunpack.c.l.b16 %v749
        %v2295 = vunpack.c.h.b16 %v749
        %v2296 = vunpack.c.l.b16 %v750
        %v2297 = vunpack.c.h.b16 %v750
        %v2298 = vunpack.c.l.b16 %v751
        %v2299 = vunpack.c.h.b16 %v751
        %v2300 = vunpack.c.l.b16 %v752
        %v2301 = vunpack.c.h.b16 %v752
        %v2302 = vunpack.c.l.b16 %v753
        %v2303 = vunpack.c.h.b16 %v753
        %v2304 = vunpack.c.l.b16 %v754
        %v2305 = vunpack.c.h.b16 %v754
        %v2306 = vunpack.c.l.b16 %v755
        %v2307 = vunpack.c.h.b16 %v755
        %v2308 = vunpack.c.l.b16 %v756
        %v2309 = vunpack.c.h.b16 %v756
        %v2310 = vunpack.c.l.b16 %v757
        %v2311 = vunpack.c.h.b16 %v757
        %v2312 = vunpack.c.l.b16 %v758
        %v2313 = vunpack.c.h.b16 %v758
        %v2314 = vunpack.c.l.b16 %v759
        %v2315 = vunpack.c.h.b16 %v759
        %v2316 = vunpack.c.l.b16 %v760
        %v2317 = vunpack.c.h.b16 %v760
        %v2318 = vunpack.c.l.b16 %v761
        %v2319 = vunpack.c.h.b16 %v761
        %v2320 = vunpack.c.l.b16 %v762
        %v2321 = vunpack.c.h.b16 %v762
        %v2322 = vunpack.c.l.b16 %v763
        %v2323 = vunpack.c.h.b16 %v763
        %v2324 = vunpack.c.l.b16 %v764
        %v2325 = vunpack.c.h.b16 %v764
        %v2326 = vunpack.c.l.b16 %v765
        %v2327 = vunpack.c.h.b16 %v765
        %v2328 = vunpack.c.l.b16 %v766
        %v2329 = vunpack.c.h.b16 %v766
        %v2330 = vunpack.c.l.b16 %v767
        %v2331 = vunpack.c.h.b16 %v767
        %v2332 = vunpack.c.l.b16 %v768
        %v2333 = vunpack.c.h.b16 %v768
        %v2334 = vunpack.c.l.b16 %v769
        %v2335 = vunpack.c.h.b16 %v769
        %v2336 = vunpack.c.l.b16 %v770
        %v2337 = vunpack.c.h.b16 %v770
        %v2338 = vunpack.c.l.b16 %v771
        %v2339 = vunpack.c.h.b16 %v771
        %v2340 = vunpack.c.l.b16 %v772
        %v2341 = vunpack.c.h.b16 %v772
        %v2342 = vunpack.c.l.b16 %v773
        %v2343 = vunpack.c.h.b16 %v773
        %v2344 = vunpack.c.l.b16 %v774
        %v2345 = vunpack.c.h.b16 %v774
        %v2346 = vunpack.c.l.b16 %v775
        %v2347 = vunpack.c.h.b16 %v775
        %v2348 = vpack.c.b16 %v1340, %v1324
        %v2349 = vpack.c.b16 %v1341, %v1325
        %v2350 = vpack.c.b16 %v1342, %v1326
        %v2351 = vpack.c.b16 %v1343, %v1327
        %v2352 = vpack.c.b16 %v1344, %v1328
        %v2353 = vpack.c.b16 %v1345, %v1329
        %v2354 = vpack.c.b16 %v1346, %v1330
        %v2355 = vpack.c.b16 %v1347, %v1331
        %v2356 = vpack.c.b16 %v1348, %v1332
        %v2357 = vpack.c.b16 %v1349, %v1333
        %v2358 = vpack.c.b16 %v1350, %v1334
        %v2359 = vpack.c.b16 %v1351, %v1335
        %v2360 = vpack.c.b16 %v1352, %v1336
        %v2361 = vpack.c.b16 %v1353, %v1337
        %v2362 = vpack.c.b16 %v1354, %v1338
        %v2363 = vpack.c.b16 %v1355, %v1339
        %v2364 = vpack.c.b16 %v1372, %v1356
        %v2365 = vpack.c.b16 %v1373, %v1357
        %v2366 = vpack.c.b16 %v1374, %v1358
        %v2367 = vpack.c.b16 %v1375, %v1359
        %v2368 = vpack.c.b16 %v1376, %v1360
        %v2369 = vpack.c.b16 %v1377, %v1361
        %v2370 = vpack.c.b16 %v1378, %v1362
        %v2371 = vpack.c.b16 %v1379, %v1363
        %v2372 = vpack.c.b16 %v1380, %v1364
        %v2373 = vpack.c.b16 %v1381, %v1365
        %v2374 = vpack.c.b16 %v1382, %v1366
        %v2375 = vpack.c.b16 %v1383, %v1367
        %v2376 = vpack.c.b16 %v1384, %v1368
        %v2377 = vpack.c.b16 %v1385, %v1369
        %v2378 = vpack.c.b16 %v1386, %v1370
        %v2379 = vpack.c.b16 %v1387, %v1371
        %v2380 = vpack.c.b16 %v1404, %v1388
        %v2381 = vpack.c.b16 %v1405, %v1389
        %v2382 = vpack.c.b16 %v1406, %v1390
        %v2383 = vpack.c.b16 %v1407, %v1391
        %v2384 = vpack.c.b16 %v1408, %v1392
        %v2385 = vpack.c.b16 %v1409, %v1393
        %v2386 = vpack.c.b16 %v1410, %v1394
        %v2387 = vpack.c.b16 %v1411, %v1395
        %v2388 = vpack.c.b16 %v1412, %v1396
        %v2389 = vpack.c.b16 %v1413, %v1397
        %v2390 = vpack.c.b16 %v1414, %v1398
        %v2391 = vpack.c.b16 %v1415, %v1399
        %v2392 = vpack.c.b16 %v1416, %v1400
        %v2393 = vpack.c.b16 %v1417, %v1401
        %v2394 = vpack.c.b16 %v1418, %v1402
        %v2395 = vpack.c.b16 %v1419, %v1403
        %v2396 = vpack.c.b16 %v1436, %v1420
        %v2397 = vpack.c.b16 %v1437, %v1421
        %v2398 = vpack.c.b16 %v1438, %v1422
        %v2399 = vpack.c.b16 %v1439, %v1423
        %v2400 = vpack.c.b16 %v1440, %v1424
        %v2401 = vpack.c.b16 %v1441, %v1425
        %v2402 = vpack.c.b16 %v1442, %v1426
        %v2403 = vpack.c.b16 %v1443, %v1427
        %v2404 = vpack.c.b16 %v1444, %v1428
        %v2405 = vpack.c.b16 %v1445, %v1429
        %v2406 = vpack.c.b16 %v1446, %v1430
        %v2407 = vpack.c.b16 %v1447, %v1431
        %v2408 = vpack.c.b16 %v1448, %v1432
        %v2409 = vpack.c.b16 %v1449, %v1433
        %v2410 = vpack.c.b16 %v1450, %v1434
        %v2411 = vpack.c.b16 %v1451, %v1435
        %v2412 = vpack.c.b16 %v1468, %v1452
        %v2413 = vpack.c.b16 %v1469, %v1453
        %v2414 = vpack.c.b16 %v1470, %v1454
        %v2415 = vpack.c.b16 %v1471, %v1455
        %v2416 = vpack.c.b16 %v1472, %v1456
        %v2417 = vpack.c.b16 %v1473, %v1457
        %v2418 = vpack.c.b16 %v1474, %v1458
        %v2419 = vpack.c.b16 %v1475, %v1459
        %v2420 = vpack.c.b16 %v1476, %v1460
        %v2421 = vpack.c.b16 %v1477, %v1461
        %v2422 = vpack.c.b16 %v1478, %v1462
        %v2423 = vpack.c.b16 %v1479, %v1463
        %v2424 = vpack.c.b16 %v1480, %v1464
        %v2425 = vpack.c.b16 %v1481, %v1465
        %v2426 = vpack.c.b16 %v1482, %v1466
        %v2427 = vpack.c.b16 %v1483, %v1467
        %v2428 = vpack.c.b16 %v1500, %v1484
        %v2429 = vpack.c.b16 %v1501, %v1485
        %v2430 = vpack.c.b16 %v1502, %v1486
        %v2431 = vpack.c.b16 %v1503, %v1487
        %v2432 = vpack.c.b16 %v1504, %v1488
        %v2433 = vpack.c.b16 %v1505, %v1489
        %v2434 = vpack.c.b16 %v1506, %v1490
        %v2435 = vpack.c.b16 %v1507, %v1491
        %v2436 = vpack.c.b16 %v1508, %v1492
        %v2437 = vpack.c.b16 %v1509, %v1493
        %v2438 = vpack.c.b16 %v1510, %v1494
        %v2439 = vpack.c.b16 %v1511, %v1495
        %v2440 = vpack.c.b16 %v1512, %v1496
        %v2441 = vpack.c.b16 %v1513, %v1497
        %v2442 = vpack.c.b16 %v1514, %v1498
        %v2443 = vpack.c.b16 %v1515, %v1499
        %v2444 = vpack.c.b16 %v1532, %v1516
        %v2445 = vpack.c.b16 %v1533, %v1517
        %v2446 = vpack.c.b16 %v1534, %v1518
        %v2447 = vpack.c.b16 %v1535, %v1519
        %v2448 = vpack.c.b16 %v1536, %v1520
        %v2449 = vpack.c.b16 %v1537, %v1521
        %v2450 = vpack.c.b16 %v1538, %v1522
        %v2451 = vpack.c.b16 %v1539, %v1523
        %v2452 = vpack.c.b16 %v1540, %v1524
        %v2453 = vpack.c.b16 %v1541, %v1525
        %v2454 = vpack.c.b16 %v1542, %v1526
        %v2455 = vpack.c.b16 %v1543, %v1527
        %v2456 = vpack.c.b16 %v1544, %v1528
        %v2457 = vpack.c.b16 %v1545, %v1529
        %v2458 = vpack.c.b16 %v1546, %v1530
        %v2459 = vpack.c.b16 %v1547, %v1531
        %v2460 = vpack.c.b16 %v1564, %v1548
        %v2461 = vpack.c.b16 %v1565, %v1549
        %v2462 = vpack.c.b16 %v1566, %v1550
        %v2463 = vpack.c.b16 %v1567, %v1551
        %v2464 = vpack.c.b16 %v1568, %v1552
        %v2465 = vpack.c.b16 %v1569, %v1553
        %v2466 = vpack.c.b16 %v1570, %v1554
        %v2467 = vpack.c.b16 %v1571, %v1555
        %v2468 = vpack.c.b16 %v1572, %v1556
        %v2469 = vpack.c.b16 %v1573, %v1557
        %v2470 = vpack.c.b16 %v1574, %v1558
        %v2471 = vpack.c.b16 %v1575, %v1559
        %v2472 = vpack.c.b16 %v1576, %v1560
        %v2473 = vpack.c.b16 %v1577, %v1561
        %v2474 = vpack.c.b16 %v1578, %v1562
        %v2475 = vpack.c.b16 %v1579, %v1563
        %v2476 = vpack.c.b16 %v1596, %v1580
        %v2477 = vpack.c.b16 %v1597, %v1581
        %v2478 = vpack.c.b16 %v1598, %v1582
        %v2479 = vpack.c.b16 %v1599, %v1583
        %v2480 = vpack.c.b16 %v1600, %v1584
        %v2481 = vpack.c.b16 %v1601, %v1585
        %v2482 = vpack.c.b16 %v1602, %v1586
        %v2483 = vpack.c.b16 %v1603, %v1587
        %v2484 = vpack.c.b16 %v1604, %v1588
        %v2485 = vpack.c.b16 %v1605, %v1589
        %v2486 = vpack.c.b16 %v1606, %v1590
        %v2487 = vpack.c.b16 %v1607, %v1591
        %v2488 = vpack.c.b16 %v1608, %v1592
        %v2489 = vpack.c.b16 %v1609, %v1593
        %v2490 = vpack.c.b16 %v1610, %v1594
        %v2491 = vpack.c.b16 %v1611, %v1595
        %v2492 = vpack.c.b16 %v1628, %v1612
        %v2493 = vpack.c.b16 %v1629, %v1613
        %v2494 = vpack.c.b16 %v1630, %v1614
        %v2495 = vpack.c.b16 %v1631, %v1615
        %v2496 = vpack.c.b16 %v1632, %v1616
        %v2497 = vpack.c.b16 %v1633, %v1617
        %v2498 = vpack.c.b16 %v1634, %v1618
        %v2499 = vpack.c.b16 %v1635, %v1619
        %v2500 = vpack.c.b16 %v1636, %v1620
        %v2501 = vpack.c.b16 %v1637, %v1621
        %v2502 = vpack.c.b16 %v1638, %v1622
        %v2503 = vpack.c.b16 %v1639, %v1623
        %v2504 = vpack.c.b16 %v1640, %v1624
        %v2505 = vpack.c.b16 %v1641, %v1625
        %v2506 = vpack.c.b16 %v1642, %v1626
        %v2507 = vpack.c.b16 %v1643, %v1627
        %v2508 = vpack.c.b16 %v1660, %v1644
        %v2509 = vpack.c.b16 %v1661, %v1645
        %v2510 = vpack.c.b16 %v1662, %v1646
        %v2511 = vpack.c.b16 %v1663, %v1647
        %v2512 = vpack.c.b16 %v1664, %v1648
        %v2513 = vpack.c.b16 %v1665, %v1649
        %v2514 = vpack.c.b16 %v1666, %v1650
        %v2515 = vpack.c.b16 %v1667, %v1651
        %v2516 = vpack.c.b16 %v1668, %v1652
        %v2517 = vpack.c.b16 %v1669, %v1653
        %v2518 = vpack.c.b16 %v1670, %v1654
        %v2519 = vpack.c.b16 %v1671, %v1655
        %v2520 = vpack.c.b16 %v1672, %v1656
        %v2521 = vpack.c.b16 %v1673, %v1657
        %v2522 = vpack.c.b16 %v1674, %v1658
        %v2523 = vpack.c.b16 %v1675, %v1659
        %v2524 = vpack.c.b16 %v1692, %v1676
        %v2525 = vpack.c.b16 %v1693, %v1677
        %v2526 = vpack.c.b16 %v1694, %v1678
        %v2527 = vpack.c.b16 %v1695, %v1679
        %v2528 = vpack.c.b16 %v1696, %v1680
        %v2529 = vpack.c.b16 %v1697, %v1681
        %v2530 = vpack.c.b16 %v1698, %v1682
        %v2531 = vpack.c.b16 %v1699, %v1683
        %v2532 = vpack.c.b16 %v1700, %v1684
        %v2533 = vpack.c.b16 %v1701, %v1685
        %v2534 = vpack.c.b16 %v1702, %v1686
        %v2535 = vpack.c.b16 %v1703, %v1687
        %v2536 = vpack.c.b16 %v1704, %v1688
        %v2537 = vpack.c.b16 %v1705, %v1689
        %v2538 = vpack.c.b16 %v1706, %v1690
        %v2539 = vpack.c.b16 %v1707, %v1691
        %v2540 = vpack.c.b16 %v1724, %v1708
        %v2541 = vpack.c.b16 %v1725, %v1709
        %v2542 = vpack.c.b16 %v1726, %v1710
        %v2543 = vpack.c.b16 %v1727, %v1711
        %v2544 = vpack.c.b16 %v1728, %v1712
        %v2545 = vpack.c.b16 %v1729, %v1713
        %v2546 = vpack.c.b16 %v1730, %v1714
        %v2547 = vpack.c.b16 %v1731, %v1715
        %v2548 = vpack.c.b16 %v1732, %v1716
        %v2549 = vpack.c.b16 %v1733, %v1717
        %v2550 = vpack.c.b16 %v1734, %v1718
        %v2551 = vpack.c.b16 %v1735, %v1719
        %v2552 = vpack.c.b16 %v1736, %v1720
        %v2553 = vpack.c.b16 %v1737, %v1721
        %v2554 = vpack.c.b16 %v1738, %v1722
        %v2555 = vpack.c.b16 %v1739, %v1723
        %v2556 = vpack.c.b16 %v1756, %v1740
        %v2557 = vpack.c.b16 %v1757, %v1741
        %v2558 = vpack.c.b16 %v1758, %v1742
        %v2559 = vpack.c.b16 %v1759, %v1743
        %v2560 = vpack.c.b16 %v1760, %v1744
        %v2561 = vpack.c.b16 %v1761, %v1745
        %v2562 = vpack.c.b16 %v1762, %v1746
        %v2563 = vpack.c.b16 %v1763, %v1747
        %v2564 = vpack.c.b16 %v1764, %v1748
        %v2565 = vpack.c.b16 %v1765, %v1749
        %v2566 = vpack.c.b16 %v1766, %v1750
        %v2567 = vpack.c.b16 %v1767, %v1751
        %v2568 = vpack.c.b16 %v1768, %v1752
        %v2569 = vpack.c.b16 %v1769, %v1753
        %v2570 = vpack.c.b16 %v1770, %v1754
        %v2571 = vpack.c.b16 %v1771, %v1755
        %v2572 = vpack.c.b16 %v1788, %v1772
        %v2573 = vpack.c.b16 %v1789, %v1773
        %v2574 = vpack.c.b16 %v1790, %v1774
        %v2575 = vpack.c.b16 %v1791, %v1775
        %v2576 = vpack.c.b16 %v1792, %v1776
        %v2577 = vpack.c.b16 %v1793, %v1777
        %v2578 = vpack.c.b16 %v1794, %v1778
        %v2579 = vpack.c.b16 %v1795, %v1779
        %v2580 = vpack.c.b16 %v1796, %v1780
        %v2581 = vpack.c.b16 %v1797, %v1781
        %v2582 = vpack.c.b16 %v1798, %v1782
        %v2583 = vpack.c.b16 %v1799, %v1783
        %v2584 = vpack.c.b16 %v1800, %v1784
        %v2585 = vpack.c.b16 %v1801, %v1785
        %v2586 = vpack.c.b16 %v1802, %v1786
        %v2587 = vpack.c.b16 %v1803, %v1787
        %v2588 = vpack.c.b16 %v1820, %v1804
        %v2589 = vpack.c.b16 %v1821, %v1805
        %v2590 = vpack.c.b16 %v1822, %v1806
        %v2591 = vpack.c.b16 %v1823, %v1807
        %v2592 = vpack.c.b16 %v1824, %v1808
        %v2593 = vpack.c.b16 %v1825, %v1809
        %v2594 = vpack.c.b16 %v1826, %v1810
        %v2595 = vpack.c.b16 %v1827, %v1811
        %v2596 = vpack.c.b16 %v1828, %v1812
        %v2597 = vpack.c.b16 %v1829, %v1813
        %v2598 = vpack.c.b16 %v1830, %v1814
        %v2599 = vpack.c.b16 %v1831, %v1815
        %v2600 = vpack.c.b16 %v1832, %v1816
        %v2601 = vpack.c.b16 %v1833, %v1817
        %v2602 = vpack.c.b16 %v1834, %v1818
        %v2603 = vpack.c.b16 %v1835, %v1819
        %v2604 = vpack.c.b16 %v1852, %v1836
        %v2605 = vpack.c.b16 %v1853, %v1837
        %v2606 = vpack.c.b16 %v1854, %v1838
        %v2607 = vpack.c.b16 %v1855, %v1839
        %v2608 = vpack.c.b16 %v1856, %v1840
        %v2609 = vpack.c.b16 %v1857, %v1841
        %v2610 = vpack.c.b16 %v1858, %v1842
        %v2611 = vpack.c.b16 %v1859, %v1843
        %v2612 = vpack.c.b16 %v1860, %v1844
        %v2613 = vpack.c.b16 %v1861, %v1845
        %v2614 = vpack.c.b16 %v1862, %v1846
        %v2615 = vpack.c.b16 %v1863, %v1847
        %v2616 = vpack.c.b16 %v1864, %v1848
        %v2617 = vpack.c.b16 %v1865, %v1849
        %v2618 = vpack.c.b16 %v1866, %v1850
        %v2619 = vpack.c.b16 %v1867, %v1851
        %v2620 = vpack.c.b16 %v1884, %v1868
        %v2621 = vpack.c.b16 %v1885, %v1869
        %v2622 = vpack.c.b16 %v1886, %v1870
        %v2623 = vpack.c.b16 %v1887, %v1871
        %v2624 = vpack.c.b16 %v1888, %v1872
        %v2625 = vpack.c.b16 %v1889, %v1873
        %v2626 = vpack.c.b16 %v1890, %v1874
        %v2627 = vpack.c.b16 %v1891, %v1875
        %v2628 = vpack.c.b16 %v1892, %v1876
        %v2629 = vpack.c.b16 %v1893, %v1877
        %v2630 = vpack.c.b16 %v1894, %v1878
        %v2631 = vpack.c.b16 %v1895, %v1879
        %v2632 = vpack.c.b16 %v1896, %v1880
        %v2633 = vpack.c.b16 %v1897, %v1881
        %v2634 = vpack.c.b16 %v1898, %v1882
        %v2635 = vpack.c.b16 %v1899, %v1883
        %v2636 = vpack.c.b16 %v1916, %v1900
        %v2637 = vpack.c.b16 %v1917, %v1901
        %v2638 = vpack.c.b16 %v1918, %v1902
        %v2639 = vpack.c.b16 %v1919, %v1903
        %v2640 = vpack.c.b16 %v1920, %v1904
        %v2641 = vpack.c.b16 %v1921, %v1905
        %v2642 = vpack.c.b16 %v1922, %v1906
        %v2643 = vpack.c.b16 %v1923, %v1907
        %v2644 = vpack.c.b16 %v1924, %v1908
        %v2645 = vpack.c.b16 %v1925, %v1909
        %v2646 = vpack.c.b16 %v1926, %v1910
        %v2647 = vpack.c.b16 %v1927, %v1911
        %v2648 = vpack.c.b16 %v1928, %v1912
        %v2649 = vpack.c.b16 %v1929, %v1913
        %v2650 = vpack.c.b16 %v1930, %v1914
        %v2651 = vpack.c.b16 %v1931, %v1915
        %v2652 = vpack.c.b16 %v1948, %v1932
        %v2653 = vpack.c.b16 %v1949, %v1933
        %v2654 = vpack.c.b16 %v1950, %v1934
        %v2655 = vpack.c.b16 %v1951, %v1935
        %v2656 = vpack.c.b16 %v1952, %v1936
        %v2657 = vpack.c.b16 %v1953, %v1937
        %v2658 = vpack.c.b16 %v1954, %v1938
        %v2659 = vpack.c.b16 %v1955, %v1939
        %v2660 = vpack.c.b16 %v1956, %v1940
        %v2661 = vpack.c.b16 %v1957, %v1941
        %v2662 = vpack.c.b16 %v1958, %v1942
        %v2663 = vpack.c.b16 %v1959, %v1943
        %v2664 = vpack.c.b16 %v1960, %v1944
        %v2665 = vpack.c.b16 %v1961, %v1945
        %v2666 = vpack.c.b16 %v1962, %v1946
        %v2667 = vpack.c.b16 %v1963, %v1947
        %v2668 = vpack.c.b16 %v1980, %v1964
        %v2669 = vpack.c.b16 %v1981, %v1965
        %v2670 = vpack.c.b16 %v1982, %v1966
        %v2671 = vpack.c.b16 %v1983, %v1967
        %v2672 = vpack.c.b16 %v1984, %v1968
        %v2673 = vpack.c.b16 %v1985, %v1969
        %v2674 = vpack.c.b16 %v1986, %v1970
        %v2675 = vpack.c.b16 %v1987, %v1971
        %v2676 = vpack.c.b16 %v1988, %v1972
        %v2677 = vpack.c.b16 %v1989, %v1973
        %v2678 = vpack.c.b16 %v1990, %v1974
        %v2679 = vpack.c.b16 %v1991, %v1975
        %v2680 = vpack.c.b16 %v1992, %v1976
        %v2681 = vpack.c.b16 %v1993, %v1977
        %v2682 = vpack.c.b16 %v1994, %v1978
        %v2683 = vpack.c.b16 %v1995, %v1979
        %v2684 = vpack.c.b16 %v2012, %v1996
        %v2685 = vpack.c.b16 %v2013, %v1997
        %v2686 = vpack.c.b16 %v2014, %v1998
        %v2687 = vpack.c.b16 %v2015, %v1999
        %v2688 = vpack.c.b16 %v2016, %v2000
        %v2689 = vpack.c.b16 %v2017, %v2001
        %v2690 = vpack.c.b16 %v2018, %v2002
        %v2691 = vpack.c.b16 %v2019, %v2003
        %v2692 = vpack.c.b16 %v2020, %v2004
        %v2693 = vpack.c.b16 %v2021, %v2005
        %v2694 = vpack.c.b16 %v2022, %v2006
        %v2695 = vpack.c.b16 %v2023, %v2007
        %v2696 = vpack.c.b16 %v2024, %v2008
        %v2697 = vpack.c.b16 %v2025, %v2009
        %v2698 = vpack.c.b16 %v2026, %v2010
        %v2699 = vpack.c.b16 %v2027, %v2011
        %v2700 = vpack.c.b16 %v2044, %v2028
        %v2701 = vpack.c.b16 %v2045, %v2029
        %v2702 = vpack.c.b16 %v2046, %v2030
        %v2703 = vpack.c.b16 %v2047, %v2031
        %v2704 = vpack.c.b16 %v2048, %v2032
        %v2705 = vpack.c.b16 %v2049, %v2033
        %v2706 = vpack.c.b16 %v2050, %v2034
        %v2707 = vpack.c.b16 %v2051, %v2035
        %v2708 = vpack.c.b16 %v2052, %v2036
        %v2709 = vpack.c.b16 %v2053, %v2037
        %v2710 = vpack.c.b16 %v2054, %v2038
        %v2711 = vpack.c.b16 %v2055, %v2039
        %v2712 = vpack.c.b16 %v2056, %v2040
        %v2713 = vpack.c.b16 %v2057, %v2041
        %v2714 = vpack.c.b16 %v2058, %v2042
        %v2715 = vpack.c.b16 %v2059, %v2043
        %v2716 = vpack.c.b16 %v2076, %v2060
        %v2717 = vpack.c.b16 %v2077, %v2061
        %v2718 = vpack.c.b16 %v2078, %v2062
        %v2719 = vpack.c.b16 %v2079, %v2063
        %v2720 = vpack.c.b16 %v2080, %v2064
        %v2721 = vpack.c.b16 %v2081, %v2065
        %v2722 = vpack.c.b16 %v2082, %v2066
        %v2723 = vpack.c.b16 %v2083, %v2067
        %v2724 = vpack.c.b16 %v2084, %v2068
        %v2725 = vpack.c.b16 %v2085, %v2069
        %v2726 = vpack.c.b16 %v2086, %v2070
        %v2727 = vpack.c.b16 %v2087, %v2071
        %v2728 = vpack.c.b16 %v2088, %v2072
        %v2729 = vpack.c.b16 %v2089, %v2073
        %v2730 = vpack.c.b16 %v2090, %v2074
        %v2731 = vpack.c.b16 %v2091, %v2075
        %v2732 = vpack.c.b16 %v2108, %v2092
        %v2733 = vpack.c.b16 %v2109, %v2093
        %v2734 = vpack.c.b16 %v2110, %v2094
        %v2735 = vpack.c.b16 %v2111, %v2095
        %v2736 = vpack.c.b16 %v2112, %v2096
        %v2737 = vpack.c.b16 %v2113, %v2097
        %v2738 = vpack.c.b16 %v2114, %v2098
        %v2739 = vpack.c.b16 %v2115, %v2099
        %v2740 = vpack.c.b16 %v2116, %v2100
        %v2741 = vpack.c.b16 %v2117, %v2101
        %v2742 = vpack.c.b16 %v2118, %v2102
        %v2743 = vpack.c.b16 %v2119, %v2103
        %v2744 = vpack.c.b16 %v2120, %v2104
        %v2745 = vpack.c.b16 %v2121, %v2105
        %v2746 = vpack.c.b16 %v2122, %v2106
        %v2747 = vpack.c.b16 %v2123, %v2107
        %v2748 = vpack.c.b16 %v2140, %v2124
        %v2749 = vpack.c.b16 %v2141, %v2125
        %v2750 = vpack.c.b16 %v2142, %v2126
        %v2751 = vpack.c.b16 %v2143, %v2127
        %v2752 = vpack.c.b16 %v2144, %v2128
        %v2753 = vpack.c.b16 %v2145, %v2129
        %v2754 = vpack.c.b16 %v2146, %v2130
        %v2755 = vpack.c.b16 %v2147, %v2131
        %v2756 = vpack.c.b16 %v2148, %v2132
        %v2757 = vpack.c.b16 %v2149, %v2133
        %v2758 = vpack.c.b16 %v2150, %v2134
        %v2759 = vpack.c.b16 %v2151, %v2135
        %v2760 = vpack.c.b16 %v2152, %v2136
        %v2761 = vpack.c.b16 %v2153, %v2137
        %v2762 = vpack.c.b16 %v2154, %v2138
        %v2763 = vpack.c.b16 %v2155, %v2139
        %v2764 = vpack.c.b16 %v2172, %v2156
        %v2765 = vpack.c.b16 %v2173, %v2157
        %v2766 = vpack.c.b16 %v2174, %v2158
        %v2767 = vpack.c.b16 %v2175, %v2159
        %v2768 = vpack.c.b16 %v2176, %v2160
        %v2769 = vpack.c.b16 %v2177, %v2161
        %v2770 = vpack.c.b16 %v2178, %v2162
        %v2771 = vpack.c.b16 %v2179, %v2163
        %v2772 = vpack.c.b16 %v2180, %v2164
        %v2773 = vpack.c.b16 %v2181, %v2165
        %v2774 = vpack.c.b16 %v2182, %v2166
        %v2775 = vpack.c.b16 %v2183, %v2167
        %v2776 = vpack.c.b16 %v2184, %v2168
        %v2777 = vpack.c.b16 %v2185, %v2169
        %v2778 = vpack.c.b16 %v2186, %v2170
        %v2779 = vpack.c.b16 %v2187, %v2171
        %v2780 = vpack.c.b16 %v2204, %v2188
        %v2781 = vpack.c.b16 %v2205, %v2189
        %v2782 = vpack.c.b16 %v2206, %v2190
        %v2783 = vpack.c.b16 %v2207, %v2191
        %v2784 = vpack.c.b16 %v2208, %v2192
        %v2785 = vpack.c.b16 %v2209, %v2193
        %v2786 = vpack.c.b16 %v2210, %v2194
        %v2787 = vpack.c.b16 %v2211, %v2195
        %v2788 = vpack.c.b16 %v2212, %v2196
        %v2789 = vpack.c.b16 %v2213, %v2197
        %v2790 = vpack.c.b16 %v2214, %v2198
        %v2791 = vpack.c.b16 %v2215, %v2199
        %v2792 = vpack.c.b16 %v2216, %v2200
        %v2793 = vpack.c.b16 %v2217, %v2201
        %v2794 = vpack.c.b16 %v2218, %v2202
        %v2795 = vpack.c.b16 %v2219, %v2203
        %v2796 = vpack.c.b16 %v2236, %v2220
        %v2797 = vpack.c.b16 %v2237, %v2221
        %v2798 = vpack.c.b16 %v2238, %v2222
        %v2799 = vpack.c.b16 %v2239, %v2223
        %v2800 = vpack.c.b16 %v2240, %v2224
        %v2801 = vpack.c.b16 %v2241, %v2225
        %v2802 = vpack.c.b16 %v2242, %v2226
        %v2803 = vpack.c.b16 %v2243, %v2227
        %v2804 = vpack.c.b16 %v2244, %v2228
        %v2805 = vpack.c.b16 %v2245, %v2229
        %v2806 = vpack.c.b16 %v2246, %v2230
        %v2807 = vpack.c.b16 %v2247, %v2231
        %v2808 = vpack.c.b16 %v2248, %v2232
        %v2809 = vpack.c.b16 %v2249, %v2233
        %v2810 = vpack.c.b16 %v2250, %v2234
        %v2811 = vpack.c.b16 %v2251, %v2235
        %v2812 = vpack.c.b16 %v2268, %v2252
        %v2813 = vpack.c.b16 %v2269, %v2253
        %v2814 = vpack.c.b16 %v2270, %v2254
        %v2815 = vpack.c.b16 %v2271, %v2255
        %v2816 = vpack.c.b16 %v2272, %v2256
        %v2817 = vpack.c.b16 %v2273, %v2257
        %v2818 = vpack.c.b16 %v2274, %v2258
        %v2819 = vpack.c.b16 %v2275, %v2259
        %v2820 = vpack.c.b16 %v2276, %v2260
        %v2821 = vpack.c.b16 %v2277, %v2261
        %v2822 = vpack.c.b16 %v2278, %v2262
        %v2823 = vpack.c.b16 %v2279, %v2263
        %v2824 = vpack.c.b16 %v2280, %v2264
        %v2825 = vpack.c.b16 %v2281, %v2265
        %v2826 = vpack.c.b16 %v2282, %v2266
        %v2827 = vpack.c.b16 %v2283, %v2267
        %v2828 = vpack.c.b16 %v2300, %v2284
        %v2829 = vpack.c.b16 %v2301, %v2285
        %v2830 = vpack.c.b16 %v2302, %v2286
        %v2831 = vpack.c.b16 %v2303, %v2287
        %v2832 = vpack.c.b16 %v2304, %v2288
        %v2833 = vpack.c.b16 %v2305, %v2289
        %v2834 = vpack.c.b16 %v2306, %v2290
        %v2835 = vpack.c.b16 %v2307, %v2291
        %v2836 = vpack.c.b16 %v2308, %v2292
        %v2837 = vpack.c.b16 %v2309, %v2293
        %v2838 = vpack.c.b16 %v2310, %v2294
        %v2839 = vpack.c.b16 %v2311, %v2295
        %v2840 = vpack.c.b16 %v2312, %v2296
        %v2841 = vpack.c.b16 %v2313, %v2297
        %v2842 = vpack.c.b16 %v2314, %v2298
        %v2843 = vpack.c.b16 %v2315, %v2299
        %v2844 = vpack.c.b16 %v2332, %v2316
        %v2845 = vpack.c.b16 %v2333, %v2317
        %v2846 = vpack.c.b16 %v2334, %v2318
        %v2847 = vpack.c.b16 %v2335, %v2319
        %v2848 = vpack.c.b16 %v2336, %v2320
        %v2849 = vpack.c.b16 %v2337, %v2321
        %v2850 = vpack.c.b16 %v2338, %v2322
        %v2851 = vpack.c.b16 %v2339, %v2323
        %v2852 = vpack.c.b16 %v2340, %v2324
        %v2853 = vpack.c.b16 %v2341, %v2325
        %v2854 = vpack.c.b16 %v2342, %v2326
        %v2855 = vpack.c.b16 %v2343, %v2327
        %v2856 = vpack.c.b16 %v2344, %v2328
        %v2857 = vpack.c.b16 %v2345, %v2329
        %v2858 = vpack.c.b16 %v2346, %v2330
        %v2859 = vpack.c.b16 %v2347, %v2331
        %3372 = vmatpush.bf16.msra.mxu0 %v2460
        %3373 = vmatpush.bf16.msra.mxu0 %v2444
        %3374 = vmatpush.bf16.msra.mxu0 %v2428
        %3375 = vmatpush.bf16.msra.mxu0 %v2412
        %3376 = vmatpush.bf16.msra.mxu0 %v2396
        %3377 = vmatpush.bf16.msra.mxu0 %v2380
        %3378 = vmatpush.bf16.msra.mxu0 %v2364
        %3379 = vmatpush.bf16.msra.mxu0 %v2348
        %3380 = vmatmul.bf16.gmra.mxu0 %v260
        %v3381 = vpop.f32.mrf.mxu0
        %v3382 = vadd.f32 %v780, %v3381
        %v3383 = vpop.f32.mrf.mxu0
        %v3384 = vadd.f32 %v780, %v3383
        %3385 = vdwg.mxu0
        %3386 = vmatpush.bf16.msra.mxu0 %v2588
        %3387 = vmatpush.bf16.msra.mxu0 %v2572
        %3388 = vmatpush.bf16.msra.mxu0 %v2556
        %3389 = vmatpush.bf16.msra.mxu0 %v2540
        %3390 = vmatpush.bf16.msra.mxu0 %v2524
        %3391 = vmatpush.bf16.msra.mxu0 %v2508
        %3392 = vmatpush.bf16.msra.mxu0 %v2492
        %3393 = vmatpush.bf16.msra.mxu0 %v2476
        %3394 = vmatmul.bf16.gmra.mxu0 %v261
        %v3395 = vpop.f32.mrf.mxu0
        %v3396 = vadd.f32 %v3382, %v3395
        %v3397 = vpop.f32.mrf.mxu0
        %v3398 = vadd.f32 %v3384, %v3397
        %3399 = vdwg.mxu0
        %3400 = vmatpush.bf16.msra.mxu0 %v2716
        %3401 = vmatpush.bf16.msra.mxu0 %v2700
        %3402 = vmatpush.bf16.msra.mxu0 %v2684
        %3403 = vmatpush.bf16.msra.mxu0 %v2668
        %3404 = vmatpush.bf16.msra.mxu0 %v2652
        %3405 = vmatpush.bf16.msra.mxu0 %v2636
        %3406 = vmatpush.bf16.msra.mxu0 %v2620
        %3407 = vmatpush.bf16.msra.mxu0 %v2604
        %3408 = vmatmul.bf16.gmra.mxu0 %v262
        %v3409 = vpop.f32.mrf.mxu0
        %v3410 = vadd.f32 %v3396, %v3409
        %v3411 = vpop.f32.mrf.mxu0
        %v3412 = vadd.f32 %v3398, %v3411
        %3413 = vdwg.mxu0
        %3414 = vmatpush.bf16.msra.mxu0 %v2844
        %3415 = vmatpush.bf16.msra.mxu0 %v2828
        %3416 = vmatpush.bf16.msra.mxu0 %v2812
        %3417 = vmatpush.bf16.msra.mxu0 %v2796
        %3418 = vmatpush.bf16.msra.mxu0 %v2780
        %3419 = vmatpush.bf16.msra.mxu0 %v2764
        %3420 = vmatpush.bf16.msra.mxu0 %v2748
        %3421 = vmatpush.bf16.msra.mxu0 %v2732
        %3422 = vmatmul.bf16.gmra.mxu0 %v263
        %v3423 = vpop.f32.mrf.mxu0
        %v3424 = vadd.f32 %v3410, %v3423
        %v3425 = vpop.f32.mrf.mxu0
        %v3426 = vadd.f32 %v3412, %v3425
        %3427 = vdwg.mxu0
        %3428 = vmatpush.bf16.msra.mxu0 %v2461
        %3429 = vmatpush.bf16.msra.mxu0 %v2445
        %3430 = vmatpush.bf16.msra.mxu0 %v2429
        %3431 = vmatpush.bf16.msra.mxu0 %v2413
        %3432 = vmatpush.bf16.msra.mxu0 %v2397
        %3433 = vmatpush.bf16.msra.mxu0 %v2381
        %3434 = vmatpush.bf16.msra.mxu0 %v2365
        %3435 = vmatpush.bf16.msra.mxu0 %v2349
        %3436 = vmatmul.bf16.gmra.mxu0 %v260
        %v3437 = vpop.f32.mrf.mxu0
        %v3438 = vadd.f32 %v781, %v3437
        %v3439 = vpop.f32.mrf.mxu0
        %v3440 = vadd.f32 %v781, %v3439
        %3441 = vdwg.mxu0
        %3442 = vmatpush.bf16.msra.mxu0 %v2589
        %3443 = vmatpush.bf16.msra.mxu0 %v2573
        %3444 = vmatpush.bf16.msra.mxu0 %v2557
        %3445 = vmatpush.bf16.msra.mxu0 %v2541
        %3446 = vmatpush.bf16.msra.mxu0 %v2525
        %3447 = vmatpush.bf16.msra.mxu0 %v2509
        %3448 = vmatpush.bf16.msra.mxu0 %v2493
        %3449 = vmatpush.bf16.msra.mxu0 %v2477
        %3450 = vmatmul.bf16.gmra.mxu0 %v261
        %v3451 = vpop.f32.mrf.mxu0
        %v3452 = vadd.f32 %v3438, %v3451
        %v3453 = vpop.f32.mrf.mxu0
        %v3454 = vadd.f32 %v3440, %v3453
        %3455 = vdwg.mxu0
        %3456 = vmatpush.bf16.msra.mxu0 %v2717
        %3457 = vmatpush.bf16.msra.mxu0 %v2701
        %3458 = vmatpush.bf16.msra.mxu0 %v2685
        %3459 = vmatpush.bf16.msra.mxu0 %v2669
        %3460 = vmatpush.bf16.msra.mxu0 %v2653
        %3461 = vmatpush.bf16.msra.mxu0 %v2637
        %3462 = vmatpush.bf16.msra.mxu0 %v2621
        %3463 = vmatpush.bf16.msra.mxu0 %v2605
        %3464 = vmatmul.bf16.gmra.mxu0 %v262
        %v3465 = vpop.f32.mrf.mxu0
        %v3466 = vadd.f32 %v3452, %v3465
        %v3467 = vpop.f32.mrf.mxu0
        %v3468 = vadd.f32 %v3454, %v3467
        %3469 = vdwg.mxu0
        %3470 = vmatpush.bf16.msra.mxu0 %v2845
        %3471 = vmatpush.bf16.msra.mxu0 %v2829
        %3472 = vmatpush.bf16.msra.mxu0 %v2813
        %3473 = vmatpush.bf16.msra.mxu0 %v2797
        %3474 = vmatpush.bf16.msra.mxu0 %v2781
        %3475 = vmatpush.bf16.msra.mxu0 %v2765
        %3476 = vmatpush.bf16.msra.mxu0 %v2749
        %3477 = vmatpush.bf16.msra.mxu0 %v2733
        %3478 = vmatmul.bf16.gmra.mxu0 %v263
        %v3479 = vpop.f32.mrf.mxu0
        %v3480 = vadd.f32 %v3466, %v3479
        %v3481 = vpop.f32.mrf.mxu0
        %v3482 = vadd.f32 %v3468, %v3481
        %3483 = vdwg.mxu0
        %3484 = vmatpush.bf16.msra.mxu0 %v2462
        %3485 = vmatpush.bf16.msra.mxu0 %v2446
        %3486 = vmatpush.bf16.msra.mxu0 %v2430
        %3487 = vmatpush.bf16.msra.mxu0 %v2414
        %3488 = vmatpush.bf16.msra.mxu0 %v2398
        %3489 = vmatpush.bf16.msra.mxu0 %v2382
        %3490 = vmatpush.bf16.msra.mxu0 %v2366
        %3491 = vmatpush.bf16.msra.mxu0 %v2350
        %3492 = vmatmul.bf16.gmra.mxu0 %v260
        %v3493 = vpop.f32.mrf.mxu0
        %v3494 = vadd.f32 %v782, %v3493
        %v3495 = vpop.f32.mrf.mxu0
        %v3496 = vadd.f32 %v782, %v3495
        %3497 = vdwg.mxu0
        %3498 = vmatpush.bf16.msra.mxu0 %v2590
        %3499 = vmatpush.bf16.msra.mxu0 %v2574
        %3500 = vmatpush.bf16.msra.mxu0 %v2558
        %3501 = vmatpush.bf16.msra.mxu0 %v2542
        %3502 = vmatpush.bf16.msra.mxu0 %v2526
        %3503 = vmatpush.bf16.msra.mxu0 %v2510
        %3504 = vmatpush.bf16.msra.mxu0 %v2494
        %3505 = vmatpush.bf16.msra.mxu0 %v2478
        %3506 = vmatmul.bf16.gmra.mxu0 %v261
        %v3507 = vpop.f32.mrf.mxu0
        %v3508 = vadd.f32 %v3494, %v3507
        %v3509 = vpop.f32.mrf.mxu0
        %v3510 = vadd.f32 %v3496, %v3509
        %3511 = vdwg.mxu0
        %3512 = vmatpush.bf16.msra.mxu0 %v2718
        %3513 = vmatpush.bf16.msra.mxu0 %v2702
        %3514 = vmatpush.bf16.msra.mxu0 %v2686
        %3515 = vmatpush.bf16.msra.mxu0 %v2670
        %3516 = vmatpush.bf16.msra.mxu0 %v2654
        %3517 = vmatpush.bf16.msra.mxu0 %v2638
        %3518 = vmatpush.bf16.msra.mxu0 %v2622
        %3519 = vmatpush.bf16.msra.mxu0 %v2606
        %3520 = vmatmul.bf16.gmra.mxu0 %v262
        %v3521 = vpop.f32.mrf.mxu0
        %v3522 = vadd.f32 %v3508, %v3521
        %v3523 = vpop.f32.mrf.mxu0
        %v3524 = vadd.f32 %v3510, %v3523
        %3525 = vdwg.mxu0
        %3526 = vmatpush.bf16.msra.mxu0 %v2846
        %3527 = vmatpush.bf16.msra.mxu0 %v2830
        %3528 = vmatpush.bf16.msra.mxu0 %v2814
        %3529 = vmatpush.bf16.msra.mxu0 %v2798
        %3530 = vmatpush.bf16.msra.mxu0 %v2782
        %3531 = vmatpush.bf16.msra.mxu0 %v2766
        %3532 = vmatpush.bf16.msra.mxu0 %v2750
        %3533 = vmatpush.bf16.msra.mxu0 %v2734
        %3534 = vmatmul.bf16.gmra.mxu0 %v263
        %v3535 = vpop.f32.mrf.mxu0
        %v3536 = vadd.f32 %v3522, %v3535
        %v3537 = vpop.f32.mrf.mxu0
        %v3538 = vadd.f32 %v3524, %v3537
        %3539 = vdwg.mxu0
        %3540 = vmatpush.bf16.msra.mxu0 %v2463
        %3541 = vmatpush.bf16.msra.mxu0 %v2447
        %3542 = vmatpush.bf16.msra.mxu0 %v2431
        %3543 = vmatpush.bf16.msra.mxu0 %v2415
        %3544 = vmatpush.bf16.msra.mxu0 %v2399
        %3545 = vmatpush.bf16.msra.mxu0 %v2383
        %3546 = vmatpush.bf16.msra.mxu0 %v2367
        %3547 = vmatpush.bf16.msra.mxu0 %v2351
        %3548 = vmatmul.bf16.gmra.mxu0 %v260
        %v3549 = vpop.f32.mrf.mxu0
        %v3550 = vadd.f32 %v783, %v3549
        %v3551 = vpop.f32.mrf.mxu0
        %v3552 = vadd.f32 %v783, %v3551
        %3553 = vdwg.mxu0
        %3554 = vmatpush.bf16.msra.mxu0 %v2591
        %3555 = vmatpush.bf16.msra.mxu0 %v2575
        %3556 = vmatpush.bf16.msra.mxu0 %v2559
        %3557 = vmatpush.bf16.msra.mxu0 %v2543
        %3558 = vmatpush.bf16.msra.mxu0 %v2527
        %3559 = vmatpush.bf16.msra.mxu0 %v2511
        %3560 = vmatpush.bf16.msra.mxu0 %v2495
        %3561 = vmatpush.bf16.msra.mxu0 %v2479
        %3562 = vmatmul.bf16.gmra.mxu0 %v261
        %v3563 = vpop.f32.mrf.mxu0
        %v3564 = vadd.f32 %v3550, %v3563
        %v3565 = vpop.f32.mrf.mxu0
        %v3566 = vadd.f32 %v3552, %v3565
        %3567 = vdwg.mxu0
        %3568 = vmatpush.bf16.msra.mxu0 %v2719
        %3569 = vmatpush.bf16.msra.mxu0 %v2703
        %3570 = vmatpush.bf16.msra.mxu0 %v2687
        %3571 = vmatpush.bf16.msra.mxu0 %v2671
        %3572 = vmatpush.bf16.msra.mxu0 %v2655
        %3573 = vmatpush.bf16.msra.mxu0 %v2639
        %3574 = vmatpush.bf16.msra.mxu0 %v2623
        %3575 = vmatpush.bf16.msra.mxu0 %v2607
        %3576 = vmatmul.bf16.gmra.mxu0 %v262
        %v3577 = vpop.f32.mrf.mxu0
        %v3578 = vadd.f32 %v3564, %v3577
        %v3579 = vpop.f32.mrf.mxu0
        %v3580 = vadd.f32 %v3566, %v3579
        %3581 = vdwg.mxu0
        %3582 = vmatpush.bf16.msra.mxu0 %v2847
        %3583 = vmatpush.bf16.msra.mxu0 %v2831
        %3584 = vmatpush.bf16.msra.mxu0 %v2815
        %3585 = vmatpush.bf16.msra.mxu0 %v2799
        %3586 = vmatpush.bf16.msra.mxu0 %v2783
        %3587 = vmatpush.bf16.msra.mxu0 %v2767
        %3588 = vmatpush.bf16.msra.mxu0 %v2751
        %3589 = vmatpush.bf16.msra.mxu0 %v2735
        %3590 = vmatmul.bf16.gmra.mxu0 %v263
        %v3591 = vpop.f32.mrf.mxu0
        %v3592 = vadd.f32 %v3578, %v3591
        %v3593 = vpop.f32.mrf.mxu0
        %v3594 = vadd.f32 %v3580, %v3593
        %3595 = vdwg.mxu0
        %3596 = vmatpush.bf16.msra.mxu0 %v2464
        %3597 = vmatpush.bf16.msra.mxu0 %v2448
        %3598 = vmatpush.bf16.msra.mxu0 %v2432
        %3599 = vmatpush.bf16.msra.mxu0 %v2416
        %3600 = vmatpush.bf16.msra.mxu0 %v2400
        %3601 = vmatpush.bf16.msra.mxu0 %v2384
        %3602 = vmatpush.bf16.msra.mxu0 %v2368
        %3603 = vmatpush.bf16.msra.mxu0 %v2352
        %3604 = vmatmul.bf16.gmra.mxu0 %v260
        %v3605 = vpop.f32.mrf.mxu0
        %v3606 = vadd.f32 %v784, %v3605
        %v3607 = vpop.f32.mrf.mxu0
        %v3608 = vadd.f32 %v784, %v3607
        %3609 = vdwg.mxu0
        %3610 = vmatpush.bf16.msra.mxu0 %v2592
        %3611 = vmatpush.bf16.msra.mxu0 %v2576
        %3612 = vmatpush.bf16.msra.mxu0 %v2560
        %3613 = vmatpush.bf16.msra.mxu0 %v2544
        %3614 = vmatpush.bf16.msra.mxu0 %v2528
        %3615 = vmatpush.bf16.msra.mxu0 %v2512
        %3616 = vmatpush.bf16.msra.mxu0 %v2496
        %3617 = vmatpush.bf16.msra.mxu0 %v2480
        %3618 = vmatmul.bf16.gmra.mxu0 %v261
        %v3619 = vpop.f32.mrf.mxu0
        %v3620 = vadd.f32 %v3606, %v3619
        %v3621 = vpop.f32.mrf.mxu0
        %v3622 = vadd.f32 %v3608, %v3621
        %3623 = vdwg.mxu0
        %3624 = vmatpush.bf16.msra.mxu0 %v2720
        %3625 = vmatpush.bf16.msra.mxu0 %v2704
        %3626 = vmatpush.bf16.msra.mxu0 %v2688
        %3627 = vmatpush.bf16.msra.mxu0 %v2672
        %3628 = vmatpush.bf16.msra.mxu0 %v2656
        %3629 = vmatpush.bf16.msra.mxu0 %v2640
        %3630 = vmatpush.bf16.msra.mxu0 %v2624
        %3631 = vmatpush.bf16.msra.mxu0 %v2608
        %3632 = vmatmul.bf16.gmra.mxu0 %v262
        %v3633 = vpop.f32.mrf.mxu0
        %v3634 = vadd.f32 %v3620, %v3633
        %v3635 = vpop.f32.mrf.mxu0
        %v3636 = vadd.f32 %v3622, %v3635
        %3637 = vdwg.mxu0
        %3638 = vmatpush.bf16.msra.mxu0 %v2848
        %3639 = vmatpush.bf16.msra.mxu0 %v2832
        %3640 = vmatpush.bf16.msra.mxu0 %v2816
        %3641 = vmatpush.bf16.msra.mxu0 %v2800
        %3642 = vmatpush.bf16.msra.mxu0 %v2784
        %3643 = vmatpush.bf16.msra.mxu0 %v2768
        %3644 = vmatpush.bf16.msra.mxu0 %v2752
        %3645 = vmatpush.bf16.msra.mxu0 %v2736
        %3646 = vmatmul.bf16.gmra.mxu0 %v263
        %v3647 = vpop.f32.mrf.mxu0
        %v3648 = vadd.f32 %v3634, %v3647
        %v3649 = vpop.f32.mrf.mxu0
        %v3650 = vadd.f32 %v3636, %v3649
        %3651 = vdwg.mxu0
        %3652 = vmatpush.bf16.msra.mxu0 %v2465
        %3653 = vmatpush.bf16.msra.mxu0 %v2449
        %3654 = vmatpush.bf16.msra.mxu0 %v2433
        %3655 = vmatpush.bf16.msra.mxu0 %v2417
        %3656 = vmatpush.bf16.msra.mxu0 %v2401
        %3657 = vmatpush.bf16.msra.mxu0 %v2385
        %3658 = vmatpush.bf16.msra.mxu0 %v2369
        %3659 = vmatpush.bf16.msra.mxu0 %v2353
        %3660 = vmatmul.bf16.gmra.mxu0 %v260
        %v3661 = vpop.f32.mrf.mxu0
        %v3662 = vadd.f32 %v785, %v3661
        %v3663 = vpop.f32.mrf.mxu0
        %v3664 = vadd.f32 %v785, %v3663
        %3665 = vdwg.mxu0
        %3666 = vmatpush.bf16.msra.mxu0 %v2593
        %3667 = vmatpush.bf16.msra.mxu0 %v2577
        %3668 = vmatpush.bf16.msra.mxu0 %v2561
        %3669 = vmatpush.bf16.msra.mxu0 %v2545
        %3670 = vmatpush.bf16.msra.mxu0 %v2529
        %3671 = vmatpush.bf16.msra.mxu0 %v2513
        %3672 = vmatpush.bf16.msra.mxu0 %v2497
        %3673 = vmatpush.bf16.msra.mxu0 %v2481
        %3674 = vmatmul.bf16.gmra.mxu0 %v261
        %v3675 = vpop.f32.mrf.mxu0
        %v3676 = vadd.f32 %v3662, %v3675
        %v3677 = vpop.f32.mrf.mxu0
        %v3678 = vadd.f32 %v3664, %v3677
        %3679 = vdwg.mxu0
        %3680 = vmatpush.bf16.msra.mxu0 %v2721
        %3681 = vmatpush.bf16.msra.mxu0 %v2705
        %3682 = vmatpush.bf16.msra.mxu0 %v2689
        %3683 = vmatpush.bf16.msra.mxu0 %v2673
        %3684 = vmatpush.bf16.msra.mxu0 %v2657
        %3685 = vmatpush.bf16.msra.mxu0 %v2641
        %3686 = vmatpush.bf16.msra.mxu0 %v2625
        %3687 = vmatpush.bf16.msra.mxu0 %v2609
        %3688 = vmatmul.bf16.gmra.mxu0 %v262
        %v3689 = vpop.f32.mrf.mxu0
        %v3690 = vadd.f32 %v3676, %v3689
        %v3691 = vpop.f32.mrf.mxu0
        %v3692 = vadd.f32 %v3678, %v3691
        %3693 = vdwg.mxu0
        %3694 = vmatpush.bf16.msra.mxu0 %v2849
        %3695 = vmatpush.bf16.msra.mxu0 %v2833
        %3696 = vmatpush.bf16.msra.mxu0 %v2817
        %3697 = vmatpush.bf16.msra.mxu0 %v2801
        %3698 = vmatpush.bf16.msra.mxu0 %v2785
        %3699 = vmatpush.bf16.msra.mxu0 %v2769
        %3700 = vmatpush.bf16.msra.mxu0 %v2753
        %3701 = vmatpush.bf16.msra.mxu0 %v2737
        %3702 = vmatmul.bf16.gmra.mxu0 %v263
        %v3703 = vpop.f32.mrf.mxu0
        %v3704 = vadd.f32 %v3690, %v3703
        %v3705 = vpop.f32.mrf.mxu0
        %v3706 = vadd.f32 %v3692, %v3705
        %3707 = vdwg.mxu0
        %3708 = vmatpush.bf16.msra.mxu0 %v2466
        %3709 = vmatpush.bf16.msra.mxu0 %v2450
        %3710 = vmatpush.bf16.msra.mxu0 %v2434
        %3711 = vmatpush.bf16.msra.mxu0 %v2418
        %3712 = vmatpush.bf16.msra.mxu0 %v2402
        %3713 = vmatpush.bf16.msra.mxu0 %v2386
        %3714 = vmatpush.bf16.msra.mxu0 %v2370
        %3715 = vmatpush.bf16.msra.mxu0 %v2354
        %3716 = vmatmul.bf16.gmra.mxu0 %v260
        %v3717 = vpop.f32.mrf.mxu0
        %v3718 = vadd.f32 %v786, %v3717
        %v3719 = vpop.f32.mrf.mxu0
        %v3720 = vadd.f32 %v786, %v3719
        %3721 = vdwg.mxu0
        %3722 = vmatpush.bf16.msra.mxu0 %v2594
        %3723 = vmatpush.bf16.msra.mxu0 %v2578
        %3724 = vmatpush.bf16.msra.mxu0 %v2562
        %3725 = vmatpush.bf16.msra.mxu0 %v2546
        %3726 = vmatpush.bf16.msra.mxu0 %v2530
        %3727 = vmatpush.bf16.msra.mxu0 %v2514
        %3728 = vmatpush.bf16.msra.mxu0 %v2498
        %3729 = vmatpush.bf16.msra.mxu0 %v2482
        %3730 = vmatmul.bf16.gmra.mxu0 %v261
        %v3731 = vpop.f32.mrf.mxu0
        %v3732 = vadd.f32 %v3718, %v3731
        %v3733 = vpop.f32.mrf.mxu0
        %v3734 = vadd.f32 %v3720, %v3733
        %3735 = vdwg.mxu0
        %3736 = vmatpush.bf16.msra.mxu0 %v2722
        %3737 = vmatpush.bf16.msra.mxu0 %v2706
        %3738 = vmatpush.bf16.msra.mxu0 %v2690
        %3739 = vmatpush.bf16.msra.mxu0 %v2674
        %3740 = vmatpush.bf16.msra.mxu0 %v2658
        %3741 = vmatpush.bf16.msra.mxu0 %v2642
        %3742 = vmatpush.bf16.msra.mxu0 %v2626
        %3743 = vmatpush.bf16.msra.mxu0 %v2610
        %3744 = vmatmul.bf16.gmra.mxu0 %v262
        %v3745 = vpop.f32.mrf.mxu0
        %v3746 = vadd.f32 %v3732, %v3745
        %v3747 = vpop.f32.mrf.mxu0
        %v3748 = vadd.f32 %v3734, %v3747
        %3749 = vdwg.mxu0
        %3750 = vmatpush.bf16.msra.mxu0 %v2850
        %3751 = vmatpush.bf16.msra.mxu0 %v2834
        %3752 = vmatpush.bf16.msra.mxu0 %v2818
        %3753 = vmatpush.bf16.msra.mxu0 %v2802
        %3754 = vmatpush.bf16.msra.mxu0 %v2786
        %3755 = vmatpush.bf16.msra.mxu0 %v2770
        %3756 = vmatpush.bf16.msra.mxu0 %v2754
        %3757 = vmatpush.bf16.msra.mxu0 %v2738
        %3758 = vmatmul.bf16.gmra.mxu0 %v263
        %v3759 = vpop.f32.mrf.mxu0
        %v3760 = vadd.f32 %v3746, %v3759
        %v3761 = vpop.f32.mrf.mxu0
        %v3762 = vadd.f32 %v3748, %v3761
        %3763 = vdwg.mxu0
        %3764 = vmatpush.bf16.msra.mxu0 %v2467
        %3765 = vmatpush.bf16.msra.mxu0 %v2451
        %3766 = vmatpush.bf16.msra.mxu0 %v2435
        %3767 = vmatpush.bf16.msra.mxu0 %v2419
        %3768 = vmatpush.bf16.msra.mxu0 %v2403
        %3769 = vmatpush.bf16.msra.mxu0 %v2387
        %3770 = vmatpush.bf16.msra.mxu0 %v2371
        %3771 = vmatpush.bf16.msra.mxu0 %v2355
        %3772 = vmatmul.bf16.gmra.mxu0 %v260
        %v3773 = vpop.f32.mrf.mxu0
        %v3774 = vadd.f32 %v787, %v3773
        %v3775 = vpop.f32.mrf.mxu0
        %v3776 = vadd.f32 %v787, %v3775
        %3777 = vdwg.mxu0
        %3778 = vmatpush.bf16.msra.mxu0 %v2595
        %3779 = vmatpush.bf16.msra.mxu0 %v2579
        %3780 = vmatpush.bf16.msra.mxu0 %v2563
        %3781 = vmatpush.bf16.msra.mxu0 %v2547
        %3782 = vmatpush.bf16.msra.mxu0 %v2531
        %3783 = vmatpush.bf16.msra.mxu0 %v2515
        %3784 = vmatpush.bf16.msra.mxu0 %v2499
        %3785 = vmatpush.bf16.msra.mxu0 %v2483
        %3786 = vmatmul.bf16.gmra.mxu0 %v261
        %v3787 = vpop.f32.mrf.mxu0
        %v3788 = vadd.f32 %v3774, %v3787
        %v3789 = vpop.f32.mrf.mxu0
        %v3790 = vadd.f32 %v3776, %v3789
        %3791 = vdwg.mxu0
        %3792 = vmatpush.bf16.msra.mxu0 %v2723
        %3793 = vmatpush.bf16.msra.mxu0 %v2707
        %3794 = vmatpush.bf16.msra.mxu0 %v2691
        %3795 = vmatpush.bf16.msra.mxu0 %v2675
        %3796 = vmatpush.bf16.msra.mxu0 %v2659
        %3797 = vmatpush.bf16.msra.mxu0 %v2643
        %3798 = vmatpush.bf16.msra.mxu0 %v2627
        %3799 = vmatpush.bf16.msra.mxu0 %v2611
        %3800 = vmatmul.bf16.gmra.mxu0 %v262
        %v3801 = vpop.f32.mrf.mxu0
        %v3802 = vadd.f32 %v3788, %v3801
        %v3803 = vpop.f32.mrf.mxu0
        %v3804 = vadd.f32 %v3790, %v3803
        %3805 = vdwg.mxu0
        %3806 = vmatpush.bf16.msra.mxu0 %v2851
        %3807 = vmatpush.bf16.msra.mxu0 %v2835
        %3808 = vmatpush.bf16.msra.mxu0 %v2819
        %3809 = vmatpush.bf16.msra.mxu0 %v2803
        %3810 = vmatpush.bf16.msra.mxu0 %v2787
        %3811 = vmatpush.bf16.msra.mxu0 %v2771
        %3812 = vmatpush.bf16.msra.mxu0 %v2755
        %3813 = vmatpush.bf16.msra.mxu0 %v2739
        %3814 = vmatmul.bf16.gmra.mxu0 %v263
        %v3815 = vpop.f32.mrf.mxu0
        %v3816 = vadd.f32 %v3802, %v3815
        %v3817 = vpop.f32.mrf.mxu0
        %v3818 = vadd.f32 %v3804, %v3817
        %3819 = vdwg.mxu0
        %3820 = vmatpush.bf16.msra.mxu0 %v2468
        %3821 = vmatpush.bf16.msra.mxu0 %v2452
        %3822 = vmatpush.bf16.msra.mxu0 %v2436
        %3823 = vmatpush.bf16.msra.mxu0 %v2420
        %3824 = vmatpush.bf16.msra.mxu0 %v2404
        %3825 = vmatpush.bf16.msra.mxu0 %v2388
        %3826 = vmatpush.bf16.msra.mxu0 %v2372
        %3827 = vmatpush.bf16.msra.mxu0 %v2356
        %3828 = vmatmul.bf16.gmra.mxu0 %v260
        %v3829 = vpop.f32.mrf.mxu0
        %v3830 = vadd.f32 %v788, %v3829
        %v3831 = vpop.f32.mrf.mxu0
        %v3832 = vadd.f32 %v788, %v3831
        %3833 = vdwg.mxu0
        %3834 = vmatpush.bf16.msra.mxu0 %v2596
        %3835 = vmatpush.bf16.msra.mxu0 %v2580
        %3836 = vmatpush.bf16.msra.mxu0 %v2564
        %3837 = vmatpush.bf16.msra.mxu0 %v2548
        %3838 = vmatpush.bf16.msra.mxu0 %v2532
        %3839 = vmatpush.bf16.msra.mxu0 %v2516
        %3840 = vmatpush.bf16.msra.mxu0 %v2500
        %3841 = vmatpush.bf16.msra.mxu0 %v2484
        %3842 = vmatmul.bf16.gmra.mxu0 %v261
        %v3843 = vpop.f32.mrf.mxu0
        %v3844 = vadd.f32 %v3830, %v3843
        %v3845 = vpop.f32.mrf.mxu0
        %v3846 = vadd.f32 %v3832, %v3845
        %3847 = vdwg.mxu0
        %3848 = vmatpush.bf16.msra.mxu0 %v2724
        %3849 = vmatpush.bf16.msra.mxu0 %v2708
        %3850 = vmatpush.bf16.msra.mxu0 %v2692
        %3851 = vmatpush.bf16.msra.mxu0 %v2676
        %3852 = vmatpush.bf16.msra.mxu0 %v2660
        %3853 = vmatpush.bf16.msra.mxu0 %v2644
        %3854 = vmatpush.bf16.msra.mxu0 %v2628
        %3855 = vmatpush.bf16.msra.mxu0 %v2612
        %3856 = vmatmul.bf16.gmra.mxu0 %v262
        %v3857 = vpop.f32.mrf.mxu0
        %v3858 = vadd.f32 %v3844, %v3857
        %v3859 = vpop.f32.mrf.mxu0
        %v3860 = vadd.f32 %v3846, %v3859
        %3861 = vdwg.mxu0
        %3862 = vmatpush.bf16.msra.mxu0 %v2852
        %3863 = vmatpush.bf16.msra.mxu0 %v2836
        %3864 = vmatpush.bf16.msra.mxu0 %v2820
        %3865 = vmatpush.bf16.msra.mxu0 %v2804
        %3866 = vmatpush.bf16.msra.mxu0 %v2788
        %3867 = vmatpush.bf16.msra.mxu0 %v2772
        %3868 = vmatpush.bf16.msra.mxu0 %v2756
        %3869 = vmatpush.bf16.msra.mxu0 %v2740
        %3870 = vmatmul.bf16.gmra.mxu0 %v263
        %v3871 = vpop.f32.mrf.mxu0
        %v3872 = vadd.f32 %v3858, %v3871
        %v3873 = vpop.f32.mrf.mxu0
        %v3874 = vadd.f32 %v3860, %v3873
        %3875 = vdwg.mxu0
        %3876 = vmatpush.bf16.msra.mxu0 %v2469
        %3877 = vmatpush.bf16.msra.mxu0 %v2453
        %3878 = vmatpush.bf16.msra.mxu0 %v2437
        %3879 = vmatpush.bf16.msra.mxu0 %v2421
        %3880 = vmatpush.bf16.msra.mxu0 %v2405
        %3881 = vmatpush.bf16.msra.mxu0 %v2389
        %3882 = vmatpush.bf16.msra.mxu0 %v2373
        %3883 = vmatpush.bf16.msra.mxu0 %v2357
        %3884 = vmatmul.bf16.gmra.mxu0 %v260
        %v3885 = vpop.f32.mrf.mxu0
        %v3886 = vadd.f32 %v789, %v3885
        %v3887 = vpop.f32.mrf.mxu0
        %v3888 = vadd.f32 %v789, %v3887
        %3889 = vdwg.mxu0
        %3890 = vmatpush.bf16.msra.mxu0 %v2597
        %3891 = vmatpush.bf16.msra.mxu0 %v2581
        %3892 = vmatpush.bf16.msra.mxu0 %v2565
        %3893 = vmatpush.bf16.msra.mxu0 %v2549
        %3894 = vmatpush.bf16.msra.mxu0 %v2533
        %3895 = vmatpush.bf16.msra.mxu0 %v2517
        %3896 = vmatpush.bf16.msra.mxu0 %v2501
        %3897 = vmatpush.bf16.msra.mxu0 %v2485
        %3898 = vmatmul.bf16.gmra.mxu0 %v261
        %v3899 = vpop.f32.mrf.mxu0
        %v3900 = vadd.f32 %v3886, %v3899
        %v3901 = vpop.f32.mrf.mxu0
        %v3902 = vadd.f32 %v3888, %v3901
        %3903 = vdwg.mxu0
        %3904 = vmatpush.bf16.msra.mxu0 %v2725
        %3905 = vmatpush.bf16.msra.mxu0 %v2709
        %3906 = vmatpush.bf16.msra.mxu0 %v2693
        %3907 = vmatpush.bf16.msra.mxu0 %v2677
        %3908 = vmatpush.bf16.msra.mxu0 %v2661
        %3909 = vmatpush.bf16.msra.mxu0 %v2645
        %3910 = vmatpush.bf16.msra.mxu0 %v2629
        %3911 = vmatpush.bf16.msra.mxu0 %v2613
        %3912 = vmatmul.bf16.gmra.mxu0 %v262
        %v3913 = vpop.f32.mrf.mxu0
        %v3914 = vadd.f32 %v3900, %v3913
        %v3915 = vpop.f32.mrf.mxu0
        %v3916 = vadd.f32 %v3902, %v3915
        %3917 = vdwg.mxu0
        %3918 = vmatpush.bf16.msra.mxu0 %v2853
        %3919 = vmatpush.bf16.msra.mxu0 %v2837
        %3920 = vmatpush.bf16.msra.mxu0 %v2821
        %3921 = vmatpush.bf16.msra.mxu0 %v2805
        %3922 = vmatpush.bf16.msra.mxu0 %v2789
        %3923 = vmatpush.bf16.msra.mxu0 %v2773
        %3924 = vmatpush.bf16.msra.mxu0 %v2757
        %3925 = vmatpush.bf16.msra.mxu0 %v2741
        %3926 = vmatmul.bf16.gmra.mxu0 %v263
        %v3927 = vpop.f32.mrf.mxu0
        %v3928 = vadd.f32 %v3914, %v3927
        %v3929 = vpop.f32.mrf.mxu0
        %v3930 = vadd.f32 %v3916, %v3929
        %3931 = vdwg.mxu0
        %3932 = vmatpush.bf16.msra.mxu0 %v2470
        %3933 = vmatpush.bf16.msra.mxu0 %v2454
        %3934 = vmatpush.bf16.msra.mxu0 %v2438
        %3935 = vmatpush.bf16.msra.mxu0 %v2422
        %3936 = vmatpush.bf16.msra.mxu0 %v2406
        %3937 = vmatpush.bf16.msra.mxu0 %v2390
        %3938 = vmatpush.bf16.msra.mxu0 %v2374
        %3939 = vmatpush.bf16.msra.mxu0 %v2358
        %3940 = vmatmul.bf16.gmra.mxu0 %v260
        %v3941 = vpop.f32.mrf.mxu0
        %v3942 = vadd.f32 %v790, %v3941
        %v3943 = vpop.f32.mrf.mxu0
        %v3944 = vadd.f32 %v790, %v3943
        %3945 = vdwg.mxu0
        %3946 = vmatpush.bf16.msra.mxu0 %v2598
        %3947 = vmatpush.bf16.msra.mxu0 %v2582
        %3948 = vmatpush.bf16.msra.mxu0 %v2566
        %3949 = vmatpush.bf16.msra.mxu0 %v2550
        %3950 = vmatpush.bf16.msra.mxu0 %v2534
        %3951 = vmatpush.bf16.msra.mxu0 %v2518
        %3952 = vmatpush.bf16.msra.mxu0 %v2502
        %3953 = vmatpush.bf16.msra.mxu0 %v2486
        %3954 = vmatmul.bf16.gmra.mxu0 %v261
        %v3955 = vpop.f32.mrf.mxu0
        %v3956 = vadd.f32 %v3942, %v3955
        %v3957 = vpop.f32.mrf.mxu0
        %v3958 = vadd.f32 %v3944, %v3957
        %3959 = vdwg.mxu0
        %3960 = vmatpush.bf16.msra.mxu0 %v2726
        %3961 = vmatpush.bf16.msra.mxu0 %v2710
        %3962 = vmatpush.bf16.msra.mxu0 %v2694
        %3963 = vmatpush.bf16.msra.mxu0 %v2678
        %3964 = vmatpush.bf16.msra.mxu0 %v2662
        %3965 = vmatpush.bf16.msra.mxu0 %v2646
        %3966 = vmatpush.bf16.msra.mxu0 %v2630
        %3967 = vmatpush.bf16.msra.mxu0 %v2614
        %3968 = vmatmul.bf16.gmra.mxu0 %v262
        %v3969 = vpop.f32.mrf.mxu0
        %v3970 = vadd.f32 %v3956, %v3969
        %v3971 = vpop.f32.mrf.mxu0
        %v3972 = vadd.f32 %v3958, %v3971
        %3973 = vdwg.mxu0
        %3974 = vmatpush.bf16.msra.mxu0 %v2854
        %3975 = vmatpush.bf16.msra.mxu0 %v2838
        %3976 = vmatpush.bf16.msra.mxu0 %v2822
        %3977 = vmatpush.bf16.msra.mxu0 %v2806
        %3978 = vmatpush.bf16.msra.mxu0 %v2790
        %3979 = vmatpush.bf16.msra.mxu0 %v2774
        %3980 = vmatpush.bf16.msra.mxu0 %v2758
        %3981 = vmatpush.bf16.msra.mxu0 %v2742
        %3982 = vmatmul.bf16.gmra.mxu0 %v263
        %v3983 = vpop.f32.mrf.mxu0
        %v3984 = vadd.f32 %v3970, %v3983
        %v3985 = vpop.f32.mrf.mxu0
        %v3986 = vadd.f32 %v3972, %v3985
        %3987 = vdwg.mxu0
        %3988 = vmatpush.bf16.msra.mxu0 %v2471
        %3989 = vmatpush.bf16.msra.mxu0 %v2455
        %3990 = vmatpush.bf16.msra.mxu0 %v2439
        %3991 = vmatpush.bf16.msra.mxu0 %v2423
        %3992 = vmatpush.bf16.msra.mxu0 %v2407
        %3993 = vmatpush.bf16.msra.mxu0 %v2391
        %3994 = vmatpush.bf16.msra.mxu0 %v2375
        %3995 = vmatpush.bf16.msra.mxu0 %v2359
        %3996 = vmatmul.bf16.gmra.mxu0 %v260
        %v3997 = vpop.f32.mrf.mxu0
        %v3998 = vadd.f32 %v791, %v3997
        %v3999 = vpop.f32.mrf.mxu0
        %v4000 = vadd.f32 %v791, %v3999
        %4001 = vdwg.mxu0
        %4002 = vmatpush.bf16.msra.mxu0 %v2599
        %4003 = vmatpush.bf16.msra.mxu0 %v2583
        %4004 = vmatpush.bf16.msra.mxu0 %v2567
        %4005 = vmatpush.bf16.msra.mxu0 %v2551
        %4006 = vmatpush.bf16.msra.mxu0 %v2535
        %4007 = vmatpush.bf16.msra.mxu0 %v2519
        %4008 = vmatpush.bf16.msra.mxu0 %v2503
        %4009 = vmatpush.bf16.msra.mxu0 %v2487
        %4010 = vmatmul.bf16.gmra.mxu0 %v261
        %v4011 = vpop.f32.mrf.mxu0
        %v4012 = vadd.f32 %v3998, %v4011
        %v4013 = vpop.f32.mrf.mxu0
        %v4014 = vadd.f32 %v4000, %v4013
        %4015 = vdwg.mxu0
        %4016 = vmatpush.bf16.msra.mxu0 %v2727
        %4017 = vmatpush.bf16.msra.mxu0 %v2711
        %4018 = vmatpush.bf16.msra.mxu0 %v2695
        %4019 = vmatpush.bf16.msra.mxu0 %v2679
        %4020 = vmatpush.bf16.msra.mxu0 %v2663
        %4021 = vmatpush.bf16.msra.mxu0 %v2647
        %4022 = vmatpush.bf16.msra.mxu0 %v2631
        %4023 = vmatpush.bf16.msra.mxu0 %v2615
        %4024 = vmatmul.bf16.gmra.mxu0 %v262
        %v4025 = vpop.f32.mrf.mxu0
        %v4026 = vadd.f32 %v4012, %v4025
        %v4027 = vpop.f32.mrf.mxu0
        %v4028 = vadd.f32 %v4014, %v4027
        %4029 = vdwg.mxu0
        %4030 = vmatpush.bf16.msra.mxu0 %v2855
        %4031 = vmatpush.bf16.msra.mxu0 %v2839
        %4032 = vmatpush.bf16.msra.mxu0 %v2823
        %4033 = vmatpush.bf16.msra.mxu0 %v2807
        %4034 = vmatpush.bf16.msra.mxu0 %v2791
        %4035 = vmatpush.bf16.msra.mxu0 %v2775
        %4036 = vmatpush.bf16.msra.mxu0 %v2759
        %4037 = vmatpush.bf16.msra.mxu0 %v2743
        %4038 = vmatmul.bf16.gmra.mxu0 %v263
        %v4039 = vpop.f32.mrf.mxu0
        %v4040 = vadd.f32 %v4026, %v4039
        %v4041 = vpop.f32.mrf.mxu0
        %v4042 = vadd.f32 %v4028, %v4041
        %4043 = vdwg.mxu0
        %4044 = vmatpush.bf16.msra.mxu0 %v2472
        %4045 = vmatpush.bf16.msra.mxu0 %v2456
        %4046 = vmatpush.bf16.msra.mxu0 %v2440
        %4047 = vmatpush.bf16.msra.mxu0 %v2424
        %4048 = vmatpush.bf16.msra.mxu0 %v2408
        %4049 = vmatpush.bf16.msra.mxu0 %v2392
        %4050 = vmatpush.bf16.msra.mxu0 %v2376
        %4051 = vmatpush.bf16.msra.mxu0 %v2360
        %4052 = vmatmul.bf16.gmra.mxu0 %v260
        %v4053 = vpop.f32.mrf.mxu0
        %v4054 = vadd.f32 %v792, %v4053
        %v4055 = vpop.f32.mrf.mxu0
        %v4056 = vadd.f32 %v792, %v4055
        %4057 = vdwg.mxu0
        %4058 = vmatpush.bf16.msra.mxu0 %v2600
        %4059 = vmatpush.bf16.msra.mxu0 %v2584
        %4060 = vmatpush.bf16.msra.mxu0 %v2568
        %4061 = vmatpush.bf16.msra.mxu0 %v2552
        %4062 = vmatpush.bf16.msra.mxu0 %v2536
        %4063 = vmatpush.bf16.msra.mxu0 %v2520
        %4064 = vmatpush.bf16.msra.mxu0 %v2504
        %4065 = vmatpush.bf16.msra.mxu0 %v2488
        %4066 = vmatmul.bf16.gmra.mxu0 %v261
        %v4067 = vpop.f32.mrf.mxu0
        %v4068 = vadd.f32 %v4054, %v4067
        %v4069 = vpop.f32.mrf.mxu0
        %v4070 = vadd.f32 %v4056, %v4069
        %4071 = vdwg.mxu0
        %4072 = vmatpush.bf16.msra.mxu0 %v2728
        %4073 = vmatpush.bf16.msra.mxu0 %v2712
        %4074 = vmatpush.bf16.msra.mxu0 %v2696
        %4075 = vmatpush.bf16.msra.mxu0 %v2680
        %4076 = vmatpush.bf16.msra.mxu0 %v2664
        %4077 = vmatpush.bf16.msra.mxu0 %v2648
        %4078 = vmatpush.bf16.msra.mxu0 %v2632
        %4079 = vmatpush.bf16.msra.mxu0 %v2616
        %4080 = vmatmul.bf16.gmra.mxu0 %v262
        %v4081 = vpop.f32.mrf.mxu0
        %v4082 = vadd.f32 %v4068, %v4081
        %v4083 = vpop.f32.mrf.mxu0
        %v4084 = vadd.f32 %v4070, %v4083
        %4085 = vdwg.mxu0
        %4086 = vmatpush.bf16.msra.mxu0 %v2856
        %4087 = vmatpush.bf16.msra.mxu0 %v2840
        %4088 = vmatpush.bf16.msra.mxu0 %v2824
        %4089 = vmatpush.bf16.msra.mxu0 %v2808
        %4090 = vmatpush.bf16.msra.mxu0 %v2792
        %4091 = vmatpush.bf16.msra.mxu0 %v2776
        %4092 = vmatpush.bf16.msra.mxu0 %v2760
        %4093 = vmatpush.bf16.msra.mxu0 %v2744
        %4094 = vmatmul.bf16.gmra.mxu0 %v263
        %v4095 = vpop.f32.mrf.mxu0
        %v4096 = vadd.f32 %v4082, %v4095
        %v4097 = vpop.f32.mrf.mxu0
        %v4098 = vadd.f32 %v4084, %v4097
        %4099 = vdwg.mxu0
        %4100 = vmatpush.bf16.msra.mxu0 %v2473
        %4101 = vmatpush.bf16.msra.mxu0 %v2457
        %4102 = vmatpush.bf16.msra.mxu0 %v2441
        %4103 = vmatpush.bf16.msra.mxu0 %v2425
        %4104 = vmatpush.bf16.msra.mxu0 %v2409
        %4105 = vmatpush.bf16.msra.mxu0 %v2393
        %4106 = vmatpush.bf16.msra.mxu0 %v2377
        %4107 = vmatpush.bf16.msra.mxu0 %v2361
        %4108 = vmatmul.bf16.gmra.mxu0 %v260
        %v4109 = vpop.f32.mrf.mxu0
        %v4110 = vadd.f32 %v793, %v4109
        %v4111 = vpop.f32.mrf.mxu0
        %v4112 = vadd.f32 %v793, %v4111
        %4113 = vdwg.mxu0
        %4114 = vmatpush.bf16.msra.mxu0 %v2601
        %4115 = vmatpush.bf16.msra.mxu0 %v2585
        %4116 = vmatpush.bf16.msra.mxu0 %v2569
        %4117 = vmatpush.bf16.msra.mxu0 %v2553
        %4118 = vmatpush.bf16.msra.mxu0 %v2537
        %4119 = vmatpush.bf16.msra.mxu0 %v2521
        %4120 = vmatpush.bf16.msra.mxu0 %v2505
        %4121 = vmatpush.bf16.msra.mxu0 %v2489
        %4122 = vmatmul.bf16.gmra.mxu0 %v261
        %v4123 = vpop.f32.mrf.mxu0
        %v4124 = vadd.f32 %v4110, %v4123
        %v4125 = vpop.f32.mrf.mxu0
        %v4126 = vadd.f32 %v4112, %v4125
        %4127 = vdwg.mxu0
        %4128 = vmatpush.bf16.msra.mxu0 %v2729
        %4129 = vmatpush.bf16.msra.mxu0 %v2713
        %4130 = vmatpush.bf16.msra.mxu0 %v2697
        %4131 = vmatpush.bf16.msra.mxu0 %v2681
        %4132 = vmatpush.bf16.msra.mxu0 %v2665
        %4133 = vmatpush.bf16.msra.mxu0 %v2649
        %4134 = vmatpush.bf16.msra.mxu0 %v2633
        %4135 = vmatpush.bf16.msra.mxu0 %v2617
        %4136 = vmatmul.bf16.gmra.mxu0 %v262
        %v4137 = vpop.f32.mrf.mxu0
        %v4138 = vadd.f32 %v4124, %v4137
        %v4139 = vpop.f32.mrf.mxu0
        %v4140 = vadd.f32 %v4126, %v4139
        %4141 = vdwg.mxu0
        %4142 = vmatpush.bf16.msra.mxu0 %v2857
        %4143 = vmatpush.bf16.msra.mxu0 %v2841
        %4144 = vmatpush.bf16.msra.mxu0 %v2825
        %4145 = vmatpush.bf16.msra.mxu0 %v2809
        %4146 = vmatpush.bf16.msra.mxu0 %v2793
        %4147 = vmatpush.bf16.msra.mxu0 %v2777
        %4148 = vmatpush.bf16.msra.mxu0 %v2761
        %4149 = vmatpush.bf16.msra.mxu0 %v2745
        %4150 = vmatmul.bf16.gmra.mxu0 %v263
        %v4151 = vpop.f32.mrf.mxu0
        %v4152 = vadd.f32 %v4138, %v4151
        %v4153 = vpop.f32.mrf.mxu0
        %v4154 = vadd.f32 %v4140, %v4153
        %4155 = vdwg.mxu0
        %4156 = vmatpush.bf16.msra.mxu0 %v2474
        %4157 = vmatpush.bf16.msra.mxu0 %v2458
        %4158 = vmatpush.bf16.msra.mxu0 %v2442
        %4159 = vmatpush.bf16.msra.mxu0 %v2426
        %4160 = vmatpush.bf16.msra.mxu0 %v2410
        %4161 = vmatpush.bf16.msra.mxu0 %v2394
        %4162 = vmatpush.bf16.msra.mxu0 %v2378
        %4163 = vmatpush.bf16.msra.mxu0 %v2362
        %4164 = vmatmul.bf16.gmra.mxu0 %v260
        %v4165 = vpop.f32.mrf.mxu0
        %v4166 = vadd.f32 %v794, %v4165
        %v4167 = vpop.f32.mrf.mxu0
        %v4168 = vadd.f32 %v794, %v4167
        %4169 = vdwg.mxu0
        %4170 = vmatpush.bf16.msra.mxu0 %v2602
        %4171 = vmatpush.bf16.msra.mxu0 %v2586
        %4172 = vmatpush.bf16.msra.mxu0 %v2570
        %4173 = vmatpush.bf16.msra.mxu0 %v2554
        %4174 = vmatpush.bf16.msra.mxu0 %v2538
        %4175 = vmatpush.bf16.msra.mxu0 %v2522
        %4176 = vmatpush.bf16.msra.mxu0 %v2506
        %4177 = vmatpush.bf16.msra.mxu0 %v2490
        %4178 = vmatmul.bf16.gmra.mxu0 %v261
        %v4179 = vpop.f32.mrf.mxu0
        %v4180 = vadd.f32 %v4166, %v4179
        %v4181 = vpop.f32.mrf.mxu0
        %v4182 = vadd.f32 %v4168, %v4181
        %4183 = vdwg.mxu0
        %4184 = vmatpush.bf16.msra.mxu0 %v2730
        %4185 = vmatpush.bf16.msra.mxu0 %v2714
        %4186 = vmatpush.bf16.msra.mxu0 %v2698
        %4187 = vmatpush.bf16.msra.mxu0 %v2682
        %4188 = vmatpush.bf16.msra.mxu0 %v2666
        %4189 = vmatpush.bf16.msra.mxu0 %v2650
        %4190 = vmatpush.bf16.msra.mxu0 %v2634
        %4191 = vmatpush.bf16.msra.mxu0 %v2618
        %4192 = vmatmul.bf16.gmra.mxu0 %v262
        %v4193 = vpop.f32.mrf.mxu0
        %v4194 = vadd.f32 %v4180, %v4193
        %v4195 = vpop.f32.mrf.mxu0
        %v4196 = vadd.f32 %v4182, %v4195
        %4197 = vdwg.mxu0
        %4198 = vmatpush.bf16.msra.mxu0 %v2858
        %4199 = vmatpush.bf16.msra.mxu0 %v2842
        %4200 = vmatpush.bf16.msra.mxu0 %v2826
        %4201 = vmatpush.bf16.msra.mxu0 %v2810
        %4202 = vmatpush.bf16.msra.mxu0 %v2794
        %4203 = vmatpush.bf16.msra.mxu0 %v2778
        %4204 = vmatpush.bf16.msra.mxu0 %v2762
        %4205 = vmatpush.bf16.msra.mxu0 %v2746
        %4206 = vmatmul.bf16.gmra.mxu0 %v263
        %v4207 = vpop.f32.mrf.mxu0
        %v4208 = vadd.f32 %v4194, %v4207
        %v4209 = vpop.f32.mrf.mxu0
        %v4210 = vadd.f32 %v4196, %v4209
        %4211 = vdwg.mxu0
        %4212 = vmatpush.bf16.msra.mxu0 %v2475
        %4213 = vmatpush.bf16.msra.mxu0 %v2459
        %4214 = vmatpush.bf16.msra.mxu0 %v2443
        %4215 = vmatpush.bf16.msra.mxu0 %v2427
        %4216 = vmatpush.bf16.msra.mxu0 %v2411
        %4217 = vmatpush.bf16.msra.mxu0 %v2395
        %4218 = vmatpush.bf16.msra.mxu0 %v2379
        %4219 = vmatpush.bf16.msra.mxu0 %v2363
        %4220 = vmatmul.bf16.gmra.mxu0 %v260
        %v4221 = vpop.f32.mrf.mxu0
        %v4222 = vadd.f32 %v795, %v4221
        %v4223 = vpop.f32.mrf.mxu0
        %v4224 = vadd.f32 %v795, %v4223
        %4225 = vdwg.mxu0
        %4226 = vmatpush.bf16.msra.mxu0 %v2603
        %4227 = vmatpush.bf16.msra.mxu0 %v2587
        %4228 = vmatpush.bf16.msra.mxu0 %v2571
        %4229 = vmatpush.bf16.msra.mxu0 %v2555
        %4230 = vmatpush.bf16.msra.mxu0 %v2539
        %4231 = vmatpush.bf16.msra.mxu0 %v2523
        %4232 = vmatpush.bf16.msra.mxu0 %v2507
        %4233 = vmatpush.bf16.msra.mxu0 %v2491
        %4234 = vmatmul.bf16.gmra.mxu0 %v261
        %v4235 = vpop.f32.mrf.mxu0
        %v4236 = vadd.f32 %v4222, %v4235
        %v4237 = vpop.f32.mrf.mxu0
        %v4238 = vadd.f32 %v4224, %v4237
        %4239 = vdwg.mxu0
        %4240 = vmatpush.bf16.msra.mxu0 %v2731
        %4241 = vmatpush.bf16.msra.mxu0 %v2715
        %4242 = vmatpush.bf16.msra.mxu0 %v2699
        %4243 = vmatpush.bf16.msra.mxu0 %v2683
        %4244 = vmatpush.bf16.msra.mxu0 %v2667
        %4245 = vmatpush.bf16.msra.mxu0 %v2651
        %4246 = vmatpush.bf16.msra.mxu0 %v2635
        %4247 = vmatpush.bf16.msra.mxu0 %v2619
        %4248 = vmatmul.bf16.gmra.mxu0 %v262
        %v4249 = vpop.f32.mrf.mxu0
        %v4250 = vadd.f32 %v4236, %v4249
        %v4251 = vpop.f32.mrf.mxu0
        %v4252 = vadd.f32 %v4238, %v4251
        %4253 = vdwg.mxu0
        %4254 = vmatpush.bf16.msra.mxu0 %v2859
        %4255 = vmatpush.bf16.msra.mxu0 %v2843
        %4256 = vmatpush.bf16.msra.mxu0 %v2827
        %4257 = vmatpush.bf16.msra.mxu0 %v2811
        %4258 = vmatpush.bf16.msra.mxu0 %v2795
        %4259 = vmatpush.bf16.msra.mxu0 %v2779
        %4260 = vmatpush.bf16.msra.mxu0 %v2763
        %4261 = vmatpush.bf16.msra.mxu0 %v2747
        %4262 = vmatmul.bf16.gmra.mxu0 %v263
        %v4263 = vpop.f32.mrf.mxu0
        %v4264 = vadd.f32 %v4250, %v4263
        %v4265 = vpop.f32.mrf.mxu0
        %v4266 = vadd.f32 %v4252, %v4265
        %4267 = vdwg.mxu0
        %4268 = vst [vmem:[%s251] sm:$0xff] %v3424
        %4269 = vst [vmem:[%s251 + $0x8] sm:$0xff] %v3480
        %4270 = vst [vmem:[%s251 + $0x10] sm:$0xff] %v3536
        %4271 = vst [vmem:[%s251 + $0x18] sm:$0xff] %v3592
        %4272 = vst [vmem:[%s251 + $0x20] sm:$0xff] %v3648
        %4273 = vst [vmem:[%s251 + $0x28] sm:$0xff] %v3704
        %4274 = vst [vmem:[%s251 + $0x30] sm:$0xff] %v3760
        %4275 = vst [vmem:[%s251 + $0x38] sm:$0xff] %v3816
        %4276 = vst [vmem:[%s251 + $0x40] sm:$0xff] %v3872
        %4277 = vst [vmem:[%s251 + $0x48] sm:$0xff] %v3928
        %4278 = vst [vmem:[%s251 + $0x50] sm:$0xff] %v3984
        %4279 = vst [vmem:[%s251 + $0x58] sm:$0xff] %v4040
        %4280 = vst [vmem:[%s251 + $0x60] sm:$0xff] %v4096
        %4281 = vst [vmem:[%s251 + $0x68] sm:$0xff] %v4152
        %4282 = vst [vmem:[%s251 + $0x70] sm:$0xff] %v4208
        %4283 = vst [vmem:[%s251 + $0x78] sm:$0xff] %v4264
        %4284 = vst [vmem:[%s251 + $0x80] sm:$0x3f] %v3426
        %4285 = vst [vmem:[%s251 + $0x88] sm:$0x3f] %v3482
        %4286 = vst [vmem:[%s251 + $0x90] sm:$0x3f] %v3538
        %4287 = vst [vmem:[%s251 + $0x98] sm:$0x3f] %v3594
        %4288 = vst [vmem:[%s251 + $0xa0] sm:$0x3f] %v3650
        %4289 = vst [vmem:[%s251 + $0xa8] sm:$0x3f] %v3706
        %4290 = vst [vmem:[%s251 + $0xb0] sm:$0x3f] %v3762
        %4291 = vst [vmem:[%s251 + $0xb8] sm:$0x3f] %v3818
        %4292 = vst [vmem:[%s251 + $0xc0] sm:$0x3f] %v3874
        %4293 = vst [vmem:[%s251 + $0xc8] sm:$0x3f] %v3930
        %4294 = vst [vmem:[%s251 + $0xd0] sm:$0x3f] %v3986
        %4295 = vst [vmem:[%s251 + $0xd8] sm:$0x3f] %v4042
        %4296 = vst [vmem:[%s251 + $0xe0] sm:$0x3f] %v4098
        %4297 = vst [vmem:[%s251 + $0xe8] sm:$0x3f] %v4154
        %4298 = vst [vmem:[%s251 + $0xf0] sm:$0x3f] %v4210
        %4299 = vst [vmem:[%s251 + $0xf8] sm:$0x3f] %v4266
        %p4300 = scmp.lt.s32.totalorder %s20, 1
        %s4301 = scalar_select %p4300, %s20, 1
        %s4302 = smul.addr %s4301, 32
        %s4303 = smul.addr %s4302, 8
        %s4304 = scalar_lea.vmem %s3, %s4303
        // Predicated region
        $region41: #{forward.10} parent=31 // pred_check
          %p4305 = pneg %p116
        $region42: #{forward.10} parent=31 // pred_check_branch
          %4307 = sbr.rel (%p4305) target = $region44
        $region43: #{forward.10} parent=31 // pred_region
          _
        $region44: #{forward.10} parent=31 // pred_fallthru
          _
      $region32: #{forward.10} parent=5 // pred_fallthru
        _
      %p4308 = scmp.le.s32.totalorder 2, %s15
      // Predicated region
      $region45: #{forward.10} parent=5 // pred_check
        %p4309 = pneg %p4308
      $region46: #{forward.10} parent=5 // pred_check_branch
        %4311 = sbr.rel (%p4309) target = $region48
      $region47: #{forward.10} parent=5 // pred_region
        %s4312 = ssub.s32 %s15, 2
        // Predicated region
        $region49: #{forward.10} parent=47 // pred_check
          %p4313 = pneg %p122
        $region50: #{forward.10} parent=47 // pred_check_branch
          %4315 = sbr.rel (%p4313) target = $region52
        $region51: #{forward.10} parent=47 // pred_region
          %p4316 = scmp.lt.s32.totalorder %s21, 1
          %s4317 = scalar_select %p4316, %s21, 1
          %s4318 = smul.addr %s4317, 32
          %s4319 = smul.addr %s4318, 8
          %s4320 = scalar_lea.vmem %s3, %s4319
        $region52: #{forward.10} parent=47 // pred_fallthru
          _
      $region48: #{forward.10} parent=5 // pred_fallthru
        _
    $region6: #{forward.10} parent=1 // loop_footer
      %s19 = sadd.s32 1, %s15
    $region7: #{forward.10} parent=1 // loop_footer_branch
      %14 = sbr.rel target = $region3
    $region8: #{forward.10} parent=1 // loop_exit
      _
    %4321 = vsyncpa [#allocation3], 1
    %s4322 = scalar_lea.sflag [#allocation3], 1
    %4323 = vsyncpa %s4322, 1
    %4324 = vsyncpa [#allocation5], 1
    %s4325 = scalar_lea.sflag [#allocation5], 1
    %4326 = vsyncpa %s4325, 1

// kernel: forward.13
$region0: #{forward.13}
  #allocation0 [shape = 'u32[]', space=smem, size = 0x4, offset = 0x4, fixed_abs, tag = 'smem constant byte address 0x4 - core index']
  #allocation1 [shape = 'u32[72,128]{1,0:T(1,128)}', space=vmem, size = 0x9000, scoped, tag = 'internal scratch']
  #allocation2 [shape = 'f32[1,1]{1,0:T(1,128)S(1)}', space=vmem, size = 0x200, scoped, tag = 'scoped memory for forward.13']
  %s0 = inlined_call_operand.vmem [shape: f32[2,512], index: 0, kind: input, shape index: {}]
  %s1 = inlined_call_operand.hbm [shape: bf16[512,256], index: 1, kind: input, shape index: {}]
  %s2 = inlined_call_operand.hbm [shape: f32[1,256], index: 2, kind: input, shape index: {}]
  %s3 = inlined_call_operand.vmem [shape: bf16[256,1], index: 3, kind: input, shape index: {}]
  %s4 = inlined_call_operand.<no memory space> [shape: f32[1,1], index: 4, kind: input, shape index: {}]
  %s5 = inlined_call_operand.vmem [shape: f32[2,1], index: 5, kind: output, shape index: {}]
  %s6 = sld [smem:[#allocation0]]
  $region38: #{forward.13} parent=0
    _
  %s8 = ssub.s32 1, %s6
  %s9 = scalar_select 0, %s8, %s6
  %v10 = vstv %s4
  %11 = vst [vmem:[#allocation2] sm:$0x1] %v10
  $region1: #{forward.13} parent=0
    #allocation3 [shape = 'u8[262144]{0}', space=vmem, size = 0x40000, scoped, tag = 'input window, operand 1, single buffered']
    #allocation4 [shape = 's32[1]{0}', space=sflag, size = 0x4, scoped, tag = 'scoped memory for forward.13']
    #allocation5 [shape = 'u8[1024]{0}', space=vmem, size = 0x400, scoped, tag = 'input window, operand 2, single buffered']
    #allocation6 [shape = 's32[1]{0}', space=sflag, size = 0x4, scoped, tag = 'scoped memory for forward.13']
    %12 = vsyncpa [#allocation4], 0
    %13 = vsyncpa [#allocation6], 0
    // Predicated region
    $region2: #{forward.13} parent=1 // pred_check
      _
    $region3: #{forward.13} parent=1 // pred_check_branch
      %15 = sbr.rel (0) target = $region5
    $region4: #{forward.13} parent=1 // pred_region
      _
    $region5: #{forward.13} parent=1 // pred_fallthru
      _
    // Predicated region
    $region6: #{forward.13} parent=1 // pred_check
      _
    $region7: #{forward.13} parent=1 // pred_check_branch
      %17 = sbr.rel (0) target = $region9
    $region8: #{forward.13} parent=1 // pred_region
      %19 = vsyncadd [#allocation4], 0
      %s20 = sshll.u32 %s1, 4
      %s21 = int_to_ptr.hbm [resolvable:$true] %s20
      %s22 = sshll.u32 [#allocation3], 4
      %s23 = int_to_ptr.vmem [resolvable:$true] %s22
      %28 = dma.hbm_to_vmem [thread:$0]  %s21, 8192, %s23, [#allocation4], 128, 128, 8
    $region9: #{forward.13} parent=1 // pred_fallthru
      _
    // Predicated region
    $region10: #{forward.13} parent=1 // pred_check
      _
    $region11: #{forward.13} parent=1 // pred_check_branch
      %30 = sbr.rel (0) target = $region13
    $region12: #{forward.13} parent=1 // pred_region
      %32 = vsyncadd [#allocation6], 0
      %s34 = sshll.u32 %s2, 4
      %s35 = int_to_ptr.hbm [resolvable:$true] %s34
      %s36 = sshll.u32 [#allocation5], 4
      %s37 = int_to_ptr.vmem [resolvable:$true] %s36
      %39 = dma.hbm_to_vmem [thread:$0]  %s35, 32, %s37, [#allocation6]
    $region13: #{forward.13} parent=1 // pred_fallthru
      _
    // Predicated region
    $region14: #{forward.13} parent=1 // pred_check
      _
    $region15: #{forward.13} parent=1 // pred_check_branch
      %41 = sbr.rel (0) target = $region17
    $region16: #{forward.13} parent=1 // pred_region
      _
    $region17: #{forward.13} parent=1 // pred_fallthru
      _
    // Predicated region
    $region18: #{forward.13} parent=1 // pred_check
      _
    $region19: #{forward.13} parent=1 // pred_check_branch
      %43 = sbr.rel (0) target = $region21
    $region20: #{forward.13} parent=1 // pred_region
      _
    $region21: #{forward.13} parent=1 // pred_fallthru
      _
    // Predicated region
    $region22: #{forward.13} parent=1 // pred_check
      _
    $region23: #{forward.13} parent=1 // pred_check_branch
      %45 = sbr.rel (0) target = $region25
    $region24: #{forward.13} parent=1 // pred_region
      %47 = dma.done [#allocation4], 8192
    $region25: #{forward.13} parent=1 // pred_fallthru
      _
    // Predicated region
    $region26: #{forward.13} parent=1 // pred_check
      _
    $region27: #{forward.13} parent=1 // pred_check_branch
      %49 = sbr.rel (0) target = $region29
    $region28: #{forward.13} parent=1 // pred_region
      %51 = dma.done [#allocation6], 32
    $region29: #{forward.13} parent=1 // pred_fallthru
      _
    %v52 = vld [vmem:[%s0] sm:$0xff]
    %54 = vst [vmem:[#allocation1] ss:$4 sm:$0xff] %v52
    %v55 = vld.sshfl [vmem:[#allocation1] sm:$0xff pattern:$0x73625140]
    %v56 = vld.sshfl [vmem:[#allocation1 + $0x8] sm:$0xff pattern:$0x73625140]
    %v57 = vld.sshfl [vmem:[#allocation1 + $0x10] sm:$0xff pattern:$0x73625140]
    %v58 = vld.sshfl [vmem:[#allocation1 + $0x18] sm:$0xff pattern:$0x73625140]
    %v63 = vpack.c.bf16 %v55, %v55
    %v64 = vpack.c.bf16 %v56, %v56
    %v65 = vpack.c.bf16 %v57, %v57
    %v66 = vpack.c.bf16 %v58, %v58
    %v67 = vld [vmem:[#allocation3] sm:$0xff]
    %v68 = vld [vmem:[#allocation3 + $0x8] sm:$0xff]
    %v69 = vld [vmem:[#allocation3 + $0x10] sm:$0xff]
    %v70 = vld [vmem:[#allocation3 + $0x18] sm:$0xff]
    %v71 = vld [vmem:[#allocation3 + $0x20] sm:$0xff]
    %v72 = vld [vmem:[#allocation3 + $0x28] sm:$0xff]
    %v73 = vld [vmem:[#allocation3 + $0x30] sm:$0xff]
    %v74 = vld [vmem:[#allocation3 + $0x38] sm:$0xff]
    %v75 = vld [vmem:[#allocation3 + $0x40] sm:$0xff]
    %v76 = vld [vmem:[#allocation3 + $0x48] sm:$0xff]
    %v77 = vld [vmem:[#allocation3 + $0x50] sm:$0xff]
    %v78 = vld [vmem:[#allocation3 + $0x58] sm:$0xff]
    %v79 = vld [vmem:[#allocation3 + $0x60] sm:$0xff]
    %v80 = vld [vmem:[#allocation3 + $0x68] sm:$0xff]
    %v81 = vld [vmem:[#allocation3 + $0x70] sm:$0xff]
    %v82 = vld [vmem:[#allocation3 + $0x78] sm:$0xff]
    %v83 = vld [vmem:[#allocation3 + $0x80] sm:$0xff]
    %v84 = vld [vmem:[#allocation3 + $0x88] sm:$0xff]
    %v85 = vld [vmem:[#allocation3 + $0x90] sm:$0xff]
    %v86 = vld [vmem:[#allocation3 + $0x98] sm:$0xff]
    %v87 = vld [vmem:[#allocation3 + $0xa0] sm:$0xff]
    %v88 = vld [vmem:[#allocation3 + $0xa8] sm:$0xff]
    %v89 = vld [vmem:[#allocation3 + $0xb0] sm:$0xff]
    %v90 = vld [vmem:[#allocation3 + $0xb8] sm:$0xff]
    %v91 = vld [vmem:[#allocation3 + $0xc0] sm:$0xff]
    %v92 = vld [vmem:[#allocation3 + $0xc8] sm:$0xff]
    %v93 = vld [vmem:[#allocation3 + $0xd0] sm:$0xff]
    %v94 = vld [vmem:[#allocation3 + $0xd8] sm:$0xff]
    %v95 = vld [vmem:[#allocation3 + $0xe0] sm:$0xff]
    %v96 = vld [vmem:[#allocation3 + $0xe8] sm:$0xff]
    %v97 = vld [vmem:[#allocation3 + $0xf0] sm:$0xff]
    %v98 = vld [vmem:[#allocation3 + $0xf8] sm:$0xff]
    %v99 = vld [vmem:[#allocation3 + $0x100] sm:$0xff]
    %v100 = vld [vmem:[#allocation3 + $0x108] sm:$0xff]
    %v101 = vld [vmem:[#allocation3 + $0x110] sm:$0xff]
    %v102 = vld [vmem:[#allocation3 + $0x118] sm:$0xff]
    %v103 = vld [vmem:[#allocation3 + $0x120] sm:$0xff]
    %v104 = vld [vmem:[#allocation3 + $0x128] sm:$0xff]
    %v105 = vld [vmem:[#allocation3 + $0x130] sm:$0xff]
    %v106 = vld [vmem:[#allocation3 + $0x138] sm:$0xff]
    %v107 = vld [vmem:[#allocation3 + $0x140] sm:$0xff]
    %v108 = vld [vmem:[#allocation3 + $0x148] sm:$0xff]
    %v109 = vld [vmem:[#allocation3 + $0x150] sm:$0xff]
    %v110 = vld [vmem:[#allocation3 + $0x158] sm:$0xff]
    %v111 = vld [vmem:[#allocation3 + $0x160] sm:$0xff]
    %v112 = vld [vmem:[#allocation3 + $0x168] sm:$0xff]
    %v113 = vld [vmem:[#allocation3 + $0x170] sm:$0xff]
    %v114 = vld [vmem:[#allocation3 + $0x178] sm:$0xff]
    %v115 = vld [vmem:[#allocation3 + $0x180] sm:$0xff]
    %v116 = vld [vmem:[#allocation3 + $0x188] sm:$0xff]
    %v117 = vld [vmem:[#allocation3 + $0x190] sm:$0xff]
    %v118 = vld [vmem:[#allocation3 + $0x198] sm:$0xff]
    %v119 = vld [vmem:[#allocation3 + $0x1a0] sm:$0xff]
    %v120 = vld [vmem:[#allocation3 + $0x1a8] sm:$0xff]
    %v121 = vld [vmem:[#allocation3 + $0x1b0] sm:$0xff]
    %v122 = vld [vmem:[#allocation3 + $0x1b8] sm:$0xff]
    %v123 = vld [vmem:[#allocation3 + $0x1c0] sm:$0xff]
    %v124 = vld [vmem:[#allocation3 + $0x1c8] sm:$0xff]
    %v125 = vld [vmem:[#allocation3 + $0x1d0] sm:$0xff]
    %v126 = vld [vmem:[#allocation3 + $0x1d8] sm:$0xff]
    %v127 = vld [vmem:[#allocation3 + $0x1e0] sm:$0xff]
    %v128 = vld [vmem:[#allocation3 + $0x1e8] sm:$0xff]
    %v129 = vld [vmem:[#allocation3 + $0x1f0] sm:$0xff]
    %v130 = vld [vmem:[#allocation3 + $0x1f8] sm:$0xff]
    %v131 = vld [vmem:[#allocation5] sm:$0x3]
    %v133 = vperm.slane %v131, 0
    %v134 = vperm.slane %v131, 1
    %v201 = vunpack.c.l.b16 %v67
    %v202 = vunpack.c.h.b16 %v67
    %v203 = vunpack.c.l.b16 %v68
    %v204 = vunpack.c.h.b16 %v68
    %v205 = vunpack.c.l.b16 %v69
    %v206 = vunpack.c.h.b16 %v69
    %v207 = vunpack.c.l.b16 %v70
    %v208 = vunpack.c.h.b16 %v70
    %v209 = vunpack.c.l.b16 %v71
    %v210 = vunpack.c.h.b16 %v71
    %v211 = vunpack.c.l.b16 %v72
    %v212 = vunpack.c.h.b16 %v72
    %v213 = vunpack.c.l.b16 %v73
    %v214 = vunpack.c.h.b16 %v73
    %v215 = vunpack.c.l.b16 %v74
    %v216 = vunpack.c.h.b16 %v74
    %v217 = vunpack.c.l.b16 %v75
    %v218 = vunpack.c.h.b16 %v75
    %v219 = vunpack.c.l.b16 %v76
    %v220 = vunpack.c.h.b16 %v76
    %v221 = vunpack.c.l.b16 %v77
    %v222 = vunpack.c.h.b16 %v77
    %v223 = vunpack.c.l.b16 %v78
    %v224 = vunpack.c.h.b16 %v78
    %v225 = vunpack.c.l.b16 %v79
    %v226 = vunpack.c.h.b16 %v79
    %v227 = vunpack.c.l.b16 %v80
    %v228 = vunpack.c.h.b16 %v80
    %v229 = vunpack.c.l.b16 %v81
    %v230 = vunpack.c.h.b16 %v81
    %v231 = vunpack.c.l.b16 %v82
    %v232 = vunpack.c.h.b16 %v82
    %v233 = vunpack.c.l.b16 %v83
    %v234 = vunpack.c.h.b16 %v83
    %v235 = vunpack.c.l.b16 %v84
    %v236 = vunpack.c.h.b16 %v84
    %v237 = vunpack.c.l.b16 %v85
    %v238 = vunpack.c.h.b16 %v85
    %v239 = vunpack.c.l.b16 %v86
    %v240 = vunpack.c.h.b16 %v86
    %v241 = vunpack.c.l.b16 %v87
    %v242 = vunpack.c.h.b16 %v87
    %v243 = vunpack.c.l.b16 %v88
    %v244 = vunpack.c.h.b16 %v88
    %v245 = vunpack.c.l.b16 %v89
    %v246 = vunpack.c.h.b16 %v89
    %v247 = vunpack.c.l.b16 %v90
    %v248 = vunpack.c.h.b16 %v90
    %v249 = vunpack.c.l.b16 %v91
    %v250 = vunpack.c.h.b16 %v91
    %v251 = vunpack.c.l.b16 %v92
    %v252 = vunpack.c.h.b16 %v92
    %v253 = vunpack.c.l.b16 %v93
    %v254 = vunpack.c.h.b16 %v93
    %v255 = vunpack.c.l.b16 %v94
    %v256 = vunpack.c.h.b16 %v94
    %v257 = vunpack.c.l.b16 %v95
    %v258 = vunpack.c.h.b16 %v95
    %v259 = vunpack.c.l.b16 %v96
    %v260 = vunpack.c.h.b16 %v96
    %v261 = vunpack.c.l.b16 %v97
    %v262 = vunpack.c.h.b16 %v97
    %v263 = vunpack.c.l.b16 %v98
    %v264 = vunpack.c.h.b16 %v98
    %v265 = vunpack.c.l.b16 %v99
    %v266 = vunpack.c.h.b16 %v99
    %v267 = vunpack.c.l.b16 %v100
    %v268 = vunpack.c.h.b16 %v100
    %v269 = vunpack.c.l.b16 %v101
    %v270 = vunpack.c.h.b16 %v101
    %v271 = vunpack.c.l.b16 %v102
    %v272 = vunpack.c.h.b16 %v102
    %v273 = vunpack.c.l.b16 %v103
    %v274 = vunpack.c.h.b16 %v103
    %v275 = vunpack.c.l.b16 %v104
    %v276 = vunpack.c.h.b16 %v104
    %v277 = vunpack.c.l.b16 %v105
    %v278 = vunpack.c.h.b16 %v105
    %v279 = vunpack.c.l.b16 %v106
    %v280 = vunpack.c.h.b16 %v106
    %v281 = vunpack.c.l.b16 %v107
    %v282 = vunpack.c.h.b16 %v107
    %v283 = vunpack.c.l.b16 %v108
    %v284 = vunpack.c.h.b16 %v108
    %v285 = vunpack.c.l.b16 %v109
    %v286 = vunpack.c.h.b16 %v109
    %v287 = vunpack.c.l.b16 %v110
    %v288 = vunpack.c.h.b16 %v110
    %v289 = vunpack.c.l.b16 %v111
    %v290 = vunpack.c.h.b16 %v111
    %v291 = vunpack.c.l.b16 %v112
    %v292 = vunpack.c.h.b16 %v112
    %v293 = vunpack.c.l.b16 %v113
    %v294 = vunpack.c.h.b16 %v113
    %v295 = vunpack.c.l.b16 %v114
    %v296 = vunpack.c.h.b16 %v114
    %v297 = vunpack.c.l.b16 %v115
    %v298 = vunpack.c.h.b16 %v115
    %v299 = vunpack.c.l.b16 %v116
    %v300 = vunpack.c.h.b16 %v116
    %v301 = vunpack.c.l.b16 %v117
    %v302 = vunpack.c.h.b16 %v117
    %v303 = vunpack.c.l.b16 %v118
    %v304 = vunpack.c.h.b16 %v118
    %v305 = vunpack.c.l.b16 %v119
    %v306 = vunpack.c.h.b16 %v119
    %v307 = vunpack.c.l.b16 %v120
    %v308 = vunpack.c.h.b16 %v120
    %v309 = vunpack.c.l.b16 %v121
    %v310 = vunpack.c.h.b16 %v121
    %v311 = vunpack.c.l.b16 %v122
    %v312 = vunpack.c.h.b16 %v122
    %v313 = vunpack.c.l.b16 %v123
    %v314 = vunpack.c.h.b16 %v123
    %v315 = vunpack.c.l.b16 %v124
    %v316 = vunpack.c.h.b16 %v124
    %v317 = vunpack.c.l.b16 %v125
    %v318 = vunpack.c.h.b16 %v125
    %v319 = vunpack.c.l.b16 %v126
    %v320 = vunpack.c.h.b16 %v126
    %v321 = vunpack.c.l.b16 %v127
    %v322 = vunpack.c.h.b16 %v127
    %v323 = vunpack.c.l.b16 %v128
    %v324 = vunpack.c.h.b16 %v128
    %v325 = vunpack.c.l.b16 %v129
    %v326 = vunpack.c.h.b16 %v129
    %v327 = vunpack.c.l.b16 %v130
    %v328 = vunpack.c.h.b16 %v130
    %v329 = vpack.c.b16 %v203, %v201
    %v330 = vpack.c.b16 %v204, %v202
    %v331 = vpack.c.b16 %v207, %v205
    %v332 = vpack.c.b16 %v208, %v206
    %v333 = vpack.c.b16 %v211, %v209
    %v334 = vpack.c.b16 %v212, %v210
    %v335 = vpack.c.b16 %v215, %v213
    %v336 = vpack.c.b16 %v216, %v214
    %v337 = vpack.c.b16 %v219, %v217
    %v338 = vpack.c.b16 %v220, %v218
    %v339 = vpack.c.b16 %v223, %v221
    %v340 = vpack.c.b16 %v224, %v222
    %v341 = vpack.c.b16 %v227, %v225
    %v342 = vpack.c.b16 %v228, %v226
    %v343 = vpack.c.b16 %v231, %v229
    %v344 = vpack.c.b16 %v232, %v230
    %v345 = vpack.c.b16 %v235, %v233
    %v346 = vpack.c.b16 %v236, %v234
    %v347 = vpack.c.b16 %v239, %v237
    %v348 = vpack.c.b16 %v240, %v238
    %v349 = vpack.c.b16 %v243, %v241
    %v350 = vpack.c.b16 %v244, %v242
    %v351 = vpack.c.b16 %v247, %v245
    %v352 = vpack.c.b16 %v248, %v246
    %v353 = vpack.c.b16 %v251, %v249
    %v354 = vpack.c.b16 %v252, %v250
    %v355 = vpack.c.b16 %v255, %v253
    %v356 = vpack.c.b16 %v256, %v254
    %v357 = vpack.c.b16 %v259, %v257
    %v358 = vpack.c.b16 %v260, %v258
    %v359 = vpack.c.b16 %v263, %v261
    %v360 = vpack.c.b16 %v264, %v262
    %v361 = vpack.c.b16 %v267, %v265
    %v362 = vpack.c.b16 %v268, %v266
    %v363 = vpack.c.b16 %v271, %v269
    %v364 = vpack.c.b16 %v272, %v270
    %v365 = vpack.c.b16 %v275, %v273
    %v366 = vpack.c.b16 %v276, %v274
    %v367 = vpack.c.b16 %v279, %v277
    %v368 = vpack.c.b16 %v280, %v278
    %v369 = vpack.c.b16 %v283, %v281
    %v370 = vpack.c.b16 %v284, %v282
    %v371 = vpack.c.b16 %v287, %v285
    %v372 = vpack.c.b16 %v288, %v286
    %v373 = vpack.c.b16 %v291, %v289
    %v374 = vpack.c.b16 %v292, %v290
    %v375 = vpack.c.b16 %v295, %v293
    %v376 = vpack.c.b16 %v296, %v294
    %v377 = vpack.c.b16 %v299, %v297
    %v378 = vpack.c.b16 %v300, %v298
    %v379 = vpack.c.b16 %v303, %v301
    %v380 = vpack.c.b16 %v304, %v302
    %v381 = vpack.c.b16 %v307, %v305
    %v382 = vpack.c.b16 %v308, %v306
    %v383 = vpack.c.b16 %v311, %v309
    %v384 = vpack.c.b16 %v312, %v310
    %v385 = vpack.c.b16 %v315, %v313
    %v386 = vpack.c.b16 %v316, %v314
    %v387 = vpack.c.b16 %v319, %v317
    %v388 = vpack.c.b16 %v320, %v318
    %v389 = vpack.c.b16 %v323, %v321
    %v390 = vpack.c.b16 %v324, %v322
    %v391 = vpack.c.b16 %v327, %v325
    %v392 = vpack.c.b16 %v328, %v326
    %457 = vmatpush.bf16.msra.mxu0 %v343
    %458 = vmatpush.bf16.msra.mxu0 %v341
    %459 = vmatpush.bf16.msra.mxu0 %v339
    %460 = vmatpush.bf16.msra.mxu0 %v337
    %461 = vmatpush.bf16.msra.mxu0 %v335
    %462 = vmatpush.bf16.msra.mxu0 %v333
    %463 = vmatpush.bf16.msra.mxu0 %v331
    %464 = vmatpush.bf16.msra.mxu0 %v329
    %465 = vmatmul.bf16.gmra.mxu0 %v63
    %v466 = vpop.f32.mrf.mxu0
    %v467 = vadd.f32 %v133, %v466
    %v468 = vpop.f32.mrf.mxu0
    %469 = vdwg.mxu0
    %470 = vmatpush.bf16.msra.mxu0 %v359
    %471 = vmatpush.bf16.msra.mxu0 %v357
    %472 = vmatpush.bf16.msra.mxu0 %v355
    %473 = vmatpush.bf16.msra.mxu0 %v353
    %474 = vmatpush.bf16.msra.mxu0 %v351
    %475 = vmatpush.bf16.msra.mxu0 %v349
    %476 = vmatpush.bf16.msra.mxu0 %v347
    %477 = vmatpush.bf16.msra.mxu0 %v345
    %478 = vmatmul.bf16.gmra.mxu0 %v64
    %v479 = vpop.f32.mrf.mxu0
    %v480 = vadd.f32 %v467, %v479
    %v481 = vpop.f32.mrf.mxu0
    %482 = vdwg.mxu0
    %483 = vmatpush.bf16.msra.mxu0 %v375
    %484 = vmatpush.bf16.msra.mxu0 %v373
    %485 = vmatpush.bf16.msra.mxu0 %v371
    %486 = vmatpush.bf16.msra.mxu0 %v369
    %487 = vmatpush.bf16.msra.mxu0 %v367
    %488 = vmatpush.bf16.msra.mxu0 %v365
    %489 = vmatpush.bf16.msra.mxu0 %v363
    %490 = vmatpush.bf16.msra.mxu0 %v361
    %491 = vmatmul.bf16.gmra.mxu0 %v65
    %v492 = vpop.f32.mrf.mxu0
    %v493 = vadd.f32 %v480, %v492
    %v494 = vpop.f32.mrf.mxu0
    %495 = vdwg.mxu0
    %496 = vmatpush.bf16.msra.mxu0 %v391
    %497 = vmatpush.bf16.msra.mxu0 %v389
    %498 = vmatpush.bf16.msra.mxu0 %v387
    %499 = vmatpush.bf16.msra.mxu0 %v385
    %500 = vmatpush.bf16.msra.mxu0 %v383
    %501 = vmatpush.bf16.msra.mxu0 %v381
    %502 = vmatpush.bf16.msra.mxu0 %v379
    %503 = vmatpush.bf16.msra.mxu0 %v377
    %504 = vmatmul.bf16.gmra.mxu0 %v66
    %v505 = vpop.f32.mrf.mxu0
    %v506 = vadd.f32 %v493, %v505
    %v507 = vpop.f32.mrf.mxu0
    %508 = vdwg.mxu0
    %509 = vmatpush.bf16.msra.mxu0 %v344
    %510 = vmatpush.bf16.msra.mxu0 %v342
    %511 = vmatpush.bf16.msra.mxu0 %v340
    %512 = vmatpush.bf16.msra.mxu0 %v338
    %513 = vmatpush.bf16.msra.mxu0 %v336
    %514 = vmatpush.bf16.msra.mxu0 %v334
    %515 = vmatpush.bf16.msra.mxu0 %v332
    %516 = vmatpush.bf16.msra.mxu0 %v330
    %517 = vmatmul.bf16.gmra.mxu0 %v63
    %v518 = vpop.f32.mrf.mxu0
    %v519 = vadd.f32 %v134, %v518
    %v520 = vpop.f32.mrf.mxu0
    %521 = vdwg.mxu0
    %522 = vmatpush.bf16.msra.mxu0 %v360
    %523 = vmatpush.bf16.msra.mxu0 %v358
    %524 = vmatpush.bf16.msra.mxu0 %v356
    %525 = vmatpush.bf16.msra.mxu0 %v354
    %526 = vmatpush.bf16.msra.mxu0 %v352
    %527 = vmatpush.bf16.msra.mxu0 %v350
    %528 = vmatpush.bf16.msra.mxu0 %v348
    %529 = vmatpush.bf16.msra.mxu0 %v346
    %530 = vmatmul.bf16.gmra.mxu0 %v64
    %v531 = vpop.f32.mrf.mxu0
    %v532 = vadd.f32 %v519, %v531
    %v533 = vpop.f32.mrf.mxu0
    %534 = vdwg.mxu0
    %535 = vmatpush.bf16.msra.mxu0 %v376
    %536 = vmatpush.bf16.msra.mxu0 %v374
    %537 = vmatpush.bf16.msra.mxu0 %v372
    %538 = vmatpush.bf16.msra.mxu0 %v370
    %539 = vmatpush.bf16.msra.mxu0 %v368
    %540 = vmatpush.bf16.msra.mxu0 %v366
    %541 = vmatpush.bf16.msra.mxu0 %v364
    %542 = vmatpush.bf16.msra.mxu0 %v362
    %543 = vmatmul.bf16.gmra.mxu0 %v65
    %v544 = vpop.f32.mrf.mxu0
    %v545 = vadd.f32 %v532, %v544
    %v546 = vpop.f32.mrf.mxu0
    %547 = vdwg.mxu0
    %548 = vmatpush.bf16.msra.mxu0 %v392
    %549 = vmatpush.bf16.msra.mxu0 %v390
    %550 = vmatpush.bf16.msra.mxu0 %v388
    %551 = vmatpush.bf16.msra.mxu0 %v386
    %552 = vmatpush.bf16.msra.mxu0 %v384
    %553 = vmatpush.bf16.msra.mxu0 %v382
    %554 = vmatpush.bf16.msra.mxu0 %v380
    %555 = vmatpush.bf16.msra.mxu0 %v378
    %556 = vmatmul.bf16.gmra.mxu0 %v66
    %v557 = vpop.f32.mrf.mxu0
    %v558 = vadd.f32 %v545, %v557
    %v559 = vpop.f32.mrf.mxu0
    %560 = vdwg.mxu0
    %vm561 = vcmp.ge.f32.partialorder %v506, 0.0
    %vm562 = vcmp.ge.f32.partialorder %v558, 0.0
    %v563 = vmul.f32 %v506, 0.1
    %v564 = vmul.f32 %v558, 0.1
    %v565 = vsel %vm561, %v506, %v563
    %v566 = vsel %vm562, %v558, %v564
    %v567 = vpack.c.bf16 %v565, %v565
    %v568 = vpack.c.bf16 %v566, %v566
    %v569 = vld [vmem:[%s3] sm:$0xf]
    %v570 = vld [vmem:[%s3 + $0x4] sm:$0xf]
    %v571 = vld [vmem:[%s3 + $0x8] sm:$0xf]
    %v572 = vld [vmem:[%s3 + $0xc] sm:$0xf]
    %v573 = vld [vmem:[%s3 + $0x10] sm:$0xf]
    %v574 = vld [vmem:[%s3 + $0x14] sm:$0xf]
    %v575 = vld [vmem:[%s3 + $0x18] sm:$0xf]
    %v576 = vld [vmem:[%s3 + $0x1c] sm:$0xf]
    %v577 = vld [vmem:[%s3 + $0x20] sm:$0xf]
    %v578 = vld [vmem:[%s3 + $0x24] sm:$0xf]
    %v579 = vld [vmem:[%s3 + $0x28] sm:$0xf]
    %v580 = vld [vmem:[%s3 + $0x2c] sm:$0xf]
    %v581 = vld [vmem:[%s3 + $0x30] sm:$0xf]
    %v582 = vld [vmem:[%s3 + $0x34] sm:$0xf]
    %v583 = vld [vmem:[%s3 + $0x38] sm:$0xf]
    %v584 = vld [vmem:[%s3 + $0x3c] sm:$0xf]
    %v585 = vld [vmem:[%s3 + $0x40] sm:$0xf]
    %v586 = vld [vmem:[%s3 + $0x44] sm:$0xf]
    %v587 = vld [vmem:[%s3 + $0x48] sm:$0xf]
    %v588 = vld [vmem:[%s3 + $0x4c] sm:$0xf]
    %v589 = vld [vmem:[%s3 + $0x50] sm:$0xf]
    %v590 = vld [vmem:[%s3 + $0x54] sm:$0xf]
    %v591 = vld [vmem:[%s3 + $0x58] sm:$0xf]
    %v592 = vld [vmem:[%s3 + $0x5c] sm:$0xf]
    %v593 = vld [vmem:[%s3 + $0x60] sm:$0xf]
    %v594 = vld [vmem:[%s3 + $0x64] sm:$0xf]
    %v595 = vld [vmem:[%s3 + $0x68] sm:$0xf]
    %v596 = vld [vmem:[%s3 + $0x6c] sm:$0xf]
    %v597 = vld [vmem:[%s3 + $0x70] sm:$0xf]
    %v598 = vld [vmem:[%s3 + $0x74] sm:$0xf]
    %v599 = vld [vmem:[%s3 + $0x78] sm:$0xf]
    %v600 = vld [vmem:[%s3 + $0x7c] sm:$0xf]
    %v601 = vld [vmem:[#allocation2] sm:$0x1]
    %v603 = vperm.slane %v601, 0
    %v637 = vunpack.c.l.b16 %v569
    %v638 = vunpack.c.l.b16 %v570
    %v639 = vunpack.c.l.b16 %v571
    %v640 = vunpack.c.l.b16 %v572
    %v641 = vunpack.c.l.b16 %v573
    %v642 = vunpack.c.l.b16 %v574
    %v643 = vunpack.c.l.b16 %v575
    %v644 = vunpack.c.l.b16 %v576
    %v645 = vunpack.c.l.b16 %v577
    %v646 = vunpack.c.l.b16 %v578
    %v647 = vunpack.c.l.b16 %v579
    %v648 = vunpack.c.l.b16 %v580
    %v649 = vunpack.c.l.b16 %v581
    %v650 = vunpack.c.l.b16 %v582
    %v651 = vunpack.c.l.b16 %v583
    %v652 = vunpack.c.l.b16 %v584
    %v653 = vunpack.c.l.b16 %v585
    %v654 = vunpack.c.l.b16 %v586
    %v655 = vunpack.c.l.b16 %v587
    %v656 = vunpack.c.l.b16 %v588
    %v657 = vunpack.c.l.b16 %v589
    %v658 = vunpack.c.l.b16 %v590
    %v659 = vunpack.c.l.b16 %v591
    %v660 = vunpack.c.l.b16 %v592
    %v661 = vunpack.c.l.b16 %v593
    %v662 = vunpack.c.l.b16 %v594
    %v663 = vunpack.c.l.b16 %v595
    %v664 = vunpack.c.l.b16 %v596
    %v665 = vunpack.c.l.b16 %v597
    %v666 = vunpack.c.l.b16 %v598
    %v667 = vunpack.c.l.b16 %v599
    %v668 = vunpack.c.l.b16 %v600
    %v669 = vpack.c.b16 %v638, %v637
    %v670 = vpack.c.b16 %v640, %v639
    %v671 = vpack.c.b16 %v642, %v641
    %v672 = vpack.c.b16 %v644, %v643
    %v673 = vpack.c.b16 %v646, %v645
    %v674 = vpack.c.b16 %v648, %v647
    %v675 = vpack.c.b16 %v650, %v649
    %v676 = vpack.c.b16 %v652, %v651
    %v677 = vpack.c.b16 %v654, %v653
    %v678 = vpack.c.b16 %v656, %v655
    %v679 = vpack.c.b16 %v658, %v657
    %v680 = vpack.c.b16 %v660, %v659
    %v681 = vpack.c.b16 %v662, %v661
    %v682 = vpack.c.b16 %v664, %v663
    %v683 = vpack.c.b16 %v666, %v665
    %v684 = vpack.c.b16 %v668, %v667
    %701 = vmatpush.bf16.msra.mxu0 %v676
    %702 = vmatpush.bf16.msra.mxu0 %v675
    %703 = vmatpush.bf16.msra.mxu0 %v674
    %704 = vmatpush.bf16.msra.mxu0 %v673
    %705 = vmatpush.bf16.msra.mxu0 %v672
    %706 = vmatpush.bf16.msra.mxu0 %v671
    %707 = vmatpush.bf16.msra.mxu0 %v670
    %708 = vmatpush.bf16.msra.mxu0 %v669
    %709 = vmatmul.bf16.gmra.mxu0 %v567
    %v710 = vpop.f32.mrf.mxu0
    %v711 = vadd.f32 %v603, %v710
    %v712 = vpop.f32.mrf.mxu0
    %713 = vdwg.mxu0
    %714 = vmatpush.bf16.msra.mxu0 %v684
    %715 = vmatpush.bf16.msra.mxu0 %v683
    %716 = vmatpush.bf16.msra.mxu0 %v682
    %717 = vmatpush.bf16.msra.mxu0 %v681
    %718 = vmatpush.bf16.msra.mxu0 %v680
    %719 = vmatpush.bf16.msra.mxu0 %v679
    %720 = vmatpush.bf16.msra.mxu0 %v678
    %721 = vmatpush.bf16.msra.mxu0 %v677
    %722 = vmatmul.bf16.gmra.mxu0 %v568
    %v723 = vpop.f32.mrf.mxu0
    %v724 = vadd.f32 %v711, %v723
    %v725 = vpop.f32.mrf.mxu0
    %726 = vdwg.mxu0
    %vm727 = vcmask 1024
    %728 = vst.msk [vmem:[%s5] sm:$0x3] %vm727, %v724
    // Predicated region
    $region30: #{forward.13} parent=1 // pred_check
      _
    $region31: #{forward.13} parent=1 // pred_check_branch
      %730 = sbr.rel (0) target = $region33
    $region32: #{forward.13} parent=1 // pred_region
      _
    $region33: #{forward.13} parent=1 // pred_fallthru
      _
    // Predicated region
    $region34: #{forward.13} parent=1 // pred_check
      _
    $region35: #{forward.13} parent=1 // pred_check_branch
      %732 = sbr.rel (0) target = $region37
    $region36: #{forward.13} parent=1 // pred_region
      _
    $region37: #{forward.13} parent=1 // pred_fallthru
      _
    %733 = vsyncpa [#allocation4], 1
    %734 = vsyncpa [#allocation6], 1

</llo_original>
